<compile_context>
chip_gen: v6e
topology: v6e:2x2x1
jax: 0.10.0
libtpu: 0.0.40
codegen_flags: <defaults>
</compile_context>

<pallas_src>
import jax
import jax.numpy as jnp
import numpy as np
from jax import lax
from jax.experimental import pallas as pl
from jax.experimental.pallas import tpu as pltpu

K = 5            # conv kernel size (both convs are 5x5, VALID, stride 1)
BT = 32          # images per grid step (batch tile)
LANES = 128      # per-image lane segment: 8 grid rows x 16 lanes per row
ROW = 16         # lane stride of one grid row inside a segment

# Segment-slack invariant: (largest consumed destination lane offset) +
# (largest lane shift) < 128, so wrapped/bled lanes are never consumed.
assert 16 * 6 + 6 + (1 * ROW + 1) < LANES   # conv1: consumed u,v <= 6, shift <= 17
assert 16 * 4 + 4 + (2 * ROW + 2) < LANES   # conv2: consumed i,j <= 4, shift <= 34

_ROLL_MODE = "unknown"   # "numpy" | "inverse" | "unsupported"


def _detect_roll_convention():
    """Probe pltpu.roll's direction convention once (eagerly, outside jit).

    If roll is unavailable or behaves unexpectedly, fall back to the
    concat-of-slices shift (always correct)."""
    global _ROLL_MODE
    if _ROLL_MODE != "unknown":
        return
    try:
        def probe(x_ref, o_ref):
            o_ref[...] = pltpu.roll(x_ref[...], 1, axis=1)

        x = jnp.tile(jnp.arange(128, dtype=jnp.float32)[None, :], (8, 1))
        out = pl.pallas_call(
            probe, out_shape=jax.ShapeDtypeStruct((8, 128), jnp.float32))(x)
        v = float(out[0, 0])
        if abs(v - 127.0) < 0.5:
            _ROLL_MODE = "numpy"      # roll(x, k)[i] == x[i - k]
        elif abs(v - 1.0) < 0.5:
            _ROLL_MODE = "inverse"    # roll(x, k)[i] == x[i + k]
        else:
            _ROLL_MODE = "unsupported"
    except Exception:
        _ROLL_MODE = "unsupported"


def _shift_left_lanes(v, s):
    """result[:, p] = v[:, (p + s) % N].  Wrapped lanes are never consumed."""
    if s == 0:
        return v
    n = v.shape[-1]
    if _ROLL_MODE == "numpy":
        return pltpu.roll(v, n - s, axis=1)
    if _ROLL_MODE == "inverse":
        return pltpu.roll(v, s, axis=1)
    return jnp.concatenate([v[:, s:], v[:, :s]], axis=1)


# ---------------------------------------------------------------------------
# Fused kernel
# ---------------------------------------------------------------------------
def net_kernel(x_ref, w1_ref, b1_ref, w2_ref, b2_ref,
               fc1_ref, bf1_ref, fc2_ref, bf2_ref, fc3_ref, bf3_ref, o_ref):
    f32 = jnp.float32
    n = x_ref.shape[-1]                # BT * 128 (static)
    bt = n // LANES

    # x_ref: (48, BT*128); row (sy*12 + sx*3 + c), lane b*128 + 16U + V holds
    # x[b, c, 4U+sy, 4V+sx]  (V in [0,8); V in [8,16) is zero padding).
    x48 = x_ref[...]

    # ---------------- conv1 + ReLU + 2x2 max-pool (one dot) ----------------
    # Master matrix: 4 lane-rolled copies of the whole input block.
    m1 = jnp.concatenate(
        [_shift_left_lanes(x48, a * ROW + b0) for a in range(2) for b0 in range(2)],
        axis=0)                                                   # (192, N)
    y1 = jnp.dot(w1_ref[...], m1, preferred_element_type=f32)     # (96, N)
    z1 = jnp.maximum(jnp.maximum(y1[0:24], y1[24:48]),
                     jnp.maximum(y1[48:72], y1[72:96]))           # pool max
    # bias + ReLU hoisted after the pool max (bias constant over pool offsets,
    # ReLU monotone).  a1 row = phase(ry*2+rx)*6 + channel; lane = (b, u, v)
    # holds pooled conv1 output at (channel, 2u+ry, 2v+rx).
    a1 = jnp.maximum(z1 + b1_ref[...], 0.0)                       # (24, N)

    # ---------------- conv2 + ReLU + 2x2 max-pool (one dot) ----------------
    m2 = jnp.concatenate(
        [_shift_left_lanes(a1, a2 * ROW + b2) for a2 in range(3) for b2 in range(3)],
        axis=0)                                                   # (216, N)
    y2 = jnp.dot(w2_ref[...], m2, preferred_element_type=f32)     # (64, N)
    z2 = jnp.maximum(jnp.maximum(y2[0:16], y2[16:32]),
                     jnp.maximum(y2[32:48], y2[48:64]))
    # a2v[c, b*128 + 16i + j] == pooled conv2 activation (c, i, j), i, j < 5
    a2v = jnp.maximum(z2 + b2_ref[...], 0.0)                      # (16, N)

    # ---------------- flatten + fc1 + fc2 + fc3 -----------------------------
    # Re-tile to batch-major: BT lane-aligned (16,128) segment slices, stacked
    # and merged to (BT, 2048).  fc1_ref is the zero-expanded (2048, 120)
    # weight (zeros at padded spatial positions), so no compaction is needed.
    segs = [a2v[:, b * LANES:(b + 1) * LANES] for b in range(bt)]
    s3 = jnp.stack(segs, axis=0)                                  # (BT, 16, 128)
    xflat = s3.reshape(bt, 16 * LANES)                            # (BT, 2048)

    h = jnp.maximum(jnp.dot(xflat, fc1_ref[...], preferred_element_type=f32)
                    + bf1_ref[...], 0.0)                          # (BT, 120)
    h = jnp.maximum(jnp.dot(h, fc2_ref[...], preferred_element_type=f32)
                    + bf2_ref[...], 0.0)                          # (BT, 84)
    # fc3 weight/bias are zero-padded to 128 output columns -> lane-dense store
    o_ref[...] = (jnp.dot(h, fc3_ref[...], preferred_element_type=f32)
                  + bf3_ref[...])                                 # (BT, 128)


# ---------------------------------------------------------------------------
# One-time host-side parameter preparation
# ---------------------------------------------------------------------------
def _expand_conv1(w1):
    """(6,3,5,5) -> (96,192) row-expanded conv1 weight.

    Row  = (qy*2+qx)*24 + (ry*2+rx)*6 + o       (pool offset, phase, channel)
    Col  = (a*2+b0)*48 + (sy*4+sx)*3 + c        (shift group, input plane)
    """
    w = np.asarray(w1, np.float32)
    out = np.zeros((96, 192), np.float32)
    for qy in range(2):
        for qx in range(2):
            for ry in range(2):
                for rx in range(2):
                    for o in range(6):
                        row = (qy * 2 + qx) * 24 + (ry * 2 + rx) * 6 + o
                        for a in range(2):
                            for b0 in range(2):
                                for sy in range(4):
                                    for sx in range(4):
                                        ty, tx = 4 * a + sy, 4 * b0 + sx
                                        ky = ty - 2 * ry - qy
                                        kx = tx - 2 * rx - qx
                                        if 0 <= ky < K and 0 <= kx < K:
                                            for c in range(3):
                                                col = (a * 2 + b0) * 48 + (sy * 4 + sx) * 3 + c
                                                out[row, col] = w[o, c, ky, kx]
    return jnp.asarray(out)


def _expand_conv2(w2):
    """(16,6,5,5) -> (64,216) row-expanded conv2 weight.

    Row  = (qy*2+qx)*16 + o                     (pool offset, channel)
    Col  = (a2*3+b2)*24 + (ry*2+rx)*6 + c1      (shift group, conv1 row)
    """
    w = np.asarray(w2, np.float32)
    out = np.zeros((64, 216), np.float32)
    for qy in range(2):
        for qx in range(2):
            for o in range(16):
                row = (qy * 2 + qx) * 16 + o
                for a2 in range(3):
                    for b2 in range(3):
                        for ry in range(2):
                            for rx in range(2):
                                ty2, tx2 = 2 * a2 + ry, 2 * b2 + rx
                                ky, kx = ty2 - qy, tx2 - qx
                                if 0 <= ky < K and 0 <= kx < K:
                                    for c1 in range(6):
                                        col = (a2 * 3 + b2) * 24 + (ry * 2 + rx) * 6 + c1
                                        out[row, col] = w[o, c1, ky, kx]
    return jnp.asarray(out)


def _expand_fc1(fc1_w):
    """(400,120) -> (2048,120): PyTorch flatten order (c,i,j) scattered onto
    the padded 8x16 lane grid (zeros at invalid positions)."""
    w = jnp.asarray(fc1_w, jnp.float32).reshape(16, 5, 5, 120)
    out = jnp.zeros((16, 8, 16, 120), jnp.float32).at[:, :5, :5, :].set(w)
    return out.reshape(16 * 128, 120)


def prepare_params(params):
    """One-time weight preparation (call eagerly, outside jit)."""
    _detect_roll_convention()
    fc3p = jnp.zeros((84, 128), jnp.float32).at[:, :10].set(
        jnp.asarray(params["fc3_w"], jnp.float32))
    bf3p = jnp.zeros((1, 128), jnp.float32).at[:, :10].set(
        jnp.asarray(params["fc3_b"], jnp.float32).reshape(1, 10))
    return {
        "w1": _expand_conv1(params["conv1_w"]),
        "b1": jnp.tile(jnp.asarray(params["conv1_b"], jnp.float32), 4).reshape(24, 1),
        "w2": _expand_conv2(params["conv2_w"]),
        "b2": jnp.asarray(params["conv2_b"], jnp.float32).reshape(16, 1),
        "fc1": _expand_fc1(params["fc1_w"]),
        "bf1": jnp.asarray(params["fc1_b"], jnp.float32).reshape(1, 120),
        "fc2": jnp.asarray(params["fc2_w"], jnp.float32),
        "bf2": jnp.asarray(params["fc2_b"], jnp.float32).reshape(1, 84),
        "fc3": fc3p,
        "bf3": bf3p,
    }


def _prep_input(x, b_pad):
    """(B,3,32,32) -> (48, b_pad*128) phase-decomposed, row-padded, dense."""
    b = x.shape[0]
    x = jnp.pad(x, ((0, b_pad - b), (0, 0), (0, 0), (0, 0)))
    x6 = x.reshape(b_pad, 3, 8, 4, 8, 4)             # b, c, U, sy, V, sx
    x6 = jnp.transpose(x6, (3, 5, 1, 0, 2, 4))       # sy, sx, c, b, U, V
    x6 = jnp.pad(x6, ((0, 0),) * 5 + ((0, 8),))      # pad V: 8 -> 16 lanes/row
    return x6.reshape(48, b_pad * 128)


def net_forward(prepped, x):
    b = x.shape[0]
    b_pad = ((b + BT - 1) // BT) * BT
    xp = _prep_input(x.astype(jnp.float32), b_pad)

    def rep(block_shape):
        nd = len(block_shape)
        return pl.BlockSpec(block_shape, lambda i, nd=nd: (0,) * nd)

    out = pl.pallas_call(
        net_kernel,
        out_shape=jax.ShapeDtypeStruct((b_pad, 128), jnp.float32),
        grid=(b_pad // BT,),
        in_specs=[
            pl.BlockSpec((48, BT * LANES), lambda i: (0, i)),
            rep((96, 192)), rep((24, 1)),
            rep((64, 216)), rep((16, 1)),
            rep((16 * 128, 120)), rep((1, 120)),
            rep((120, 84)), rep((1, 84)),
            rep((84, 128)), rep((1, 128)),
        ],
        out_specs=pl.BlockSpec((BT, 128), lambda i: (i, 0)),
        compiler_params=pltpu.CompilerParams(
            dimension_semantics=("parallel",),
            vmem_limit_bytes=48 * 1024 * 1024),
    )(xp, prepped["w1"], prepped["b1"], prepped["w2"], prepped["b2"],
      prepped["fc1"], prepped["bf1"], prepped["fc2"], prepped["bf2"],
      prepped["fc3"], prepped["bf3"])
    return out[:b, :10]


# ---------------------------------------------------------------------------
# Parameters + pure-JAX reference (independent of the kernel formulation)
# ---------------------------------------------------------------------------
def init_params(key):
    def u(k, shape, fan_in):
        bound = 1.0 / (fan_in ** 0.5)
        return jax.random.uniform(k, shape, jnp.float32, -bound, bound)

    ks = jax.random.split(key, 10)
    return {
        "conv1_w": u(ks[0], (6, 3, 5, 5), 3 * 25),
        "conv1_b": u(ks[1], (6,), 3 * 25),
        "conv2_w": u(ks[2], (16, 6, 5, 5), 6 * 25),
        "conv2_b": u(ks[3], (16,), 6 * 25),
        "fc1_w": u(ks[4], (400, 120), 400),
        "fc1_b": u(ks[5], (120,), 400),
        "fc2_w": u(ks[6], (120, 84), 120),
        "fc2_b": u(ks[7], (84,), 120),
        "fc3_w": u(ks[8], (84, 10), 84),
        "fc3_b": u(ks[9], (10,), 84),
    }


def reference_forward(params, x):
    def conv(y, w, b):
        y = lax.conv_general_dilated(
            y, w, (1, 1), "VALID", dimension_numbers=("NCHW", "OIHW", "NCHW"))
        return y + b.reshape(1, -1, 1, 1)

    def pool(y):
        return lax.reduce_window(y, -jnp.inf, lax.max,
                                 (1, 1, 2, 2), (1, 1, 2, 2), "VALID")

    y = pool(jax.nn.relu(conv(x, params["conv1_w"], params["conv1_b"])))
    y = pool(jax.nn.relu(conv(y, params["conv2_w"], params["conv2_b"])))
    y = y.reshape(y.shape[0], -1)
    y = jax.nn.relu(y @ params["fc1_w"] + params["fc1_b"])
    y = jax.nn.relu(y @ params["fc2_w"] + params["fc2_b"])
    return y @ params["fc3_w"] + params["fc3_b"]


if __name__ == "__main__":
    key = jax.random.PRNGKey(0)
    kp, kx = jax.random.split(key)
    params = init_params(kp)
    prepped = prepare_params(params)          # one-time weight prep (eager)
    x = jax.random.normal(kx, (2, 3, 32, 32), jnp.float32)

    fwd = jax.jit(net_forward)
    out = jax.block_until_ready(fwd(prepped, x))
    assert out.shape == (2, 10), out.shape

    ref = reference_forward(params, x)
    if not jnp.allclose(out, ref, atol=2e-3, rtol=2e-3):
        raise AssertionError(
            f"mismatch vs reference, max abs diff = {jnp.max(jnp.abs(out - ref))}")

    print("KERNEL_OK")
</pallas_src>

<mosaic_0001>
module attributes {stable_mosaic.version = 11 : i64} {
  func.func @probe(%arg0: memref<8x128xf32, #tpu.memory_space<vmem>>, %arg1: memref<8x128xf32, #tpu.memory_space<vmem>>) attributes {dimension_semantics = [], scalar_prefetch = 0 : i64, scratch_operands = 0 : i64, tpu.core_type = #tpu.core_type<tc>} {
    %c0 = arith.constant 0 : index
    %c0_0 = arith.constant 0 : index
    %0 = vector.load %arg0[%c0, %c0_0] : memref<8x128xf32, #tpu.memory_space<vmem>>, vector<8x128xf32>
    %c1_i32 = arith.constant 1 : i32
    %1 = tpu.dynamic_rotate %0 by %c1_i32 dim 1 : vector<8x128xf32>, i32 -> vector<8x128xf32>
    %c0_1 = arith.constant 0 : index
    %c0_2 = arith.constant 0 : index
    %2 = vector.load %arg1[%c0_1, %c0_2] : memref<8x128xf32, #tpu.memory_space<vmem>>, vector<8x128xf32>
    tpu.vector_store %arg1[%c0_1, %c0_2], %1 {strides = array<i32>} : memref<8x128xf32, #tpu.memory_space<vmem>>, vector<8x128xf32>,
    return
  }
}

module attributes {stable_mosaic.version = 11 : i64} {
  func.func @net_kernel(%arg0: i32, %arg1: memref<48x4096xf32, #tpu.memory_space<vmem>>, %arg2: memref<96x192xf32, #tpu.memory_space<vmem>>, %arg3: memref<24x1xf32, #tpu.memory_space<vmem>>, %arg4: memref<64x216xf32, #tpu.memory_space<vmem>>, %arg5: memref<16x1xf32, #tpu.memory_space<vmem>>, %arg6: memref<2048x120xf32, #tpu.memory_space<vmem>>, %arg7: memref<1x120xf32, #tpu.memory_space<vmem>>, %arg8: memref<120x84xf32, #tpu.memory_space<vmem>>, %arg9: memref<1x84xf32, #tpu.memory_space<vmem>>, %arg10: memref<84x128xf32, #tpu.memory_space<vmem>>, %arg11: memref<1x128xf32, #tpu.memory_space<vmem>>, %arg12: memref<32x128xf32, #tpu.memory_space<vmem>>) attributes {dimension_semantics = [#tpu.dimension_semantics<parallel>], iteration_bounds = array<i64: 1>, scalar_prefetch = 0 : i64, scratch_operands = 0 : i64, tpu.core_type = #tpu.core_type<tc>, window_params = [{transform_indices = @transform_0, window_bounds = array<i64: 48, 4096>}, {pipeline_mode = #tpu.pipeline_mode<synchronous>, transform_indices = @transform_1, window_bounds = array<i64: 96, 192>}, {pipeline_mode = #tpu.pipeline_mode<synchronous>, transform_indices = @transform_2, window_bounds = array<i64: 24, 1>}, {pipeline_mode = #tpu.pipeline_mode<synchronous>, transform_indices = @transform_3, window_bounds = array<i64: 64, 216>}, {pipeline_mode = #tpu.pipeline_mode<synchronous>, transform_indices = @transform_4, window_bounds = array<i64: 16, 1>}, {pipeline_mode = #tpu.pipeline_mode<synchronous>, transform_indices = @transform_5, window_bounds = array<i64: 2048, 120>}, {pipeline_mode = #tpu.pipeline_mode<synchronous>, transform_indices = @transform_6, window_bounds = array<i64: 1, 120>}, {pipeline_mode = #tpu.pipeline_mode<synchronous>, transform_indices = @transform_7, window_bounds = array<i64: 120, 84>}, {pipeline_mode = #tpu.pipeline_mode<synchronous>, transform_indices = @transform_8, window_bounds = array<i64: 1, 84>}, {pipeline_mode = #tpu.pipeline_mode<synchronous>, transform_indices = @transform_9, window_bounds = array<i64: 84, 128>}, {pipeline_mode = #tpu.pipeline_mode<synchronous>, transform_indices = @transform_10, window_bounds = array<i64: 1, 128>}, {transform_indices = @transform_11, window_bounds = array<i64: 32, 128>}]} {
    %c0 = arith.constant 0 : index
    %c0_0 = arith.constant 0 : index
    %0 = vector.load %arg1[%c0, %c0_0] : memref<48x4096xf32, #tpu.memory_space<vmem>>, vector<48x4096xf32>
    %1 = vector.extract_strided_slice %0 {offsets = [0, 1], sizes = [48, 4095], strides = [1, 1]} : vector<48x4096xf32> to vector<48x4095xf32>
    %2 = vector.extract_strided_slice %0 {offsets = [0, 0], sizes = [48, 1], strides = [1, 1]} : vector<48x4096xf32> to vector<48x1xf32>
    %3 = tpu.concatenate %1, %2 in 1 : vector<48x4095xf32>, vector<48x1xf32> -> vector<48x4096xf32>
    %4 = vector.extract_strided_slice %0 {offsets = [0, 16], sizes = [48, 4080], strides = [1, 1]} : vector<48x4096xf32> to vector<48x4080xf32>
    %5 = vector.extract_strided_slice %0 {offsets = [0, 0], sizes = [48, 16], strides = [1, 1]} : vector<48x4096xf32> to vector<48x16xf32>
    %6 = tpu.concatenate %4, %5 in 1 : vector<48x4080xf32>, vector<48x16xf32> -> vector<48x4096xf32>
    %7 = vector.extract_strided_slice %0 {offsets = [0, 17], sizes = [48, 4079], strides = [1, 1]} : vector<48x4096xf32> to vector<48x4079xf32>
    %8 = vector.extract_strided_slice %0 {offsets = [0, 0], sizes = [48, 17], strides = [1, 1]} : vector<48x4096xf32> to vector<48x17xf32>
    %9 = tpu.concatenate %7, %8 in 1 : vector<48x4079xf32>, vector<48x17xf32> -> vector<48x4096xf32>
    %10 = tpu.concatenate %0, %3, %6, %9 in 0 : vector<48x4096xf32>, vector<48x4096xf32>, vector<48x4096xf32>, vector<48x4096xf32> -> vector<192x4096xf32>
    %c0_1 = arith.constant 0 : index
    %c0_2 = arith.constant 0 : index
    %11 = vector.load %arg2[%c0_1, %c0_2] : memref<96x192xf32, #tpu.memory_space<vmem>>, vector<96x192xf32>
    %cst = arith.constant dense<0.000000e+00> : vector<96x4096xf32>
    %12 = tpu.matmul %11, %10, %cst {dimension_numbers = #tpu.dot_dimension_numbers<[1], [0], [0], [1], [0, 0, 1, 1], [], []>} : vector<96x192xf32>, vector<192x4096xf32>, vector<96x4096xf32> -> vector<96x4096xf32>
    %13 = vector.extract_strided_slice %12 {offsets = [0, 0], sizes = [24, 4096], strides = [1, 1]} : vector<96x4096xf32> to vector<24x4096xf32>
    %14 = vector.extract_strided_slice %12 {offsets = [24, 0], sizes = [24, 4096], strides = [1, 1]} : vector<96x4096xf32> to vector<24x4096xf32>
    %15 = arith.maximumf %13, %14 : vector<24x4096xf32>
    %16 = vector.extract_strided_slice %12 {offsets = [48, 0], sizes = [24, 4096], strides = [1, 1]} : vector<96x4096xf32> to vector<24x4096xf32>
    %17 = vector.extract_strided_slice %12 {offsets = [72, 0], sizes = [24, 4096], strides = [1, 1]} : vector<96x4096xf32> to vector<24x4096xf32>
    %18 = arith.maximumf %16, %17 : vector<24x4096xf32>
    %19 = arith.maximumf %15, %18 : vector<24x4096xf32>
    %c0_3 = arith.constant 0 : index
    %c0_4 = arith.constant 0 : index
    %20 = vector.load %arg3[%c0_3, %c0_4] : memref<24x1xf32, #tpu.memory_space<vmem>>, vector<24x1xf32>
    %21 = vector.broadcast %20 : vector<24x1xf32> to vector<24x4096xf32>
    %22 = arith.addf %19, %21 : vector<24x4096xf32>
    %cst_5 = arith.constant 0.000000e+00 : f32
    %23 = vector.broadcast %cst_5 : f32 to vector<24x4096xf32>
    %24 = arith.maximumf %22, %23 : vector<24x4096xf32>
    %25 = vector.extract_strided_slice %24 {offsets = [0, 1], sizes = [24, 4095], strides = [1, 1]} : vector<24x4096xf32> to vector<24x4095xf32>
    %26 = vector.extract_strided_slice %24 {offsets = [0, 0], sizes = [24, 1], strides = [1, 1]} : vector<24x4096xf32> to vector<24x1xf32>
    %27 = tpu.concatenate %25, %26 in 1 : vector<24x4095xf32>, vector<24x1xf32> -> vector<24x4096xf32>
    %28 = vector.extract_strided_slice %24 {offsets = [0, 2], sizes = [24, 4094], strides = [1, 1]} : vector<24x4096xf32> to vector<24x4094xf32>
    %29 = vector.extract_strided_slice %24 {offsets = [0, 0], sizes = [24, 2], strides = [1, 1]} : vector<24x4096xf32> to vector<24x2xf32>
    %30 = tpu.concatenate %28, %29 in 1 : vector<24x4094xf32>, vector<24x2xf32> -> vector<24x4096xf32>
    %31 = vector.extract_strided_slice %24 {offsets = [0, 16], sizes = [24, 4080], strides = [1, 1]} : vector<24x4096xf32> to vector<24x4080xf32>
    %32 = vector.extract_strided_slice %24 {offsets = [0, 0], sizes = [24, 16], strides = [1, 1]} : vector<24x4096xf32> to vector<24x16xf32>
    %33 = tpu.concatenate %31, %32 in 1 : vector<24x4080xf32>, vector<24x16xf32> -> vector<24x4096xf32>
    %34 = vector.extract_strided_slice %24 {offsets = [0, 17], sizes = [24, 4079], strides = [1, 1]} : vector<24x4096xf32> to vector<24x4079xf32>
    %35 = vector.extract_strided_slice %24 {offsets = [0, 0], sizes = [24, 17], strides = [1, 1]} : vector<24x4096xf32> to vector<24x17xf32>
    %36 = tpu.concatenate %34, %35 in 1 : vector<24x4079xf32>, vector<24x17xf32> -> vector<24x4096xf32>
    %37 = vector.extract_strided_slice %24 {offsets = [0, 18], sizes = [24, 4078], strides = [1, 1]} : vector<24x4096xf32> to vector<24x4078xf32>
    %38 = vector.extract_strided_slice %24 {offsets = [0, 0], sizes = [24, 18], strides = [1, 1]} : vector<24x4096xf32> to vector<24x18xf32>
    %39 = tpu.concatenate %37, %38 in 1 : vector<24x4078xf32>, vector<24x18xf32> -> vector<24x4096xf32>
    %40 = vector.extract_strided_slice %24 {offsets = [0, 32], sizes = [24, 4064], strides = [1, 1]} : vector<24x4096xf32> to vector<24x4064xf32>
    %41 = vector.extract_strided_slice %24 {offsets = [0, 0], sizes = [24, 32], strides = [1, 1]} : vector<24x4096xf32> to vector<24x32xf32>
    %42 = tpu.concatenate %40, %41 in 1 : vector<24x4064xf32>, vector<24x32xf32> -> vector<24x4096xf32>
    %43 = vector.extract_strided_slice %24 {offsets = [0, 33], sizes = [24, 4063], strides = [1, 1]} : vector<24x4096xf32> to vector<24x4063xf32>
    %44 = vector.extract_strided_slice %24 {offsets = [0, 0], sizes = [24, 33], strides = [1, 1]} : vector<24x4096xf32> to vector<24x33xf32>
    %45 = tpu.concatenate %43, %44 in 1 : vector<24x4063xf32>, vector<24x33xf32> -> vector<24x4096xf32>
    %46 = vector.extract_strided_slice %24 {offsets = [0, 34], sizes = [24, 4062], strides = [1, 1]} : vector<24x4096xf32> to vector<24x4062xf32>
    %47 = vector.extract_strided_slice %24 {offsets = [0, 0], sizes = [24, 34], strides = [1, 1]} : vector<24x4096xf32> to vector<24x34xf32>
    %48 = tpu.concatenate %46, %47 in 1 : vector<24x4062xf32>, vector<24x34xf32> -> vector<24x4096xf32>
    %49 = tpu.concatenate %24, %27, %30, %33, %36, %39, %42, %45, %48 in 0 : vector<24x4096xf32>, vector<24x4096xf32>, vector<24x4096xf32>, vector<24x4096xf32>, vector<24x4096xf32>, vector<24x4096xf32>, vector<24x4096xf32>, vector<24x4096xf32>, vector<24x4096xf32> -> vector<216x4096xf32>
    %c0_6 = arith.constant 0 : index
    %c0_7 = arith.constant 0 : index
    %50 = vector.load %arg4[%c0_6, %c0_7] : memref<64x216xf32, #tpu.memory_space<vmem>>, vector<64x216xf32>
    %cst_8 = arith.constant dense<0.000000e+00> : vector<64x4096xf32>
    %51 = tpu.matmul %50, %49, %cst_8 {dimension_numbers = #tpu.dot_dimension_numbers<[1], [0], [0], [1], [0, 0, 1, 1], [], []>} : vector<64x216xf32>, vector<216x4096xf32>, vector<64x4096xf32> -> vector<64x4096xf32>
    %52 = vector.extract_strided_slice %51 {offsets = [0, 0], sizes = [16, 4096], strides = [1, 1]} : vector<64x4096xf32> to vector<16x4096xf32>
    %53 = vector.extract_strided_slice %51 {offsets = [16, 0], sizes = [16, 4096], strides = [1, 1]} : vector<64x4096xf32> to vector<16x4096xf32>
    %54 = arith.maximumf %52, %53 : vector<16x4096xf32>
    %55 = vector.extract_strided_slice %51 {offsets = [32, 0], sizes = [16, 4096], strides = [1, 1]} : vector<64x4096xf32> to vector<16x4096xf32>
    %56 = vector.extract_strided_slice %51 {offsets = [48, 0], sizes = [16, 4096], strides = [1, 1]} : vector<64x4096xf32> to vector<16x4096xf32>
    %57 = arith.maximumf %55, %56 : vector<16x4096xf32>
    %58 = arith.maximumf %54, %57 : vector<16x4096xf32>
    %c0_9 = arith.constant 0 : index
    %c0_10 = arith.constant 0 : index
    %59 = vector.load %arg5[%c0_9, %c0_10] : memref<16x1xf32, #tpu.memory_space<vmem>>, vector<16x1xf32>
    %60 = vector.broadcast %59 : vector<16x1xf32> to vector<16x4096xf32>
    %61 = arith.addf %58, %60 : vector<16x4096xf32>
    %cst_11 = arith.constant 0.000000e+00 : f32
    %62 = vector.broadcast %cst_11 : f32 to vector<16x4096xf32>
    %63 = arith.maximumf %61, %62 : vector<16x4096xf32>
    %64 = vector.extract_strided_slice %63 {offsets = [0, 0], sizes = [16, 128], strides = [1, 1]} : vector<16x4096xf32> to vector<16x128xf32>
    %65 = vector.extract_strided_slice %63 {offsets = [0, 128], sizes = [16, 128], strides = [1, 1]} : vector<16x4096xf32> to vector<16x128xf32>
    %66 = vector.extract_strided_slice %63 {offsets = [0, 256], sizes = [16, 128], strides = [1, 1]} : vector<16x4096xf32> to vector<16x128xf32>
    %67 = vector.extract_strided_slice %63 {offsets = [0, 384], sizes = [16, 128], strides = [1, 1]} : vector<16x4096xf32> to vector<16x128xf32>
    %68 = vector.extract_strided_slice %63 {offsets = [0, 512], sizes = [16, 128], strides = [1, 1]} : vector<16x4096xf32> to vector<16x128xf32>
    %69 = vector.extract_strided_slice %63 {offsets = [0, 640], sizes = [16, 128], strides = [1, 1]} : vector<16x4096xf32> to vector<16x128xf32>
    %70 = vector.extract_strided_slice %63 {offsets = [0, 768], sizes = [16, 128], strides = [1, 1]} : vector<16x4096xf32> to vector<16x128xf32>
    %71 = vector.extract_strided_slice %63 {offsets = [0, 896], sizes = [16, 128], strides = [1, 1]} : vector<16x4096xf32> to vector<16x128xf32>
    %72 = vector.extract_strided_slice %63 {offsets = [0, 1024], sizes = [16, 128], strides = [1, 1]} : vector<16x4096xf32> to vector<16x128xf32>
    %73 = vector.extract_strided_slice %63 {offsets = [0, 1152], sizes = [16, 128], strides = [1, 1]} : vector<16x4096xf32> to vector<16x128xf32>
    %74 = vector.extract_strided_slice %63 {offsets = [0, 1280], sizes = [16, 128], strides = [1, 1]} : vector<16x4096xf32> to vector<16x128xf32>
    %75 = vector.extract_strided_slice %63 {offsets = [0, 1408], sizes = [16, 128], strides = [1, 1]} : vector<16x4096xf32> to vector<16x128xf32>
    %76 = vector.extract_strided_slice %63 {offsets = [0, 1536], sizes = [16, 128], strides = [1, 1]} : vector<16x4096xf32> to vector<16x128xf32>
    %77 = vector.extract_strided_slice %63 {offsets = [0, 1664], sizes = [16, 128], strides = [1, 1]} : vector<16x4096xf32> to vector<16x128xf32>
    %78 = vector.extract_strided_slice %63 {offsets = [0, 1792], sizes = [16, 128], strides = [1, 1]} : vector<16x4096xf32> to vector<16x128xf32>
    %79 = vector.extract_strided_slice %63 {offsets = [0, 1920], sizes = [16, 128], strides = [1, 1]} : vector<16x4096xf32> to vector<16x128xf32>
    %80 = vector.extract_strided_slice %63 {offsets = [0, 2048], sizes = [16, 128], strides = [1, 1]} : vector<16x4096xf32> to vector<16x128xf32>
    %81 = vector.extract_strided_slice %63 {offsets = [0, 2176], sizes = [16, 128], strides = [1, 1]} : vector<16x4096xf32> to vector<16x128xf32>
    %82 = vector.extract_strided_slice %63 {offsets = [0, 2304], sizes = [16, 128], strides = [1, 1]} : vector<16x4096xf32> to vector<16x128xf32>
    %83 = vector.extract_strided_slice %63 {offsets = [0, 2432], sizes = [16, 128], strides = [1, 1]} : vector<16x4096xf32> to vector<16x128xf32>
    %84 = vector.extract_strided_slice %63 {offsets = [0, 2560], sizes = [16, 128], strides = [1, 1]} : vector<16x4096xf32> to vector<16x128xf32>
    %85 = vector.extract_strided_slice %63 {offsets = [0, 2688], sizes = [16, 128], strides = [1, 1]} : vector<16x4096xf32> to vector<16x128xf32>
    %86 = vector.extract_strided_slice %63 {offsets = [0, 2816], sizes = [16, 128], strides = [1, 1]} : vector<16x4096xf32> to vector<16x128xf32>
    %87 = vector.extract_strided_slice %63 {offsets = [0, 2944], sizes = [16, 128], strides = [1, 1]} : vector<16x4096xf32> to vector<16x128xf32>
    %88 = vector.extract_strided_slice %63 {offsets = [0, 3072], sizes = [16, 128], strides = [1, 1]} : vector<16x4096xf32> to vector<16x128xf32>
    %89 = vector.extract_strided_slice %63 {offsets = [0, 3200], sizes = [16, 128], strides = [1, 1]} : vector<16x4096xf32> to vector<16x128xf32>
    %90 = vector.extract_strided_slice %63 {offsets = [0, 3328], sizes = [16, 128], strides = [1, 1]} : vector<16x4096xf32> to vector<16x128xf32>
    %91 = vector.extract_strided_slice %63 {offsets = [0, 3456], sizes = [16, 128], strides = [1, 1]} : vector<16x4096xf32> to vector<16x128xf32>
    %92 = vector.extract_strided_slice %63 {offsets = [0, 3584], sizes = [16, 128], strides = [1, 1]} : vector<16x4096xf32> to vector<16x128xf32>
    %93 = vector.extract_strided_slice %63 {offsets = [0, 3712], sizes = [16, 128], strides = [1, 1]} : vector<16x4096xf32> to vector<16x128xf32>
    %94 = vector.extract_strided_slice %63 {offsets = [0, 3840], sizes = [16, 128], strides = [1, 1]} : vector<16x4096xf32> to vector<16x128xf32>
    %95 = vector.extract_strided_slice %63 {offsets = [0, 3968], sizes = [16, 128], strides = [1, 1]} : vector<16x4096xf32> to vector<16x128xf32>
    %96 = vector.shape_cast %64 : vector<16x128xf32> to vector<1x16x128xf32>
    %97 = vector.shape_cast %65 : vector<16x128xf32> to vector<1x16x128xf32>
    %98 = vector.shape_cast %66 : vector<16x128xf32> to vector<1x16x128xf32>
    %99 = vector.shape_cast %67 : vector<16x128xf32> to vector<1x16x128xf32>
    %100 = vector.shape_cast %68 : vector<16x128xf32> to vector<1x16x128xf32>
    %101 = vector.shape_cast %69 : vector<16x128xf32> to vector<1x16x128xf32>
    %102 = vector.shape_cast %70 : vector<16x128xf32> to vector<1x16x128xf32>
    %103 = vector.shape_cast %71 : vector<16x128xf32> to vector<1x16x128xf32>
    %104 = vector.shape_cast %72 : vector<16x128xf32> to vector<1x16x128xf32>
    %105 = vector.shape_cast %73 : vector<16x128xf32> to vector<1x16x128xf32>
    %106 = vector.shape_cast %74 : vector<16x128xf32> to vector<1x16x128xf32>
    %107 = vector.shape_cast %75 : vector<16x128xf32> to vector<1x16x128xf32>
    %108 = vector.shape_cast %76 : vector<16x128xf32> to vector<1x16x128xf32>
    %109 = vector.shape_cast %77 : vector<16x128xf32> to vector<1x16x128xf32>
    %110 = vector.shape_cast %78 : vector<16x128xf32> to vector<1x16x128xf32>
    %111 = vector.shape_cast %79 : vector<16x128xf32> to vector<1x16x128xf32>
    %112 = vector.shape_cast %80 : vector<16x128xf32> to vector<1x16x128xf32>
    %113 = vector.shape_cast %81 : vector<16x128xf32> to vector<1x16x128xf32>
    %114 = vector.shape_cast %82 : vector<16x128xf32> to vector<1x16x128xf32>
    %115 = vector.shape_cast %83 : vector<16x128xf32> to vector<1x16x128xf32>
    %116 = vector.shape_cast %84 : vector<16x128xf32> to vector<1x16x128xf32>
    %117 = vector.shape_cast %85 : vector<16x128xf32> to vector<1x16x128xf32>
    %118 = vector.shape_cast %86 : vector<16x128xf32> to vector<1x16x128xf32>
    %119 = vector.shape_cast %87 : vector<16x128xf32> to vector<1x16x128xf32>
    %120 = vector.shape_cast %88 : vector<16x128xf32> to vector<1x16x128xf32>
    %121 = vector.shape_cast %89 : vector<16x128xf32> to vector<1x16x128xf32>
    %122 = vector.shape_cast %90 : vector<16x128xf32> to vector<1x16x128xf32>
    %123 = vector.shape_cast %91 : vector<16x128xf32> to vector<1x16x128xf32>
    %124 = vector.shape_cast %92 : vector<16x128xf32> to vector<1x16x128xf32>
    %125 = vector.shape_cast %93 : vector<16x128xf32> to vector<1x16x128xf32>
    %126 = vector.shape_cast %94 : vector<16x128xf32> to vector<1x16x128xf32>
    %127 = vector.shape_cast %95 : vector<16x128xf32> to vector<1x16x128xf32>
    %128 = tpu.concatenate %96, %97, %98, %99, %100, %101, %102, %103, %104, %105, %106, %107, %108, %109, %110, %111 in 0 : vector<1x16x128xf32>, vector<1x16x128xf32>, vector<1x16x128xf32>, vector<1x16x128xf32>, vector<1x16x128xf32>, vector<1x16x128xf32>, vector<1x16x128xf32>, vector<1x16x128xf32>, vector<1x16x128xf32>, vector<1x16x128xf32>, vector<1x16x128xf32>, vector<1x16x128xf32>, vector<1x16x128xf32>, vector<1x16x128xf32>, vector<1x16x128xf32>, vector<1x16x128xf32> -> vector<16x16x128xf32>
    %129 = tpu.concatenate %112, %113, %114, %115, %116, %117, %118, %119, %120, %121, %122, %123, %124, %125, %126, %127 in 0 : vector<1x16x128xf32>, vector<1x16x128xf32>, vector<1x16x128xf32>, vector<1x16x128xf32>, vector<1x16x128xf32>, vector<1x16x128xf32>, vector<1x16x128xf32>, vector<1x16x128xf32>, vector<1x16x128xf32>, vector<1x16x128xf32>, vector<1x16x128xf32>, vector<1x16x128xf32>, vector<1x16x128xf32>, vector<1x16x128xf32>, vector<1x16x128xf32>, vector<1x16x128xf32> -> vector<16x16x128xf32>
    %130 = tpu.concatenate %128, %129 in 0 : vector<16x16x128xf32>, vector<16x16x128xf32> -> vector<32x16x128xf32>
    %131 = vector.shape_cast %130 : vector<32x16x128xf32> to vector<32x2048xf32>
    %c0_12 = arith.constant 0 : index
    %c0_13 = arith.constant 0 : index
    %132 = vector.load %arg6[%c0_12, %c0_13] : memref<2048x120xf32, #tpu.memory_space<vmem>>, vector<2048x120xf32>
    %cst_14 = arith.constant dense<0.000000e+00> : vector<32x120xf32>
    %133 = tpu.matmul %131, %132, %cst_14 {dimension_numbers = #tpu.dot_dimension_numbers<[1], [0], [0], [1], [0, 0, 1, 1], [], []>} : vector<32x2048xf32>, vector<2048x120xf32>, vector<32x120xf32> -> vector<32x120xf32>
    %c0_15 = arith.constant 0 : index
    %c0_16 = arith.constant 0 : index
    %134 = vector.load %arg7[%c0_15, %c0_16] : memref<1x120xf32, #tpu.memory_space<vmem>>, vector<1x120xf32>
    %135 = vector.broadcast %134 : vector<1x120xf32> to vector<32x120xf32>
    %136 = arith.addf %133, %135 : vector<32x120xf32>
    %cst_17 = arith.constant 0.000000e+00 : f32
    %137 = vector.broadcast %cst_17 : f32 to vector<32x120xf32>
    %138 = arith.maximumf %136, %137 : vector<32x120xf32>
    %c0_18 = arith.constant 0 : index
    %c0_19 = arith.constant 0 : index
    %139 = vector.load %arg8[%c0_18, %c0_19] : memref<120x84xf32, #tpu.memory_space<vmem>>, vector<120x84xf32>
    %cst_20 = arith.constant dense<0.000000e+00> : vector<32x84xf32>
    %140 = tpu.matmul %138, %139, %cst_20 {dimension_numbers = #tpu.dot_dimension_numbers<[1], [0], [0], [1], [0, 0, 1, 1], [], []>} : vector<32x120xf32>, vector<120x84xf32>, vector<32x84xf32> -> vector<32x84xf32>
    %c0_21 = arith.constant 0 : index
    %c0_22 = arith.constant 0 : index
    %141 = vector.load %arg9[%c0_21, %c0_22] : memref<1x84xf32, #tpu.memory_space<vmem>>, vector<1x84xf32>
    %142 = vector.broadcast %141 : vector<1x84xf32> to vector<32x84xf32>
    %143 = arith.addf %140, %142 : vector<32x84xf32>
    %cst_23 = arith.constant 0.000000e+00 : f32
    %144 = vector.broadcast %cst_23 : f32 to vector<32x84xf32>
    %145 = arith.maximumf %143, %144 : vector<32x84xf32>
    %c0_24 = arith.constant 0 : index
    %c0_25 = arith.constant 0 : index
    %146 = vector.load %arg10[%c0_24, %c0_25] : memref<84x128xf32, #tpu.memory_space<vmem>>, vector<84x128xf32>
    %cst_26 = arith.constant dense<0.000000e+00> : vector<32x128xf32>
    %147 = tpu.matmul %145, %146, %cst_26 {dimension_numbers = #tpu.dot_dimension_numbers<[1], [0], [0], [1], [0, 0, 1, 1], [], []>} : vector<32x84xf32>, vector<84x128xf32>, vector<32x128xf32> -> vector<32x128xf32>
    %c0_27 = arith.constant 0 : index
    %c0_28 = arith.constant 0 : index
    %148 = vector.load %arg11[%c0_27, %c0_28] : memref<1x128xf32, #tpu.memory_space<vmem>>, vector<1x128xf32>
    %149 = vector.broadcast %148 : vector<1x128xf32> to vector<32x128xf32>
    %150 = arith.addf %147, %149 : vector<32x128xf32>
    %c0_29 = arith.constant 0 : index
    %c0_30 = arith.constant 0 : index
    %151 = vector.load %arg12[%c0_29, %c0_30] : memref<32x128xf32, #tpu.memory_space<vmem>>, vector<32x128xf32>
    tpu.vector_store %arg12[%c0_29, %c0_30], %150 {strides = array<i32>} : memref<32x128xf32, #tpu.memory_space<vmem>>, vector<32x128xf32>,
    return
  }
  func.func @transform_0(%arg0: i32) -> (i32, i32) {
    %c0_i32 = arith.constant 0 : i32
    %c0_i32_0 = arith.constant 0 : i32
    return %c0_i32, %arg0 : i32, i32
  }
  func.func @transform_1(%arg0: i32) -> (i32, i32) {
    %c0_i32 = arith.constant 0 : i32
    %c0_i32_0 = arith.constant 0 : i32
    %c0_i32_1 = arith.constant 0 : i32
    return %c0_i32, %c0_i32_0 : i32, i32
  }
  func.func @transform_2(%arg0: i32) -> (i32, i32) {
    %c0_i32 = arith.constant 0 : i32
    %c0_i32_0 = arith.constant 0 : i32
    %c0_i32_1 = arith.constant 0 : i32
    return %c0_i32, %c0_i32_0 : i32, i32
  }
  func.func @transform_3(%arg0: i32) -> (i32, i32) {
    %c0_i32 = arith.constant 0 : i32
    %c0_i32_0 = arith.constant 0 : i32
    %c0_i32_1 = arith.constant 0 : i32
    return %c0_i32, %c0_i32_0 : i32, i32
  }
  func.func @transform_4(%arg0: i32) -> (i32, i32) {
    %c0_i32 = arith.constant 0 : i32
    %c0_i32_0 = arith.constant 0 : i32
    %c0_i32_1 = arith.constant 0 : i32
    return %c0_i32, %c0_i32_0 : i32, i32
  }
  func.func @transform_5(%arg0: i32) -> (i32, i32) {
    %c0_i32 = arith.constant 0 : i32
    %c0_i32_0 = arith.constant 0 : i32
    %c0_i32_1 = arith.constant 0 : i32
    return %c0_i32, %c0_i32_0 : i32, i32
  }
  func.func @transform_6(%arg0: i32) -> (i32, i32) {
    %c0_i32 = arith.constant 0 : i32
    %c0_i32_0 = arith.constant 0 : i32
    %c0_i32_1 = arith.constant 0 : i32
    return %c0_i32, %c0_i32_0 : i32, i32
  }
  func.func @transform_7(%arg0: i32) -> (i32, i32) {
    %c0_i32 = arith.constant 0 : i32
    %c0_i32_0 = arith.constant 0 : i32
    %c0_i32_1 = arith.constant 0 : i32
    return %c0_i32, %c0_i32_0 : i32, i32
  }
  func.func @transform_8(%arg0: i32) -> (i32, i32) {
    %c0_i32 = arith.constant 0 : i32
    %c0_i32_0 = arith.constant 0 : i32
    %c0_i32_1 = arith.constant 0 : i32
    return %c0_i32, %c0_i32_0 : i32, i32
  }
  func.func @transform_9(%arg0: i32) -> (i32, i32) {
    %c0_i32 = arith.constant 0 : i32
    %c0_i32_0 = arith.constant 0 : i32
    %c0_i32_1 = arith.constant 0 : i32
    return %c0_i32, %c0_i32_0 : i32, i32
  }
  func.func @transform_10(%arg0: i32) -> (i32, i32) {
    %c0_i32 = arith.constant 0 : i32
    %c0_i32_0 = arith.constant 0 : i32
    %c0_i32_1 = arith.constant 0 : i32
    return %c0_i32, %c0_i32_0 : i32, i32
  }
  func.func @transform_11(%arg0: i32) -> (i32, i32) {
    %c0_i32 = arith.constant 0 : i32
    %c0_i32_0 = arith.constant 0 : i32
    return %arg0, %c0_i32 : i32, i32
  }
}

</mosaic_0001>

<llo_original>
// kernel: tpu_custom_call.1
$region0: #{tpu_custom_call.1}
  #allocation0 [shape = 'u32[]', space=smem, size = 0x4, offset = 0x4, fixed_abs, tag = 'smem constant byte address 0x4 - core index']
  #allocation1 [shape = 'u32[144,128]{1,0:T(1,128)}', space=vmem, size = 0x12000, scoped, tag = 'internal scratch']
  %s0 = inlined_call_operand.hbm [shape: f32[8,128], index: 0, kind: input, shape index: {}]
  %s1 = inlined_call_operand.hbm [shape: f32[8,128], index: 1, kind: output, shape index: {}]
  %s2 = sld [smem:[#allocation0]]
  $region18: #{tpu_custom_call.1} parent=0
    _
  %s4 = ssub.s32 1, %s2
  %s5 = scalar_select 0, %s4, %s2
  $region1: #{tpu_custom_call.1} parent=0
    #allocation2 [shape = 'u8[4096]{0}', space=vmem, size = 0x1000, scoped, tag = 'input window, operand 0, single buffered']
    #allocation3 [shape = 's32[1]{0}', space=sflag, size = 0x4, scoped, tag = 'scoped memory for tpu_custom_call.1']
    #allocation4 [shape = 's32[1]{0}', space=sflag, size = 0x4, scoped, tag = 'scoped memory for tpu_custom_call.1']
    #allocation5 [shape = 'u8[4096]{0}', space=vmem, size = 0x1000, scoped, tag = 'output window, operand 0, single buffered']
    %6 = vsyncpa [#allocation3], 0
    %7 = vsyncpa [#allocation4], 0
    // Predicated region
    $region2: #{tpu_custom_call.1} parent=1 // pred_check
      _
    $region3: #{tpu_custom_call.1} parent=1 // pred_check_branch
      %9 = sbr.rel (0) target = $region5
    $region4: #{tpu_custom_call.1} parent=1 // pred_region
      %s11 = ssub.s32 128, 128
      %12 = vsyncadd [#allocation3], %s11
      %s14 = sshll.u32 [#allocation2], 4
      %s15 = int_to_ptr.vmem [resolvable:$true] %s14
      %17 = dma.hbm_to_vmem [thread:$0]  %s0, 128, %s15, [#allocation3]
    $region5: #{tpu_custom_call.1} parent=1 // pred_fallthru
      _
    // Predicated region
    $region6: #{tpu_custom_call.1} parent=1 // pred_check
      _
    $region7: #{tpu_custom_call.1} parent=1 // pred_check_branch
      %19 = sbr.rel (0) target = $region9
    $region8: #{tpu_custom_call.1} parent=1 // pred_region
      %20 = dma.done [#allocation3], 128
    $region9: #{tpu_custom_call.1} parent=1 // pred_fallthru
      _
    %v21 = vld [vmem:[#allocation2] sm:$0xff]
    %22 = vrot.lane.b32.xlu0 %v21, 1
    %v23 = vpop.permute.xlu0 %22
    %24 = vst [vmem:[#allocation5] sm:$0xff] %v23
    // Predicated region
    $region10: #{tpu_custom_call.1} parent=1 // pred_check
      _
    $region11: #{tpu_custom_call.1} parent=1 // pred_check_branch
      %26 = sbr.rel (0) target = $region13
    $region12: #{tpu_custom_call.1} parent=1 // pred_region
      %s28 = ssub.s32 128, 128
      %29 = vsyncadd [#allocation4], %s28
      %s31 = sshll.u32 [#allocation5], 4
      %s32 = int_to_ptr.vmem [resolvable:$true] %s31
      %34 = dma.vmem_to_hbm [thread:$0]  %s32, 128, %s1, [#allocation4]
    $region13: #{tpu_custom_call.1} parent=1 // pred_fallthru
      _
    // Predicated region
    $region14: #{tpu_custom_call.1} parent=1 // pred_check
      _
    $region15: #{tpu_custom_call.1} parent=1 // pred_check_branch
      %36 = sbr.rel (0) target = $region17
    $region16: #{tpu_custom_call.1} parent=1 // pred_region
      %37 = dma.done [#allocation4], 128
    $region17: #{tpu_custom_call.1} parent=1 // pred_fallthru
      _
    %38 = vsyncpa [#allocation3], 1
    %39 = vsyncpa [#allocation4], 1

// kernel: net_forward.1
$region0: #{net_forward.1}
  #allocation0 [shape = 'u32[]', space=smem, size = 0x4, offset = 0x4, fixed_abs, tag = 'smem constant byte address 0x4 - core index']
  #allocation1 [shape = 'u32[144,128]{1,0:T(1,128)}', space=vmem, size = 0x12000, scoped, tag = 'internal scratch']
  %s0 = inlined_call_operand.vmem [shape: f32[48,4096], index: 0, kind: input, shape index: {}]
  %s1 = inlined_call_operand.vmem [shape: f32[96,192], index: 1, kind: input, shape index: {}]
  %s2 = inlined_call_operand.vmem [shape: f32[24,1], index: 2, kind: input, shape index: {}]
  %s3 = inlined_call_operand.vmem [shape: f32[64,216], index: 3, kind: input, shape index: {}]
  %s4 = inlined_call_operand.vmem [shape: f32[16,1], index: 4, kind: input, shape index: {}]
  %s5 = inlined_call_operand.vmem [shape: f32[2048,120], index: 5, kind: input, shape index: {}]
  %s6 = inlined_call_operand.vmem [shape: f32[1,120], index: 6, kind: input, shape index: {}]
  %s7 = inlined_call_operand.vmem [shape: f32[120,84], index: 7, kind: input, shape index: {}]
  %s8 = inlined_call_operand.vmem [shape: f32[1,84], index: 8, kind: input, shape index: {}]
  %s9 = inlined_call_operand.vmem [shape: f32[84,128], index: 9, kind: input, shape index: {}]
  %s10 = inlined_call_operand.vmem [shape: f32[1,128], index: 10, kind: input, shape index: {}]
  %s11 = inlined_call_operand.vmem [shape: f32[32,128], index: 11, kind: output, shape index: {}]
  %s12 = sld [smem:[#allocation0]]
  $region54: #{net_forward.1} parent=0
    _
  %s14 = ssub.s32 1, %s12
  %s15 = scalar_select 0, %s14, %s12
  // Predicated region
  $region2: #{net_forward.1} parent=0 // pred_check
    _
  $region3: #{net_forward.1} parent=0 // pred_check_branch
    %17 = sbr.rel (0) target = $region5
  $region4: #{net_forward.1} parent=0 // pred_region
    _
  $region5: #{net_forward.1} parent=0 // pred_fallthru
    _
  // Predicated region
  $region6: #{net_forward.1} parent=0 // pred_check
    _
  $region7: #{net_forward.1} parent=0 // pred_check_branch
    %19 = sbr.rel (0) target = $region9
  $region8: #{net_forward.1} parent=0 // pred_region
    _
  $region9: #{net_forward.1} parent=0 // pred_fallthru
    _
  // Predicated region
  $region10: #{net_forward.1} parent=0 // pred_check
    _
  $region11: #{net_forward.1} parent=0 // pred_check_branch
    %21 = sbr.rel (0) target = $region13
  $region12: #{net_forward.1} parent=0 // pred_region
    _
  $region13: #{net_forward.1} parent=0 // pred_fallthru
    _
  // Predicated region
  $region14: #{net_forward.1} parent=0 // pred_check
    _
  $region15: #{net_forward.1} parent=0 // pred_check_branch
    %23 = sbr.rel (0) target = $region17
  $region16: #{net_forward.1} parent=0 // pred_region
    _
  $region17: #{net_forward.1} parent=0 // pred_fallthru
    _
  // Predicated region
  $region18: #{net_forward.1} parent=0 // pred_check
    _
  $region19: #{net_forward.1} parent=0 // pred_check_branch
    %25 = sbr.rel (0) target = $region21
  $region20: #{net_forward.1} parent=0 // pred_region
    _
  $region21: #{net_forward.1} parent=0 // pred_fallthru
    _
  // Predicated region
  $region22: #{net_forward.1} parent=0 // pred_check
    _
  $region23: #{net_forward.1} parent=0 // pred_check_branch
    %27 = sbr.rel (0) target = $region25
  $region24: #{net_forward.1} parent=0 // pred_region
    _
  $region25: #{net_forward.1} parent=0 // pred_fallthru
    _
  // Predicated region
  $region26: #{net_forward.1} parent=0 // pred_check
    _
  $region27: #{net_forward.1} parent=0 // pred_check_branch
    %29 = sbr.rel (0) target = $region29
  $region28: #{net_forward.1} parent=0 // pred_region
    _
  $region29: #{net_forward.1} parent=0 // pred_fallthru
    _
  // Predicated region
  $region30: #{net_forward.1} parent=0 // pred_check
    _
  $region31: #{net_forward.1} parent=0 // pred_check_branch
    %31 = sbr.rel (0) target = $region33
  $region32: #{net_forward.1} parent=0 // pred_region
    _
  $region33: #{net_forward.1} parent=0 // pred_fallthru
    _
  // Predicated region
  $region34: #{net_forward.1} parent=0 // pred_check
    _
  $region35: #{net_forward.1} parent=0 // pred_check_branch
    %33 = sbr.rel (0) target = $region37
  $region36: #{net_forward.1} parent=0 // pred_region
    _
  $region37: #{net_forward.1} parent=0 // pred_fallthru
    _
  // Predicated region
  $region38: #{net_forward.1} parent=0 // pred_check
    _
  $region39: #{net_forward.1} parent=0 // pred_check_branch
    %35 = sbr.rel (0) target = $region41
  $region40: #{net_forward.1} parent=0 // pred_region
    _
  $region41: #{net_forward.1} parent=0 // pred_fallthru
    _
  // Predicated region
  $region42: #{net_forward.1} parent=0 // pred_check
    _
  $region43: #{net_forward.1} parent=0 // pred_check_branch
    %37 = sbr.rel (0) target = $region45
  $region44: #{net_forward.1} parent=0 // pred_region
    _
  $region45: #{net_forward.1} parent=0 // pred_fallthru
    _
  %v38 = vld [vmem:[%s0] sm:$0xff]
  %v39 = vld [vmem:[%s0 + $0x8] sm:$0xff]
  %v40 = vld [vmem:[%s0 + $0x10] sm:$0xff]
  %v41 = vld [vmem:[%s0 + $0x18] sm:$0xff]
  %v42 = vld [vmem:[%s0 + $0x20] sm:$0xff]
  %v43 = vld [vmem:[%s0 + $0x28] sm:$0xff]
  %v44 = vld [vmem:[%s0 + $0x30] sm:$0xff]
  %v45 = vld [vmem:[%s0 + $0x38] sm:$0xff]
  %v46 = vld [vmem:[%s0 + $0x40] sm:$0xff]
  %v47 = vld [vmem:[%s0 + $0x48] sm:$0xff]
  %v48 = vld [vmem:[%s0 + $0x50] sm:$0xff]
  %v49 = vld [vmem:[%s0 + $0x58] sm:$0xff]
  %v50 = vld [vmem:[%s0 + $0x60] sm:$0xff]
  %v51 = vld [vmem:[%s0 + $0x68] sm:$0xff]
  %v52 = vld [vmem:[%s0 + $0x70] sm:$0xff]
  %v53 = vld [vmem:[%s0 + $0x78] sm:$0xff]
  %v54 = vld [vmem:[%s0 + $0x80] sm:$0xff]
  %v55 = vld [vmem:[%s0 + $0x88] sm:$0xff]
  %v56 = vld [vmem:[%s0 + $0x90] sm:$0xff]
  %v57 = vld [vmem:[%s0 + $0x98] sm:$0xff]
  %v58 = vld [vmem:[%s0 + $0xa0] sm:$0xff]
  %v59 = vld [vmem:[%s0 + $0xa8] sm:$0xff]
  %v60 = vld [vmem:[%s0 + $0xb0] sm:$0xff]
  %v61 = vld [vmem:[%s0 + $0xb8] sm:$0xff]
  %v62 = vld [vmem:[%s0 + $0xc0] sm:$0xff]
  %v63 = vld [vmem:[%s0 + $0xc8] sm:$0xff]
  %v64 = vld [vmem:[%s0 + $0xd0] sm:$0xff]
  %v65 = vld [vmem:[%s0 + $0xd8] sm:$0xff]
  %v66 = vld [vmem:[%s0 + $0xe0] sm:$0xff]
  %v67 = vld [vmem:[%s0 + $0xe8] sm:$0xff]
  %v68 = vld [vmem:[%s0 + $0xf0] sm:$0xff]
  %v69 = vld [vmem:[%s0 + $0xf8] sm:$0xff]
  %v70 = vld [vmem:[%s0 + $0x100] sm:$0xff]
  %v71 = vld [vmem:[%s0 + $0x108] sm:$0xff]
  %v72 = vld [vmem:[%s0 + $0x110] sm:$0xff]
  %v73 = vld [vmem:[%s0 + $0x118] sm:$0xff]
  %v74 = vld [vmem:[%s0 + $0x120] sm:$0xff]
  %v75 = vld [vmem:[%s0 + $0x128] sm:$0xff]
  %v76 = vld [vmem:[%s0 + $0x130] sm:$0xff]
  %v77 = vld [vmem:[%s0 + $0x138] sm:$0xff]
  %v78 = vld [vmem:[%s0 + $0x140] sm:$0xff]
  %v79 = vld [vmem:[%s0 + $0x148] sm:$0xff]
  %v80 = vld [vmem:[%s0 + $0x150] sm:$0xff]
  %v81 = vld [vmem:[%s0 + $0x158] sm:$0xff]
  %v82 = vld [vmem:[%s0 + $0x160] sm:$0xff]
  %v83 = vld [vmem:[%s0 + $0x168] sm:$0xff]
  %v84 = vld [vmem:[%s0 + $0x170] sm:$0xff]
  %v85 = vld [vmem:[%s0 + $0x178] sm:$0xff]
  %v86 = vld [vmem:[%s0 + $0x180] sm:$0xff]
  %v87 = vld [vmem:[%s0 + $0x188] sm:$0xff]
  %v88 = vld [vmem:[%s0 + $0x190] sm:$0xff]
  %v89 = vld [vmem:[%s0 + $0x198] sm:$0xff]
  %v90 = vld [vmem:[%s0 + $0x1a0] sm:$0xff]
  %v91 = vld [vmem:[%s0 + $0x1a8] sm:$0xff]
  %v92 = vld [vmem:[%s0 + $0x1b0] sm:$0xff]
  %v93 = vld [vmem:[%s0 + $0x1b8] sm:$0xff]
  %v94 = vld [vmem:[%s0 + $0x1c0] sm:$0xff]
  %v95 = vld [vmem:[%s0 + $0x1c8] sm:$0xff]
  %v96 = vld [vmem:[%s0 + $0x1d0] sm:$0xff]
  %v97 = vld [vmem:[%s0 + $0x1d8] sm:$0xff]
  %v98 = vld [vmem:[%s0 + $0x1e0] sm:$0xff]
  %v99 = vld [vmem:[%s0 + $0x1e8] sm:$0xff]
  %v100 = vld [vmem:[%s0 + $0x1f0] sm:$0xff]
  %v101 = vld [vmem:[%s0 + $0x1f8] sm:$0xff]
  %v102 = vld [vmem:[%s0 + $0x200] sm:$0xff]
  %v103 = vld [vmem:[%s0 + $0x208] sm:$0xff]
  %v104 = vld [vmem:[%s0 + $0x210] sm:$0xff]
  %v105 = vld [vmem:[%s0 + $0x218] sm:$0xff]
  %v106 = vld [vmem:[%s0 + $0x220] sm:$0xff]
  %v107 = vld [vmem:[%s0 + $0x228] sm:$0xff]
  %v108 = vld [vmem:[%s0 + $0x230] sm:$0xff]
  %v109 = vld [vmem:[%s0 + $0x238] sm:$0xff]
  %v110 = vld [vmem:[%s0 + $0x240] sm:$0xff]
  %v111 = vld [vmem:[%s0 + $0x248] sm:$0xff]
  %v112 = vld [vmem:[%s0 + $0x250] sm:$0xff]
  %v113 = vld [vmem:[%s0 + $0x258] sm:$0xff]
  %v114 = vld [vmem:[%s0 + $0x260] sm:$0xff]
  %v115 = vld [vmem:[%s0 + $0x268] sm:$0xff]
  %v116 = vld [vmem:[%s0 + $0x270] sm:$0xff]
  %v117 = vld [vmem:[%s0 + $0x278] sm:$0xff]
  %v118 = vld [vmem:[%s0 + $0x280] sm:$0xff]
  %v119 = vld [vmem:[%s0 + $0x288] sm:$0xff]
  %v120 = vld [vmem:[%s0 + $0x290] sm:$0xff]
  %v121 = vld [vmem:[%s0 + $0x298] sm:$0xff]
  %v122 = vld [vmem:[%s0 + $0x2a0] sm:$0xff]
  %v123 = vld [vmem:[%s0 + $0x2a8] sm:$0xff]
  %v124 = vld [vmem:[%s0 + $0x2b0] sm:$0xff]
  %v125 = vld [vmem:[%s0 + $0x2b8] sm:$0xff]
  %v126 = vld [vmem:[%s0 + $0x2c0] sm:$0xff]
  %v127 = vld [vmem:[%s0 + $0x2c8] sm:$0xff]
  %v128 = vld [vmem:[%s0 + $0x2d0] sm:$0xff]
  %v129 = vld [vmem:[%s0 + $0x2d8] sm:$0xff]
  %v130 = vld [vmem:[%s0 + $0x2e0] sm:$0xff]
  %v131 = vld [vmem:[%s0 + $0x2e8] sm:$0xff]
  %v132 = vld [vmem:[%s0 + $0x2f0] sm:$0xff]
  %v133 = vld [vmem:[%s0 + $0x2f8] sm:$0xff]
  %v134 = vld [vmem:[%s0 + $0x300] sm:$0xff]
  %v135 = vld [vmem:[%s0 + $0x308] sm:$0xff]
  %v136 = vld [vmem:[%s0 + $0x310] sm:$0xff]
  %v137 = vld [vmem:[%s0 + $0x318] sm:$0xff]
  %v138 = vld [vmem:[%s0 + $0x320] sm:$0xff]
  %v139 = vld [vmem:[%s0 + $0x328] sm:$0xff]
  %v140 = vld [vmem:[%s0 + $0x330] sm:$0xff]
  %v141 = vld [vmem:[%s0 + $0x338] sm:$0xff]
  %v142 = vld [vmem:[%s0 + $0x340] sm:$0xff]
  %v143 = vld [vmem:[%s0 + $0x348] sm:$0xff]
  %v144 = vld [vmem:[%s0 + $0x350] sm:$0xff]
  %v145 = vld [vmem:[%s0 + $0x358] sm:$0xff]
  %v146 = vld [vmem:[%s0 + $0x360] sm:$0xff]
  %v147 = vld [vmem:[%s0 + $0x368] sm:$0xff]
  %v148 = vld [vmem:[%s0 + $0x370] sm:$0xff]
  %v149 = vld [vmem:[%s0 + $0x378] sm:$0xff]
  %v150 = vld [vmem:[%s0 + $0x380] sm:$0xff]
  %v151 = vld [vmem:[%s0 + $0x388] sm:$0xff]
  %v152 = vld [vmem:[%s0 + $0x390] sm:$0xff]
  %v153 = vld [vmem:[%s0 + $0x398] sm:$0xff]
  %v154 = vld [vmem:[%s0 + $0x3a0] sm:$0xff]
  %v155 = vld [vmem:[%s0 + $0x3a8] sm:$0xff]
  %v156 = vld [vmem:[%s0 + $0x3b0] sm:$0xff]
  %v157 = vld [vmem:[%s0 + $0x3b8] sm:$0xff]
  %v158 = vld [vmem:[%s0 + $0x3c0] sm:$0xff]
  %v159 = vld [vmem:[%s0 + $0x3c8] sm:$0xff]
  %v160 = vld [vmem:[%s0 + $0x3d0] sm:$0xff]
  %v161 = vld [vmem:[%s0 + $0x3d8] sm:$0xff]
  %v162 = vld [vmem:[%s0 + $0x3e0] sm:$0xff]
  %v163 = vld [vmem:[%s0 + $0x3e8] sm:$0xff]
  %v164 = vld [vmem:[%s0 + $0x3f0] sm:$0xff]
  %v165 = vld [vmem:[%s0 + $0x3f8] sm:$0xff]
  %v166 = vld [vmem:[%s0 + $0x400] sm:$0xff]
  %v167 = vld [vmem:[%s0 + $0x408] sm:$0xff]
  %v168 = vld [vmem:[%s0 + $0x410] sm:$0xff]
  %v169 = vld [vmem:[%s0 + $0x418] sm:$0xff]
  %v170 = vld [vmem:[%s0 + $0x420] sm:$0xff]
  %v171 = vld [vmem:[%s0 + $0x428] sm:$0xff]
  %v172 = vld [vmem:[%s0 + $0x430] sm:$0xff]
  %v173 = vld [vmem:[%s0 + $0x438] sm:$0xff]
  %v174 = vld [vmem:[%s0 + $0x440] sm:$0xff]
  %v175 = vld [vmem:[%s0 + $0x448] sm:$0xff]
  %v176 = vld [vmem:[%s0 + $0x450] sm:$0xff]
  %v177 = vld [vmem:[%s0 + $0x458] sm:$0xff]
  %v178 = vld [vmem:[%s0 + $0x460] sm:$0xff]
  %v179 = vld [vmem:[%s0 + $0x468] sm:$0xff]
  %v180 = vld [vmem:[%s0 + $0x470] sm:$0xff]
  %v181 = vld [vmem:[%s0 + $0x478] sm:$0xff]
  %v182 = vld [vmem:[%s0 + $0x480] sm:$0xff]
  %v183 = vld [vmem:[%s0 + $0x488] sm:$0xff]
  %v184 = vld [vmem:[%s0 + $0x490] sm:$0xff]
  %v185 = vld [vmem:[%s0 + $0x498] sm:$0xff]
  %v186 = vld [vmem:[%s0 + $0x4a0] sm:$0xff]
  %v187 = vld [vmem:[%s0 + $0x4a8] sm:$0xff]
  %v188 = vld [vmem:[%s0 + $0x4b0] sm:$0xff]
  %v189 = vld [vmem:[%s0 + $0x4b8] sm:$0xff]
  %v190 = vld [vmem:[%s0 + $0x4c0] sm:$0xff]
  %v191 = vld [vmem:[%s0 + $0x4c8] sm:$0xff]
  %v192 = vld [vmem:[%s0 + $0x4d0] sm:$0xff]
  %v193 = vld [vmem:[%s0 + $0x4d8] sm:$0xff]
  %v194 = vld [vmem:[%s0 + $0x4e0] sm:$0xff]
  %v195 = vld [vmem:[%s0 + $0x4e8] sm:$0xff]
  %v196 = vld [vmem:[%s0 + $0x4f0] sm:$0xff]
  %v197 = vld [vmem:[%s0 + $0x4f8] sm:$0xff]
  %v198 = vld [vmem:[%s0 + $0x500] sm:$0xff]
  %v199 = vld [vmem:[%s0 + $0x508] sm:$0xff]
  %v200 = vld [vmem:[%s0 + $0x510] sm:$0xff]
  %v201 = vld [vmem:[%s0 + $0x518] sm:$0xff]
  %v202 = vld [vmem:[%s0 + $0x520] sm:$0xff]
  %v203 = vld [vmem:[%s0 + $0x528] sm:$0xff]
  %v204 = vld [vmem:[%s0 + $0x530] sm:$0xff]
  %v205 = vld [vmem:[%s0 + $0x538] sm:$0xff]
  %v206 = vld [vmem:[%s0 + $0x540] sm:$0xff]
  %v207 = vld [vmem:[%s0 + $0x548] sm:$0xff]
  %v208 = vld [vmem:[%s0 + $0x550] sm:$0xff]
  %v209 = vld [vmem:[%s0 + $0x558] sm:$0xff]
  %v210 = vld [vmem:[%s0 + $0x560] sm:$0xff]
  %v211 = vld [vmem:[%s0 + $0x568] sm:$0xff]
  %v212 = vld [vmem:[%s0 + $0x570] sm:$0xff]
  %v213 = vld [vmem:[%s0 + $0x578] sm:$0xff]
  %v214 = vld [vmem:[%s0 + $0x580] sm:$0xff]
  %v215 = vld [vmem:[%s0 + $0x588] sm:$0xff]
  %v216 = vld [vmem:[%s0 + $0x590] sm:$0xff]
  %v217 = vld [vmem:[%s0 + $0x598] sm:$0xff]
  %v218 = vld [vmem:[%s0 + $0x5a0] sm:$0xff]
  %v219 = vld [vmem:[%s0 + $0x5a8] sm:$0xff]
  %v220 = vld [vmem:[%s0 + $0x5b0] sm:$0xff]
  %v221 = vld [vmem:[%s0 + $0x5b8] sm:$0xff]
  %v222 = vld [vmem:[%s0 + $0x5c0] sm:$0xff]
  %v223 = vld [vmem:[%s0 + $0x5c8] sm:$0xff]
  %v224 = vld [vmem:[%s0 + $0x5d0] sm:$0xff]
  %v225 = vld [vmem:[%s0 + $0x5d8] sm:$0xff]
  %v226 = vld [vmem:[%s0 + $0x5e0] sm:$0xff]
  %v227 = vld [vmem:[%s0 + $0x5e8] sm:$0xff]
  %v228 = vld [vmem:[%s0 + $0x5f0] sm:$0xff]
  %v229 = vld [vmem:[%s0 + $0x5f8] sm:$0xff]
  %422 = vrot.lane.b32.xlu0 %v38, 127
  %v423 = vpop.permute.xlu0 %422
  %424 = vrot.lane.b32.xlu0 %v39, 127
  %v425 = vpop.permute.xlu0 %424
  %426 = vrot.lane.b32.xlu0 %v40, 127
  %v427 = vpop.permute.xlu0 %426
  %428 = vrot.lane.b32.xlu0 %v41, 127
  %v429 = vpop.permute.xlu0 %428
  %430 = vrot.lane.b32.xlu0 %v42, 127
  %v431 = vpop.permute.xlu0 %430
  %432 = vrot.lane.b32.xlu0 %v43, 127
  %v433 = vpop.permute.xlu0 %432
  %434 = vrot.lane.b32.xlu0 %v44, 127
  %v435 = vpop.permute.xlu0 %434
  %436 = vrot.lane.b32.xlu0 %v45, 127
  %v437 = vpop.permute.xlu0 %436
  %438 = vrot.lane.b32.xlu0 %v46, 127
  %v439 = vpop.permute.xlu0 %438
  %440 = vrot.lane.b32.xlu0 %v47, 127
  %v441 = vpop.permute.xlu0 %440
  %442 = vrot.lane.b32.xlu0 %v48, 127
  %v443 = vpop.permute.xlu0 %442
  %444 = vrot.lane.b32.xlu0 %v49, 127
  %v445 = vpop.permute.xlu0 %444
  %446 = vrot.lane.b32.xlu0 %v50, 127
  %v447 = vpop.permute.xlu0 %446
  %448 = vrot.lane.b32.xlu0 %v51, 127
  %v449 = vpop.permute.xlu0 %448
  %450 = vrot.lane.b32.xlu0 %v52, 127
  %v451 = vpop.permute.xlu0 %450
  %452 = vrot.lane.b32.xlu0 %v53, 127
  %v453 = vpop.permute.xlu0 %452
  %454 = vrot.lane.b32.xlu0 %v54, 127
  %v455 = vpop.permute.xlu0 %454
  %456 = vrot.lane.b32.xlu0 %v55, 127
  %v457 = vpop.permute.xlu0 %456
  %458 = vrot.lane.b32.xlu0 %v56, 127
  %v459 = vpop.permute.xlu0 %458
  %460 = vrot.lane.b32.xlu0 %v57, 127
  %v461 = vpop.permute.xlu0 %460
  %462 = vrot.lane.b32.xlu0 %v58, 127
  %v463 = vpop.permute.xlu0 %462
  %464 = vrot.lane.b32.xlu0 %v59, 127
  %v465 = vpop.permute.xlu0 %464
  %466 = vrot.lane.b32.xlu0 %v60, 127
  %v467 = vpop.permute.xlu0 %466
  %468 = vrot.lane.b32.xlu0 %v61, 127
  %v469 = vpop.permute.xlu0 %468
  %470 = vrot.lane.b32.xlu0 %v62, 127
  %v471 = vpop.permute.xlu0 %470
  %472 = vrot.lane.b32.xlu0 %v63, 127
  %v473 = vpop.permute.xlu0 %472
  %474 = vrot.lane.b32.xlu0 %v64, 127
  %v475 = vpop.permute.xlu0 %474
  %476 = vrot.lane.b32.xlu0 %v65, 127
  %v477 = vpop.permute.xlu0 %476
  %478 = vrot.lane.b32.xlu0 %v66, 127
  %v479 = vpop.permute.xlu0 %478
  %480 = vrot.lane.b32.xlu0 %v67, 127
  %v481 = vpop.permute.xlu0 %480
  %482 = vrot.lane.b32.xlu0 %v68, 127
  %v483 = vpop.permute.xlu0 %482
  %484 = vrot.lane.b32.xlu0 %v69, 127
  %v485 = vpop.permute.xlu0 %484
  %486 = vrot.lane.b32.xlu0 %v70, 127
  %v487 = vpop.permute.xlu0 %486
  %488 = vrot.lane.b32.xlu0 %v71, 127
  %v489 = vpop.permute.xlu0 %488
  %490 = vrot.lane.b32.xlu0 %v72, 127
  %v491 = vpop.permute.xlu0 %490
  %492 = vrot.lane.b32.xlu0 %v73, 127
  %v493 = vpop.permute.xlu0 %492
  %494 = vrot.lane.b32.xlu0 %v74, 127
  %v495 = vpop.permute.xlu0 %494
  %496 = vrot.lane.b32.xlu0 %v75, 127
  %v497 = vpop.permute.xlu0 %496
  %498 = vrot.lane.b32.xlu0 %v76, 127
  %v499 = vpop.permute.xlu0 %498
  %500 = vrot.lane.b32.xlu0 %v77, 127
  %v501 = vpop.permute.xlu0 %500
  %502 = vrot.lane.b32.xlu0 %v78, 127
  %v503 = vpop.permute.xlu0 %502
  %504 = vrot.lane.b32.xlu0 %v79, 127
  %v505 = vpop.permute.xlu0 %504
  %506 = vrot.lane.b32.xlu0 %v80, 127
  %v507 = vpop.permute.xlu0 %506
  %508 = vrot.lane.b32.xlu0 %v81, 127
  %v509 = vpop.permute.xlu0 %508
  %510 = vrot.lane.b32.xlu0 %v82, 127
  %v511 = vpop.permute.xlu0 %510
  %512 = vrot.lane.b32.xlu0 %v83, 127
  %v513 = vpop.permute.xlu0 %512
  %514 = vrot.lane.b32.xlu0 %v84, 127
  %v515 = vpop.permute.xlu0 %514
  %516 = vrot.lane.b32.xlu0 %v85, 127
  %v517 = vpop.permute.xlu0 %516
  %518 = vrot.lane.b32.xlu0 %v86, 127
  %v519 = vpop.permute.xlu0 %518
  %520 = vrot.lane.b32.xlu0 %v87, 127
  %v521 = vpop.permute.xlu0 %520
  %522 = vrot.lane.b32.xlu0 %v88, 127
  %v523 = vpop.permute.xlu0 %522
  %524 = vrot.lane.b32.xlu0 %v89, 127
  %v525 = vpop.permute.xlu0 %524
  %526 = vrot.lane.b32.xlu0 %v90, 127
  %v527 = vpop.permute.xlu0 %526
  %528 = vrot.lane.b32.xlu0 %v91, 127
  %v529 = vpop.permute.xlu0 %528
  %530 = vrot.lane.b32.xlu0 %v92, 127
  %v531 = vpop.permute.xlu0 %530
  %532 = vrot.lane.b32.xlu0 %v93, 127
  %v533 = vpop.permute.xlu0 %532
  %534 = vrot.lane.b32.xlu0 %v94, 127
  %v535 = vpop.permute.xlu0 %534
  %536 = vrot.lane.b32.xlu0 %v95, 127
  %v537 = vpop.permute.xlu0 %536
  %538 = vrot.lane.b32.xlu0 %v96, 127
  %v539 = vpop.permute.xlu0 %538
  %540 = vrot.lane.b32.xlu0 %v97, 127
  %v541 = vpop.permute.xlu0 %540
  %542 = vrot.lane.b32.xlu0 %v98, 127
  %v543 = vpop.permute.xlu0 %542
  %544 = vrot.lane.b32.xlu0 %v99, 127
  %v545 = vpop.permute.xlu0 %544
  %546 = vrot.lane.b32.xlu0 %v100, 127
  %v547 = vpop.permute.xlu0 %546
  %548 = vrot.lane.b32.xlu0 %v101, 127
  %v549 = vpop.permute.xlu0 %548
  %550 = vrot.lane.b32.xlu0 %v102, 127
  %v551 = vpop.permute.xlu0 %550
  %552 = vrot.lane.b32.xlu0 %v103, 127
  %v553 = vpop.permute.xlu0 %552
  %554 = vrot.lane.b32.xlu0 %v104, 127
  %v555 = vpop.permute.xlu0 %554
  %556 = vrot.lane.b32.xlu0 %v105, 127
  %v557 = vpop.permute.xlu0 %556
  %558 = vrot.lane.b32.xlu0 %v106, 127
  %v559 = vpop.permute.xlu0 %558
  %560 = vrot.lane.b32.xlu0 %v107, 127
  %v561 = vpop.permute.xlu0 %560
  %562 = vrot.lane.b32.xlu0 %v108, 127
  %v563 = vpop.permute.xlu0 %562
  %564 = vrot.lane.b32.xlu0 %v109, 127
  %v565 = vpop.permute.xlu0 %564
  %566 = vrot.lane.b32.xlu0 %v110, 127
  %v567 = vpop.permute.xlu0 %566
  %568 = vrot.lane.b32.xlu0 %v111, 127
  %v569 = vpop.permute.xlu0 %568
  %570 = vrot.lane.b32.xlu0 %v112, 127
  %v571 = vpop.permute.xlu0 %570
  %572 = vrot.lane.b32.xlu0 %v113, 127
  %v573 = vpop.permute.xlu0 %572
  %574 = vrot.lane.b32.xlu0 %v114, 127
  %v575 = vpop.permute.xlu0 %574
  %576 = vrot.lane.b32.xlu0 %v115, 127
  %v577 = vpop.permute.xlu0 %576
  %578 = vrot.lane.b32.xlu0 %v116, 127
  %v579 = vpop.permute.xlu0 %578
  %580 = vrot.lane.b32.xlu0 %v117, 127
  %v581 = vpop.permute.xlu0 %580
  %582 = vrot.lane.b32.xlu0 %v118, 127
  %v583 = vpop.permute.xlu0 %582
  %584 = vrot.lane.b32.xlu0 %v119, 127
  %v585 = vpop.permute.xlu0 %584
  %586 = vrot.lane.b32.xlu0 %v120, 127
  %v587 = vpop.permute.xlu0 %586
  %588 = vrot.lane.b32.xlu0 %v121, 127
  %v589 = vpop.permute.xlu0 %588
  %590 = vrot.lane.b32.xlu0 %v122, 127
  %v591 = vpop.permute.xlu0 %590
  %592 = vrot.lane.b32.xlu0 %v123, 127
  %v593 = vpop.permute.xlu0 %592
  %594 = vrot.lane.b32.xlu0 %v124, 127
  %v595 = vpop.permute.xlu0 %594
  %596 = vrot.lane.b32.xlu0 %v125, 127
  %v597 = vpop.permute.xlu0 %596
  %598 = vrot.lane.b32.xlu0 %v126, 127
  %v599 = vpop.permute.xlu0 %598
  %600 = vrot.lane.b32.xlu0 %v127, 127
  %v601 = vpop.permute.xlu0 %600
  %602 = vrot.lane.b32.xlu0 %v128, 127
  %v603 = vpop.permute.xlu0 %602
  %604 = vrot.lane.b32.xlu0 %v129, 127
  %v605 = vpop.permute.xlu0 %604
  %606 = vrot.lane.b32.xlu0 %v130, 127
  %v607 = vpop.permute.xlu0 %606
  %608 = vrot.lane.b32.xlu0 %v131, 127
  %v609 = vpop.permute.xlu0 %608
  %610 = vrot.lane.b32.xlu0 %v132, 127
  %v611 = vpop.permute.xlu0 %610
  %612 = vrot.lane.b32.xlu0 %v133, 127
  %v613 = vpop.permute.xlu0 %612
  %614 = vrot.lane.b32.xlu0 %v134, 127
  %v615 = vpop.permute.xlu0 %614
  %616 = vrot.lane.b32.xlu0 %v135, 127
  %v617 = vpop.permute.xlu0 %616
  %618 = vrot.lane.b32.xlu0 %v136, 127
  %v619 = vpop.permute.xlu0 %618
  %620 = vrot.lane.b32.xlu0 %v137, 127
  %v621 = vpop.permute.xlu0 %620
  %622 = vrot.lane.b32.xlu0 %v138, 127
  %v623 = vpop.permute.xlu0 %622
  %624 = vrot.lane.b32.xlu0 %v139, 127
  %v625 = vpop.permute.xlu0 %624
  %626 = vrot.lane.b32.xlu0 %v140, 127
  %v627 = vpop.permute.xlu0 %626
  %628 = vrot.lane.b32.xlu0 %v141, 127
  %v629 = vpop.permute.xlu0 %628
  %630 = vrot.lane.b32.xlu0 %v142, 127
  %v631 = vpop.permute.xlu0 %630
  %632 = vrot.lane.b32.xlu0 %v143, 127
  %v633 = vpop.permute.xlu0 %632
  %634 = vrot.lane.b32.xlu0 %v144, 127
  %v635 = vpop.permute.xlu0 %634
  %636 = vrot.lane.b32.xlu0 %v145, 127
  %v637 = vpop.permute.xlu0 %636
  %638 = vrot.lane.b32.xlu0 %v146, 127
  %v639 = vpop.permute.xlu0 %638
  %640 = vrot.lane.b32.xlu0 %v147, 127
  %v641 = vpop.permute.xlu0 %640
  %642 = vrot.lane.b32.xlu0 %v148, 127
  %v643 = vpop.permute.xlu0 %642
  %644 = vrot.lane.b32.xlu0 %v149, 127
  %v645 = vpop.permute.xlu0 %644
  %646 = vrot.lane.b32.xlu0 %v150, 127
  %v647 = vpop.permute.xlu0 %646
  %648 = vrot.lane.b32.xlu0 %v151, 127
  %v649 = vpop.permute.xlu0 %648
  %650 = vrot.lane.b32.xlu0 %v152, 127
  %v651 = vpop.permute.xlu0 %650
  %652 = vrot.lane.b32.xlu0 %v153, 127
  %v653 = vpop.permute.xlu0 %652
  %654 = vrot.lane.b32.xlu0 %v154, 127
  %v655 = vpop.permute.xlu0 %654
  %656 = vrot.lane.b32.xlu0 %v155, 127
  %v657 = vpop.permute.xlu0 %656
  %658 = vrot.lane.b32.xlu0 %v156, 127
  %v659 = vpop.permute.xlu0 %658
  %660 = vrot.lane.b32.xlu0 %v157, 127
  %v661 = vpop.permute.xlu0 %660
  %662 = vrot.lane.b32.xlu0 %v158, 127
  %v663 = vpop.permute.xlu0 %662
  %664 = vrot.lane.b32.xlu0 %v159, 127
  %v665 = vpop.permute.xlu0 %664
  %666 = vrot.lane.b32.xlu0 %v160, 127
  %v667 = vpop.permute.xlu0 %666
  %668 = vrot.lane.b32.xlu0 %v161, 127
  %v669 = vpop.permute.xlu0 %668
  %670 = vrot.lane.b32.xlu0 %v162, 127
  %v671 = vpop.permute.xlu0 %670
  %672 = vrot.lane.b32.xlu0 %v163, 127
  %v673 = vpop.permute.xlu0 %672
  %674 = vrot.lane.b32.xlu0 %v164, 127
  %v675 = vpop.permute.xlu0 %674
  %676 = vrot.lane.b32.xlu0 %v165, 127
  %v677 = vpop.permute.xlu0 %676
  %678 = vrot.lane.b32.xlu0 %v166, 127
  %v679 = vpop.permute.xlu0 %678
  %680 = vrot.lane.b32.xlu0 %v167, 127
  %v681 = vpop.permute.xlu0 %680
  %682 = vrot.lane.b32.xlu0 %v168, 127
  %v683 = vpop.permute.xlu0 %682
  %684 = vrot.lane.b32.xlu0 %v169, 127
  %v685 = vpop.permute.xlu0 %684
  %686 = vrot.lane.b32.xlu0 %v170, 127
  %v687 = vpop.permute.xlu0 %686
  %688 = vrot.lane.b32.xlu0 %v171, 127
  %v689 = vpop.permute.xlu0 %688
  %690 = vrot.lane.b32.xlu0 %v172, 127
  %v691 = vpop.permute.xlu0 %690
  %692 = vrot.lane.b32.xlu0 %v173, 127
  %v693 = vpop.permute.xlu0 %692
  %694 = vrot.lane.b32.xlu0 %v174, 127
  %v695 = vpop.permute.xlu0 %694
  %696 = vrot.lane.b32.xlu0 %v175, 127
  %v697 = vpop.permute.xlu0 %696
  %698 = vrot.lane.b32.xlu0 %v176, 127
  %v699 = vpop.permute.xlu0 %698
  %700 = vrot.lane.b32.xlu0 %v177, 127
  %v701 = vpop.permute.xlu0 %700
  %702 = vrot.lane.b32.xlu0 %v178, 127
  %v703 = vpop.permute.xlu0 %702
  %704 = vrot.lane.b32.xlu0 %v179, 127
  %v705 = vpop.permute.xlu0 %704
  %706 = vrot.lane.b32.xlu0 %v180, 127
  %v707 = vpop.permute.xlu0 %706
  %708 = vrot.lane.b32.xlu0 %v181, 127
  %v709 = vpop.permute.xlu0 %708
  %710 = vrot.lane.b32.xlu0 %v182, 127
  %v711 = vpop.permute.xlu0 %710
  %712 = vrot.lane.b32.xlu0 %v183, 127
  %v713 = vpop.permute.xlu0 %712
  %714 = vrot.lane.b32.xlu0 %v184, 127
  %v715 = vpop.permute.xlu0 %714
  %716 = vrot.lane.b32.xlu0 %v185, 127
  %v717 = vpop.permute.xlu0 %716
  %718 = vrot.lane.b32.xlu0 %v186, 127
  %v719 = vpop.permute.xlu0 %718
  %720 = vrot.lane.b32.xlu0 %v187, 127
  %v721 = vpop.permute.xlu0 %720
  %722 = vrot.lane.b32.xlu0 %v188, 127
  %v723 = vpop.permute.xlu0 %722
  %724 = vrot.lane.b32.xlu0 %v189, 127
  %v725 = vpop.permute.xlu0 %724
  %726 = vrot.lane.b32.xlu0 %v190, 127
  %v727 = vpop.permute.xlu0 %726
  %728 = vrot.lane.b32.xlu0 %v191, 127
  %v729 = vpop.permute.xlu0 %728
  %730 = vrot.lane.b32.xlu0 %v192, 127
  %v731 = vpop.permute.xlu0 %730
  %732 = vrot.lane.b32.xlu0 %v193, 127
  %v733 = vpop.permute.xlu0 %732
  %734 = vrot.lane.b32.xlu0 %v194, 127
  %v735 = vpop.permute.xlu0 %734
  %736 = vrot.lane.b32.xlu0 %v195, 127
  %v737 = vpop.permute.xlu0 %736
  %738 = vrot.lane.b32.xlu0 %v196, 127
  %v739 = vpop.permute.xlu0 %738
  %740 = vrot.lane.b32.xlu0 %v197, 127
  %v741 = vpop.permute.xlu0 %740
  %742 = vrot.lane.b32.xlu0 %v198, 127
  %v743 = vpop.permute.xlu0 %742
  %744 = vrot.lane.b32.xlu0 %v199, 127
  %v745 = vpop.permute.xlu0 %744
  %746 = vrot.lane.b32.xlu0 %v200, 127
  %v747 = vpop.permute.xlu0 %746
  %748 = vrot.lane.b32.xlu0 %v201, 127
  %v749 = vpop.permute.xlu0 %748
  %750 = vrot.lane.b32.xlu0 %v202, 127
  %v751 = vpop.permute.xlu0 %750
  %752 = vrot.lane.b32.xlu0 %v203, 127
  %v753 = vpop.permute.xlu0 %752
  %754 = vrot.lane.b32.xlu0 %v204, 127
  %v755 = vpop.permute.xlu0 %754
  %756 = vrot.lane.b32.xlu0 %v205, 127
  %v757 = vpop.permute.xlu0 %756
  %758 = vrot.lane.b32.xlu0 %v206, 127
  %v759 = vpop.permute.xlu0 %758
  %760 = vrot.lane.b32.xlu0 %v207, 127
  %v761 = vpop.permute.xlu0 %760
  %762 = vrot.lane.b32.xlu0 %v208, 127
  %v763 = vpop.permute.xlu0 %762
  %764 = vrot.lane.b32.xlu0 %v209, 127
  %v765 = vpop.permute.xlu0 %764
  %766 = vrot.lane.b32.xlu0 %v210, 127
  %v767 = vpop.permute.xlu0 %766
  %768 = vrot.lane.b32.xlu0 %v211, 127
  %v769 = vpop.permute.xlu0 %768
  %770 = vrot.lane.b32.xlu0 %v212, 127
  %v771 = vpop.permute.xlu0 %770
  %772 = vrot.lane.b32.xlu0 %v213, 127
  %v773 = vpop.permute.xlu0 %772
  %774 = vrot.lane.b32.xlu0 %v214, 127
  %v775 = vpop.permute.xlu0 %774
  %776 = vrot.lane.b32.xlu0 %v215, 127
  %v777 = vpop.permute.xlu0 %776
  %778 = vrot.lane.b32.xlu0 %v216, 127
  %v779 = vpop.permute.xlu0 %778
  %780 = vrot.lane.b32.xlu0 %v217, 127
  %v781 = vpop.permute.xlu0 %780
  %782 = vrot.lane.b32.xlu0 %v218, 127
  %v783 = vpop.permute.xlu0 %782
  %784 = vrot.lane.b32.xlu0 %v219, 127
  %v785 = vpop.permute.xlu0 %784
  %786 = vrot.lane.b32.xlu0 %v220, 127
  %v787 = vpop.permute.xlu0 %786
  %788 = vrot.lane.b32.xlu0 %v221, 127
  %v789 = vpop.permute.xlu0 %788
  %790 = vrot.lane.b32.xlu0 %v222, 127
  %v791 = vpop.permute.xlu0 %790
  %792 = vrot.lane.b32.xlu0 %v223, 127
  %v793 = vpop.permute.xlu0 %792
  %794 = vrot.lane.b32.xlu0 %v224, 127
  %v795 = vpop.permute.xlu0 %794
  %796 = vrot.lane.b32.xlu0 %v225, 127
  %v797 = vpop.permute.xlu0 %796
  %798 = vrot.lane.b32.xlu0 %v226, 127
  %v799 = vpop.permute.xlu0 %798
  %800 = vrot.lane.b32.xlu0 %v227, 127
  %v801 = vpop.permute.xlu0 %800
  %802 = vrot.lane.b32.xlu0 %v228, 127
  %v803 = vpop.permute.xlu0 %802
  %804 = vrot.lane.b32.xlu0 %v229, 127
  %v805 = vpop.permute.xlu0 %804
  %vm806 = vcmask 1039360
  %v807 = vsel %vm806, %v423, %v425
  %v808 = vsel %vm806, %v425, %v427
  %v809 = vsel %vm806, %v427, %v429
  %v810 = vsel %vm806, %v429, %v431
  %v811 = vsel %vm806, %v431, %v433
  %v812 = vsel %vm806, %v433, %v435
  %v813 = vsel %vm806, %v435, %v437
  %v814 = vsel %vm806, %v437, %v439
  %v815 = vsel %vm806, %v439, %v441
  %v816 = vsel %vm806, %v441, %v443
  %v817 = vsel %vm806, %v443, %v445
  %v818 = vsel %vm806, %v445, %v447
  %v819 = vsel %vm806, %v447, %v449
  %v820 = vsel %vm806, %v449, %v451
  %v821 = vsel %vm806, %v451, %v453
  %v822 = vsel %vm806, %v453, %v455
  %v823 = vsel %vm806, %v455, %v457
  %v824 = vsel %vm806, %v457, %v459
  %v825 = vsel %vm806, %v459, %v461
  %v826 = vsel %vm806, %v461, %v463
  %v827 = vsel %vm806, %v463, %v465
  %v828 = vsel %vm806, %v465, %v467
  %v829 = vsel %vm806, %v467, %v469
  %v830 = vsel %vm806, %v469, %v471
  %v831 = vsel %vm806, %v471, %v473
  %v832 = vsel %vm806, %v473, %v475
  %v833 = vsel %vm806, %v475, %v477
  %v834 = vsel %vm806, %v477, %v479
  %v835 = vsel %vm806, %v479, %v481
  %v836 = vsel %vm806, %v481, %v483
  %v837 = vsel %vm806, %v483, %v485
  %v838 = vsel %vm806, %v487, %v489
  %v839 = vsel %vm806, %v489, %v491
  %v840 = vsel %vm806, %v491, %v493
  %v841 = vsel %vm806, %v493, %v495
  %v842 = vsel %vm806, %v495, %v497
  %v843 = vsel %vm806, %v497, %v499
  %v844 = vsel %vm806, %v499, %v501
  %v845 = vsel %vm806, %v501, %v503
  %v846 = vsel %vm806, %v503, %v505
  %v847 = vsel %vm806, %v505, %v507
  %v848 = vsel %vm806, %v507, %v509
  %v849 = vsel %vm806, %v509, %v511
  %v850 = vsel %vm806, %v511, %v513
  %v851 = vsel %vm806, %v513, %v515
  %v852 = vsel %vm806, %v515, %v517
  %v853 = vsel %vm806, %v517, %v519
  %v854 = vsel %vm806, %v519, %v521
  %v855 = vsel %vm806, %v521, %v523
  %v856 = vsel %vm806, %v523, %v525
  %v857 = vsel %vm806, %v525, %v527
  %v858 = vsel %vm806, %v527, %v529
  %v859 = vsel %vm806, %v529, %v531
  %v860 = vsel %vm806, %v531, %v533
  %v861 = vsel %vm806, %v533, %v535
  %v862 = vsel %vm806, %v535, %v537
  %v863 = vsel %vm806, %v537, %v539
  %v864 = vsel %vm806, %v539, %v541
  %v865 = vsel %vm806, %v541, %v543
  %v866 = vsel %vm806, %v543, %v545
  %v867 = vsel %vm806, %v545, %v547
  %v868 = vsel %vm806, %v547, %v549
  %v869 = vsel %vm806, %v551, %v553
  %v870 = vsel %vm806, %v553, %v555
  %v871 = vsel %vm806, %v555, %v557
  %v872 = vsel %vm806, %v557, %v559
  %v873 = vsel %vm806, %v559, %v561
  %v874 = vsel %vm806, %v561, %v563
  %v875 = vsel %vm806, %v563, %v565
  %v876 = vsel %vm806, %v565, %v567
  %v877 = vsel %vm806, %v567, %v569
  %v878 = vsel %vm806, %v569, %v571
  %v879 = vsel %vm806, %v571, %v573
  %v880 = vsel %vm806, %v573, %v575
  %v881 = vsel %vm806, %v575, %v577
  %v882 = vsel %vm806, %v577, %v579
  %v883 = vsel %vm806, %v579, %v581
  %v884 = vsel %vm806, %v581, %v583
  %v885 = vsel %vm806, %v583, %v585
  %v886 = vsel %vm806, %v585, %v587
  %v887 = vsel %vm806, %v587, %v589
  %v888 = vsel %vm806, %v589, %v591
  %v889 = vsel %vm806, %v591, %v593
  %v890 = vsel %vm806, %v593, %v595
  %v891 = vsel %vm806, %v595, %v597
  %v892 = vsel %vm806, %v597, %v599
  %v893 = vsel %vm806, %v599, %v601
  %v894 = vsel %vm806, %v601, %v603
  %v895 = vsel %vm806, %v603, %v605
  %v896 = vsel %vm806, %v605, %v607
  %v897 = vsel %vm806, %v607, %v609
  %v898 = vsel %vm806, %v609, %v611
  %v899 = vsel %vm806, %v611, %v613
  %v900 = vsel %vm806, %v615, %v617
  %v901 = vsel %vm806, %v617, %v619
  %v902 = vsel %vm806, %v619, %v621
  %v903 = vsel %vm806, %v621, %v623
  %v904 = vsel %vm806, %v623, %v625
  %v905 = vsel %vm806, %v625, %v627
  %v906 = vsel %vm806, %v627, %v629
  %v907 = vsel %vm806, %v629, %v631
  %v908 = vsel %vm806, %v631, %v633
  %v909 = vsel %vm806, %v633, %v635
  %v910 = vsel %vm806, %v635, %v637
  %v911 = vsel %vm806, %v637, %v639
  %v912 = vsel %vm806, %v639, %v641
  %v913 = vsel %vm806, %v641, %v643
  %v914 = vsel %vm806, %v643, %v645
  %v915 = vsel %vm806, %v645, %v647
  %v916 = vsel %vm806, %v647, %v649
  %v917 = vsel %vm806, %v649, %v651
  %v918 = vsel %vm806, %v651, %v653
  %v919 = vsel %vm806, %v653, %v655
  %v920 = vsel %vm806, %v655, %v657
  %v921 = vsel %vm806, %v657, %v659
  %v922 = vsel %vm806, %v659, %v661
  %v923 = vsel %vm806, %v661, %v663
  %v924 = vsel %vm806, %v663, %v665
  %v925 = vsel %vm806, %v665, %v667
  %v926 = vsel %vm806, %v667, %v669
  %v927 = vsel %vm806, %v669, %v671
  %v928 = vsel %vm806, %v671, %v673
  %v929 = vsel %vm806, %v673, %v675
  %v930 = vsel %vm806, %v675, %v677
  %v931 = vsel %vm806, %v679, %v681
  %v932 = vsel %vm806, %v681, %v683
  %v933 = vsel %vm806, %v683, %v685
  %v934 = vsel %vm806, %v685, %v687
  %v935 = vsel %vm806, %v687, %v689
  %v936 = vsel %vm806, %v689, %v691
  %v937 = vsel %vm806, %v691, %v693
  %v938 = vsel %vm806, %v693, %v695
  %v939 = vsel %vm806, %v695, %v697
  %v940 = vsel %vm806, %v697, %v699
  %v941 = vsel %vm806, %v699, %v701
  %v942 = vsel %vm806, %v701, %v703
  %v943 = vsel %vm806, %v703, %v705
  %v944 = vsel %vm806, %v705, %v707
  %v945 = vsel %vm806, %v707, %v709
  %v946 = vsel %vm806, %v709, %v711
  %v947 = vsel %vm806, %v711, %v713
  %v948 = vsel %vm806, %v713, %v715
  %v949 = vsel %vm806, %v715, %v717
  %v950 = vsel %vm806, %v717, %v719
  %v951 = vsel %vm806, %v719, %v721
  %v952 = vsel %vm806, %v721, %v723
  %v953 = vsel %vm806, %v723, %v725
  %v954 = vsel %vm806, %v725, %v727
  %v955 = vsel %vm806, %v727, %v729
  %v956 = vsel %vm806, %v729, %v731
  %v957 = vsel %vm806, %v731, %v733
  %v958 = vsel %vm806, %v733, %v735
  %v959 = vsel %vm806, %v735, %v737
  %v960 = vsel %vm806, %v737, %v739
  %v961 = vsel %vm806, %v739, %v741
  %v962 = vsel %vm806, %v743, %v745
  %v963 = vsel %vm806, %v745, %v747
  %v964 = vsel %vm806, %v747, %v749
  %v965 = vsel %vm806, %v749, %v751
  %v966 = vsel %vm806, %v751, %v753
  %v967 = vsel %vm806, %v753, %v755
  %v968 = vsel %vm806, %v755, %v757
  %v969 = vsel %vm806, %v757, %v759
  %v970 = vsel %vm806, %v759, %v761
  %v971 = vsel %vm806, %v761, %v763
  %v972 = vsel %vm806, %v763, %v765
  %v973 = vsel %vm806, %v765, %v767
  %v974 = vsel %vm806, %v767, %v769
  %v975 = vsel %vm806, %v769, %v771
  %v976 = vsel %vm806, %v771, %v773
  %v977 = vsel %vm806, %v773, %v775
  %v978 = vsel %vm806, %v775, %v777
  %v979 = vsel %vm806, %v777, %v779
  %v980 = vsel %vm806, %v779, %v781
  %v981 = vsel %vm806, %v781, %v783
  %v982 = vsel %vm806, %v783, %v785
  %v983 = vsel %vm806, %v785, %v787
  %v984 = vsel %vm806, %v787, %v789
  %v985 = vsel %vm806, %v789, %v791
  %v986 = vsel %vm806, %v791, %v793
  %v987 = vsel %vm806, %v793, %v795
  %v988 = vsel %vm806, %v795, %v797
  %v989 = vsel %vm806, %v797, %v799
  %v990 = vsel %vm806, %v799, %v801
  %v991 = vsel %vm806, %v801, %v803
  %v992 = vsel %vm806, %v803, %v805
  %v1191 = vsel %vm806, %v485, %v423
  %v1192 = vsel %vm806, %v549, %v487
  %v1193 = vsel %vm806, %v613, %v551
  %v1194 = vsel %vm806, %v677, %v615
  %v1195 = vsel %vm806, %v741, %v679
  %v1196 = vsel %vm806, %v805, %v743
  %1197 = vrot.lane.b32.xlu0 %v38, 112
  %v1198 = vpop.permute.xlu0 %1197
  %1199 = vrot.lane.b32.xlu0 %v39, 112
  %v1200 = vpop.permute.xlu0 %1199
  %1201 = vrot.lane.b32.xlu0 %v40, 112
  %v1202 = vpop.permute.xlu0 %1201
  %1203 = vrot.lane.b32.xlu0 %v41, 112
  %v1204 = vpop.permute.xlu0 %1203
  %1205 = vrot.lane.b32.xlu0 %v42, 112
  %v1206 = vpop.permute.xlu0 %1205
  %1207 = vrot.lane.b32.xlu0 %v43, 112
  %v1208 = vpop.permute.xlu0 %1207
  %1209 = vrot.lane.b32.xlu0 %v44, 112
  %v1210 = vpop.permute.xlu0 %1209
  %1211 = vrot.lane.b32.xlu0 %v45, 112
  %v1212 = vpop.permute.xlu0 %1211
  %1213 = vrot.lane.b32.xlu0 %v46, 112
  %v1214 = vpop.permute.xlu0 %1213
  %1215 = vrot.lane.b32.xlu0 %v47, 112
  %v1216 = vpop.permute.xlu0 %1215
  %1217 = vrot.lane.b32.xlu0 %v48, 112
  %v1218 = vpop.permute.xlu0 %1217
  %1219 = vrot.lane.b32.xlu0 %v49, 112
  %v1220 = vpop.permute.xlu0 %1219
  %1221 = vrot.lane.b32.xlu0 %v50, 112
  %v1222 = vpop.permute.xlu0 %1221
  %1223 = vrot.lane.b32.xlu0 %v51, 112
  %v1224 = vpop.permute.xlu0 %1223
  %1225 = vrot.lane.b32.xlu0 %v52, 112
  %v1226 = vpop.permute.xlu0 %1225
  %1227 = vrot.lane.b32.xlu0 %v53, 112
  %v1228 = vpop.permute.xlu0 %1227
  %1229 = vrot.lane.b32.xlu0 %v54, 112
  %v1230 = vpop.permute.xlu0 %1229
  %1231 = vrot.lane.b32.xlu0 %v55, 112
  %v1232 = vpop.permute.xlu0 %1231
  %1233 = vrot.lane.b32.xlu0 %v56, 112
  %v1234 = vpop.permute.xlu0 %1233
  %1235 = vrot.lane.b32.xlu0 %v57, 112
  %v1236 = vpop.permute.xlu0 %1235
  %1237 = vrot.lane.b32.xlu0 %v58, 112
  %v1238 = vpop.permute.xlu0 %1237
  %1239 = vrot.lane.b32.xlu0 %v59, 112
  %v1240 = vpop.permute.xlu0 %1239
  %1241 = vrot.lane.b32.xlu0 %v60, 112
  %v1242 = vpop.permute.xlu0 %1241
  %1243 = vrot.lane.b32.xlu0 %v61, 112
  %v1244 = vpop.permute.xlu0 %1243
  %1245 = vrot.lane.b32.xlu0 %v62, 112
  %v1246 = vpop.permute.xlu0 %1245
  %1247 = vrot.lane.b32.xlu0 %v63, 112
  %v1248 = vpop.permute.xlu0 %1247
  %1249 = vrot.lane.b32.xlu0 %v64, 112
  %v1250 = vpop.permute.xlu0 %1249
  %1251 = vrot.lane.b32.xlu0 %v65, 112
  %v1252 = vpop.permute.xlu0 %1251
  %1253 = vrot.lane.b32.xlu0 %v66, 112
  %v1254 = vpop.permute.xlu0 %1253
  %1255 = vrot.lane.b32.xlu0 %v67, 112
  %v1256 = vpop.permute.xlu0 %1255
  %1257 = vrot.lane.b32.xlu0 %v68, 112
  %v1258 = vpop.permute.xlu0 %1257
  %1259 = vrot.lane.b32.xlu0 %v69, 112
  %v1260 = vpop.permute.xlu0 %1259
  %1261 = vrot.lane.b32.xlu0 %v70, 112
  %v1262 = vpop.permute.xlu0 %1261
  %1263 = vrot.lane.b32.xlu0 %v71, 112
  %v1264 = vpop.permute.xlu0 %1263
  %1265 = vrot.lane.b32.xlu0 %v72, 112
  %v1266 = vpop.permute.xlu0 %1265
  %1267 = vrot.lane.b32.xlu0 %v73, 112
  %v1268 = vpop.permute.xlu0 %1267
  %1269 = vrot.lane.b32.xlu0 %v74, 112
  %v1270 = vpop.permute.xlu0 %1269
  %1271 = vrot.lane.b32.xlu0 %v75, 112
  %v1272 = vpop.permute.xlu0 %1271
  %1273 = vrot.lane.b32.xlu0 %v76, 112
  %v1274 = vpop.permute.xlu0 %1273
  %1275 = vrot.lane.b32.xlu0 %v77, 112
  %v1276 = vpop.permute.xlu0 %1275
  %1277 = vrot.lane.b32.xlu0 %v78, 112
  %v1278 = vpop.permute.xlu0 %1277
  %1279 = vrot.lane.b32.xlu0 %v79, 112
  %v1280 = vpop.permute.xlu0 %1279
  %1281 = vrot.lane.b32.xlu0 %v80, 112
  %v1282 = vpop.permute.xlu0 %1281
  %1283 = vrot.lane.b32.xlu0 %v81, 112
  %v1284 = vpop.permute.xlu0 %1283
  %1285 = vrot.lane.b32.xlu0 %v82, 112
  %v1286 = vpop.permute.xlu0 %1285
  %1287 = vrot.lane.b32.xlu0 %v83, 112
  %v1288 = vpop.permute.xlu0 %1287
  %1289 = vrot.lane.b32.xlu0 %v84, 112
  %v1290 = vpop.permute.xlu0 %1289
  %1291 = vrot.lane.b32.xlu0 %v85, 112
  %v1292 = vpop.permute.xlu0 %1291
  %1293 = vrot.lane.b32.xlu0 %v86, 112
  %v1294 = vpop.permute.xlu0 %1293
  %1295 = vrot.lane.b32.xlu0 %v87, 112
  %v1296 = vpop.permute.xlu0 %1295
  %1297 = vrot.lane.b32.xlu0 %v88, 112
  %v1298 = vpop.permute.xlu0 %1297
  %1299 = vrot.lane.b32.xlu0 %v89, 112
  %v1300 = vpop.permute.xlu0 %1299
  %1301 = vrot.lane.b32.xlu0 %v90, 112
  %v1302 = vpop.permute.xlu0 %1301
  %1303 = vrot.lane.b32.xlu0 %v91, 112
  %v1304 = vpop.permute.xlu0 %1303
  %1305 = vrot.lane.b32.xlu0 %v92, 112
  %v1306 = vpop.permute.xlu0 %1305
  %1307 = vrot.lane.b32.xlu0 %v93, 112
  %v1308 = vpop.permute.xlu0 %1307
  %1309 = vrot.lane.b32.xlu0 %v94, 112
  %v1310 = vpop.permute.xlu0 %1309
  %1311 = vrot.lane.b32.xlu0 %v95, 112
  %v1312 = vpop.permute.xlu0 %1311
  %1313 = vrot.lane.b32.xlu0 %v96, 112
  %v1314 = vpop.permute.xlu0 %1313
  %1315 = vrot.lane.b32.xlu0 %v97, 112
  %v1316 = vpop.permute.xlu0 %1315
  %1317 = vrot.lane.b32.xlu0 %v98, 112
  %v1318 = vpop.permute.xlu0 %1317
  %1319 = vrot.lane.b32.xlu0 %v99, 112
  %v1320 = vpop.permute.xlu0 %1319
  %1321 = vrot.lane.b32.xlu0 %v100, 112
  %v1322 = vpop.permute.xlu0 %1321
  %1323 = vrot.lane.b32.xlu0 %v101, 112
  %v1324 = vpop.permute.xlu0 %1323
  %1325 = vrot.lane.b32.xlu0 %v102, 112
  %v1326 = vpop.permute.xlu0 %1325
  %1327 = vrot.lane.b32.xlu0 %v103, 112
  %v1328 = vpop.permute.xlu0 %1327
  %1329 = vrot.lane.b32.xlu0 %v104, 112
  %v1330 = vpop.permute.xlu0 %1329
  %1331 = vrot.lane.b32.xlu0 %v105, 112
  %v1332 = vpop.permute.xlu0 %1331
  %1333 = vrot.lane.b32.xlu0 %v106, 112
  %v1334 = vpop.permute.xlu0 %1333
  %1335 = vrot.lane.b32.xlu0 %v107, 112
  %v1336 = vpop.permute.xlu0 %1335
  %1337 = vrot.lane.b32.xlu0 %v108, 112
  %v1338 = vpop.permute.xlu0 %1337
  %1339 = vrot.lane.b32.xlu0 %v109, 112
  %v1340 = vpop.permute.xlu0 %1339
  %1341 = vrot.lane.b32.xlu0 %v110, 112
  %v1342 = vpop.permute.xlu0 %1341
  %1343 = vrot.lane.b32.xlu0 %v111, 112
  %v1344 = vpop.permute.xlu0 %1343
  %1345 = vrot.lane.b32.xlu0 %v112, 112
  %v1346 = vpop.permute.xlu0 %1345
  %1347 = vrot.lane.b32.xlu0 %v113, 112
  %v1348 = vpop.permute.xlu0 %1347
  %1349 = vrot.lane.b32.xlu0 %v114, 112
  %v1350 = vpop.permute.xlu0 %1349
  %1351 = vrot.lane.b32.xlu0 %v115, 112
  %v1352 = vpop.permute.xlu0 %1351
  %1353 = vrot.lane.b32.xlu0 %v116, 112
  %v1354 = vpop.permute.xlu0 %1353
  %1355 = vrot.lane.b32.xlu0 %v117, 112
  %v1356 = vpop.permute.xlu0 %1355
  %1357 = vrot.lane.b32.xlu0 %v118, 112
  %v1358 = vpop.permute.xlu0 %1357
  %1359 = vrot.lane.b32.xlu0 %v119, 112
  %v1360 = vpop.permute.xlu0 %1359
  %1361 = vrot.lane.b32.xlu0 %v120, 112
  %v1362 = vpop.permute.xlu0 %1361
  %1363 = vrot.lane.b32.xlu0 %v121, 112
  %v1364 = vpop.permute.xlu0 %1363
  %1365 = vrot.lane.b32.xlu0 %v122, 112
  %v1366 = vpop.permute.xlu0 %1365
  %1367 = vrot.lane.b32.xlu0 %v123, 112
  %v1368 = vpop.permute.xlu0 %1367
  %1369 = vrot.lane.b32.xlu0 %v124, 112
  %v1370 = vpop.permute.xlu0 %1369
  %1371 = vrot.lane.b32.xlu0 %v125, 112
  %v1372 = vpop.permute.xlu0 %1371
  %1373 = vrot.lane.b32.xlu0 %v126, 112
  %v1374 = vpop.permute.xlu0 %1373
  %1375 = vrot.lane.b32.xlu0 %v127, 112
  %v1376 = vpop.permute.xlu0 %1375
  %1377 = vrot.lane.b32.xlu0 %v128, 112
  %v1378 = vpop.permute.xlu0 %1377
  %1379 = vrot.lane.b32.xlu0 %v129, 112
  %v1380 = vpop.permute.xlu0 %1379
  %1381 = vrot.lane.b32.xlu0 %v130, 112
  %v1382 = vpop.permute.xlu0 %1381
  %1383 = vrot.lane.b32.xlu0 %v131, 112
  %v1384 = vpop.permute.xlu0 %1383
  %1385 = vrot.lane.b32.xlu0 %v132, 112
  %v1386 = vpop.permute.xlu0 %1385
  %1387 = vrot.lane.b32.xlu0 %v133, 112
  %v1388 = vpop.permute.xlu0 %1387
  %1389 = vrot.lane.b32.xlu0 %v134, 112
  %v1390 = vpop.permute.xlu0 %1389
  %1391 = vrot.lane.b32.xlu0 %v135, 112
  %v1392 = vpop.permute.xlu0 %1391
  %1393 = vrot.lane.b32.xlu0 %v136, 112
  %v1394 = vpop.permute.xlu0 %1393
  %1395 = vrot.lane.b32.xlu0 %v137, 112
  %v1396 = vpop.permute.xlu0 %1395
  %1397 = vrot.lane.b32.xlu0 %v138, 112
  %v1398 = vpop.permute.xlu0 %1397
  %1399 = vrot.lane.b32.xlu0 %v139, 112
  %v1400 = vpop.permute.xlu0 %1399
  %1401 = vrot.lane.b32.xlu0 %v140, 112
  %v1402 = vpop.permute.xlu0 %1401
  %1403 = vrot.lane.b32.xlu0 %v141, 112
  %v1404 = vpop.permute.xlu0 %1403
  %1405 = vrot.lane.b32.xlu0 %v142, 112
  %v1406 = vpop.permute.xlu0 %1405
  %1407 = vrot.lane.b32.xlu0 %v143, 112
  %v1408 = vpop.permute.xlu0 %1407
  %1409 = vrot.lane.b32.xlu0 %v144, 112
  %v1410 = vpop.permute.xlu0 %1409
  %1411 = vrot.lane.b32.xlu0 %v145, 112
  %v1412 = vpop.permute.xlu0 %1411
  %1413 = vrot.lane.b32.xlu0 %v146, 112
  %v1414 = vpop.permute.xlu0 %1413
  %1415 = vrot.lane.b32.xlu0 %v147, 112
  %v1416 = vpop.permute.xlu0 %1415
  %1417 = vrot.lane.b32.xlu0 %v148, 112
  %v1418 = vpop.permute.xlu0 %1417
  %1419 = vrot.lane.b32.xlu0 %v149, 112
  %v1420 = vpop.permute.xlu0 %1419
  %1421 = vrot.lane.b32.xlu0 %v150, 112
  %v1422 = vpop.permute.xlu0 %1421
  %1423 = vrot.lane.b32.xlu0 %v151, 112
  %v1424 = vpop.permute.xlu0 %1423
  %1425 = vrot.lane.b32.xlu0 %v152, 112
  %v1426 = vpop.permute.xlu0 %1425
  %1427 = vrot.lane.b32.xlu0 %v153, 112
  %v1428 = vpop.permute.xlu0 %1427
  %1429 = vrot.lane.b32.xlu0 %v154, 112
  %v1430 = vpop.permute.xlu0 %1429
  %1431 = vrot.lane.b32.xlu0 %v155, 112
  %v1432 = vpop.permute.xlu0 %1431
  %1433 = vrot.lane.b32.xlu0 %v156, 112
  %v1434 = vpop.permute.xlu0 %1433
  %1435 = vrot.lane.b32.xlu0 %v157, 112
  %v1436 = vpop.permute.xlu0 %1435
  %1437 = vrot.lane.b32.xlu0 %v158, 112
  %v1438 = vpop.permute.xlu0 %1437
  %1439 = vrot.lane.b32.xlu0 %v159, 112
  %v1440 = vpop.permute.xlu0 %1439
  %1441 = vrot.lane.b32.xlu0 %v160, 112
  %v1442 = vpop.permute.xlu0 %1441
  %1443 = vrot.lane.b32.xlu0 %v161, 112
  %v1444 = vpop.permute.xlu0 %1443
  %1445 = vrot.lane.b32.xlu0 %v162, 112
  %v1446 = vpop.permute.xlu0 %1445
  %1447 = vrot.lane.b32.xlu0 %v163, 112
  %v1448 = vpop.permute.xlu0 %1447
  %1449 = vrot.lane.b32.xlu0 %v164, 112
  %v1450 = vpop.permute.xlu0 %1449
  %1451 = vrot.lane.b32.xlu0 %v165, 112
  %v1452 = vpop.permute.xlu0 %1451
  %1453 = vrot.lane.b32.xlu0 %v166, 112
  %v1454 = vpop.permute.xlu0 %1453
  %1455 = vrot.lane.b32.xlu0 %v167, 112
  %v1456 = vpop.permute.xlu0 %1455
  %1457 = vrot.lane.b32.xlu0 %v168, 112
  %v1458 = vpop.permute.xlu0 %1457
  %1459 = vrot.lane.b32.xlu0 %v169, 112
  %v1460 = vpop.permute.xlu0 %1459
  %1461 = vrot.lane.b32.xlu0 %v170, 112
  %v1462 = vpop.permute.xlu0 %1461
  %1463 = vrot.lane.b32.xlu0 %v171, 112
  %v1464 = vpop.permute.xlu0 %1463
  %1465 = vrot.lane.b32.xlu0 %v172, 112
  %v1466 = vpop.permute.xlu0 %1465
  %1467 = vrot.lane.b32.xlu0 %v173, 112
  %v1468 = vpop.permute.xlu0 %1467
  %1469 = vrot.lane.b32.xlu0 %v174, 112
  %v1470 = vpop.permute.xlu0 %1469
  %1471 = vrot.lane.b32.xlu0 %v175, 112
  %v1472 = vpop.permute.xlu0 %1471
  %1473 = vrot.lane.b32.xlu0 %v176, 112
  %v1474 = vpop.permute.xlu0 %1473
  %1475 = vrot.lane.b32.xlu0 %v177, 112
  %v1476 = vpop.permute.xlu0 %1475
  %1477 = vrot.lane.b32.xlu0 %v178, 112
  %v1478 = vpop.permute.xlu0 %1477
  %1479 = vrot.lane.b32.xlu0 %v179, 112
  %v1480 = vpop.permute.xlu0 %1479
  %1481 = vrot.lane.b32.xlu0 %v180, 112
  %v1482 = vpop.permute.xlu0 %1481
  %1483 = vrot.lane.b32.xlu0 %v181, 112
  %v1484 = vpop.permute.xlu0 %1483
  %1485 = vrot.lane.b32.xlu0 %v182, 112
  %v1486 = vpop.permute.xlu0 %1485
  %1487 = vrot.lane.b32.xlu0 %v183, 112
  %v1488 = vpop.permute.xlu0 %1487
  %1489 = vrot.lane.b32.xlu0 %v184, 112
  %v1490 = vpop.permute.xlu0 %1489
  %1491 = vrot.lane.b32.xlu0 %v185, 112
  %v1492 = vpop.permute.xlu0 %1491
  %1493 = vrot.lane.b32.xlu0 %v186, 112
  %v1494 = vpop.permute.xlu0 %1493
  %1495 = vrot.lane.b32.xlu0 %v187, 112
  %v1496 = vpop.permute.xlu0 %1495
  %1497 = vrot.lane.b32.xlu0 %v188, 112
  %v1498 = vpop.permute.xlu0 %1497
  %1499 = vrot.lane.b32.xlu0 %v189, 112
  %v1500 = vpop.permute.xlu0 %1499
  %1501 = vrot.lane.b32.xlu0 %v190, 112
  %v1502 = vpop.permute.xlu0 %1501
  %1503 = vrot.lane.b32.xlu0 %v191, 112
  %v1504 = vpop.permute.xlu0 %1503
  %1505 = vrot.lane.b32.xlu0 %v192, 112
  %v1506 = vpop.permute.xlu0 %1505
  %1507 = vrot.lane.b32.xlu0 %v193, 112
  %v1508 = vpop.permute.xlu0 %1507
  %1509 = vrot.lane.b32.xlu0 %v194, 112
  %v1510 = vpop.permute.xlu0 %1509
  %1511 = vrot.lane.b32.xlu0 %v195, 112
  %v1512 = vpop.permute.xlu0 %1511
  %1513 = vrot.lane.b32.xlu0 %v196, 112
  %v1514 = vpop.permute.xlu0 %1513
  %1515 = vrot.lane.b32.xlu0 %v197, 112
  %v1516 = vpop.permute.xlu0 %1515
  %1517 = vrot.lane.b32.xlu0 %v198, 112
  %v1518 = vpop.permute.xlu0 %1517
  %1519 = vrot.lane.b32.xlu0 %v199, 112
  %v1520 = vpop.permute.xlu0 %1519
  %1521 = vrot.lane.b32.xlu0 %v200, 112
  %v1522 = vpop.permute.xlu0 %1521
  %1523 = vrot.lane.b32.xlu0 %v201, 112
  %v1524 = vpop.permute.xlu0 %1523
  %1525 = vrot.lane.b32.xlu0 %v202, 112
  %v1526 = vpop.permute.xlu0 %1525
  %1527 = vrot.lane.b32.xlu0 %v203, 112
  %v1528 = vpop.permute.xlu0 %1527
  %1529 = vrot.lane.b32.xlu0 %v204, 112
  %v1530 = vpop.permute.xlu0 %1529
  %1531 = vrot.lane.b32.xlu0 %v205, 112
  %v1532 = vpop.permute.xlu0 %1531
  %1533 = vrot.lane.b32.xlu0 %v206, 112
  %v1534 = vpop.permute.xlu0 %1533
  %1535 = vrot.lane.b32.xlu0 %v207, 112
  %v1536 = vpop.permute.xlu0 %1535
  %1537 = vrot.lane.b32.xlu0 %v208, 112
  %v1538 = vpop.permute.xlu0 %1537
  %1539 = vrot.lane.b32.xlu0 %v209, 112
  %v1540 = vpop.permute.xlu0 %1539
  %1541 = vrot.lane.b32.xlu0 %v210, 112
  %v1542 = vpop.permute.xlu0 %1541
  %1543 = vrot.lane.b32.xlu0 %v211, 112
  %v1544 = vpop.permute.xlu0 %1543
  %1545 = vrot.lane.b32.xlu0 %v212, 112
  %v1546 = vpop.permute.xlu0 %1545
  %1547 = vrot.lane.b32.xlu0 %v213, 112
  %v1548 = vpop.permute.xlu0 %1547
  %1549 = vrot.lane.b32.xlu0 %v214, 112
  %v1550 = vpop.permute.xlu0 %1549
  %1551 = vrot.lane.b32.xlu0 %v215, 112
  %v1552 = vpop.permute.xlu0 %1551
  %1553 = vrot.lane.b32.xlu0 %v216, 112
  %v1554 = vpop.permute.xlu0 %1553
  %1555 = vrot.lane.b32.xlu0 %v217, 112
  %v1556 = vpop.permute.xlu0 %1555
  %1557 = vrot.lane.b32.xlu0 %v218, 112
  %v1558 = vpop.permute.xlu0 %1557
  %1559 = vrot.lane.b32.xlu0 %v219, 112
  %v1560 = vpop.permute.xlu0 %1559
  %1561 = vrot.lane.b32.xlu0 %v220, 112
  %v1562 = vpop.permute.xlu0 %1561
  %1563 = vrot.lane.b32.xlu0 %v221, 112
  %v1564 = vpop.permute.xlu0 %1563
  %1565 = vrot.lane.b32.xlu0 %v222, 112
  %v1566 = vpop.permute.xlu0 %1565
  %1567 = vrot.lane.b32.xlu0 %v223, 112
  %v1568 = vpop.permute.xlu0 %1567
  %1569 = vrot.lane.b32.xlu0 %v224, 112
  %v1570 = vpop.permute.xlu0 %1569
  %1571 = vrot.lane.b32.xlu0 %v225, 112
  %v1572 = vpop.permute.xlu0 %1571
  %1573 = vrot.lane.b32.xlu0 %v226, 112
  %v1574 = vpop.permute.xlu0 %1573
  %1575 = vrot.lane.b32.xlu0 %v227, 112
  %v1576 = vpop.permute.xlu0 %1575
  %1577 = vrot.lane.b32.xlu0 %v228, 112
  %v1578 = vpop.permute.xlu0 %1577
  %1579 = vrot.lane.b32.xlu0 %v229, 112
  %v1580 = vpop.permute.xlu0 %1579
  %vm1581 = vcmask 916480
  %v1582 = vsel %vm1581, %v1198, %v1200
  %v1583 = vsel %vm1581, %v1200, %v1202
  %v1584 = vsel %vm1581, %v1202, %v1204
  %v1585 = vsel %vm1581, %v1204, %v1206
  %v1586 = vsel %vm1581, %v1206, %v1208
  %v1587 = vsel %vm1581, %v1208, %v1210
  %v1588 = vsel %vm1581, %v1210, %v1212
  %v1589 = vsel %vm1581, %v1212, %v1214
  %v1590 = vsel %vm1581, %v1214, %v1216
  %v1591 = vsel %vm1581, %v1216, %v1218
  %v1592 = vsel %vm1581, %v1218, %v1220
  %v1593 = vsel %vm1581, %v1220, %v1222
  %v1594 = vsel %vm1581, %v1222, %v1224
  %v1595 = vsel %vm1581, %v1224, %v1226
  %v1596 = vsel %vm1581, %v1226, %v1228
  %v1597 = vsel %vm1581, %v1228, %v1230
  %v1598 = vsel %vm1581, %v1230, %v1232
  %v1599 = vsel %vm1581, %v1232, %v1234
  %v1600 = vsel %vm1581, %v1234, %v1236
  %v1601 = vsel %vm1581, %v1236, %v1238
  %v1602 = vsel %vm1581, %v1238, %v1240
  %v1603 = vsel %vm1581, %v1240, %v1242
  %v1604 = vsel %vm1581, %v1242, %v1244
  %v1605 = vsel %vm1581, %v1244, %v1246
  %v1606 = vsel %vm1581, %v1246, %v1248
  %v1607 = vsel %vm1581, %v1248, %v1250
  %v1608 = vsel %vm1581, %v1250, %v1252
  %v1609 = vsel %vm1581, %v1252, %v1254
  %v1610 = vsel %vm1581, %v1254, %v1256
  %v1611 = vsel %vm1581, %v1256, %v1258
  %v1612 = vsel %vm1581, %v1258, %v1260
  %v1613 = vsel %vm1581, %v1262, %v1264
  %v1614 = vsel %vm1581, %v1264, %v1266
  %v1615 = vsel %vm1581, %v1266, %v1268
  %v1616 = vsel %vm1581, %v1268, %v1270
  %v1617 = vsel %vm1581, %v1270, %v1272
  %v1618 = vsel %vm1581, %v1272, %v1274
  %v1619 = vsel %vm1581, %v1274, %v1276
  %v1620 = vsel %vm1581, %v1276, %v1278
  %v1621 = vsel %vm1581, %v1278, %v1280
  %v1622 = vsel %vm1581, %v1280, %v1282
  %v1623 = vsel %vm1581, %v1282, %v1284
  %v1624 = vsel %vm1581, %v1284, %v1286
  %v1625 = vsel %vm1581, %v1286, %v1288
  %v1626 = vsel %vm1581, %v1288, %v1290
  %v1627 = vsel %vm1581, %v1290, %v1292
  %v1628 = vsel %vm1581, %v1292, %v1294
  %v1629 = vsel %vm1581, %v1294, %v1296
  %v1630 = vsel %vm1581, %v1296, %v1298
  %v1631 = vsel %vm1581, %v1298, %v1300
  %v1632 = vsel %vm1581, %v1300, %v1302
  %v1633 = vsel %vm1581, %v1302, %v1304
  %v1634 = vsel %vm1581, %v1304, %v1306
  %v1635 = vsel %vm1581, %v1306, %v1308
  %v1636 = vsel %vm1581, %v1308, %v1310
  %v1637 = vsel %vm1581, %v1310, %v1312
  %v1638 = vsel %vm1581, %v1312, %v1314
  %v1639 = vsel %vm1581, %v1314, %v1316
  %v1640 = vsel %vm1581, %v1316, %v1318
  %v1641 = vsel %vm1581, %v1318, %v1320
  %v1642 = vsel %vm1581, %v1320, %v1322
  %v1643 = vsel %vm1581, %v1322, %v1324
  %v1644 = vsel %vm1581, %v1326, %v1328
  %v1645 = vsel %vm1581, %v1328, %v1330
  %v1646 = vsel %vm1581, %v1330, %v1332
  %v1647 = vsel %vm1581, %v1332, %v1334
  %v1648 = vsel %vm1581, %v1334, %v1336
  %v1649 = vsel %vm1581, %v1336, %v1338
  %v1650 = vsel %vm1581, %v1338, %v1340
  %v1651 = vsel %vm1581, %v1340, %v1342
  %v1652 = vsel %vm1581, %v1342, %v1344
  %v1653 = vsel %vm1581, %v1344, %v1346
  %v1654 = vsel %vm1581, %v1346, %v1348
  %v1655 = vsel %vm1581, %v1348, %v1350
  %v1656 = vsel %vm1581, %v1350, %v1352
  %v1657 = vsel %vm1581, %v1352, %v1354
  %v1658 = vsel %vm1581, %v1354, %v1356
  %v1659 = vsel %vm1581, %v1356, %v1358
  %v1660 = vsel %vm1581, %v1358, %v1360
  %v1661 = vsel %vm1581, %v1360, %v1362
  %v1662 = vsel %vm1581, %v1362, %v1364
  %v1663 = vsel %vm1581, %v1364, %v1366
  %v1664 = vsel %vm1581, %v1366, %v1368
  %v1665 = vsel %vm1581, %v1368, %v1370
  %v1666 = vsel %vm1581, %v1370, %v1372
  %v1667 = vsel %vm1581, %v1372, %v1374
  %v1668 = vsel %vm1581, %v1374, %v1376
  %v1669 = vsel %vm1581, %v1376, %v1378
  %v1670 = vsel %vm1581, %v1378, %v1380
  %v1671 = vsel %vm1581, %v1380, %v1382
  %v1672 = vsel %vm1581, %v1382, %v1384
  %v1673 = vsel %vm1581, %v1384, %v1386
  %v1674 = vsel %vm1581, %v1386, %v1388
  %v1675 = vsel %vm1581, %v1390, %v1392
  %v1676 = vsel %vm1581, %v1392, %v1394
  %v1677 = vsel %vm1581, %v1394, %v1396
  %v1678 = vsel %vm1581, %v1396, %v1398
  %v1679 = vsel %vm1581, %v1398, %v1400
  %v1680 = vsel %vm1581, %v1400, %v1402
  %v1681 = vsel %vm1581, %v1402, %v1404
  %v1682 = vsel %vm1581, %v1404, %v1406
  %v1683 = vsel %vm1581, %v1406, %v1408
  %v1684 = vsel %vm1581, %v1408, %v1410
  %v1685 = vsel %vm1581, %v1410, %v1412
  %v1686 = vsel %vm1581, %v1412, %v1414
  %v1687 = vsel %vm1581, %v1414, %v1416
  %v1688 = vsel %vm1581, %v1416, %v1418
  %v1689 = vsel %vm1581, %v1418, %v1420
  %v1690 = vsel %vm1581, %v1420, %v1422
  %v1691 = vsel %vm1581, %v1422, %v1424
  %v1692 = vsel %vm1581, %v1424, %v1426
  %v1693 = vsel %vm1581, %v1426, %v1428
  %v1694 = vsel %vm1581, %v1428, %v1430
  %v1695 = vsel %vm1581, %v1430, %v1432
  %v1696 = vsel %vm1581, %v1432, %v1434
  %v1697 = vsel %vm1581, %v1434, %v1436
  %v1698 = vsel %vm1581, %v1436, %v1438
  %v1699 = vsel %vm1581, %v1438, %v1440
  %v1700 = vsel %vm1581, %v1440, %v1442
  %v1701 = vsel %vm1581, %v1442, %v1444
  %v1702 = vsel %vm1581, %v1444, %v1446
  %v1703 = vsel %vm1581, %v1446, %v1448
  %v1704 = vsel %vm1581, %v1448, %v1450
  %v1705 = vsel %vm1581, %v1450, %v1452
  %v1706 = vsel %vm1581, %v1454, %v1456
  %v1707 = vsel %vm1581, %v1456, %v1458
  %v1708 = vsel %vm1581, %v1458, %v1460
  %v1709 = vsel %vm1581, %v1460, %v1462
  %v1710 = vsel %vm1581, %v1462, %v1464
  %v1711 = vsel %vm1581, %v1464, %v1466
  %v1712 = vsel %vm1581, %v1466, %v1468
  %v1713 = vsel %vm1581, %v1468, %v1470
  %v1714 = vsel %vm1581, %v1470, %v1472
  %v1715 = vsel %vm1581, %v1472, %v1474
  %v1716 = vsel %vm1581, %v1474, %v1476
  %v1717 = vsel %vm1581, %v1476, %v1478
  %v1718 = vsel %vm1581, %v1478, %v1480
  %v1719 = vsel %vm1581, %v1480, %v1482
  %v1720 = vsel %vm1581, %v1482, %v1484
  %v1721 = vsel %vm1581, %v1484, %v1486
  %v1722 = vsel %vm1581, %v1486, %v1488
  %v1723 = vsel %vm1581, %v1488, %v1490
  %v1724 = vsel %vm1581, %v1490, %v1492
  %v1725 = vsel %vm1581, %v1492, %v1494
  %v1726 = vsel %vm1581, %v1494, %v1496
  %v1727 = vsel %vm1581, %v1496, %v1498
  %v1728 = vsel %vm1581, %v1498, %v1500
  %v1729 = vsel %vm1581, %v1500, %v1502
  %v1730 = vsel %vm1581, %v1502, %v1504
  %v1731 = vsel %vm1581, %v1504, %v1506
  %v1732 = vsel %vm1581, %v1506, %v1508
  %v1733 = vsel %vm1581, %v1508, %v1510
  %v1734 = vsel %vm1581, %v1510, %v1512
  %v1735 = vsel %vm1581, %v1512, %v1514
  %v1736 = vsel %vm1581, %v1514, %v1516
  %v1737 = vsel %vm1581, %v1518, %v1520
  %v1738 = vsel %vm1581, %v1520, %v1522
  %v1739 = vsel %vm1581, %v1522, %v1524
  %v1740 = vsel %vm1581, %v1524, %v1526
  %v1741 = vsel %vm1581, %v1526, %v1528
  %v1742 = vsel %vm1581, %v1528, %v1530
  %v1743 = vsel %vm1581, %v1530, %v1532
  %v1744 = vsel %vm1581, %v1532, %v1534
  %v1745 = vsel %vm1581, %v1534, %v1536
  %v1746 = vsel %vm1581, %v1536, %v1538
  %v1747 = vsel %vm1581, %v1538, %v1540
  %v1748 = vsel %vm1581, %v1540, %v1542
  %v1749 = vsel %vm1581, %v1542, %v1544
  %v1750 = vsel %vm1581, %v1544, %v1546
  %v1751 = vsel %vm1581, %v1546, %v1548
  %v1752 = vsel %vm1581, %v1548, %v1550
  %v1753 = vsel %vm1581, %v1550, %v1552
  %v1754 = vsel %vm1581, %v1552, %v1554
  %v1755 = vsel %vm1581, %v1554, %v1556
  %v1756 = vsel %vm1581, %v1556, %v1558
  %v1757 = vsel %vm1581, %v1558, %v1560
  %v1758 = vsel %vm1581, %v1560, %v1562
  %v1759 = vsel %vm1581, %v1562, %v1564
  %v1760 = vsel %vm1581, %v1564, %v1566
  %v1761 = vsel %vm1581, %v1566, %v1568
  %v1762 = vsel %vm1581, %v1568, %v1570
  %v1763 = vsel %vm1581, %v1570, %v1572
  %v1764 = vsel %vm1581, %v1572, %v1574
  %v1765 = vsel %vm1581, %v1574, %v1576
  %v1766 = vsel %vm1581, %v1576, %v1578
  %v1767 = vsel %vm1581, %v1578, %v1580
  %v1966 = vsel %vm1581, %v1260, %v1198
  %v1967 = vsel %vm1581, %v1324, %v1262
  %v1968 = vsel %vm1581, %v1388, %v1326
  %v1969 = vsel %vm1581, %v1452, %v1390
  %v1970 = vsel %vm1581, %v1516, %v1454
  %v1971 = vsel %vm1581, %v1580, %v1518
  %1972 = vrot.lane.b32.xlu0 %v38, 111
  %v1973 = vpop.permute.xlu0 %1972
  %1974 = vrot.lane.b32.xlu0 %v39, 111
  %v1975 = vpop.permute.xlu0 %1974
  %1976 = vrot.lane.b32.xlu0 %v40, 111
  %v1977 = vpop.permute.xlu0 %1976
  %1978 = vrot.lane.b32.xlu0 %v41, 111
  %v1979 = vpop.permute.xlu0 %1978
  %1980 = vrot.lane.b32.xlu0 %v42, 111
  %v1981 = vpop.permute.xlu0 %1980
  %1982 = vrot.lane.b32.xlu0 %v43, 111
  %v1983 = vpop.permute.xlu0 %1982
  %1984 = vrot.lane.b32.xlu0 %v44, 111
  %v1985 = vpop.permute.xlu0 %1984
  %1986 = vrot.lane.b32.xlu0 %v45, 111
  %v1987 = vpop.permute.xlu0 %1986
  %1988 = vrot.lane.b32.xlu0 %v46, 111
  %v1989 = vpop.permute.xlu0 %1988
  %1990 = vrot.lane.b32.xlu0 %v47, 111
  %v1991 = vpop.permute.xlu0 %1990
  %1992 = vrot.lane.b32.xlu0 %v48, 111
  %v1993 = vpop.permute.xlu0 %1992
  %1994 = vrot.lane.b32.xlu0 %v49, 111
  %v1995 = vpop.permute.xlu0 %1994
  %1996 = vrot.lane.b32.xlu0 %v50, 111
  %v1997 = vpop.permute.xlu0 %1996
  %1998 = vrot.lane.b32.xlu0 %v51, 111
  %v1999 = vpop.permute.xlu0 %1998
  %2000 = vrot.lane.b32.xlu0 %v52, 111
  %v2001 = vpop.permute.xlu0 %2000
  %2002 = vrot.lane.b32.xlu0 %v53, 111
  %v2003 = vpop.permute.xlu0 %2002
  %2004 = vrot.lane.b32.xlu0 %v54, 111
  %v2005 = vpop.permute.xlu0 %2004
  %2006 = vrot.lane.b32.xlu0 %v55, 111
  %v2007 = vpop.permute.xlu0 %2006
  %2008 = vrot.lane.b32.xlu0 %v56, 111
  %v2009 = vpop.permute.xlu0 %2008
  %2010 = vrot.lane.b32.xlu0 %v57, 111
  %v2011 = vpop.permute.xlu0 %2010
  %2012 = vrot.lane.b32.xlu0 %v58, 111
  %v2013 = vpop.permute.xlu0 %2012
  %2014 = vrot.lane.b32.xlu0 %v59, 111
  %v2015 = vpop.permute.xlu0 %2014
  %2016 = vrot.lane.b32.xlu0 %v60, 111
  %v2017 = vpop.permute.xlu0 %2016
  %2018 = vrot.lane.b32.xlu0 %v61, 111
  %v2019 = vpop.permute.xlu0 %2018
  %2020 = vrot.lane.b32.xlu0 %v62, 111
  %v2021 = vpop.permute.xlu0 %2020
  %2022 = vrot.lane.b32.xlu0 %v63, 111
  %v2023 = vpop.permute.xlu0 %2022
  %2024 = vrot.lane.b32.xlu0 %v64, 111
  %v2025 = vpop.permute.xlu0 %2024
  %2026 = vrot.lane.b32.xlu0 %v65, 111
  %v2027 = vpop.permute.xlu0 %2026
  %2028 = vrot.lane.b32.xlu0 %v66, 111
  %v2029 = vpop.permute.xlu0 %2028
  %2030 = vrot.lane.b32.xlu0 %v67, 111
  %v2031 = vpop.permute.xlu0 %2030
  %2032 = vrot.lane.b32.xlu0 %v68, 111
  %v2033 = vpop.permute.xlu0 %2032
  %2034 = vrot.lane.b32.xlu0 %v69, 111
  %v2035 = vpop.permute.xlu0 %2034
  %2036 = vrot.lane.b32.xlu0 %v70, 111
  %v2037 = vpop.permute.xlu0 %2036
  %2038 = vrot.lane.b32.xlu0 %v71, 111
  %v2039 = vpop.permute.xlu0 %2038
  %2040 = vrot.lane.b32.xlu0 %v72, 111
  %v2041 = vpop.permute.xlu0 %2040
  %2042 = vrot.lane.b32.xlu0 %v73, 111
  %v2043 = vpop.permute.xlu0 %2042
  %2044 = vrot.lane.b32.xlu0 %v74, 111
  %v2045 = vpop.permute.xlu0 %2044
  %2046 = vrot.lane.b32.xlu0 %v75, 111
  %v2047 = vpop.permute.xlu0 %2046
  %2048 = vrot.lane.b32.xlu0 %v76, 111
  %v2049 = vpop.permute.xlu0 %2048
  %2050 = vrot.lane.b32.xlu0 %v77, 111
  %v2051 = vpop.permute.xlu0 %2050
  %2052 = vrot.lane.b32.xlu0 %v78, 111
  %v2053 = vpop.permute.xlu0 %2052
  %2054 = vrot.lane.b32.xlu0 %v79, 111
  %v2055 = vpop.permute.xlu0 %2054
  %2056 = vrot.lane.b32.xlu0 %v80, 111
  %v2057 = vpop.permute.xlu0 %2056
  %2058 = vrot.lane.b32.xlu0 %v81, 111
  %v2059 = vpop.permute.xlu0 %2058
  %2060 = vrot.lane.b32.xlu0 %v82, 111
  %v2061 = vpop.permute.xlu0 %2060
  %2062 = vrot.lane.b32.xlu0 %v83, 111
  %v2063 = vpop.permute.xlu0 %2062
  %2064 = vrot.lane.b32.xlu0 %v84, 111
  %v2065 = vpop.permute.xlu0 %2064
  %2066 = vrot.lane.b32.xlu0 %v85, 111
  %v2067 = vpop.permute.xlu0 %2066
  %2068 = vrot.lane.b32.xlu0 %v86, 111
  %v2069 = vpop.permute.xlu0 %2068
  %2070 = vrot.lane.b32.xlu0 %v87, 111
  %v2071 = vpop.permute.xlu0 %2070
  %2072 = vrot.lane.b32.xlu0 %v88, 111
  %v2073 = vpop.permute.xlu0 %2072
  %2074 = vrot.lane.b32.xlu0 %v89, 111
  %v2075 = vpop.permute.xlu0 %2074
  %2076 = vrot.lane.b32.xlu0 %v90, 111
  %v2077 = vpop.permute.xlu0 %2076
  %2078 = vrot.lane.b32.xlu0 %v91, 111
  %v2079 = vpop.permute.xlu0 %2078
  %2080 = vrot.lane.b32.xlu0 %v92, 111
  %v2081 = vpop.permute.xlu0 %2080
  %2082 = vrot.lane.b32.xlu0 %v93, 111
  %v2083 = vpop.permute.xlu0 %2082
  %2084 = vrot.lane.b32.xlu0 %v94, 111
  %v2085 = vpop.permute.xlu0 %2084
  %2086 = vrot.lane.b32.xlu0 %v95, 111
  %v2087 = vpop.permute.xlu0 %2086
  %2088 = vrot.lane.b32.xlu0 %v96, 111
  %v2089 = vpop.permute.xlu0 %2088
  %2090 = vrot.lane.b32.xlu0 %v97, 111
  %v2091 = vpop.permute.xlu0 %2090
  %2092 = vrot.lane.b32.xlu0 %v98, 111
  %v2093 = vpop.permute.xlu0 %2092
  %2094 = vrot.lane.b32.xlu0 %v99, 111
  %v2095 = vpop.permute.xlu0 %2094
  %2096 = vrot.lane.b32.xlu0 %v100, 111
  %v2097 = vpop.permute.xlu0 %2096
  %2098 = vrot.lane.b32.xlu0 %v101, 111
  %v2099 = vpop.permute.xlu0 %2098
  %2100 = vrot.lane.b32.xlu0 %v102, 111
  %v2101 = vpop.permute.xlu0 %2100
  %2102 = vrot.lane.b32.xlu0 %v103, 111
  %v2103 = vpop.permute.xlu0 %2102
  %2104 = vrot.lane.b32.xlu0 %v104, 111
  %v2105 = vpop.permute.xlu0 %2104
  %2106 = vrot.lane.b32.xlu0 %v105, 111
  %v2107 = vpop.permute.xlu0 %2106
  %2108 = vrot.lane.b32.xlu0 %v106, 111
  %v2109 = vpop.permute.xlu0 %2108
  %2110 = vrot.lane.b32.xlu0 %v107, 111
  %v2111 = vpop.permute.xlu0 %2110
  %2112 = vrot.lane.b32.xlu0 %v108, 111
  %v2113 = vpop.permute.xlu0 %2112
  %2114 = vrot.lane.b32.xlu0 %v109, 111
  %v2115 = vpop.permute.xlu0 %2114
  %2116 = vrot.lane.b32.xlu0 %v110, 111
  %v2117 = vpop.permute.xlu0 %2116
  %2118 = vrot.lane.b32.xlu0 %v111, 111
  %v2119 = vpop.permute.xlu0 %2118
  %2120 = vrot.lane.b32.xlu0 %v112, 111
  %v2121 = vpop.permute.xlu0 %2120
  %2122 = vrot.lane.b32.xlu0 %v113, 111
  %v2123 = vpop.permute.xlu0 %2122
  %2124 = vrot.lane.b32.xlu0 %v114, 111
  %v2125 = vpop.permute.xlu0 %2124
  %2126 = vrot.lane.b32.xlu0 %v115, 111
  %v2127 = vpop.permute.xlu0 %2126
  %2128 = vrot.lane.b32.xlu0 %v116, 111
  %v2129 = vpop.permute.xlu0 %2128
  %2130 = vrot.lane.b32.xlu0 %v117, 111
  %v2131 = vpop.permute.xlu0 %2130
  %2132 = vrot.lane.b32.xlu0 %v118, 111
  %v2133 = vpop.permute.xlu0 %2132
  %2134 = vrot.lane.b32.xlu0 %v119, 111
  %v2135 = vpop.permute.xlu0 %2134
  %2136 = vrot.lane.b32.xlu0 %v120, 111
  %v2137 = vpop.permute.xlu0 %2136
  %2138 = vrot.lane.b32.xlu0 %v121, 111
  %v2139 = vpop.permute.xlu0 %2138
  %2140 = vrot.lane.b32.xlu0 %v122, 111
  %v2141 = vpop.permute.xlu0 %2140
  %2142 = vrot.lane.b32.xlu0 %v123, 111
  %v2143 = vpop.permute.xlu0 %2142
  %2144 = vrot.lane.b32.xlu0 %v124, 111
  %v2145 = vpop.permute.xlu0 %2144
  %2146 = vrot.lane.b32.xlu0 %v125, 111
  %v2147 = vpop.permute.xlu0 %2146
  %2148 = vrot.lane.b32.xlu0 %v126, 111
  %v2149 = vpop.permute.xlu0 %2148
  %2150 = vrot.lane.b32.xlu0 %v127, 111
  %v2151 = vpop.permute.xlu0 %2150
  %2152 = vrot.lane.b32.xlu0 %v128, 111
  %v2153 = vpop.permute.xlu0 %2152
  %2154 = vrot.lane.b32.xlu0 %v129, 111
  %v2155 = vpop.permute.xlu0 %2154
  %2156 = vrot.lane.b32.xlu0 %v130, 111
  %v2157 = vpop.permute.xlu0 %2156
  %2158 = vrot.lane.b32.xlu0 %v131, 111
  %v2159 = vpop.permute.xlu0 %2158
  %2160 = vrot.lane.b32.xlu0 %v132, 111
  %v2161 = vpop.permute.xlu0 %2160
  %2162 = vrot.lane.b32.xlu0 %v133, 111
  %v2163 = vpop.permute.xlu0 %2162
  %2164 = vrot.lane.b32.xlu0 %v134, 111
  %v2165 = vpop.permute.xlu0 %2164
  %2166 = vrot.lane.b32.xlu0 %v135, 111
  %v2167 = vpop.permute.xlu0 %2166
  %2168 = vrot.lane.b32.xlu0 %v136, 111
  %v2169 = vpop.permute.xlu0 %2168
  %2170 = vrot.lane.b32.xlu0 %v137, 111
  %v2171 = vpop.permute.xlu0 %2170
  %2172 = vrot.lane.b32.xlu0 %v138, 111
  %v2173 = vpop.permute.xlu0 %2172
  %2174 = vrot.lane.b32.xlu0 %v139, 111
  %v2175 = vpop.permute.xlu0 %2174
  %2176 = vrot.lane.b32.xlu0 %v140, 111
  %v2177 = vpop.permute.xlu0 %2176
  %2178 = vrot.lane.b32.xlu0 %v141, 111
  %v2179 = vpop.permute.xlu0 %2178
  %2180 = vrot.lane.b32.xlu0 %v142, 111
  %v2181 = vpop.permute.xlu0 %2180
  %2182 = vrot.lane.b32.xlu0 %v143, 111
  %v2183 = vpop.permute.xlu0 %2182
  %2184 = vrot.lane.b32.xlu0 %v144, 111
  %v2185 = vpop.permute.xlu0 %2184
  %2186 = vrot.lane.b32.xlu0 %v145, 111
  %v2187 = vpop.permute.xlu0 %2186
  %2188 = vrot.lane.b32.xlu0 %v146, 111
  %v2189 = vpop.permute.xlu0 %2188
  %2190 = vrot.lane.b32.xlu0 %v147, 111
  %v2191 = vpop.permute.xlu0 %2190
  %2192 = vrot.lane.b32.xlu0 %v148, 111
  %v2193 = vpop.permute.xlu0 %2192
  %2194 = vrot.lane.b32.xlu0 %v149, 111
  %v2195 = vpop.permute.xlu0 %2194
  %2196 = vrot.lane.b32.xlu0 %v150, 111
  %v2197 = vpop.permute.xlu0 %2196
  %2198 = vrot.lane.b32.xlu0 %v151, 111
  %v2199 = vpop.permute.xlu0 %2198
  %2200 = vrot.lane.b32.xlu0 %v152, 111
  %v2201 = vpop.permute.xlu0 %2200
  %2202 = vrot.lane.b32.xlu0 %v153, 111
  %v2203 = vpop.permute.xlu0 %2202
  %2204 = vrot.lane.b32.xlu0 %v154, 111
  %v2205 = vpop.permute.xlu0 %2204
  %2206 = vrot.lane.b32.xlu0 %v155, 111
  %v2207 = vpop.permute.xlu0 %2206
  %2208 = vrot.lane.b32.xlu0 %v156, 111
  %v2209 = vpop.permute.xlu0 %2208
  %2210 = vrot.lane.b32.xlu0 %v157, 111
  %v2211 = vpop.permute.xlu0 %2210
  %2212 = vrot.lane.b32.xlu0 %v158, 111
  %v2213 = vpop.permute.xlu0 %2212
  %2214 = vrot.lane.b32.xlu0 %v159, 111
  %v2215 = vpop.permute.xlu0 %2214
  %2216 = vrot.lane.b32.xlu0 %v160, 111
  %v2217 = vpop.permute.xlu0 %2216
  %2218 = vrot.lane.b32.xlu0 %v161, 111
  %v2219 = vpop.permute.xlu0 %2218
  %2220 = vrot.lane.b32.xlu0 %v162, 111
  %v2221 = vpop.permute.xlu0 %2220
  %2222 = vrot.lane.b32.xlu0 %v163, 111
  %v2223 = vpop.permute.xlu0 %2222
  %2224 = vrot.lane.b32.xlu0 %v164, 111
  %v2225 = vpop.permute.xlu0 %2224
  %2226 = vrot.lane.b32.xlu0 %v165, 111
  %v2227 = vpop.permute.xlu0 %2226
  %2228 = vrot.lane.b32.xlu0 %v166, 111
  %v2229 = vpop.permute.xlu0 %2228
  %2230 = vrot.lane.b32.xlu0 %v167, 111
  %v2231 = vpop.permute.xlu0 %2230
  %2232 = vrot.lane.b32.xlu0 %v168, 111
  %v2233 = vpop.permute.xlu0 %2232
  %2234 = vrot.lane.b32.xlu0 %v169, 111
  %v2235 = vpop.permute.xlu0 %2234
  %2236 = vrot.lane.b32.xlu0 %v170, 111
  %v2237 = vpop.permute.xlu0 %2236
  %2238 = vrot.lane.b32.xlu0 %v171, 111
  %v2239 = vpop.permute.xlu0 %2238
  %2240 = vrot.lane.b32.xlu0 %v172, 111
  %v2241 = vpop.permute.xlu0 %2240
  %2242 = vrot.lane.b32.xlu0 %v173, 111
  %v2243 = vpop.permute.xlu0 %2242
  %2244 = vrot.lane.b32.xlu0 %v174, 111
  %v2245 = vpop.permute.xlu0 %2244
  %2246 = vrot.lane.b32.xlu0 %v175, 111
  %v2247 = vpop.permute.xlu0 %2246
  %2248 = vrot.lane.b32.xlu0 %v176, 111
  %v2249 = vpop.permute.xlu0 %2248
  %2250 = vrot.lane.b32.xlu0 %v177, 111
  %v2251 = vpop.permute.xlu0 %2250
  %2252 = vrot.lane.b32.xlu0 %v178, 111
  %v2253 = vpop.permute.xlu0 %2252
  %2254 = vrot.lane.b32.xlu0 %v179, 111
  %v2255 = vpop.permute.xlu0 %2254
  %2256 = vrot.lane.b32.xlu0 %v180, 111
  %v2257 = vpop.permute.xlu0 %2256
  %2258 = vrot.lane.b32.xlu0 %v181, 111
  %v2259 = vpop.permute.xlu0 %2258
  %2260 = vrot.lane.b32.xlu0 %v182, 111
  %v2261 = vpop.permute.xlu0 %2260
  %2262 = vrot.lane.b32.xlu0 %v183, 111
  %v2263 = vpop.permute.xlu0 %2262
  %2264 = vrot.lane.b32.xlu0 %v184, 111
  %v2265 = vpop.permute.xlu0 %2264
  %2266 = vrot.lane.b32.xlu0 %v185, 111
  %v2267 = vpop.permute.xlu0 %2266
  %2268 = vrot.lane.b32.xlu0 %v186, 111
  %v2269 = vpop.permute.xlu0 %2268
  %2270 = vrot.lane.b32.xlu0 %v187, 111
  %v2271 = vpop.permute.xlu0 %2270
  %2272 = vrot.lane.b32.xlu0 %v188, 111
  %v2273 = vpop.permute.xlu0 %2272
  %2274 = vrot.lane.b32.xlu0 %v189, 111
  %v2275 = vpop.permute.xlu0 %2274
  %2276 = vrot.lane.b32.xlu0 %v190, 111
  %v2277 = vpop.permute.xlu0 %2276
  %2278 = vrot.lane.b32.xlu0 %v191, 111
  %v2279 = vpop.permute.xlu0 %2278
  %2280 = vrot.lane.b32.xlu0 %v192, 111
  %v2281 = vpop.permute.xlu0 %2280
  %2282 = vrot.lane.b32.xlu0 %v193, 111
  %v2283 = vpop.permute.xlu0 %2282
  %2284 = vrot.lane.b32.xlu0 %v194, 111
  %v2285 = vpop.permute.xlu0 %2284
  %2286 = vrot.lane.b32.xlu0 %v195, 111
  %v2287 = vpop.permute.xlu0 %2286
  %2288 = vrot.lane.b32.xlu0 %v196, 111
  %v2289 = vpop.permute.xlu0 %2288
  %2290 = vrot.lane.b32.xlu0 %v197, 111
  %v2291 = vpop.permute.xlu0 %2290
  %2292 = vrot.lane.b32.xlu0 %v198, 111
  %v2293 = vpop.permute.xlu0 %2292
  %2294 = vrot.lane.b32.xlu0 %v199, 111
  %v2295 = vpop.permute.xlu0 %2294
  %2296 = vrot.lane.b32.xlu0 %v200, 111
  %v2297 = vpop.permute.xlu0 %2296
  %2298 = vrot.lane.b32.xlu0 %v201, 111
  %v2299 = vpop.permute.xlu0 %2298
  %2300 = vrot.lane.b32.xlu0 %v202, 111
  %v2301 = vpop.permute.xlu0 %2300
  %2302 = vrot.lane.b32.xlu0 %v203, 111
  %v2303 = vpop.permute.xlu0 %2302
  %2304 = vrot.lane.b32.xlu0 %v204, 111
  %v2305 = vpop.permute.xlu0 %2304
  %2306 = vrot.lane.b32.xlu0 %v205, 111
  %v2307 = vpop.permute.xlu0 %2306
  %2308 = vrot.lane.b32.xlu0 %v206, 111
  %v2309 = vpop.permute.xlu0 %2308
  %2310 = vrot.lane.b32.xlu0 %v207, 111
  %v2311 = vpop.permute.xlu0 %2310
  %2312 = vrot.lane.b32.xlu0 %v208, 111
  %v2313 = vpop.permute.xlu0 %2312
  %2314 = vrot.lane.b32.xlu0 %v209, 111
  %v2315 = vpop.permute.xlu0 %2314
  %2316 = vrot.lane.b32.xlu0 %v210, 111
  %v2317 = vpop.permute.xlu0 %2316
  %2318 = vrot.lane.b32.xlu0 %v211, 111
  %v2319 = vpop.permute.xlu0 %2318
  %2320 = vrot.lane.b32.xlu0 %v212, 111
  %v2321 = vpop.permute.xlu0 %2320
  %2322 = vrot.lane.b32.xlu0 %v213, 111
  %v2323 = vpop.permute.xlu0 %2322
  %2324 = vrot.lane.b32.xlu0 %v214, 111
  %v2325 = vpop.permute.xlu0 %2324
  %2326 = vrot.lane.b32.xlu0 %v215, 111
  %v2327 = vpop.permute.xlu0 %2326
  %2328 = vrot.lane.b32.xlu0 %v216, 111
  %v2329 = vpop.permute.xlu0 %2328
  %2330 = vrot.lane.b32.xlu0 %v217, 111
  %v2331 = vpop.permute.xlu0 %2330
  %2332 = vrot.lane.b32.xlu0 %v218, 111
  %v2333 = vpop.permute.xlu0 %2332
  %2334 = vrot.lane.b32.xlu0 %v219, 111
  %v2335 = vpop.permute.xlu0 %2334
  %2336 = vrot.lane.b32.xlu0 %v220, 111
  %v2337 = vpop.permute.xlu0 %2336
  %2338 = vrot.lane.b32.xlu0 %v221, 111
  %v2339 = vpop.permute.xlu0 %2338
  %2340 = vrot.lane.b32.xlu0 %v222, 111
  %v2341 = vpop.permute.xlu0 %2340
  %2342 = vrot.lane.b32.xlu0 %v223, 111
  %v2343 = vpop.permute.xlu0 %2342
  %2344 = vrot.lane.b32.xlu0 %v224, 111
  %v2345 = vpop.permute.xlu0 %2344
  %2346 = vrot.lane.b32.xlu0 %v225, 111
  %v2347 = vpop.permute.xlu0 %2346
  %2348 = vrot.lane.b32.xlu0 %v226, 111
  %v2349 = vpop.permute.xlu0 %2348
  %2350 = vrot.lane.b32.xlu0 %v227, 111
  %v2351 = vpop.permute.xlu0 %2350
  %2352 = vrot.lane.b32.xlu0 %v228, 111
  %v2353 = vpop.permute.xlu0 %2352
  %2354 = vrot.lane.b32.xlu0 %v229, 111
  %v2355 = vpop.permute.xlu0 %2354
  %vm2356 = vcmask 908288
  %v2357 = vsel %vm2356, %v1973, %v1975
  %v2358 = vsel %vm2356, %v1975, %v1977
  %v2359 = vsel %vm2356, %v1977, %v1979
  %v2360 = vsel %vm2356, %v1979, %v1981
  %v2361 = vsel %vm2356, %v1981, %v1983
  %v2362 = vsel %vm2356, %v1983, %v1985
  %v2363 = vsel %vm2356, %v1985, %v1987
  %v2364 = vsel %vm2356, %v1987, %v1989
  %v2365 = vsel %vm2356, %v1989, %v1991
  %v2366 = vsel %vm2356, %v1991, %v1993
  %v2367 = vsel %vm2356, %v1993, %v1995
  %v2368 = vsel %vm2356, %v1995, %v1997
  %v2369 = vsel %vm2356, %v1997, %v1999
  %v2370 = vsel %vm2356, %v1999, %v2001
  %v2371 = vsel %vm2356, %v2001, %v2003
  %v2372 = vsel %vm2356, %v2003, %v2005
  %v2373 = vsel %vm2356, %v2005, %v2007
  %v2374 = vsel %vm2356, %v2007, %v2009
  %v2375 = vsel %vm2356, %v2009, %v2011
  %v2376 = vsel %vm2356, %v2011, %v2013
  %v2377 = vsel %vm2356, %v2013, %v2015
  %v2378 = vsel %vm2356, %v2015, %v2017
  %v2379 = vsel %vm2356, %v2017, %v2019
  %v2380 = vsel %vm2356, %v2019, %v2021
  %v2381 = vsel %vm2356, %v2021, %v2023
  %v2382 = vsel %vm2356, %v2023, %v2025
  %v2383 = vsel %vm2356, %v2025, %v2027
  %v2384 = vsel %vm2356, %v2027, %v2029
  %v2385 = vsel %vm2356, %v2029, %v2031
  %v2386 = vsel %vm2356, %v2031, %v2033
  %v2387 = vsel %vm2356, %v2033, %v2035
  %v2388 = vsel %vm2356, %v2037, %v2039
  %v2389 = vsel %vm2356, %v2039, %v2041
  %v2390 = vsel %vm2356, %v2041, %v2043
  %v2391 = vsel %vm2356, %v2043, %v2045
  %v2392 = vsel %vm2356, %v2045, %v2047
  %v2393 = vsel %vm2356, %v2047, %v2049
  %v2394 = vsel %vm2356, %v2049, %v2051
  %v2395 = vsel %vm2356, %v2051, %v2053
  %v2396 = vsel %vm2356, %v2053, %v2055
  %v2397 = vsel %vm2356, %v2055, %v2057
  %v2398 = vsel %vm2356, %v2057, %v2059
  %v2399 = vsel %vm2356, %v2059, %v2061
  %v2400 = vsel %vm2356, %v2061, %v2063
  %v2401 = vsel %vm2356, %v2063, %v2065
  %v2402 = vsel %vm2356, %v2065, %v2067
  %v2403 = vsel %vm2356, %v2067, %v2069
  %v2404 = vsel %vm2356, %v2069, %v2071
  %v2405 = vsel %vm2356, %v2071, %v2073
  %v2406 = vsel %vm2356, %v2073, %v2075
  %v2407 = vsel %vm2356, %v2075, %v2077
  %v2408 = vsel %vm2356, %v2077, %v2079
  %v2409 = vsel %vm2356, %v2079, %v2081
  %v2410 = vsel %vm2356, %v2081, %v2083
  %v2411 = vsel %vm2356, %v2083, %v2085
  %v2412 = vsel %vm2356, %v2085, %v2087
  %v2413 = vsel %vm2356, %v2087, %v2089
  %v2414 = vsel %vm2356, %v2089, %v2091
  %v2415 = vsel %vm2356, %v2091, %v2093
  %v2416 = vsel %vm2356, %v2093, %v2095
  %v2417 = vsel %vm2356, %v2095, %v2097
  %v2418 = vsel %vm2356, %v2097, %v2099
  %v2419 = vsel %vm2356, %v2101, %v2103
  %v2420 = vsel %vm2356, %v2103, %v2105
  %v2421 = vsel %vm2356, %v2105, %v2107
  %v2422 = vsel %vm2356, %v2107, %v2109
  %v2423 = vsel %vm2356, %v2109, %v2111
  %v2424 = vsel %vm2356, %v2111, %v2113
  %v2425 = vsel %vm2356, %v2113, %v2115
  %v2426 = vsel %vm2356, %v2115, %v2117
  %v2427 = vsel %vm2356, %v2117, %v2119
  %v2428 = vsel %vm2356, %v2119, %v2121
  %v2429 = vsel %vm2356, %v2121, %v2123
  %v2430 = vsel %vm2356, %v2123, %v2125
  %v2431 = vsel %vm2356, %v2125, %v2127
  %v2432 = vsel %vm2356, %v2127, %v2129
  %v2433 = vsel %vm2356, %v2129, %v2131
  %v2434 = vsel %vm2356, %v2131, %v2133
  %v2435 = vsel %vm2356, %v2133, %v2135
  %v2436 = vsel %vm2356, %v2135, %v2137
  %v2437 = vsel %vm2356, %v2137, %v2139
  %v2438 = vsel %vm2356, %v2139, %v2141
  %v2439 = vsel %vm2356, %v2141, %v2143
  %v2440 = vsel %vm2356, %v2143, %v2145
  %v2441 = vsel %vm2356, %v2145, %v2147
  %v2442 = vsel %vm2356, %v2147, %v2149
  %v2443 = vsel %vm2356, %v2149, %v2151
  %v2444 = vsel %vm2356, %v2151, %v2153
  %v2445 = vsel %vm2356, %v2153, %v2155
  %v2446 = vsel %vm2356, %v2155, %v2157
  %v2447 = vsel %vm2356, %v2157, %v2159
  %v2448 = vsel %vm2356, %v2159, %v2161
  %v2449 = vsel %vm2356, %v2161, %v2163
  %v2450 = vsel %vm2356, %v2165, %v2167
  %v2451 = vsel %vm2356, %v2167, %v2169
  %v2452 = vsel %vm2356, %v2169, %v2171
  %v2453 = vsel %vm2356, %v2171, %v2173
  %v2454 = vsel %vm2356, %v2173, %v2175
  %v2455 = vsel %vm2356, %v2175, %v2177
  %v2456 = vsel %vm2356, %v2177, %v2179
  %v2457 = vsel %vm2356, %v2179, %v2181
  %v2458 = vsel %vm2356, %v2181, %v2183
  %v2459 = vsel %vm2356, %v2183, %v2185
  %v2460 = vsel %vm2356, %v2185, %v2187
  %v2461 = vsel %vm2356, %v2187, %v2189
  %v2462 = vsel %vm2356, %v2189, %v2191
  %v2463 = vsel %vm2356, %v2191, %v2193
  %v2464 = vsel %vm2356, %v2193, %v2195
  %v2465 = vsel %vm2356, %v2195, %v2197
  %v2466 = vsel %vm2356, %v2197, %v2199
  %v2467 = vsel %vm2356, %v2199, %v2201
  %v2468 = vsel %vm2356, %v2201, %v2203
  %v2469 = vsel %vm2356, %v2203, %v2205
  %v2470 = vsel %vm2356, %v2205, %v2207
  %v2471 = vsel %vm2356, %v2207, %v2209
  %v2472 = vsel %vm2356, %v2209, %v2211
  %v2473 = vsel %vm2356, %v2211, %v2213
  %v2474 = vsel %vm2356, %v2213, %v2215
  %v2475 = vsel %vm2356, %v2215, %v2217
  %v2476 = vsel %vm2356, %v2217, %v2219
  %v2477 = vsel %vm2356, %v2219, %v2221
  %v2478 = vsel %vm2356, %v2221, %v2223
  %v2479 = vsel %vm2356, %v2223, %v2225
  %v2480 = vsel %vm2356, %v2225, %v2227
  %v2481 = vsel %vm2356, %v2229, %v2231
  %v2482 = vsel %vm2356, %v2231, %v2233
  %v2483 = vsel %vm2356, %v2233, %v2235
  %v2484 = vsel %vm2356, %v2235, %v2237
  %v2485 = vsel %vm2356, %v2237, %v2239
  %v2486 = vsel %vm2356, %v2239, %v2241
  %v2487 = vsel %vm2356, %v2241, %v2243
  %v2488 = vsel %vm2356, %v2243, %v2245
  %v2489 = vsel %vm2356, %v2245, %v2247
  %v2490 = vsel %vm2356, %v2247, %v2249
  %v2491 = vsel %vm2356, %v2249, %v2251
  %v2492 = vsel %vm2356, %v2251, %v2253
  %v2493 = vsel %vm2356, %v2253, %v2255
  %v2494 = vsel %vm2356, %v2255, %v2257
  %v2495 = vsel %vm2356, %v2257, %v2259
  %v2496 = vsel %vm2356, %v2259, %v2261
  %v2497 = vsel %vm2356, %v2261, %v2263
  %v2498 = vsel %vm2356, %v2263, %v2265
  %v2499 = vsel %vm2356, %v2265, %v2267
  %v2500 = vsel %vm2356, %v2267, %v2269
  %v2501 = vsel %vm2356, %v2269, %v2271
  %v2502 = vsel %vm2356, %v2271, %v2273
  %v2503 = vsel %vm2356, %v2273, %v2275
  %v2504 = vsel %vm2356, %v2275, %v2277
  %v2505 = vsel %vm2356, %v2277, %v2279
  %v2506 = vsel %vm2356, %v2279, %v2281
  %v2507 = vsel %vm2356, %v2281, %v2283
  %v2508 = vsel %vm2356, %v2283, %v2285
  %v2509 = vsel %vm2356, %v2285, %v2287
  %v2510 = vsel %vm2356, %v2287, %v2289
  %v2511 = vsel %vm2356, %v2289, %v2291
  %v2512 = vsel %vm2356, %v2293, %v2295
  %v2513 = vsel %vm2356, %v2295, %v2297
  %v2514 = vsel %vm2356, %v2297, %v2299
  %v2515 = vsel %vm2356, %v2299, %v2301
  %v2516 = vsel %vm2356, %v2301, %v2303
  %v2517 = vsel %vm2356, %v2303, %v2305
  %v2518 = vsel %vm2356, %v2305, %v2307
  %v2519 = vsel %vm2356, %v2307, %v2309
  %v2520 = vsel %vm2356, %v2309, %v2311
  %v2521 = vsel %vm2356, %v2311, %v2313
  %v2522 = vsel %vm2356, %v2313, %v2315
  %v2523 = vsel %vm2356, %v2315, %v2317
  %v2524 = vsel %vm2356, %v2317, %v2319
  %v2525 = vsel %vm2356, %v2319, %v2321
  %v2526 = vsel %vm2356, %v2321, %v2323
  %v2527 = vsel %vm2356, %v2323, %v2325
  %v2528 = vsel %vm2356, %v2325, %v2327
  %v2529 = vsel %vm2356, %v2327, %v2329
  %v2530 = vsel %vm2356, %v2329, %v2331
  %v2531 = vsel %vm2356, %v2331, %v2333
  %v2532 = vsel %vm2356, %v2333, %v2335
  %v2533 = vsel %vm2356, %v2335, %v2337
  %v2534 = vsel %vm2356, %v2337, %v2339
  %v2535 = vsel %vm2356, %v2339, %v2341
  %v2536 = vsel %vm2356, %v2341, %v2343
  %v2537 = vsel %vm2356, %v2343, %v2345
  %v2538 = vsel %vm2356, %v2345, %v2347
  %v2539 = vsel %vm2356, %v2347, %v2349
  %v2540 = vsel %vm2356, %v2349, %v2351
  %v2541 = vsel %vm2356, %v2351, %v2353
  %v2542 = vsel %vm2356, %v2353, %v2355
  %v2741 = vsel %vm2356, %v2035, %v1973
  %v2742 = vsel %vm2356, %v2099, %v2037
  %v2743 = vsel %vm2356, %v2163, %v2101
  %v2744 = vsel %vm2356, %v2227, %v2165
  %v2745 = vsel %vm2356, %v2291, %v2229
  %v2746 = vsel %vm2356, %v2355, %v2293
  %v2747 = vld [vmem:[%s1] sm:$0xff]
  %v2748 = vld [vmem:[%s1 + $0x8] sm:$0xff]
  %v2749 = vld [vmem:[%s1 + $0x10] sm:$0xff]
  %v2750 = vld [vmem:[%s1 + $0x18] sm:$0xff]
  %v2751 = vld [vmem:[%s1 + $0x20] sm:$0xff]
  %v2752 = vld [vmem:[%s1 + $0x28] sm:$0xff]
  %v2753 = vld [vmem:[%s1 + $0x30] sm:$0xff]
  %v2754 = vld [vmem:[%s1 + $0x38] sm:$0xff]
  %v2755 = vld [vmem:[%s1 + $0x40] sm:$0xff]
  %v2756 = vld [vmem:[%s1 + $0x48] sm:$0xff]
  %v2757 = vld [vmem:[%s1 + $0x50] sm:$0xff]
  %v2758 = vld [vmem:[%s1 + $0x58] sm:$0xff]
  %v2759 = vld [vmem:[%s1 + $0x60] sm:$0xff]
  %v2760 = vld [vmem:[%s1 + $0x68] sm:$0xff]
  %v2761 = vld [vmem:[%s1 + $0x70] sm:$0xff]
  %v2762 = vld [vmem:[%s1 + $0x78] sm:$0xff]
  %v2763 = vld [vmem:[%s1 + $0x80] sm:$0xff]
  %v2764 = vld [vmem:[%s1 + $0x88] sm:$0xff]
  %v2765 = vld [vmem:[%s1 + $0x90] sm:$0xff]
  %v2766 = vld [vmem:[%s1 + $0x98] sm:$0xff]
  %v2767 = vld [vmem:[%s1 + $0xa0] sm:$0xff]
  %v2768 = vld [vmem:[%s1 + $0xa8] sm:$0xff]
  %v2769 = vld [vmem:[%s1 + $0xb0] sm:$0xff]
  %v2770 = vld [vmem:[%s1 + $0xb8] sm:$0xff]
  %vm2771 = vcmask 523264
  %v2773 = vsel %vm2771, %v2748, 0
  %v2776 = vsel %vm2771, %v2750, 0
  %v2779 = vsel %vm2771, %v2752, 0
  %v2782 = vsel %vm2771, %v2754, 0
  %v2785 = vsel %vm2771, %v2756, 0
  %v2788 = vsel %vm2771, %v2758, 0
  %v2791 = vsel %vm2771, %v2760, 0
  %v2794 = vsel %vm2771, %v2762, 0
  %v2797 = vsel %vm2771, %v2764, 0
  %v2800 = vsel %vm2771, %v2766, 0
  %v2803 = vsel %vm2771, %v2768, 0
  %v2806 = vsel %vm2771, %v2770, 0
  %2808 = vmatprep.subr.mxu0 %v1676
  %2809 = vmatpush1.msra.mxu0 %v1675
  %2810 = vmatprep.subr.mxu0 %v1645
  %2811 = vmatpush1.msra.mxu0 %v1644
  %2812 = vmatprep.subr.mxu0 %v1614
  %2813 = vmatpush1.msra.mxu0 %v1613
  %2814 = vmatprep.subr.mxu0 %v1583
  %2815 = vmatpush1.msra.mxu0 %v1582
  %2816 = vmatprep.subr.mxu0 %v963
  %2817 = vmatpush1.msra.mxu0 %v962
  %2818 = vmatprep.subr.mxu0 %v932
  %2819 = vmatpush1.msra.mxu0 %v931
  %2820 = vmatprep.subr.mxu0 %v901
  %2821 = vmatpush1.msra.mxu0 %v900
  %2822 = vmatprep.subr.mxu0 %v870
  %2823 = vmatpush1.msra.mxu0 %v869
  %2824 = vmatprep.subr.mxu0 %v839
  %2825 = vmatpush1.msra.mxu0 %v838
  %2826 = vmatprep.subr.mxu0 %v808
  %2827 = vmatpush1.msra.mxu0 %v807
  %2828 = vmatprep.subr.mxu0 %v199
  %2829 = vmatpush1.msra.mxu0 %v198
  %2830 = vmatprep.subr.mxu0 %v167
  %2831 = vmatpush1.msra.mxu0 %v166
  %2832 = vmatprep.subr.mxu0 %v135
  %2833 = vmatpush1.msra.mxu0 %v134
  %2834 = vmatprep.subr.mxu0 %v103
  %2835 = vmatpush1.msra.mxu0 %v102
  %2836 = vmatprep.subr.mxu0 %v71
  %2837 = vmatpush1.msra.mxu0 %v70
  %2838 = vmatprep.subr.mxu0 %v39
  %2839 = vmatpush1.msra.mxu0 %v38
  %2840 = vmatprep.subr.mxu0 0.0
  %2841 = vmatpush2.msra.mxu0 0.0
  %2842 = vmatprep.subr.mxu0 0.0
  %2843 = vmatpush2.msra.mxu0 0.0
  %2844 = vmatprep.subr.mxu0 0.0
  %2845 = vmatpush2.msra.mxu0 0.0
  %2846 = vmatprep.subr.mxu0 0.0
  %2847 = vmatpush2.msra.mxu0 0.0
  %2848 = vmatprep.subr.mxu0 0.0
  %2849 = vmatpush2.msra.mxu0 0.0
  %2850 = vmatprep.subr.mxu0 0.0
  %2851 = vmatpush2.msra.mxu0 0.0
  %2852 = vmatprep.subr.mxu0 0.0
  %2853 = vmatpush2.msra.mxu0 0.0
  %2854 = vmatprep.subr.mxu0 0.0
  %2855 = vmatpush2.msra.mxu0 0.0
  %2856 = vmatprep.subr.mxu0 %v2513
  %2857 = vmatpush2.msra.mxu0 %v2512
  %2858 = vmatprep.subr.mxu0 %v2482
  %2859 = vmatpush2.msra.mxu0 %v2481
  %2860 = vmatprep.subr.mxu0 %v2451
  %2861 = vmatpush2.msra.mxu0 %v2450
  %2862 = vmatprep.subr.mxu0 %v2420
  %2863 = vmatpush2.msra.mxu0 %v2419
  %2864 = vmatprep.subr.mxu0 %v2389
  %2865 = vmatpush2.msra.mxu0 %v2388
  %2866 = vmatprep.subr.mxu0 %v2358
  %2867 = vmatpush2.msra.mxu0 %v2357
  %2868 = vmatprep.subr.mxu0 %v1738
  %2869 = vmatpush2.msra.mxu0 %v1737
  %2870 = vmatprep.subr.mxu0 %v1707
  %2871 = vmatpush2.msra.mxu0 %v1706
  %2872 = vmatprep.mubr.f32.mxu0 %v2773
  %2873 = vmatmul.mubr.f32.gmra.mxu0 %v2747
  %v2874 = vpop.f32.mrf.mxu0
  %v2875 = vadd.f32 0.0, %v2874
  %v2876 = vpop.f32.mrf.mxu0
  %v2877 = vadd.f32 0.0, %v2876
  %2878 = vmatprep.mubr.f32.mxu0 %v2776
  %2879 = vmatmul.mubr.f32.gmra.mxu0 %v2749
  %v2880 = vpop.f32.mrf.mxu0
  %v2881 = vadd.f32 0.0, %v2880
  %v2882 = vpop.f32.mrf.mxu0
  %v2883 = vadd.f32 0.0, %v2882
  %2884 = vmatprep.mubr.f32.mxu0 %v2779
  %2885 = vmatmul.mubr.f32.gmra.mxu0 %v2751
  %v2886 = vpop.f32.mrf.mxu0
  %v2887 = vadd.f32 0.0, %v2886
  %v2888 = vpop.f32.mrf.mxu0
  %v2889 = vadd.f32 0.0, %v2888
  %2890 = vmatprep.mubr.f32.mxu0 %v2782
  %2891 = vmatmul.mubr.f32.gmra.mxu0 %v2753
  %v2892 = vpop.f32.mrf.mxu0
  %v2893 = vadd.f32 0.0, %v2892
  %v2894 = vpop.f32.mrf.mxu0
  %v2895 = vadd.f32 0.0, %v2894
  %2896 = vmatprep.mubr.f32.mxu0 %v2785
  %2897 = vmatmul.mubr.f32.gmra.mxu0 %v2755
  %v2898 = vpop.f32.mrf.mxu0
  %v2899 = vadd.f32 0.0, %v2898
  %v2900 = vpop.f32.mrf.mxu0
  %v2901 = vadd.f32 0.0, %v2900
  %2902 = vmatprep.mubr.f32.mxu0 %v2788
  %2903 = vmatmul.mubr.f32.gmra.mxu0 %v2757
  %v2904 = vpop.f32.mrf.mxu0
  %v2905 = vadd.f32 0.0, %v2904
  %v2906 = vpop.f32.mrf.mxu0
  %v2907 = vadd.f32 0.0, %v2906
  %2908 = vmatprep.mubr.f32.mxu0 %v2791
  %2909 = vmatmul.mubr.f32.gmra.mxu0 %v2759
  %v2910 = vpop.f32.mrf.mxu0
  %v2911 = vadd.f32 0.0, %v2910
  %v2912 = vpop.f32.mrf.mxu0
  %v2913 = vadd.f32 0.0, %v2912
  %2914 = vmatprep.mubr.f32.mxu0 %v2794
  %2915 = vmatmul.mubr.f32.gmra.mxu0 %v2761
  %v2916 = vpop.f32.mrf.mxu0
  %v2917 = vadd.f32 0.0, %v2916
  %v2918 = vpop.f32.mrf.mxu0
  %v2919 = vadd.f32 0.0, %v2918
  %2920 = vmatprep.mubr.f32.mxu0 %v2797
  %2921 = vmatmul.mubr.f32.gmra.mxu0 %v2763
  %v2922 = vpop.f32.mrf.mxu0
  %v2923 = vadd.f32 0.0, %v2922
  %v2924 = vpop.f32.mrf.mxu0
  %v2925 = vadd.f32 0.0, %v2924
  %2926 = vmatprep.mubr.f32.mxu0 %v2800
  %2927 = vmatmul.mubr.f32.gmra.mxu0 %v2765
  %v2928 = vpop.f32.mrf.mxu0
  %v2929 = vadd.f32 0.0, %v2928
  %v2930 = vpop.f32.mrf.mxu0
  %v2931 = vadd.f32 0.0, %v2930
  %2932 = vmatprep.mubr.f32.mxu0 %v2803
  %2933 = vmatmul.mubr.f32.gmra.mxu0 %v2767
  %v2934 = vpop.f32.mrf.mxu0
  %v2935 = vadd.f32 0.0, %v2934
  %v2936 = vpop.f32.mrf.mxu0
  %v2937 = vadd.f32 0.0, %v2936
  %2938 = vmatprep.mubr.f32.mxu0 %v2806
  %2939 = vmatmul.mubr.f32.gmra.mxu0 %v2769
  %v2940 = vpop.f32.mrf.mxu0
  %v2941 = vadd.f32 0.0, %v2940
  %v2942 = vpop.f32.mrf.mxu0
  %v2943 = vadd.f32 0.0, %v2942
  %2944 = vdwg.mxu0
  %2945 = vmatprep.subr.mxu0 %v1678
  %2946 = vmatpush1.msra.mxu0 %v1677
  %2947 = vmatprep.subr.mxu0 %v1647
  %2948 = vmatpush1.msra.mxu0 %v1646
  %2949 = vmatprep.subr.mxu0 %v1616
  %2950 = vmatpush1.msra.mxu0 %v1615
  %2951 = vmatprep.subr.mxu0 %v1585
  %2952 = vmatpush1.msra.mxu0 %v1584
  %2953 = vmatprep.subr.mxu0 %v965
  %2954 = vmatpush1.msra.mxu0 %v964
  %2955 = vmatprep.subr.mxu0 %v934
  %2956 = vmatpush1.msra.mxu0 %v933
  %2957 = vmatprep.subr.mxu0 %v903
  %2958 = vmatpush1.msra.mxu0 %v902
  %2959 = vmatprep.subr.mxu0 %v872
  %2960 = vmatpush1.msra.mxu0 %v871
  %2961 = vmatprep.subr.mxu0 %v841
  %2962 = vmatpush1.msra.mxu0 %v840
  %2963 = vmatprep.subr.mxu0 %v810
  %2964 = vmatpush1.msra.mxu0 %v809
  %2965 = vmatprep.subr.mxu0 %v201
  %2966 = vmatpush1.msra.mxu0 %v200
  %2967 = vmatprep.subr.mxu0 %v169
  %2968 = vmatpush1.msra.mxu0 %v168
  %2969 = vmatprep.subr.mxu0 %v137
  %2970 = vmatpush1.msra.mxu0 %v136
  %2971 = vmatprep.subr.mxu0 %v105
  %2972 = vmatpush1.msra.mxu0 %v104
  %2973 = vmatprep.subr.mxu0 %v73
  %2974 = vmatpush1.msra.mxu0 %v72
  %2975 = vmatprep.subr.mxu0 %v41
  %2976 = vmatpush1.msra.mxu0 %v40
  %2977 = vmatprep.subr.mxu0 0.0
  %2978 = vmatpush2.msra.mxu0 0.0
  %2979 = vmatprep.subr.mxu0 0.0
  %2980 = vmatpush2.msra.mxu0 0.0
  %2981 = vmatprep.subr.mxu0 0.0
  %2982 = vmatpush2.msra.mxu0 0.0
  %2983 = vmatprep.subr.mxu0 0.0
  %2984 = vmatpush2.msra.mxu0 0.0
  %2985 = vmatprep.subr.mxu0 0.0
  %2986 = vmatpush2.msra.mxu0 0.0
  %2987 = vmatprep.subr.mxu0 0.0
  %2988 = vmatpush2.msra.mxu0 0.0
  %2989 = vmatprep.subr.mxu0 0.0
  %2990 = vmatpush2.msra.mxu0 0.0
  %2991 = vmatprep.subr.mxu0 0.0
  %2992 = vmatpush2.msra.mxu0 0.0
  %2993 = vmatprep.subr.mxu0 %v2515
  %2994 = vmatpush2.msra.mxu0 %v2514
  %2995 = vmatprep.subr.mxu0 %v2484
  %2996 = vmatpush2.msra.mxu0 %v2483
  %2997 = vmatprep.subr.mxu0 %v2453
  %2998 = vmatpush2.msra.mxu0 %v2452
  %2999 = vmatprep.subr.mxu0 %v2422
  %3000 = vmatpush2.msra.mxu0 %v2421
  %3001 = vmatprep.subr.mxu0 %v2391
  %3002 = vmatpush2.msra.mxu0 %v2390
  %3003 = vmatprep.subr.mxu0 %v2360
  %3004 = vmatpush2.msra.mxu0 %v2359
  %3005 = vmatprep.subr.mxu0 %v1740
  %3006 = vmatpush2.msra.mxu0 %v1739
  %3007 = vmatprep.subr.mxu0 %v1709
  %3008 = vmatpush2.msra.mxu0 %v1708
  %3009 = vmatprep.mubr.f32.mxu0 %v2773
  %3010 = vmatmul.mubr.f32.gmra.mxu0 %v2747
  %v3011 = vpop.f32.mrf.mxu0
  %v3012 = vadd.f32 0.0, %v3011
  %v3013 = vpop.f32.mrf.mxu0
  %v3014 = vadd.f32 0.0, %v3013
  %3015 = vmatprep.mubr.f32.mxu0 %v2776
  %3016 = vmatmul.mubr.f32.gmra.mxu0 %v2749
  %v3017 = vpop.f32.mrf.mxu0
  %v3018 = vadd.f32 0.0, %v3017
  %v3019 = vpop.f32.mrf.mxu0
  %v3020 = vadd.f32 0.0, %v3019
  %3021 = vmatprep.mubr.f32.mxu0 %v2779
  %3022 = vmatmul.mubr.f32.gmra.mxu0 %v2751
  %v3023 = vpop.f32.mrf.mxu0
  %v3024 = vadd.f32 0.0, %v3023
  %v3025 = vpop.f32.mrf.mxu0
  %v3026 = vadd.f32 0.0, %v3025
  %3027 = vmatprep.mubr.f32.mxu0 %v2782
  %3028 = vmatmul.mubr.f32.gmra.mxu0 %v2753
  %v3029 = vpop.f32.mrf.mxu0
  %v3030 = vadd.f32 0.0, %v3029
  %v3031 = vpop.f32.mrf.mxu0
  %v3032 = vadd.f32 0.0, %v3031
  %3033 = vmatprep.mubr.f32.mxu0 %v2785
  %3034 = vmatmul.mubr.f32.gmra.mxu0 %v2755
  %v3035 = vpop.f32.mrf.mxu0
  %v3036 = vadd.f32 0.0, %v3035
  %v3037 = vpop.f32.mrf.mxu0
  %v3038 = vadd.f32 0.0, %v3037
  %3039 = vmatprep.mubr.f32.mxu0 %v2788
  %3040 = vmatmul.mubr.f32.gmra.mxu0 %v2757
  %v3041 = vpop.f32.mrf.mxu0
  %v3042 = vadd.f32 0.0, %v3041
  %v3043 = vpop.f32.mrf.mxu0
  %v3044 = vadd.f32 0.0, %v3043
  %3045 = vmatprep.mubr.f32.mxu0 %v2791
  %3046 = vmatmul.mubr.f32.gmra.mxu0 %v2759
  %v3047 = vpop.f32.mrf.mxu0
  %v3048 = vadd.f32 0.0, %v3047
  %v3049 = vpop.f32.mrf.mxu0
  %v3050 = vadd.f32 0.0, %v3049
  %3051 = vmatprep.mubr.f32.mxu0 %v2794
  %3052 = vmatmul.mubr.f32.gmra.mxu0 %v2761
  %v3053 = vpop.f32.mrf.mxu0
  %v3054 = vadd.f32 0.0, %v3053
  %v3055 = vpop.f32.mrf.mxu0
  %v3056 = vadd.f32 0.0, %v3055
  %3057 = vmatprep.mubr.f32.mxu0 %v2797
  %3058 = vmatmul.mubr.f32.gmra.mxu0 %v2763
  %v3059 = vpop.f32.mrf.mxu0
  %v3060 = vadd.f32 0.0, %v3059
  %v3061 = vpop.f32.mrf.mxu0
  %v3062 = vadd.f32 0.0, %v3061
  %3063 = vmatprep.mubr.f32.mxu0 %v2800
  %3064 = vmatmul.mubr.f32.gmra.mxu0 %v2765
  %v3065 = vpop.f32.mrf.mxu0
  %v3066 = vadd.f32 0.0, %v3065
  %v3067 = vpop.f32.mrf.mxu0
  %v3068 = vadd.f32 0.0, %v3067
  %3069 = vmatprep.mubr.f32.mxu0 %v2803
  %3070 = vmatmul.mubr.f32.gmra.mxu0 %v2767
  %v3071 = vpop.f32.mrf.mxu0
  %v3072 = vadd.f32 0.0, %v3071
  %v3073 = vpop.f32.mrf.mxu0
  %v3074 = vadd.f32 0.0, %v3073
  %3075 = vmatprep.mubr.f32.mxu0 %v2806
  %3076 = vmatmul.mubr.f32.gmra.mxu0 %v2769
  %v3077 = vpop.f32.mrf.mxu0
  %v3078 = vadd.f32 0.0, %v3077
  %v3079 = vpop.f32.mrf.mxu0
  %v3080 = vadd.f32 0.0, %v3079
  %3081 = vdwg.mxu0
  %3082 = vmatprep.subr.mxu0 %v1680
  %3083 = vmatpush1.msra.mxu0 %v1679
  %3084 = vmatprep.subr.mxu0 %v1649
  %3085 = vmatpush1.msra.mxu0 %v1648
  %3086 = vmatprep.subr.mxu0 %v1618
  %3087 = vmatpush1.msra.mxu0 %v1617
  %3088 = vmatprep.subr.mxu0 %v1587
  %3089 = vmatpush1.msra.mxu0 %v1586
  %3090 = vmatprep.subr.mxu0 %v967
  %3091 = vmatpush1.msra.mxu0 %v966
  %3092 = vmatprep.subr.mxu0 %v936
  %3093 = vmatpush1.msra.mxu0 %v935
  %3094 = vmatprep.subr.mxu0 %v905
  %3095 = vmatpush1.msra.mxu0 %v904
  %3096 = vmatprep.subr.mxu0 %v874
  %3097 = vmatpush1.msra.mxu0 %v873
  %3098 = vmatprep.subr.mxu0 %v843
  %3099 = vmatpush1.msra.mxu0 %v842
  %3100 = vmatprep.subr.mxu0 %v812
  %3101 = vmatpush1.msra.mxu0 %v811
  %3102 = vmatprep.subr.mxu0 %v203
  %3103 = vmatpush1.msra.mxu0 %v202
  %3104 = vmatprep.subr.mxu0 %v171
  %3105 = vmatpush1.msra.mxu0 %v170
  %3106 = vmatprep.subr.mxu0 %v139
  %3107 = vmatpush1.msra.mxu0 %v138
  %3108 = vmatprep.subr.mxu0 %v107
  %3109 = vmatpush1.msra.mxu0 %v106
  %3110 = vmatprep.subr.mxu0 %v75
  %3111 = vmatpush1.msra.mxu0 %v74
  %3112 = vmatprep.subr.mxu0 %v43
  %3113 = vmatpush1.msra.mxu0 %v42
  %3114 = vmatprep.subr.mxu0 0.0
  %3115 = vmatpush2.msra.mxu0 0.0
  %3116 = vmatprep.subr.mxu0 0.0
  %3117 = vmatpush2.msra.mxu0 0.0
  %3118 = vmatprep.subr.mxu0 0.0
  %3119 = vmatpush2.msra.mxu0 0.0
  %3120 = vmatprep.subr.mxu0 0.0
  %3121 = vmatpush2.msra.mxu0 0.0
  %3122 = vmatprep.subr.mxu0 0.0
  %3123 = vmatpush2.msra.mxu0 0.0
  %3124 = vmatprep.subr.mxu0 0.0
  %3125 = vmatpush2.msra.mxu0 0.0
  %3126 = vmatprep.subr.mxu0 0.0
  %3127 = vmatpush2.msra.mxu0 0.0
  %3128 = vmatprep.subr.mxu0 0.0
  %3129 = vmatpush2.msra.mxu0 0.0
  %3130 = vmatprep.subr.mxu0 %v2517
  %3131 = vmatpush2.msra.mxu0 %v2516
  %3132 = vmatprep.subr.mxu0 %v2486
  %3133 = vmatpush2.msra.mxu0 %v2485
  %3134 = vmatprep.subr.mxu0 %v2455
  %3135 = vmatpush2.msra.mxu0 %v2454
  %3136 = vmatprep.subr.mxu0 %v2424
  %3137 = vmatpush2.msra.mxu0 %v2423
  %3138 = vmatprep.subr.mxu0 %v2393
  %3139 = vmatpush2.msra.mxu0 %v2392
  %3140 = vmatprep.subr.mxu0 %v2362
  %3141 = vmatpush2.msra.mxu0 %v2361
  %3142 = vmatprep.subr.mxu0 %v1742
  %3143 = vmatpush2.msra.mxu0 %v1741
  %3144 = vmatprep.subr.mxu0 %v1711
  %3145 = vmatpush2.msra.mxu0 %v1710
  %3146 = vmatprep.mubr.f32.mxu0 %v2773
  %3147 = vmatmul.mubr.f32.gmra.mxu0 %v2747
  %v3148 = vpop.f32.mrf.mxu0
  %v3149 = vadd.f32 0.0, %v3148
  %v3150 = vpop.f32.mrf.mxu0
  %v3151 = vadd.f32 0.0, %v3150
  %3152 = vmatprep.mubr.f32.mxu0 %v2776
  %3153 = vmatmul.mubr.f32.gmra.mxu0 %v2749
  %v3154 = vpop.f32.mrf.mxu0
  %v3155 = vadd.f32 0.0, %v3154
  %v3156 = vpop.f32.mrf.mxu0
  %v3157 = vadd.f32 0.0, %v3156
  %3158 = vmatprep.mubr.f32.mxu0 %v2779
  %3159 = vmatmul.mubr.f32.gmra.mxu0 %v2751
  %v3160 = vpop.f32.mrf.mxu0
  %v3161 = vadd.f32 0.0, %v3160
  %v3162 = vpop.f32.mrf.mxu0
  %v3163 = vadd.f32 0.0, %v3162
  %3164 = vmatprep.mubr.f32.mxu0 %v2782
  %3165 = vmatmul.mubr.f32.gmra.mxu0 %v2753
  %v3166 = vpop.f32.mrf.mxu0
  %v3167 = vadd.f32 0.0, %v3166
  %v3168 = vpop.f32.mrf.mxu0
  %v3169 = vadd.f32 0.0, %v3168
  %3170 = vmatprep.mubr.f32.mxu0 %v2785
  %3171 = vmatmul.mubr.f32.gmra.mxu0 %v2755
  %v3172 = vpop.f32.mrf.mxu0
  %v3173 = vadd.f32 0.0, %v3172
  %v3174 = vpop.f32.mrf.mxu0
  %v3175 = vadd.f32 0.0, %v3174
  %3176 = vmatprep.mubr.f32.mxu0 %v2788
  %3177 = vmatmul.mubr.f32.gmra.mxu0 %v2757
  %v3178 = vpop.f32.mrf.mxu0
  %v3179 = vadd.f32 0.0, %v3178
  %v3180 = vpop.f32.mrf.mxu0
  %v3181 = vadd.f32 0.0, %v3180
  %3182 = vmatprep.mubr.f32.mxu0 %v2791
  %3183 = vmatmul.mubr.f32.gmra.mxu0 %v2759
  %v3184 = vpop.f32.mrf.mxu0
  %v3185 = vadd.f32 0.0, %v3184
  %v3186 = vpop.f32.mrf.mxu0
  %v3187 = vadd.f32 0.0, %v3186
  %3188 = vmatprep.mubr.f32.mxu0 %v2794
  %3189 = vmatmul.mubr.f32.gmra.mxu0 %v2761
  %v3190 = vpop.f32.mrf.mxu0
  %v3191 = vadd.f32 0.0, %v3190
  %v3192 = vpop.f32.mrf.mxu0
  %v3193 = vadd.f32 0.0, %v3192
  %3194 = vmatprep.mubr.f32.mxu0 %v2797
  %3195 = vmatmul.mubr.f32.gmra.mxu0 %v2763
  %v3196 = vpop.f32.mrf.mxu0
  %v3197 = vadd.f32 0.0, %v3196
  %v3198 = vpop.f32.mrf.mxu0
  %v3199 = vadd.f32 0.0, %v3198
  %3200 = vmatprep.mubr.f32.mxu0 %v2800
  %3201 = vmatmul.mubr.f32.gmra.mxu0 %v2765
  %v3202 = vpop.f32.mrf.mxu0
  %v3203 = vadd.f32 0.0, %v3202
  %v3204 = vpop.f32.mrf.mxu0
  %v3205 = vadd.f32 0.0, %v3204
  %3206 = vmatprep.mubr.f32.mxu0 %v2803
  %3207 = vmatmul.mubr.f32.gmra.mxu0 %v2767
  %v3208 = vpop.f32.mrf.mxu0
  %v3209 = vadd.f32 0.0, %v3208
  %v3210 = vpop.f32.mrf.mxu0
  %v3211 = vadd.f32 0.0, %v3210
  %3212 = vmatprep.mubr.f32.mxu0 %v2806
  %3213 = vmatmul.mubr.f32.gmra.mxu0 %v2769
  %v3214 = vpop.f32.mrf.mxu0
  %v3215 = vadd.f32 0.0, %v3214
  %v3216 = vpop.f32.mrf.mxu0
  %v3217 = vadd.f32 0.0, %v3216
  %3218 = vdwg.mxu0
  %3219 = vmatprep.subr.mxu0 %v1682
  %3220 = vmatpush1.msra.mxu0 %v1681
  %3221 = vmatprep.subr.mxu0 %v1651
  %3222 = vmatpush1.msra.mxu0 %v1650
  %3223 = vmatprep.subr.mxu0 %v1620
  %3224 = vmatpush1.msra.mxu0 %v1619
  %3225 = vmatprep.subr.mxu0 %v1589
  %3226 = vmatpush1.msra.mxu0 %v1588
  %3227 = vmatprep.subr.mxu0 %v969
  %3228 = vmatpush1.msra.mxu0 %v968
  %3229 = vmatprep.subr.mxu0 %v938
  %3230 = vmatpush1.msra.mxu0 %v937
  %3231 = vmatprep.subr.mxu0 %v907
  %3232 = vmatpush1.msra.mxu0 %v906
  %3233 = vmatprep.subr.mxu0 %v876
  %3234 = vmatpush1.msra.mxu0 %v875
  %3235 = vmatprep.subr.mxu0 %v845
  %3236 = vmatpush1.msra.mxu0 %v844
  %3237 = vmatprep.subr.mxu0 %v814
  %3238 = vmatpush1.msra.mxu0 %v813
  %3239 = vmatprep.subr.mxu0 %v205
  %3240 = vmatpush1.msra.mxu0 %v204
  %3241 = vmatprep.subr.mxu0 %v173
  %3242 = vmatpush1.msra.mxu0 %v172
  %3243 = vmatprep.subr.mxu0 %v141
  %3244 = vmatpush1.msra.mxu0 %v140
  %3245 = vmatprep.subr.mxu0 %v109
  %3246 = vmatpush1.msra.mxu0 %v108
  %3247 = vmatprep.subr.mxu0 %v77
  %3248 = vmatpush1.msra.mxu0 %v76
  %3249 = vmatprep.subr.mxu0 %v45
  %3250 = vmatpush1.msra.mxu0 %v44
  %3251 = vmatprep.subr.mxu0 0.0
  %3252 = vmatpush2.msra.mxu0 0.0
  %3253 = vmatprep.subr.mxu0 0.0
  %3254 = vmatpush2.msra.mxu0 0.0
  %3255 = vmatprep.subr.mxu0 0.0
  %3256 = vmatpush2.msra.mxu0 0.0
  %3257 = vmatprep.subr.mxu0 0.0
  %3258 = vmatpush2.msra.mxu0 0.0
  %3259 = vmatprep.subr.mxu0 0.0
  %3260 = vmatpush2.msra.mxu0 0.0
  %3261 = vmatprep.subr.mxu0 0.0
  %3262 = vmatpush2.msra.mxu0 0.0
  %3263 = vmatprep.subr.mxu0 0.0
  %3264 = vmatpush2.msra.mxu0 0.0
  %3265 = vmatprep.subr.mxu0 0.0
  %3266 = vmatpush2.msra.mxu0 0.0
  %3267 = vmatprep.subr.mxu0 %v2519
  %3268 = vmatpush2.msra.mxu0 %v2518
  %3269 = vmatprep.subr.mxu0 %v2488
  %3270 = vmatpush2.msra.mxu0 %v2487
  %3271 = vmatprep.subr.mxu0 %v2457
  %3272 = vmatpush2.msra.mxu0 %v2456
  %3273 = vmatprep.subr.mxu0 %v2426
  %3274 = vmatpush2.msra.mxu0 %v2425
  %3275 = vmatprep.subr.mxu0 %v2395
  %3276 = vmatpush2.msra.mxu0 %v2394
  %3277 = vmatprep.subr.mxu0 %v2364
  %3278 = vmatpush2.msra.mxu0 %v2363
  %3279 = vmatprep.subr.mxu0 %v1744
  %3280 = vmatpush2.msra.mxu0 %v1743
  %3281 = vmatprep.subr.mxu0 %v1713
  %3282 = vmatpush2.msra.mxu0 %v1712
  %3283 = vmatprep.mubr.f32.mxu0 %v2773
  %3284 = vmatmul.mubr.f32.gmra.mxu0 %v2747
  %v3285 = vpop.f32.mrf.mxu0
  %v3286 = vadd.f32 0.0, %v3285
  %v3287 = vpop.f32.mrf.mxu0
  %v3288 = vadd.f32 0.0, %v3287
  %3289 = vmatprep.mubr.f32.mxu0 %v2776
  %3290 = vmatmul.mubr.f32.gmra.mxu0 %v2749
  %v3291 = vpop.f32.mrf.mxu0
  %v3292 = vadd.f32 0.0, %v3291
  %v3293 = vpop.f32.mrf.mxu0
  %v3294 = vadd.f32 0.0, %v3293
  %3295 = vmatprep.mubr.f32.mxu0 %v2779
  %3296 = vmatmul.mubr.f32.gmra.mxu0 %v2751
  %v3297 = vpop.f32.mrf.mxu0
  %v3298 = vadd.f32 0.0, %v3297
  %v3299 = vpop.f32.mrf.mxu0
  %v3300 = vadd.f32 0.0, %v3299
  %3301 = vmatprep.mubr.f32.mxu0 %v2782
  %3302 = vmatmul.mubr.f32.gmra.mxu0 %v2753
  %v3303 = vpop.f32.mrf.mxu0
  %v3304 = vadd.f32 0.0, %v3303
  %v3305 = vpop.f32.mrf.mxu0
  %v3306 = vadd.f32 0.0, %v3305
  %3307 = vmatprep.mubr.f32.mxu0 %v2785
  %3308 = vmatmul.mubr.f32.gmra.mxu0 %v2755
  %v3309 = vpop.f32.mrf.mxu0
  %v3310 = vadd.f32 0.0, %v3309
  %v3311 = vpop.f32.mrf.mxu0
  %v3312 = vadd.f32 0.0, %v3311
  %3313 = vmatprep.mubr.f32.mxu0 %v2788
  %3314 = vmatmul.mubr.f32.gmra.mxu0 %v2757
  %v3315 = vpop.f32.mrf.mxu0
  %v3316 = vadd.f32 0.0, %v3315
  %v3317 = vpop.f32.mrf.mxu0
  %v3318 = vadd.f32 0.0, %v3317
  %3319 = vmatprep.mubr.f32.mxu0 %v2791
  %3320 = vmatmul.mubr.f32.gmra.mxu0 %v2759
  %v3321 = vpop.f32.mrf.mxu0
  %v3322 = vadd.f32 0.0, %v3321
  %v3323 = vpop.f32.mrf.mxu0
  %v3324 = vadd.f32 0.0, %v3323
  %3325 = vmatprep.mubr.f32.mxu0 %v2794
  %3326 = vmatmul.mubr.f32.gmra.mxu0 %v2761
  %v3327 = vpop.f32.mrf.mxu0
  %v3328 = vadd.f32 0.0, %v3327
  %v3329 = vpop.f32.mrf.mxu0
  %v3330 = vadd.f32 0.0, %v3329
  %3331 = vmatprep.mubr.f32.mxu0 %v2797
  %3332 = vmatmul.mubr.f32.gmra.mxu0 %v2763
  %v3333 = vpop.f32.mrf.mxu0
  %v3334 = vadd.f32 0.0, %v3333
  %v3335 = vpop.f32.mrf.mxu0
  %v3336 = vadd.f32 0.0, %v3335
  %3337 = vmatprep.mubr.f32.mxu0 %v2800
  %3338 = vmatmul.mubr.f32.gmra.mxu0 %v2765
  %v3339 = vpop.f32.mrf.mxu0
  %v3340 = vadd.f32 0.0, %v3339
  %v3341 = vpop.f32.mrf.mxu0
  %v3342 = vadd.f32 0.0, %v3341
  %3343 = vmatprep.mubr.f32.mxu0 %v2803
  %3344 = vmatmul.mubr.f32.gmra.mxu0 %v2767
  %v3345 = vpop.f32.mrf.mxu0
  %v3346 = vadd.f32 0.0, %v3345
  %v3347 = vpop.f32.mrf.mxu0
  %v3348 = vadd.f32 0.0, %v3347
  %3349 = vmatprep.mubr.f32.mxu0 %v2806
  %3350 = vmatmul.mubr.f32.gmra.mxu0 %v2769
  %v3351 = vpop.f32.mrf.mxu0
  %v3352 = vadd.f32 0.0, %v3351
  %v3353 = vpop.f32.mrf.mxu0
  %v3354 = vadd.f32 0.0, %v3353
  %3355 = vdwg.mxu0
  %3356 = vmatprep.subr.mxu0 %v1684
  %3357 = vmatpush1.msra.mxu0 %v1683
  %3358 = vmatprep.subr.mxu0 %v1653
  %3359 = vmatpush1.msra.mxu0 %v1652
  %3360 = vmatprep.subr.mxu0 %v1622
  %3361 = vmatpush1.msra.mxu0 %v1621
  %3362 = vmatprep.subr.mxu0 %v1591
  %3363 = vmatpush1.msra.mxu0 %v1590
  %3364 = vmatprep.subr.mxu0 %v971
  %3365 = vmatpush1.msra.mxu0 %v970
  %3366 = vmatprep.subr.mxu0 %v940
  %3367 = vmatpush1.msra.mxu0 %v939
  %3368 = vmatprep.subr.mxu0 %v909
  %3369 = vmatpush1.msra.mxu0 %v908
  %3370 = vmatprep.subr.mxu0 %v878
  %3371 = vmatpush1.msra.mxu0 %v877
  %3372 = vmatprep.subr.mxu0 %v847
  %3373 = vmatpush1.msra.mxu0 %v846
  %3374 = vmatprep.subr.mxu0 %v816
  %3375 = vmatpush1.msra.mxu0 %v815
  %3376 = vmatprep.subr.mxu0 %v207
  %3377 = vmatpush1.msra.mxu0 %v206
  %3378 = vmatprep.subr.mxu0 %v175
  %3379 = vmatpush1.msra.mxu0 %v174
  %3380 = vmatprep.subr.mxu0 %v143
  %3381 = vmatpush1.msra.mxu0 %v142
  %3382 = vmatprep.subr.mxu0 %v111
  %3383 = vmatpush1.msra.mxu0 %v110
  %3384 = vmatprep.subr.mxu0 %v79
  %3385 = vmatpush1.msra.mxu0 %v78
  %3386 = vmatprep.subr.mxu0 %v47
  %3387 = vmatpush1.msra.mxu0 %v46
  %3388 = vmatprep.subr.mxu0 0.0
  %3389 = vmatpush2.msra.mxu0 0.0
  %3390 = vmatprep.subr.mxu0 0.0
  %3391 = vmatpush2.msra.mxu0 0.0
  %3392 = vmatprep.subr.mxu0 0.0
  %3393 = vmatpush2.msra.mxu0 0.0
  %3394 = vmatprep.subr.mxu0 0.0
  %3395 = vmatpush2.msra.mxu0 0.0
  %3396 = vmatprep.subr.mxu0 0.0
  %3397 = vmatpush2.msra.mxu0 0.0
  %3398 = vmatprep.subr.mxu0 0.0
  %3399 = vmatpush2.msra.mxu0 0.0
  %3400 = vmatprep.subr.mxu0 0.0
  %3401 = vmatpush2.msra.mxu0 0.0
  %3402 = vmatprep.subr.mxu0 0.0
  %3403 = vmatpush2.msra.mxu0 0.0
  %3404 = vmatprep.subr.mxu0 %v2521
  %3405 = vmatpush2.msra.mxu0 %v2520
  %3406 = vmatprep.subr.mxu0 %v2490
  %3407 = vmatpush2.msra.mxu0 %v2489
  %3408 = vmatprep.subr.mxu0 %v2459
  %3409 = vmatpush2.msra.mxu0 %v2458
  %3410 = vmatprep.subr.mxu0 %v2428
  %3411 = vmatpush2.msra.mxu0 %v2427
  %3412 = vmatprep.subr.mxu0 %v2397
  %3413 = vmatpush2.msra.mxu0 %v2396
  %3414 = vmatprep.subr.mxu0 %v2366
  %3415 = vmatpush2.msra.mxu0 %v2365
  %3416 = vmatprep.subr.mxu0 %v1746
  %3417 = vmatpush2.msra.mxu0 %v1745
  %3418 = vmatprep.subr.mxu0 %v1715
  %3419 = vmatpush2.msra.mxu0 %v1714
  %3420 = vmatprep.mubr.f32.mxu0 %v2773
  %3421 = vmatmul.mubr.f32.gmra.mxu0 %v2747
  %v3422 = vpop.f32.mrf.mxu0
  %v3423 = vadd.f32 0.0, %v3422
  %v3424 = vpop.f32.mrf.mxu0
  %v3425 = vadd.f32 0.0, %v3424
  %3426 = vmatprep.mubr.f32.mxu0 %v2776
  %3427 = vmatmul.mubr.f32.gmra.mxu0 %v2749
  %v3428 = vpop.f32.mrf.mxu0
  %v3429 = vadd.f32 0.0, %v3428
  %v3430 = vpop.f32.mrf.mxu0
  %v3431 = vadd.f32 0.0, %v3430
  %3432 = vmatprep.mubr.f32.mxu0 %v2779
  %3433 = vmatmul.mubr.f32.gmra.mxu0 %v2751
  %v3434 = vpop.f32.mrf.mxu0
  %v3435 = vadd.f32 0.0, %v3434
  %v3436 = vpop.f32.mrf.mxu0
  %v3437 = vadd.f32 0.0, %v3436
  %3438 = vmatprep.mubr.f32.mxu0 %v2782
  %3439 = vmatmul.mubr.f32.gmra.mxu0 %v2753
  %v3440 = vpop.f32.mrf.mxu0
  %v3441 = vadd.f32 0.0, %v3440
  %v3442 = vpop.f32.mrf.mxu0
  %v3443 = vadd.f32 0.0, %v3442
  %3444 = vmatprep.mubr.f32.mxu0 %v2785
  %3445 = vmatmul.mubr.f32.gmra.mxu0 %v2755
  %v3446 = vpop.f32.mrf.mxu0
  %v3447 = vadd.f32 0.0, %v3446
  %v3448 = vpop.f32.mrf.mxu0
  %v3449 = vadd.f32 0.0, %v3448
  %3450 = vmatprep.mubr.f32.mxu0 %v2788
  %3451 = vmatmul.mubr.f32.gmra.mxu0 %v2757
  %v3452 = vpop.f32.mrf.mxu0
  %v3453 = vadd.f32 0.0, %v3452
  %v3454 = vpop.f32.mrf.mxu0
  %v3455 = vadd.f32 0.0, %v3454
  %3456 = vmatprep.mubr.f32.mxu0 %v2791
  %3457 = vmatmul.mubr.f32.gmra.mxu0 %v2759
  %v3458 = vpop.f32.mrf.mxu0
  %v3459 = vadd.f32 0.0, %v3458
  %v3460 = vpop.f32.mrf.mxu0
  %v3461 = vadd.f32 0.0, %v3460
  %3462 = vmatprep.mubr.f32.mxu0 %v2794
  %3463 = vmatmul.mubr.f32.gmra.mxu0 %v2761
  %v3464 = vpop.f32.mrf.mxu0
  %v3465 = vadd.f32 0.0, %v3464
  %v3466 = vpop.f32.mrf.mxu0
  %v3467 = vadd.f32 0.0, %v3466
  %3468 = vmatprep.mubr.f32.mxu0 %v2797
  %3469 = vmatmul.mubr.f32.gmra.mxu0 %v2763
  %v3470 = vpop.f32.mrf.mxu0
  %v3471 = vadd.f32 0.0, %v3470
  %v3472 = vpop.f32.mrf.mxu0
  %v3473 = vadd.f32 0.0, %v3472
  %3474 = vmatprep.mubr.f32.mxu0 %v2800
  %3475 = vmatmul.mubr.f32.gmra.mxu0 %v2765
  %v3476 = vpop.f32.mrf.mxu0
  %v3477 = vadd.f32 0.0, %v3476
  %v3478 = vpop.f32.mrf.mxu0
  %v3479 = vadd.f32 0.0, %v3478
  %3480 = vmatprep.mubr.f32.mxu0 %v2803
  %3481 = vmatmul.mubr.f32.gmra.mxu0 %v2767
  %v3482 = vpop.f32.mrf.mxu0
  %v3483 = vadd.f32 0.0, %v3482
  %v3484 = vpop.f32.mrf.mxu0
  %v3485 = vadd.f32 0.0, %v3484
  %3486 = vmatprep.mubr.f32.mxu0 %v2806
  %3487 = vmatmul.mubr.f32.gmra.mxu0 %v2769
  %v3488 = vpop.f32.mrf.mxu0
  %v3489 = vadd.f32 0.0, %v3488
  %v3490 = vpop.f32.mrf.mxu0
  %v3491 = vadd.f32 0.0, %v3490
  %3492 = vdwg.mxu0
  %3493 = vmatprep.subr.mxu0 %v1686
  %3494 = vmatpush1.msra.mxu0 %v1685
  %3495 = vmatprep.subr.mxu0 %v1655
  %3496 = vmatpush1.msra.mxu0 %v1654
  %3497 = vmatprep.subr.mxu0 %v1624
  %3498 = vmatpush1.msra.mxu0 %v1623
  %3499 = vmatprep.subr.mxu0 %v1593
  %3500 = vmatpush1.msra.mxu0 %v1592
  %3501 = vmatprep.subr.mxu0 %v973
  %3502 = vmatpush1.msra.mxu0 %v972
  %3503 = vmatprep.subr.mxu0 %v942
  %3504 = vmatpush1.msra.mxu0 %v941
  %3505 = vmatprep.subr.mxu0 %v911
  %3506 = vmatpush1.msra.mxu0 %v910
  %3507 = vmatprep.subr.mxu0 %v880
  %3508 = vmatpush1.msra.mxu0 %v879
  %3509 = vmatprep.subr.mxu0 %v849
  %3510 = vmatpush1.msra.mxu0 %v848
  %3511 = vmatprep.subr.mxu0 %v818
  %3512 = vmatpush1.msra.mxu0 %v817
  %3513 = vmatprep.subr.mxu0 %v209
  %3514 = vmatpush1.msra.mxu0 %v208
  %3515 = vmatprep.subr.mxu0 %v177
  %3516 = vmatpush1.msra.mxu0 %v176
  %3517 = vmatprep.subr.mxu0 %v145
  %3518 = vmatpush1.msra.mxu0 %v144
  %3519 = vmatprep.subr.mxu0 %v113
  %3520 = vmatpush1.msra.mxu0 %v112
  %3521 = vmatprep.subr.mxu0 %v81
  %3522 = vmatpush1.msra.mxu0 %v80
  %3523 = vmatprep.subr.mxu0 %v49
  %3524 = vmatpush1.msra.mxu0 %v48
  %3525 = vmatprep.subr.mxu0 0.0
  %3526 = vmatpush2.msra.mxu0 0.0
  %3527 = vmatprep.subr.mxu0 0.0
  %3528 = vmatpush2.msra.mxu0 0.0
  %3529 = vmatprep.subr.mxu0 0.0
  %3530 = vmatpush2.msra.mxu0 0.0
  %3531 = vmatprep.subr.mxu0 0.0
  %3532 = vmatpush2.msra.mxu0 0.0
  %3533 = vmatprep.subr.mxu0 0.0
  %3534 = vmatpush2.msra.mxu0 0.0
  %3535 = vmatprep.subr.mxu0 0.0
  %3536 = vmatpush2.msra.mxu0 0.0
  %3537 = vmatprep.subr.mxu0 0.0
  %3538 = vmatpush2.msra.mxu0 0.0
  %3539 = vmatprep.subr.mxu0 0.0
  %3540 = vmatpush2.msra.mxu0 0.0
  %3541 = vmatprep.subr.mxu0 %v2523
  %3542 = vmatpush2.msra.mxu0 %v2522
  %3543 = vmatprep.subr.mxu0 %v2492
  %3544 = vmatpush2.msra.mxu0 %v2491
  %3545 = vmatprep.subr.mxu0 %v2461
  %3546 = vmatpush2.msra.mxu0 %v2460
  %3547 = vmatprep.subr.mxu0 %v2430
  %3548 = vmatpush2.msra.mxu0 %v2429
  %3549 = vmatprep.subr.mxu0 %v2399
  %3550 = vmatpush2.msra.mxu0 %v2398
  %3551 = vmatprep.subr.mxu0 %v2368
  %3552 = vmatpush2.msra.mxu0 %v2367
  %3553 = vmatprep.subr.mxu0 %v1748
  %3554 = vmatpush2.msra.mxu0 %v1747
  %3555 = vmatprep.subr.mxu0 %v1717
  %3556 = vmatpush2.msra.mxu0 %v1716
  %3557 = vmatprep.mubr.f32.mxu0 %v2773
  %3558 = vmatmul.mubr.f32.gmra.mxu0 %v2747
  %v3559 = vpop.f32.mrf.mxu0
  %v3560 = vadd.f32 0.0, %v3559
  %v3561 = vpop.f32.mrf.mxu0
  %v3562 = vadd.f32 0.0, %v3561
  %3563 = vmatprep.mubr.f32.mxu0 %v2776
  %3564 = vmatmul.mubr.f32.gmra.mxu0 %v2749
  %v3565 = vpop.f32.mrf.mxu0
  %v3566 = vadd.f32 0.0, %v3565
  %v3567 = vpop.f32.mrf.mxu0
  %v3568 = vadd.f32 0.0, %v3567
  %3569 = vmatprep.mubr.f32.mxu0 %v2779
  %3570 = vmatmul.mubr.f32.gmra.mxu0 %v2751
  %v3571 = vpop.f32.mrf.mxu0
  %v3572 = vadd.f32 0.0, %v3571
  %v3573 = vpop.f32.mrf.mxu0
  %v3574 = vadd.f32 0.0, %v3573
  %3575 = vmatprep.mubr.f32.mxu0 %v2782
  %3576 = vmatmul.mubr.f32.gmra.mxu0 %v2753
  %v3577 = vpop.f32.mrf.mxu0
  %v3578 = vadd.f32 0.0, %v3577
  %v3579 = vpop.f32.mrf.mxu0
  %v3580 = vadd.f32 0.0, %v3579
  %3581 = vmatprep.mubr.f32.mxu0 %v2785
  %3582 = vmatmul.mubr.f32.gmra.mxu0 %v2755
  %v3583 = vpop.f32.mrf.mxu0
  %v3584 = vadd.f32 0.0, %v3583
  %v3585 = vpop.f32.mrf.mxu0
  %v3586 = vadd.f32 0.0, %v3585
  %3587 = vmatprep.mubr.f32.mxu0 %v2788
  %3588 = vmatmul.mubr.f32.gmra.mxu0 %v2757
  %v3589 = vpop.f32.mrf.mxu0
  %v3590 = vadd.f32 0.0, %v3589
  %v3591 = vpop.f32.mrf.mxu0
  %v3592 = vadd.f32 0.0, %v3591
  %3593 = vmatprep.mubr.f32.mxu0 %v2791
  %3594 = vmatmul.mubr.f32.gmra.mxu0 %v2759
  %v3595 = vpop.f32.mrf.mxu0
  %v3596 = vadd.f32 0.0, %v3595
  %v3597 = vpop.f32.mrf.mxu0
  %v3598 = vadd.f32 0.0, %v3597
  %3599 = vmatprep.mubr.f32.mxu0 %v2794
  %3600 = vmatmul.mubr.f32.gmra.mxu0 %v2761
  %v3601 = vpop.f32.mrf.mxu0
  %v3602 = vadd.f32 0.0, %v3601
  %v3603 = vpop.f32.mrf.mxu0
  %v3604 = vadd.f32 0.0, %v3603
  %3605 = vmatprep.mubr.f32.mxu0 %v2797
  %3606 = vmatmul.mubr.f32.gmra.mxu0 %v2763
  %v3607 = vpop.f32.mrf.mxu0
  %v3608 = vadd.f32 0.0, %v3607
  %v3609 = vpop.f32.mrf.mxu0
  %v3610 = vadd.f32 0.0, %v3609
  %3611 = vmatprep.mubr.f32.mxu0 %v2800
  %3612 = vmatmul.mubr.f32.gmra.mxu0 %v2765
  %v3613 = vpop.f32.mrf.mxu0
  %v3614 = vadd.f32 0.0, %v3613
  %v3615 = vpop.f32.mrf.mxu0
  %v3616 = vadd.f32 0.0, %v3615
  %3617 = vmatprep.mubr.f32.mxu0 %v2803
  %3618 = vmatmul.mubr.f32.gmra.mxu0 %v2767
  %v3619 = vpop.f32.mrf.mxu0
  %v3620 = vadd.f32 0.0, %v3619
  %v3621 = vpop.f32.mrf.mxu0
  %v3622 = vadd.f32 0.0, %v3621
  %3623 = vmatprep.mubr.f32.mxu0 %v2806
  %3624 = vmatmul.mubr.f32.gmra.mxu0 %v2769
  %v3625 = vpop.f32.mrf.mxu0
  %v3626 = vadd.f32 0.0, %v3625
  %v3627 = vpop.f32.mrf.mxu0
  %v3628 = vadd.f32 0.0, %v3627
  %3629 = vdwg.mxu0
  %3630 = vmatprep.subr.mxu0 %v1688
  %3631 = vmatpush1.msra.mxu0 %v1687
  %3632 = vmatprep.subr.mxu0 %v1657
  %3633 = vmatpush1.msra.mxu0 %v1656
  %3634 = vmatprep.subr.mxu0 %v1626
  %3635 = vmatpush1.msra.mxu0 %v1625
  %3636 = vmatprep.subr.mxu0 %v1595
  %3637 = vmatpush1.msra.mxu0 %v1594
  %3638 = vmatprep.subr.mxu0 %v975
  %3639 = vmatpush1.msra.mxu0 %v974
  %3640 = vmatprep.subr.mxu0 %v944
  %3641 = vmatpush1.msra.mxu0 %v943
  %3642 = vmatprep.subr.mxu0 %v913
  %3643 = vmatpush1.msra.mxu0 %v912
  %3644 = vmatprep.subr.mxu0 %v882
  %3645 = vmatpush1.msra.mxu0 %v881
  %3646 = vmatprep.subr.mxu0 %v851
  %3647 = vmatpush1.msra.mxu0 %v850
  %3648 = vmatprep.subr.mxu0 %v820
  %3649 = vmatpush1.msra.mxu0 %v819
  %3650 = vmatprep.subr.mxu0 %v211
  %3651 = vmatpush1.msra.mxu0 %v210
  %3652 = vmatprep.subr.mxu0 %v179
  %3653 = vmatpush1.msra.mxu0 %v178
  %3654 = vmatprep.subr.mxu0 %v147
  %3655 = vmatpush1.msra.mxu0 %v146
  %3656 = vmatprep.subr.mxu0 %v115
  %3657 = vmatpush1.msra.mxu0 %v114
  %3658 = vmatprep.subr.mxu0 %v83
  %3659 = vmatpush1.msra.mxu0 %v82
  %3660 = vmatprep.subr.mxu0 %v51
  %3661 = vmatpush1.msra.mxu0 %v50
  %3662 = vmatprep.subr.mxu0 0.0
  %3663 = vmatpush2.msra.mxu0 0.0
  %3664 = vmatprep.subr.mxu0 0.0
  %3665 = vmatpush2.msra.mxu0 0.0
  %3666 = vmatprep.subr.mxu0 0.0
  %3667 = vmatpush2.msra.mxu0 0.0
  %3668 = vmatprep.subr.mxu0 0.0
  %3669 = vmatpush2.msra.mxu0 0.0
  %3670 = vmatprep.subr.mxu0 0.0
  %3671 = vmatpush2.msra.mxu0 0.0
  %3672 = vmatprep.subr.mxu0 0.0
  %3673 = vmatpush2.msra.mxu0 0.0
  %3674 = vmatprep.subr.mxu0 0.0
  %3675 = vmatpush2.msra.mxu0 0.0
  %3676 = vmatprep.subr.mxu0 0.0
  %3677 = vmatpush2.msra.mxu0 0.0
  %3678 = vmatprep.subr.mxu0 %v2525
  %3679 = vmatpush2.msra.mxu0 %v2524
  %3680 = vmatprep.subr.mxu0 %v2494
  %3681 = vmatpush2.msra.mxu0 %v2493
  %3682 = vmatprep.subr.mxu0 %v2463
  %3683 = vmatpush2.msra.mxu0 %v2462
  %3684 = vmatprep.subr.mxu0 %v2432
  %3685 = vmatpush2.msra.mxu0 %v2431
  %3686 = vmatprep.subr.mxu0 %v2401
  %3687 = vmatpush2.msra.mxu0 %v2400
  %3688 = vmatprep.subr.mxu0 %v2370
  %3689 = vmatpush2.msra.mxu0 %v2369
  %3690 = vmatprep.subr.mxu0 %v1750
  %3691 = vmatpush2.msra.mxu0 %v1749
  %3692 = vmatprep.subr.mxu0 %v1719
  %3693 = vmatpush2.msra.mxu0 %v1718
  %3694 = vmatprep.mubr.f32.mxu0 %v2773
  %3695 = vmatmul.mubr.f32.gmra.mxu0 %v2747
  %v3696 = vpop.f32.mrf.mxu0
  %v3697 = vadd.f32 0.0, %v3696
  %v3698 = vpop.f32.mrf.mxu0
  %v3699 = vadd.f32 0.0, %v3698
  %3700 = vmatprep.mubr.f32.mxu0 %v2776
  %3701 = vmatmul.mubr.f32.gmra.mxu0 %v2749
  %v3702 = vpop.f32.mrf.mxu0
  %v3703 = vadd.f32 0.0, %v3702
  %v3704 = vpop.f32.mrf.mxu0
  %v3705 = vadd.f32 0.0, %v3704
  %3706 = vmatprep.mubr.f32.mxu0 %v2779
  %3707 = vmatmul.mubr.f32.gmra.mxu0 %v2751
  %v3708 = vpop.f32.mrf.mxu0
  %v3709 = vadd.f32 0.0, %v3708
  %v3710 = vpop.f32.mrf.mxu0
  %v3711 = vadd.f32 0.0, %v3710
  %3712 = vmatprep.mubr.f32.mxu0 %v2782
  %3713 = vmatmul.mubr.f32.gmra.mxu0 %v2753
  %v3714 = vpop.f32.mrf.mxu0
  %v3715 = vadd.f32 0.0, %v3714
  %v3716 = vpop.f32.mrf.mxu0
  %v3717 = vadd.f32 0.0, %v3716
  %3718 = vmatprep.mubr.f32.mxu0 %v2785
  %3719 = vmatmul.mubr.f32.gmra.mxu0 %v2755
  %v3720 = vpop.f32.mrf.mxu0
  %v3721 = vadd.f32 0.0, %v3720
  %v3722 = vpop.f32.mrf.mxu0
  %v3723 = vadd.f32 0.0, %v3722
  %3724 = vmatprep.mubr.f32.mxu0 %v2788
  %3725 = vmatmul.mubr.f32.gmra.mxu0 %v2757
  %v3726 = vpop.f32.mrf.mxu0
  %v3727 = vadd.f32 0.0, %v3726
  %v3728 = vpop.f32.mrf.mxu0
  %v3729 = vadd.f32 0.0, %v3728
  %3730 = vmatprep.mubr.f32.mxu0 %v2791
  %3731 = vmatmul.mubr.f32.gmra.mxu0 %v2759
  %v3732 = vpop.f32.mrf.mxu0
  %v3733 = vadd.f32 0.0, %v3732
  %v3734 = vpop.f32.mrf.mxu0
  %v3735 = vadd.f32 0.0, %v3734
  %3736 = vmatprep.mubr.f32.mxu0 %v2794
  %3737 = vmatmul.mubr.f32.gmra.mxu0 %v2761
  %v3738 = vpop.f32.mrf.mxu0
  %v3739 = vadd.f32 0.0, %v3738
  %v3740 = vpop.f32.mrf.mxu0
  %v3741 = vadd.f32 0.0, %v3740
  %3742 = vmatprep.mubr.f32.mxu0 %v2797
  %3743 = vmatmul.mubr.f32.gmra.mxu0 %v2763
  %v3744 = vpop.f32.mrf.mxu0
  %v3745 = vadd.f32 0.0, %v3744
  %v3746 = vpop.f32.mrf.mxu0
  %v3747 = vadd.f32 0.0, %v3746
  %3748 = vmatprep.mubr.f32.mxu0 %v2800
  %3749 = vmatmul.mubr.f32.gmra.mxu0 %v2765
  %v3750 = vpop.f32.mrf.mxu0
  %v3751 = vadd.f32 0.0, %v3750
  %v3752 = vpop.f32.mrf.mxu0
  %v3753 = vadd.f32 0.0, %v3752
  %3754 = vmatprep.mubr.f32.mxu0 %v2803
  %3755 = vmatmul.mubr.f32.gmra.mxu0 %v2767
  %v3756 = vpop.f32.mrf.mxu0
  %v3757 = vadd.f32 0.0, %v3756
  %v3758 = vpop.f32.mrf.mxu0
  %v3759 = vadd.f32 0.0, %v3758
  %3760 = vmatprep.mubr.f32.mxu0 %v2806
  %3761 = vmatmul.mubr.f32.gmra.mxu0 %v2769
  %v3762 = vpop.f32.mrf.mxu0
  %v3763 = vadd.f32 0.0, %v3762
  %v3764 = vpop.f32.mrf.mxu0
  %v3765 = vadd.f32 0.0, %v3764
  %3766 = vdwg.mxu0
  %3767 = vmatprep.subr.mxu0 %v1690
  %3768 = vmatpush1.msra.mxu0 %v1689
  %3769 = vmatprep.subr.mxu0 %v1659
  %3770 = vmatpush1.msra.mxu0 %v1658
  %3771 = vmatprep.subr.mxu0 %v1628
  %3772 = vmatpush1.msra.mxu0 %v1627
  %3773 = vmatprep.subr.mxu0 %v1597
  %3774 = vmatpush1.msra.mxu0 %v1596
  %3775 = vmatprep.subr.mxu0 %v977
  %3776 = vmatpush1.msra.mxu0 %v976
  %3777 = vmatprep.subr.mxu0 %v946
  %3778 = vmatpush1.msra.mxu0 %v945
  %3779 = vmatprep.subr.mxu0 %v915
  %3780 = vmatpush1.msra.mxu0 %v914
  %3781 = vmatprep.subr.mxu0 %v884
  %3782 = vmatpush1.msra.mxu0 %v883
  %3783 = vmatprep.subr.mxu0 %v853
  %3784 = vmatpush1.msra.mxu0 %v852
  %3785 = vmatprep.subr.mxu0 %v822
  %3786 = vmatpush1.msra.mxu0 %v821
  %3787 = vmatprep.subr.mxu0 %v213
  %3788 = vmatpush1.msra.mxu0 %v212
  %3789 = vmatprep.subr.mxu0 %v181
  %3790 = vmatpush1.msra.mxu0 %v180
  %3791 = vmatprep.subr.mxu0 %v149
  %3792 = vmatpush1.msra.mxu0 %v148
  %3793 = vmatprep.subr.mxu0 %v117
  %3794 = vmatpush1.msra.mxu0 %v116
  %3795 = vmatprep.subr.mxu0 %v85
  %3796 = vmatpush1.msra.mxu0 %v84
  %3797 = vmatprep.subr.mxu0 %v53
  %3798 = vmatpush1.msra.mxu0 %v52
  %3799 = vmatprep.subr.mxu0 0.0
  %3800 = vmatpush2.msra.mxu0 0.0
  %3801 = vmatprep.subr.mxu0 0.0
  %3802 = vmatpush2.msra.mxu0 0.0
  %3803 = vmatprep.subr.mxu0 0.0
  %3804 = vmatpush2.msra.mxu0 0.0
  %3805 = vmatprep.subr.mxu0 0.0
  %3806 = vmatpush2.msra.mxu0 0.0
  %3807 = vmatprep.subr.mxu0 0.0
  %3808 = vmatpush2.msra.mxu0 0.0
  %3809 = vmatprep.subr.mxu0 0.0
  %3810 = vmatpush2.msra.mxu0 0.0
  %3811 = vmatprep.subr.mxu0 0.0
  %3812 = vmatpush2.msra.mxu0 0.0
  %3813 = vmatprep.subr.mxu0 0.0
  %3814 = vmatpush2.msra.mxu0 0.0
  %3815 = vmatprep.subr.mxu0 %v2527
  %3816 = vmatpush2.msra.mxu0 %v2526
  %3817 = vmatprep.subr.mxu0 %v2496
  %3818 = vmatpush2.msra.mxu0 %v2495
  %3819 = vmatprep.subr.mxu0 %v2465
  %3820 = vmatpush2.msra.mxu0 %v2464
  %3821 = vmatprep.subr.mxu0 %v2434
  %3822 = vmatpush2.msra.mxu0 %v2433
  %3823 = vmatprep.subr.mxu0 %v2403
  %3824 = vmatpush2.msra.mxu0 %v2402
  %3825 = vmatprep.subr.mxu0 %v2372
  %3826 = vmatpush2.msra.mxu0 %v2371
  %3827 = vmatprep.subr.mxu0 %v1752
  %3828 = vmatpush2.msra.mxu0 %v1751
  %3829 = vmatprep.subr.mxu0 %v1721
  %3830 = vmatpush2.msra.mxu0 %v1720
  %3831 = vmatprep.mubr.f32.mxu0 %v2773
  %3832 = vmatmul.mubr.f32.gmra.mxu0 %v2747
  %v3833 = vpop.f32.mrf.mxu0
  %v3834 = vadd.f32 0.0, %v3833
  %v3835 = vpop.f32.mrf.mxu0
  %v3836 = vadd.f32 0.0, %v3835
  %3837 = vmatprep.mubr.f32.mxu0 %v2776
  %3838 = vmatmul.mubr.f32.gmra.mxu0 %v2749
  %v3839 = vpop.f32.mrf.mxu0
  %v3840 = vadd.f32 0.0, %v3839
  %v3841 = vpop.f32.mrf.mxu0
  %v3842 = vadd.f32 0.0, %v3841
  %3843 = vmatprep.mubr.f32.mxu0 %v2779
  %3844 = vmatmul.mubr.f32.gmra.mxu0 %v2751
  %v3845 = vpop.f32.mrf.mxu0
  %v3846 = vadd.f32 0.0, %v3845
  %v3847 = vpop.f32.mrf.mxu0
  %v3848 = vadd.f32 0.0, %v3847
  %3849 = vmatprep.mubr.f32.mxu0 %v2782
  %3850 = vmatmul.mubr.f32.gmra.mxu0 %v2753
  %v3851 = vpop.f32.mrf.mxu0
  %v3852 = vadd.f32 0.0, %v3851
  %v3853 = vpop.f32.mrf.mxu0
  %v3854 = vadd.f32 0.0, %v3853
  %3855 = vmatprep.mubr.f32.mxu0 %v2785
  %3856 = vmatmul.mubr.f32.gmra.mxu0 %v2755
  %v3857 = vpop.f32.mrf.mxu0
  %v3858 = vadd.f32 0.0, %v3857
  %v3859 = vpop.f32.mrf.mxu0
  %v3860 = vadd.f32 0.0, %v3859
  %3861 = vmatprep.mubr.f32.mxu0 %v2788
  %3862 = vmatmul.mubr.f32.gmra.mxu0 %v2757
  %v3863 = vpop.f32.mrf.mxu0
  %v3864 = vadd.f32 0.0, %v3863
  %v3865 = vpop.f32.mrf.mxu0
  %v3866 = vadd.f32 0.0, %v3865
  %3867 = vmatprep.mubr.f32.mxu0 %v2791
  %3868 = vmatmul.mubr.f32.gmra.mxu0 %v2759
  %v3869 = vpop.f32.mrf.mxu0
  %v3870 = vadd.f32 0.0, %v3869
  %v3871 = vpop.f32.mrf.mxu0
  %v3872 = vadd.f32 0.0, %v3871
  %3873 = vmatprep.mubr.f32.mxu0 %v2794
  %3874 = vmatmul.mubr.f32.gmra.mxu0 %v2761
  %v3875 = vpop.f32.mrf.mxu0
  %v3876 = vadd.f32 0.0, %v3875
  %v3877 = vpop.f32.mrf.mxu0
  %v3878 = vadd.f32 0.0, %v3877
  %3879 = vmatprep.mubr.f32.mxu0 %v2797
  %3880 = vmatmul.mubr.f32.gmra.mxu0 %v2763
  %v3881 = vpop.f32.mrf.mxu0
  %v3882 = vadd.f32 0.0, %v3881
  %v3883 = vpop.f32.mrf.mxu0
  %v3884 = vadd.f32 0.0, %v3883
  %3885 = vmatprep.mubr.f32.mxu0 %v2800
  %3886 = vmatmul.mubr.f32.gmra.mxu0 %v2765
  %v3887 = vpop.f32.mrf.mxu0
  %v3888 = vadd.f32 0.0, %v3887
  %v3889 = vpop.f32.mrf.mxu0
  %v3890 = vadd.f32 0.0, %v3889
  %3891 = vmatprep.mubr.f32.mxu0 %v2803
  %3892 = vmatmul.mubr.f32.gmra.mxu0 %v2767
  %v3893 = vpop.f32.mrf.mxu0
  %v3894 = vadd.f32 0.0, %v3893
  %v3895 = vpop.f32.mrf.mxu0
  %v3896 = vadd.f32 0.0, %v3895
  %3897 = vmatprep.mubr.f32.mxu0 %v2806
  %3898 = vmatmul.mubr.f32.gmra.mxu0 %v2769
  %v3899 = vpop.f32.mrf.mxu0
  %v3900 = vadd.f32 0.0, %v3899
  %v3901 = vpop.f32.mrf.mxu0
  %v3902 = vadd.f32 0.0, %v3901
  %3903 = vdwg.mxu0
  %3904 = vmatprep.subr.mxu0 %v1692
  %3905 = vmatpush1.msra.mxu0 %v1691
  %3906 = vmatprep.subr.mxu0 %v1661
  %3907 = vmatpush1.msra.mxu0 %v1660
  %3908 = vmatprep.subr.mxu0 %v1630
  %3909 = vmatpush1.msra.mxu0 %v1629
  %3910 = vmatprep.subr.mxu0 %v1599
  %3911 = vmatpush1.msra.mxu0 %v1598
  %3912 = vmatprep.subr.mxu0 %v979
  %3913 = vmatpush1.msra.mxu0 %v978
  %3914 = vmatprep.subr.mxu0 %v948
  %3915 = vmatpush1.msra.mxu0 %v947
  %3916 = vmatprep.subr.mxu0 %v917
  %3917 = vmatpush1.msra.mxu0 %v916
  %3918 = vmatprep.subr.mxu0 %v886
  %3919 = vmatpush1.msra.mxu0 %v885
  %3920 = vmatprep.subr.mxu0 %v855
  %3921 = vmatpush1.msra.mxu0 %v854
  %3922 = vmatprep.subr.mxu0 %v824
  %3923 = vmatpush1.msra.mxu0 %v823
  %3924 = vmatprep.subr.mxu0 %v215
  %3925 = vmatpush1.msra.mxu0 %v214
  %3926 = vmatprep.subr.mxu0 %v183
  %3927 = vmatpush1.msra.mxu0 %v182
  %3928 = vmatprep.subr.mxu0 %v151
  %3929 = vmatpush1.msra.mxu0 %v150
  %3930 = vmatprep.subr.mxu0 %v119
  %3931 = vmatpush1.msra.mxu0 %v118
  %3932 = vmatprep.subr.mxu0 %v87
  %3933 = vmatpush1.msra.mxu0 %v86
  %3934 = vmatprep.subr.mxu0 %v55
  %3935 = vmatpush1.msra.mxu0 %v54
  %3936 = vmatprep.subr.mxu0 0.0
  %3937 = vmatpush2.msra.mxu0 0.0
  %3938 = vmatprep.subr.mxu0 0.0
  %3939 = vmatpush2.msra.mxu0 0.0
  %3940 = vmatprep.subr.mxu0 0.0
  %3941 = vmatpush2.msra.mxu0 0.0
  %3942 = vmatprep.subr.mxu0 0.0
  %3943 = vmatpush2.msra.mxu0 0.0
  %3944 = vmatprep.subr.mxu0 0.0
  %3945 = vmatpush2.msra.mxu0 0.0
  %3946 = vmatprep.subr.mxu0 0.0
  %3947 = vmatpush2.msra.mxu0 0.0
  %3948 = vmatprep.subr.mxu0 0.0
  %3949 = vmatpush2.msra.mxu0 0.0
  %3950 = vmatprep.subr.mxu0 0.0
  %3951 = vmatpush2.msra.mxu0 0.0
  %3952 = vmatprep.subr.mxu0 %v2529
  %3953 = vmatpush2.msra.mxu0 %v2528
  %3954 = vmatprep.subr.mxu0 %v2498
  %3955 = vmatpush2.msra.mxu0 %v2497
  %3956 = vmatprep.subr.mxu0 %v2467
  %3957 = vmatpush2.msra.mxu0 %v2466
  %3958 = vmatprep.subr.mxu0 %v2436
  %3959 = vmatpush2.msra.mxu0 %v2435
  %3960 = vmatprep.subr.mxu0 %v2405
  %3961 = vmatpush2.msra.mxu0 %v2404
  %3962 = vmatprep.subr.mxu0 %v2374
  %3963 = vmatpush2.msra.mxu0 %v2373
  %3964 = vmatprep.subr.mxu0 %v1754
  %3965 = vmatpush2.msra.mxu0 %v1753
  %3966 = vmatprep.subr.mxu0 %v1723
  %3967 = vmatpush2.msra.mxu0 %v1722
  %3968 = vmatprep.mubr.f32.mxu0 %v2773
  %3969 = vmatmul.mubr.f32.gmra.mxu0 %v2747
  %v3970 = vpop.f32.mrf.mxu0
  %v3971 = vadd.f32 0.0, %v3970
  %v3972 = vpop.f32.mrf.mxu0
  %v3973 = vadd.f32 0.0, %v3972
  %3974 = vmatprep.mubr.f32.mxu0 %v2776
  %3975 = vmatmul.mubr.f32.gmra.mxu0 %v2749
  %v3976 = vpop.f32.mrf.mxu0
  %v3977 = vadd.f32 0.0, %v3976
  %v3978 = vpop.f32.mrf.mxu0
  %v3979 = vadd.f32 0.0, %v3978
  %3980 = vmatprep.mubr.f32.mxu0 %v2779
  %3981 = vmatmul.mubr.f32.gmra.mxu0 %v2751
  %v3982 = vpop.f32.mrf.mxu0
  %v3983 = vadd.f32 0.0, %v3982
  %v3984 = vpop.f32.mrf.mxu0
  %v3985 = vadd.f32 0.0, %v3984
  %3986 = vmatprep.mubr.f32.mxu0 %v2782
  %3987 = vmatmul.mubr.f32.gmra.mxu0 %v2753
  %v3988 = vpop.f32.mrf.mxu0
  %v3989 = vadd.f32 0.0, %v3988
  %v3990 = vpop.f32.mrf.mxu0
  %v3991 = vadd.f32 0.0, %v3990
  %3992 = vmatprep.mubr.f32.mxu0 %v2785
  %3993 = vmatmul.mubr.f32.gmra.mxu0 %v2755
  %v3994 = vpop.f32.mrf.mxu0
  %v3995 = vadd.f32 0.0, %v3994
  %v3996 = vpop.f32.mrf.mxu0
  %v3997 = vadd.f32 0.0, %v3996
  %3998 = vmatprep.mubr.f32.mxu0 %v2788
  %3999 = vmatmul.mubr.f32.gmra.mxu0 %v2757
  %v4000 = vpop.f32.mrf.mxu0
  %v4001 = vadd.f32 0.0, %v4000
  %v4002 = vpop.f32.mrf.mxu0
  %v4003 = vadd.f32 0.0, %v4002
  %4004 = vmatprep.mubr.f32.mxu0 %v2791
  %4005 = vmatmul.mubr.f32.gmra.mxu0 %v2759
  %v4006 = vpop.f32.mrf.mxu0
  %v4007 = vadd.f32 0.0, %v4006
  %v4008 = vpop.f32.mrf.mxu0
  %v4009 = vadd.f32 0.0, %v4008
  %4010 = vmatprep.mubr.f32.mxu0 %v2794
  %4011 = vmatmul.mubr.f32.gmra.mxu0 %v2761
  %v4012 = vpop.f32.mrf.mxu0
  %v4013 = vadd.f32 0.0, %v4012
  %v4014 = vpop.f32.mrf.mxu0
  %v4015 = vadd.f32 0.0, %v4014
  %4016 = vmatprep.mubr.f32.mxu0 %v2797
  %4017 = vmatmul.mubr.f32.gmra.mxu0 %v2763
  %v4018 = vpop.f32.mrf.mxu0
  %v4019 = vadd.f32 0.0, %v4018
  %v4020 = vpop.f32.mrf.mxu0
  %v4021 = vadd.f32 0.0, %v4020
  %4022 = vmatprep.mubr.f32.mxu0 %v2800
  %4023 = vmatmul.mubr.f32.gmra.mxu0 %v2765
  %v4024 = vpop.f32.mrf.mxu0
  %v4025 = vadd.f32 0.0, %v4024
  %v4026 = vpop.f32.mrf.mxu0
  %v4027 = vadd.f32 0.0, %v4026
  %4028 = vmatprep.mubr.f32.mxu0 %v2803
  %4029 = vmatmul.mubr.f32.gmra.mxu0 %v2767
  %v4030 = vpop.f32.mrf.mxu0
  %v4031 = vadd.f32 0.0, %v4030
  %v4032 = vpop.f32.mrf.mxu0
  %v4033 = vadd.f32 0.0, %v4032
  %4034 = vmatprep.mubr.f32.mxu0 %v2806
  %4035 = vmatmul.mubr.f32.gmra.mxu0 %v2769
  %v4036 = vpop.f32.mrf.mxu0
  %v4037 = vadd.f32 0.0, %v4036
  %v4038 = vpop.f32.mrf.mxu0
  %v4039 = vadd.f32 0.0, %v4038
  %4040 = vdwg.mxu0
  %4041 = vmatprep.subr.mxu0 %v1694
  %4042 = vmatpush1.msra.mxu0 %v1693
  %4043 = vmatprep.subr.mxu0 %v1663
  %4044 = vmatpush1.msra.mxu0 %v1662
  %4045 = vmatprep.subr.mxu0 %v1632
  %4046 = vmatpush1.msra.mxu0 %v1631
  %4047 = vmatprep.subr.mxu0 %v1601
  %4048 = vmatpush1.msra.mxu0 %v1600
  %4049 = vmatprep.subr.mxu0 %v981
  %4050 = vmatpush1.msra.mxu0 %v980
  %4051 = vmatprep.subr.mxu0 %v950
  %4052 = vmatpush1.msra.mxu0 %v949
  %4053 = vmatprep.subr.mxu0 %v919
  %4054 = vmatpush1.msra.mxu0 %v918
  %4055 = vmatprep.subr.mxu0 %v888
  %4056 = vmatpush1.msra.mxu0 %v887
  %4057 = vmatprep.subr.mxu0 %v857
  %4058 = vmatpush1.msra.mxu0 %v856
  %4059 = vmatprep.subr.mxu0 %v826
  %4060 = vmatpush1.msra.mxu0 %v825
  %4061 = vmatprep.subr.mxu0 %v217
  %4062 = vmatpush1.msra.mxu0 %v216
  %4063 = vmatprep.subr.mxu0 %v185
  %4064 = vmatpush1.msra.mxu0 %v184
  %4065 = vmatprep.subr.mxu0 %v153
  %4066 = vmatpush1.msra.mxu0 %v152
  %4067 = vmatprep.subr.mxu0 %v121
  %4068 = vmatpush1.msra.mxu0 %v120
  %4069 = vmatprep.subr.mxu0 %v89
  %4070 = vmatpush1.msra.mxu0 %v88
  %4071 = vmatprep.subr.mxu0 %v57
  %4072 = vmatpush1.msra.mxu0 %v56
  %4073 = vmatprep.subr.mxu0 0.0
  %4074 = vmatpush2.msra.mxu0 0.0
  %4075 = vmatprep.subr.mxu0 0.0
  %4076 = vmatpush2.msra.mxu0 0.0
  %4077 = vmatprep.subr.mxu0 0.0
  %4078 = vmatpush2.msra.mxu0 0.0
  %4079 = vmatprep.subr.mxu0 0.0
  %4080 = vmatpush2.msra.mxu0 0.0
  %4081 = vmatprep.subr.mxu0 0.0
  %4082 = vmatpush2.msra.mxu0 0.0
  %4083 = vmatprep.subr.mxu0 0.0
  %4084 = vmatpush2.msra.mxu0 0.0
  %4085 = vmatprep.subr.mxu0 0.0
  %4086 = vmatpush2.msra.mxu0 0.0
  %4087 = vmatprep.subr.mxu0 0.0
  %4088 = vmatpush2.msra.mxu0 0.0
  %4089 = vmatprep.subr.mxu0 %v2531
  %4090 = vmatpush2.msra.mxu0 %v2530
  %4091 = vmatprep.subr.mxu0 %v2500
  %4092 = vmatpush2.msra.mxu0 %v2499
  %4093 = vmatprep.subr.mxu0 %v2469
  %4094 = vmatpush2.msra.mxu0 %v2468
  %4095 = vmatprep.subr.mxu0 %v2438
  %4096 = vmatpush2.msra.mxu0 %v2437
  %4097 = vmatprep.subr.mxu0 %v2407
  %4098 = vmatpush2.msra.mxu0 %v2406
  %4099 = vmatprep.subr.mxu0 %v2376
  %4100 = vmatpush2.msra.mxu0 %v2375
  %4101 = vmatprep.subr.mxu0 %v1756
  %4102 = vmatpush2.msra.mxu0 %v1755
  %4103 = vmatprep.subr.mxu0 %v1725
  %4104 = vmatpush2.msra.mxu0 %v1724
  %4105 = vmatprep.mubr.f32.mxu0 %v2773
  %4106 = vmatmul.mubr.f32.gmra.mxu0 %v2747
  %v4107 = vpop.f32.mrf.mxu0
  %v4108 = vadd.f32 0.0, %v4107
  %v4109 = vpop.f32.mrf.mxu0
  %v4110 = vadd.f32 0.0, %v4109
  %4111 = vmatprep.mubr.f32.mxu0 %v2776
  %4112 = vmatmul.mubr.f32.gmra.mxu0 %v2749
  %v4113 = vpop.f32.mrf.mxu0
  %v4114 = vadd.f32 0.0, %v4113
  %v4115 = vpop.f32.mrf.mxu0
  %v4116 = vadd.f32 0.0, %v4115
  %4117 = vmatprep.mubr.f32.mxu0 %v2779
  %4118 = vmatmul.mubr.f32.gmra.mxu0 %v2751
  %v4119 = vpop.f32.mrf.mxu0
  %v4120 = vadd.f32 0.0, %v4119
  %v4121 = vpop.f32.mrf.mxu0
  %v4122 = vadd.f32 0.0, %v4121
  %4123 = vmatprep.mubr.f32.mxu0 %v2782
  %4124 = vmatmul.mubr.f32.gmra.mxu0 %v2753
  %v4125 = vpop.f32.mrf.mxu0
  %v4126 = vadd.f32 0.0, %v4125
  %v4127 = vpop.f32.mrf.mxu0
  %v4128 = vadd.f32 0.0, %v4127
  %4129 = vmatprep.mubr.f32.mxu0 %v2785
  %4130 = vmatmul.mubr.f32.gmra.mxu0 %v2755
  %v4131 = vpop.f32.mrf.mxu0
  %v4132 = vadd.f32 0.0, %v4131
  %v4133 = vpop.f32.mrf.mxu0
  %v4134 = vadd.f32 0.0, %v4133
  %4135 = vmatprep.mubr.f32.mxu0 %v2788
  %4136 = vmatmul.mubr.f32.gmra.mxu0 %v2757
  %v4137 = vpop.f32.mrf.mxu0
  %v4138 = vadd.f32 0.0, %v4137
  %v4139 = vpop.f32.mrf.mxu0
  %v4140 = vadd.f32 0.0, %v4139
  %4141 = vmatprep.mubr.f32.mxu0 %v2791
  %4142 = vmatmul.mubr.f32.gmra.mxu0 %v2759
  %v4143 = vpop.f32.mrf.mxu0
  %v4144 = vadd.f32 0.0, %v4143
  %v4145 = vpop.f32.mrf.mxu0
  %v4146 = vadd.f32 0.0, %v4145
  %4147 = vmatprep.mubr.f32.mxu0 %v2794
  %4148 = vmatmul.mubr.f32.gmra.mxu0 %v2761
  %v4149 = vpop.f32.mrf.mxu0
  %v4150 = vadd.f32 0.0, %v4149
  %v4151 = vpop.f32.mrf.mxu0
  %v4152 = vadd.f32 0.0, %v4151
  %4153 = vmatprep.mubr.f32.mxu0 %v2797
  %4154 = vmatmul.mubr.f32.gmra.mxu0 %v2763
  %v4155 = vpop.f32.mrf.mxu0
  %v4156 = vadd.f32 0.0, %v4155
  %v4157 = vpop.f32.mrf.mxu0
  %v4158 = vadd.f32 0.0, %v4157
  %4159 = vmatprep.mubr.f32.mxu0 %v2800
  %4160 = vmatmul.mubr.f32.gmra.mxu0 %v2765
  %v4161 = vpop.f32.mrf.mxu0
  %v4162 = vadd.f32 0.0, %v4161
  %v4163 = vpop.f32.mrf.mxu0
  %v4164 = vadd.f32 0.0, %v4163
  %4165 = vmatprep.mubr.f32.mxu0 %v2803
  %4166 = vmatmul.mubr.f32.gmra.mxu0 %v2767
  %v4167 = vpop.f32.mrf.mxu0
  %v4168 = vadd.f32 0.0, %v4167
  %v4169 = vpop.f32.mrf.mxu0
  %v4170 = vadd.f32 0.0, %v4169
  %4171 = vmatprep.mubr.f32.mxu0 %v2806
  %4172 = vmatmul.mubr.f32.gmra.mxu0 %v2769
  %v4173 = vpop.f32.mrf.mxu0
  %v4174 = vadd.f32 0.0, %v4173
  %v4175 = vpop.f32.mrf.mxu0
  %v4176 = vadd.f32 0.0, %v4175
  %4177 = vdwg.mxu0
  %4178 = vmatprep.subr.mxu0 %v1696
  %4179 = vmatpush1.msra.mxu0 %v1695
  %4180 = vmatprep.subr.mxu0 %v1665
  %4181 = vmatpush1.msra.mxu0 %v1664
  %4182 = vmatprep.subr.mxu0 %v1634
  %4183 = vmatpush1.msra.mxu0 %v1633
  %4184 = vmatprep.subr.mxu0 %v1603
  %4185 = vmatpush1.msra.mxu0 %v1602
  %4186 = vmatprep.subr.mxu0 %v983
  %4187 = vmatpush1.msra.mxu0 %v982
  %4188 = vmatprep.subr.mxu0 %v952
  %4189 = vmatpush1.msra.mxu0 %v951
  %4190 = vmatprep.subr.mxu0 %v921
  %4191 = vmatpush1.msra.mxu0 %v920
  %4192 = vmatprep.subr.mxu0 %v890
  %4193 = vmatpush1.msra.mxu0 %v889
  %4194 = vmatprep.subr.mxu0 %v859
  %4195 = vmatpush1.msra.mxu0 %v858
  %4196 = vmatprep.subr.mxu0 %v828
  %4197 = vmatpush1.msra.mxu0 %v827
  %4198 = vmatprep.subr.mxu0 %v219
  %4199 = vmatpush1.msra.mxu0 %v218
  %4200 = vmatprep.subr.mxu0 %v187
  %4201 = vmatpush1.msra.mxu0 %v186
  %4202 = vmatprep.subr.mxu0 %v155
  %4203 = vmatpush1.msra.mxu0 %v154
  %4204 = vmatprep.subr.mxu0 %v123
  %4205 = vmatpush1.msra.mxu0 %v122
  %4206 = vmatprep.subr.mxu0 %v91
  %4207 = vmatpush1.msra.mxu0 %v90
  %4208 = vmatprep.subr.mxu0 %v59
  %4209 = vmatpush1.msra.mxu0 %v58
  %4210 = vmatprep.subr.mxu0 0.0
  %4211 = vmatpush2.msra.mxu0 0.0
  %4212 = vmatprep.subr.mxu0 0.0
  %4213 = vmatpush2.msra.mxu0 0.0
  %4214 = vmatprep.subr.mxu0 0.0
  %4215 = vmatpush2.msra.mxu0 0.0
  %4216 = vmatprep.subr.mxu0 0.0
  %4217 = vmatpush2.msra.mxu0 0.0
  %4218 = vmatprep.subr.mxu0 0.0
  %4219 = vmatpush2.msra.mxu0 0.0
  %4220 = vmatprep.subr.mxu0 0.0
  %4221 = vmatpush2.msra.mxu0 0.0
  %4222 = vmatprep.subr.mxu0 0.0
  %4223 = vmatpush2.msra.mxu0 0.0
  %4224 = vmatprep.subr.mxu0 0.0
  %4225 = vmatpush2.msra.mxu0 0.0
  %4226 = vmatprep.subr.mxu0 %v2533
  %4227 = vmatpush2.msra.mxu0 %v2532
  %4228 = vmatprep.subr.mxu0 %v2502
  %4229 = vmatpush2.msra.mxu0 %v2501
  %4230 = vmatprep.subr.mxu0 %v2471
  %4231 = vmatpush2.msra.mxu0 %v2470
  %4232 = vmatprep.subr.mxu0 %v2440
  %4233 = vmatpush2.msra.mxu0 %v2439
  %4234 = vmatprep.subr.mxu0 %v2409
  %4235 = vmatpush2.msra.mxu0 %v2408
  %4236 = vmatprep.subr.mxu0 %v2378
  %4237 = vmatpush2.msra.mxu0 %v2377
  %4238 = vmatprep.subr.mxu0 %v1758
  %4239 = vmatpush2.msra.mxu0 %v1757
  %4240 = vmatprep.subr.mxu0 %v1727
  %4241 = vmatpush2.msra.mxu0 %v1726
  %4242 = vmatprep.mubr.f32.mxu0 %v2773
  %4243 = vmatmul.mubr.f32.gmra.mxu0 %v2747
  %v4244 = vpop.f32.mrf.mxu0
  %v4245 = vadd.f32 0.0, %v4244
  %v4246 = vpop.f32.mrf.mxu0
  %v4247 = vadd.f32 0.0, %v4246
  %4248 = vmatprep.mubr.f32.mxu0 %v2776
  %4249 = vmatmul.mubr.f32.gmra.mxu0 %v2749
  %v4250 = vpop.f32.mrf.mxu0
  %v4251 = vadd.f32 0.0, %v4250
  %v4252 = vpop.f32.mrf.mxu0
  %v4253 = vadd.f32 0.0, %v4252
  %4254 = vmatprep.mubr.f32.mxu0 %v2779
  %4255 = vmatmul.mubr.f32.gmra.mxu0 %v2751
  %v4256 = vpop.f32.mrf.mxu0
  %v4257 = vadd.f32 0.0, %v4256
  %v4258 = vpop.f32.mrf.mxu0
  %v4259 = vadd.f32 0.0, %v4258
  %4260 = vmatprep.mubr.f32.mxu0 %v2782
  %4261 = vmatmul.mubr.f32.gmra.mxu0 %v2753
  %v4262 = vpop.f32.mrf.mxu0
  %v4263 = vadd.f32 0.0, %v4262
  %v4264 = vpop.f32.mrf.mxu0
  %v4265 = vadd.f32 0.0, %v4264
  %4266 = vmatprep.mubr.f32.mxu0 %v2785
  %4267 = vmatmul.mubr.f32.gmra.mxu0 %v2755
  %v4268 = vpop.f32.mrf.mxu0
  %v4269 = vadd.f32 0.0, %v4268
  %v4270 = vpop.f32.mrf.mxu0
  %v4271 = vadd.f32 0.0, %v4270
  %4272 = vmatprep.mubr.f32.mxu0 %v2788
  %4273 = vmatmul.mubr.f32.gmra.mxu0 %v2757
  %v4274 = vpop.f32.mrf.mxu0
  %v4275 = vadd.f32 0.0, %v4274
  %v4276 = vpop.f32.mrf.mxu0
  %v4277 = vadd.f32 0.0, %v4276
  %4278 = vmatprep.mubr.f32.mxu0 %v2791
  %4279 = vmatmul.mubr.f32.gmra.mxu0 %v2759
  %v4280 = vpop.f32.mrf.mxu0
  %v4281 = vadd.f32 0.0, %v4280
  %v4282 = vpop.f32.mrf.mxu0
  %v4283 = vadd.f32 0.0, %v4282
  %4284 = vmatprep.mubr.f32.mxu0 %v2794
  %4285 = vmatmul.mubr.f32.gmra.mxu0 %v2761
  %v4286 = vpop.f32.mrf.mxu0
  %v4287 = vadd.f32 0.0, %v4286
  %v4288 = vpop.f32.mrf.mxu0
  %v4289 = vadd.f32 0.0, %v4288
  %4290 = vmatprep.mubr.f32.mxu0 %v2797
  %4291 = vmatmul.mubr.f32.gmra.mxu0 %v2763
  %v4292 = vpop.f32.mrf.mxu0
  %v4293 = vadd.f32 0.0, %v4292
  %v4294 = vpop.f32.mrf.mxu0
  %v4295 = vadd.f32 0.0, %v4294
  %4296 = vmatprep.mubr.f32.mxu0 %v2800
  %4297 = vmatmul.mubr.f32.gmra.mxu0 %v2765
  %v4298 = vpop.f32.mrf.mxu0
  %v4299 = vadd.f32 0.0, %v4298
  %v4300 = vpop.f32.mrf.mxu0
  %v4301 = vadd.f32 0.0, %v4300
  %4302 = vmatprep.mubr.f32.mxu0 %v2803
  %4303 = vmatmul.mubr.f32.gmra.mxu0 %v2767
  %v4304 = vpop.f32.mrf.mxu0
  %v4305 = vadd.f32 0.0, %v4304
  %v4306 = vpop.f32.mrf.mxu0
  %v4307 = vadd.f32 0.0, %v4306
  %4308 = vmatprep.mubr.f32.mxu0 %v2806
  %4309 = vmatmul.mubr.f32.gmra.mxu0 %v2769
  %v4310 = vpop.f32.mrf.mxu0
  %v4311 = vadd.f32 0.0, %v4310
  %v4312 = vpop.f32.mrf.mxu0
  %v4313 = vadd.f32 0.0, %v4312
  %4314 = vdwg.mxu0
  %4315 = vmatprep.subr.mxu0 %v1698
  %4316 = vmatpush1.msra.mxu0 %v1697
  %4317 = vmatprep.subr.mxu0 %v1667
  %4318 = vmatpush1.msra.mxu0 %v1666
  %4319 = vmatprep.subr.mxu0 %v1636
  %4320 = vmatpush1.msra.mxu0 %v1635
  %4321 = vmatprep.subr.mxu0 %v1605
  %4322 = vmatpush1.msra.mxu0 %v1604
  %4323 = vmatprep.subr.mxu0 %v985
  %4324 = vmatpush1.msra.mxu0 %v984
  %4325 = vmatprep.subr.mxu0 %v954
  %4326 = vmatpush1.msra.mxu0 %v953
  %4327 = vmatprep.subr.mxu0 %v923
  %4328 = vmatpush1.msra.mxu0 %v922
  %4329 = vmatprep.subr.mxu0 %v892
  %4330 = vmatpush1.msra.mxu0 %v891
  %4331 = vmatprep.subr.mxu0 %v861
  %4332 = vmatpush1.msra.mxu0 %v860
  %4333 = vmatprep.subr.mxu0 %v830
  %4334 = vmatpush1.msra.mxu0 %v829
  %4335 = vmatprep.subr.mxu0 %v221
  %4336 = vmatpush1.msra.mxu0 %v220
  %4337 = vmatprep.subr.mxu0 %v189
  %4338 = vmatpush1.msra.mxu0 %v188
  %4339 = vmatprep.subr.mxu0 %v157
  %4340 = vmatpush1.msra.mxu0 %v156
  %4341 = vmatprep.subr.mxu0 %v125
  %4342 = vmatpush1.msra.mxu0 %v124
  %4343 = vmatprep.subr.mxu0 %v93
  %4344 = vmatpush1.msra.mxu0 %v92
  %4345 = vmatprep.subr.mxu0 %v61
  %4346 = vmatpush1.msra.mxu0 %v60
  %4347 = vmatprep.subr.mxu0 0.0
  %4348 = vmatpush2.msra.mxu0 0.0
  %4349 = vmatprep.subr.mxu0 0.0
  %4350 = vmatpush2.msra.mxu0 0.0
  %4351 = vmatprep.subr.mxu0 0.0
  %4352 = vmatpush2.msra.mxu0 0.0
  %4353 = vmatprep.subr.mxu0 0.0
  %4354 = vmatpush2.msra.mxu0 0.0
  %4355 = vmatprep.subr.mxu0 0.0
  %4356 = vmatpush2.msra.mxu0 0.0
  %4357 = vmatprep.subr.mxu0 0.0
  %4358 = vmatpush2.msra.mxu0 0.0
  %4359 = vmatprep.subr.mxu0 0.0
  %4360 = vmatpush2.msra.mxu0 0.0
  %4361 = vmatprep.subr.mxu0 0.0
  %4362 = vmatpush2.msra.mxu0 0.0
  %4363 = vmatprep.subr.mxu0 %v2535
  %4364 = vmatpush2.msra.mxu0 %v2534
  %4365 = vmatprep.subr.mxu0 %v2504
  %4366 = vmatpush2.msra.mxu0 %v2503
  %4367 = vmatprep.subr.mxu0 %v2473
  %4368 = vmatpush2.msra.mxu0 %v2472
  %4369 = vmatprep.subr.mxu0 %v2442
  %4370 = vmatpush2.msra.mxu0 %v2441
  %4371 = vmatprep.subr.mxu0 %v2411
  %4372 = vmatpush2.msra.mxu0 %v2410
  %4373 = vmatprep.subr.mxu0 %v2380
  %4374 = vmatpush2.msra.mxu0 %v2379
  %4375 = vmatprep.subr.mxu0 %v1760
  %4376 = vmatpush2.msra.mxu0 %v1759
  %4377 = vmatprep.subr.mxu0 %v1729
  %4378 = vmatpush2.msra.mxu0 %v1728
  %4379 = vmatprep.mubr.f32.mxu0 %v2773
  %4380 = vmatmul.mubr.f32.gmra.mxu0 %v2747
  %v4381 = vpop.f32.mrf.mxu0
  %v4382 = vadd.f32 0.0, %v4381
  %v4383 = vpop.f32.mrf.mxu0
  %v4384 = vadd.f32 0.0, %v4383
  %4385 = vmatprep.mubr.f32.mxu0 %v2776
  %4386 = vmatmul.mubr.f32.gmra.mxu0 %v2749
  %v4387 = vpop.f32.mrf.mxu0
  %v4388 = vadd.f32 0.0, %v4387
  %v4389 = vpop.f32.mrf.mxu0
  %v4390 = vadd.f32 0.0, %v4389
  %4391 = vmatprep.mubr.f32.mxu0 %v2779
  %4392 = vmatmul.mubr.f32.gmra.mxu0 %v2751
  %v4393 = vpop.f32.mrf.mxu0
  %v4394 = vadd.f32 0.0, %v4393
  %v4395 = vpop.f32.mrf.mxu0
  %v4396 = vadd.f32 0.0, %v4395
  %4397 = vmatprep.mubr.f32.mxu0 %v2782
  %4398 = vmatmul.mubr.f32.gmra.mxu0 %v2753
  %v4399 = vpop.f32.mrf.mxu0
  %v4400 = vadd.f32 0.0, %v4399
  %v4401 = vpop.f32.mrf.mxu0
  %v4402 = vadd.f32 0.0, %v4401
  %4403 = vmatprep.mubr.f32.mxu0 %v2785
  %4404 = vmatmul.mubr.f32.gmra.mxu0 %v2755
  %v4405 = vpop.f32.mrf.mxu0
  %v4406 = vadd.f32 0.0, %v4405
  %v4407 = vpop.f32.mrf.mxu0
  %v4408 = vadd.f32 0.0, %v4407
  %4409 = vmatprep.mubr.f32.mxu0 %v2788
  %4410 = vmatmul.mubr.f32.gmra.mxu0 %v2757
  %v4411 = vpop.f32.mrf.mxu0
  %v4412 = vadd.f32 0.0, %v4411
  %v4413 = vpop.f32.mrf.mxu0
  %v4414 = vadd.f32 0.0, %v4413
  %4415 = vmatprep.mubr.f32.mxu0 %v2791
  %4416 = vmatmul.mubr.f32.gmra.mxu0 %v2759
  %v4417 = vpop.f32.mrf.mxu0
  %v4418 = vadd.f32 0.0, %v4417
  %v4419 = vpop.f32.mrf.mxu0
  %v4420 = vadd.f32 0.0, %v4419
  %4421 = vmatprep.mubr.f32.mxu0 %v2794
  %4422 = vmatmul.mubr.f32.gmra.mxu0 %v2761
  %v4423 = vpop.f32.mrf.mxu0
  %v4424 = vadd.f32 0.0, %v4423
  %v4425 = vpop.f32.mrf.mxu0
  %v4426 = vadd.f32 0.0, %v4425
  %4427 = vmatprep.mubr.f32.mxu0 %v2797
  %4428 = vmatmul.mubr.f32.gmra.mxu0 %v2763
  %v4429 = vpop.f32.mrf.mxu0
  %v4430 = vadd.f32 0.0, %v4429
  %v4431 = vpop.f32.mrf.mxu0
  %v4432 = vadd.f32 0.0, %v4431
  %4433 = vmatprep.mubr.f32.mxu0 %v2800
  %4434 = vmatmul.mubr.f32.gmra.mxu0 %v2765
  %v4435 = vpop.f32.mrf.mxu0
  %v4436 = vadd.f32 0.0, %v4435
  %v4437 = vpop.f32.mrf.mxu0
  %v4438 = vadd.f32 0.0, %v4437
  %4439 = vmatprep.mubr.f32.mxu0 %v2803
  %4440 = vmatmul.mubr.f32.gmra.mxu0 %v2767
  %v4441 = vpop.f32.mrf.mxu0
  %v4442 = vadd.f32 0.0, %v4441
  %v4443 = vpop.f32.mrf.mxu0
  %v4444 = vadd.f32 0.0, %v4443
  %4445 = vmatprep.mubr.f32.mxu0 %v2806
  %4446 = vmatmul.mubr.f32.gmra.mxu0 %v2769
  %v4447 = vpop.f32.mrf.mxu0
  %v4448 = vadd.f32 0.0, %v4447
  %v4449 = vpop.f32.mrf.mxu0
  %v4450 = vadd.f32 0.0, %v4449
  %4451 = vdwg.mxu0
  %4452 = vmatprep.subr.mxu0 %v1700
  %4453 = vmatpush1.msra.mxu0 %v1699
  %4454 = vmatprep.subr.mxu0 %v1669
  %4455 = vmatpush1.msra.mxu0 %v1668
  %4456 = vmatprep.subr.mxu0 %v1638
  %4457 = vmatpush1.msra.mxu0 %v1637
  %4458 = vmatprep.subr.mxu0 %v1607
  %4459 = vmatpush1.msra.mxu0 %v1606
  %4460 = vmatprep.subr.mxu0 %v987
  %4461 = vmatpush1.msra.mxu0 %v986
  %4462 = vmatprep.subr.mxu0 %v956
  %4463 = vmatpush1.msra.mxu0 %v955
  %4464 = vmatprep.subr.mxu0 %v925
  %4465 = vmatpush1.msra.mxu0 %v924
  %4466 = vmatprep.subr.mxu0 %v894
  %4467 = vmatpush1.msra.mxu0 %v893
  %4468 = vmatprep.subr.mxu0 %v863
  %4469 = vmatpush1.msra.mxu0 %v862
  %4470 = vmatprep.subr.mxu0 %v832
  %4471 = vmatpush1.msra.mxu0 %v831
  %4472 = vmatprep.subr.mxu0 %v223
  %4473 = vmatpush1.msra.mxu0 %v222
  %4474 = vmatprep.subr.mxu0 %v191
  %4475 = vmatpush1.msra.mxu0 %v190
  %4476 = vmatprep.subr.mxu0 %v159
  %4477 = vmatpush1.msra.mxu0 %v158
  %4478 = vmatprep.subr.mxu0 %v127
  %4479 = vmatpush1.msra.mxu0 %v126
  %4480 = vmatprep.subr.mxu0 %v95
  %4481 = vmatpush1.msra.mxu0 %v94
  %4482 = vmatprep.subr.mxu0 %v63
  %4483 = vmatpush1.msra.mxu0 %v62
  %4484 = vmatprep.subr.mxu0 0.0
  %4485 = vmatpush2.msra.mxu0 0.0
  %4486 = vmatprep.subr.mxu0 0.0
  %4487 = vmatpush2.msra.mxu0 0.0
  %4488 = vmatprep.subr.mxu0 0.0
  %4489 = vmatpush2.msra.mxu0 0.0
  %4490 = vmatprep.subr.mxu0 0.0
  %4491 = vmatpush2.msra.mxu0 0.0
  %4492 = vmatprep.subr.mxu0 0.0
  %4493 = vmatpush2.msra.mxu0 0.0
  %4494 = vmatprep.subr.mxu0 0.0
  %4495 = vmatpush2.msra.mxu0 0.0
  %4496 = vmatprep.subr.mxu0 0.0
  %4497 = vmatpush2.msra.mxu0 0.0
  %4498 = vmatprep.subr.mxu0 0.0
  %4499 = vmatpush2.msra.mxu0 0.0
  %4500 = vmatprep.subr.mxu0 %v2537
  %4501 = vmatpush2.msra.mxu0 %v2536
  %4502 = vmatprep.subr.mxu0 %v2506
  %4503 = vmatpush2.msra.mxu0 %v2505
  %4504 = vmatprep.subr.mxu0 %v2475
  %4505 = vmatpush2.msra.mxu0 %v2474
  %4506 = vmatprep.subr.mxu0 %v2444
  %4507 = vmatpush2.msra.mxu0 %v2443
  %4508 = vmatprep.subr.mxu0 %v2413
  %4509 = vmatpush2.msra.mxu0 %v2412
  %4510 = vmatprep.subr.mxu0 %v2382
  %4511 = vmatpush2.msra.mxu0 %v2381
  %4512 = vmatprep.subr.mxu0 %v1762
  %4513 = vmatpush2.msra.mxu0 %v1761
  %4514 = vmatprep.subr.mxu0 %v1731
  %4515 = vmatpush2.msra.mxu0 %v1730
  %4516 = vmatprep.mubr.f32.mxu0 %v2773
  %4517 = vmatmul.mubr.f32.gmra.mxu0 %v2747
  %v4518 = vpop.f32.mrf.mxu0
  %v4519 = vadd.f32 0.0, %v4518
  %v4520 = vpop.f32.mrf.mxu0
  %v4521 = vadd.f32 0.0, %v4520
  %4522 = vmatprep.mubr.f32.mxu0 %v2776
  %4523 = vmatmul.mubr.f32.gmra.mxu0 %v2749
  %v4524 = vpop.f32.mrf.mxu0
  %v4525 = vadd.f32 0.0, %v4524
  %v4526 = vpop.f32.mrf.mxu0
  %v4527 = vadd.f32 0.0, %v4526
  %4528 = vmatprep.mubr.f32.mxu0 %v2779
  %4529 = vmatmul.mubr.f32.gmra.mxu0 %v2751
  %v4530 = vpop.f32.mrf.mxu0
  %v4531 = vadd.f32 0.0, %v4530
  %v4532 = vpop.f32.mrf.mxu0
  %v4533 = vadd.f32 0.0, %v4532
  %4534 = vmatprep.mubr.f32.mxu0 %v2782
  %4535 = vmatmul.mubr.f32.gmra.mxu0 %v2753
  %v4536 = vpop.f32.mrf.mxu0
  %v4537 = vadd.f32 0.0, %v4536
  %v4538 = vpop.f32.mrf.mxu0
  %v4539 = vadd.f32 0.0, %v4538
  %4540 = vmatprep.mubr.f32.mxu0 %v2785
  %4541 = vmatmul.mubr.f32.gmra.mxu0 %v2755
  %v4542 = vpop.f32.mrf.mxu0
  %v4543 = vadd.f32 0.0, %v4542
  %v4544 = vpop.f32.mrf.mxu0
  %v4545 = vadd.f32 0.0, %v4544
  %4546 = vmatprep.mubr.f32.mxu0 %v2788
  %4547 = vmatmul.mubr.f32.gmra.mxu0 %v2757
  %v4548 = vpop.f32.mrf.mxu0
  %v4549 = vadd.f32 0.0, %v4548
  %v4550 = vpop.f32.mrf.mxu0
  %v4551 = vadd.f32 0.0, %v4550
  %4552 = vmatprep.mubr.f32.mxu0 %v2791
  %4553 = vmatmul.mubr.f32.gmra.mxu0 %v2759
  %v4554 = vpop.f32.mrf.mxu0
  %v4555 = vadd.f32 0.0, %v4554
  %v4556 = vpop.f32.mrf.mxu0
  %v4557 = vadd.f32 0.0, %v4556
  %4558 = vmatprep.mubr.f32.mxu0 %v2794
  %4559 = vmatmul.mubr.f32.gmra.mxu0 %v2761
  %v4560 = vpop.f32.mrf.mxu0
  %v4561 = vadd.f32 0.0, %v4560
  %v4562 = vpop.f32.mrf.mxu0
  %v4563 = vadd.f32 0.0, %v4562
  %4564 = vmatprep.mubr.f32.mxu0 %v2797
  %4565 = vmatmul.mubr.f32.gmra.mxu0 %v2763
  %v4566 = vpop.f32.mrf.mxu0
  %v4567 = vadd.f32 0.0, %v4566
  %v4568 = vpop.f32.mrf.mxu0
  %v4569 = vadd.f32 0.0, %v4568
  %4570 = vmatprep.mubr.f32.mxu0 %v2800
  %4571 = vmatmul.mubr.f32.gmra.mxu0 %v2765
  %v4572 = vpop.f32.mrf.mxu0
  %v4573 = vadd.f32 0.0, %v4572
  %v4574 = vpop.f32.mrf.mxu0
  %v4575 = vadd.f32 0.0, %v4574
  %4576 = vmatprep.mubr.f32.mxu0 %v2803
  %4577 = vmatmul.mubr.f32.gmra.mxu0 %v2767
  %v4578 = vpop.f32.mrf.mxu0
  %v4579 = vadd.f32 0.0, %v4578
  %v4580 = vpop.f32.mrf.mxu0
  %v4581 = vadd.f32 0.0, %v4580
  %4582 = vmatprep.mubr.f32.mxu0 %v2806
  %4583 = vmatmul.mubr.f32.gmra.mxu0 %v2769
  %v4584 = vpop.f32.mrf.mxu0
  %v4585 = vadd.f32 0.0, %v4584
  %v4586 = vpop.f32.mrf.mxu0
  %v4587 = vadd.f32 0.0, %v4586
  %4588 = vdwg.mxu0
  %4589 = vmatprep.subr.mxu0 %v1702
  %4590 = vmatpush1.msra.mxu0 %v1701
  %4591 = vmatprep.subr.mxu0 %v1671
  %4592 = vmatpush1.msra.mxu0 %v1670
  %4593 = vmatprep.subr.mxu0 %v1640
  %4594 = vmatpush1.msra.mxu0 %v1639
  %4595 = vmatprep.subr.mxu0 %v1609
  %4596 = vmatpush1.msra.mxu0 %v1608
  %4597 = vmatprep.subr.mxu0 %v989
  %4598 = vmatpush1.msra.mxu0 %v988
  %4599 = vmatprep.subr.mxu0 %v958
  %4600 = vmatpush1.msra.mxu0 %v957
  %4601 = vmatprep.subr.mxu0 %v927
  %4602 = vmatpush1.msra.mxu0 %v926
  %4603 = vmatprep.subr.mxu0 %v896
  %4604 = vmatpush1.msra.mxu0 %v895
  %4605 = vmatprep.subr.mxu0 %v865
  %4606 = vmatpush1.msra.mxu0 %v864
  %4607 = vmatprep.subr.mxu0 %v834
  %4608 = vmatpush1.msra.mxu0 %v833
  %4609 = vmatprep.subr.mxu0 %v225
  %4610 = vmatpush1.msra.mxu0 %v224
  %4611 = vmatprep.subr.mxu0 %v193
  %4612 = vmatpush1.msra.mxu0 %v192
  %4613 = vmatprep.subr.mxu0 %v161
  %4614 = vmatpush1.msra.mxu0 %v160
  %4615 = vmatprep.subr.mxu0 %v129
  %4616 = vmatpush1.msra.mxu0 %v128
  %4617 = vmatprep.subr.mxu0 %v97
  %4618 = vmatpush1.msra.mxu0 %v96
  %4619 = vmatprep.subr.mxu0 %v65
  %4620 = vmatpush1.msra.mxu0 %v64
  %4621 = vmatprep.subr.mxu0 0.0
  %4622 = vmatpush2.msra.mxu0 0.0
  %4623 = vmatprep.subr.mxu0 0.0
  %4624 = vmatpush2.msra.mxu0 0.0
  %4625 = vmatprep.subr.mxu0 0.0
  %4626 = vmatpush2.msra.mxu0 0.0
  %4627 = vmatprep.subr.mxu0 0.0
  %4628 = vmatpush2.msra.mxu0 0.0
  %4629 = vmatprep.subr.mxu0 0.0
  %4630 = vmatpush2.msra.mxu0 0.0
  %4631 = vmatprep.subr.mxu0 0.0
  %4632 = vmatpush2.msra.mxu0 0.0
  %4633 = vmatprep.subr.mxu0 0.0
  %4634 = vmatpush2.msra.mxu0 0.0
  %4635 = vmatprep.subr.mxu0 0.0
  %4636 = vmatpush2.msra.mxu0 0.0
  %4637 = vmatprep.subr.mxu0 %v2539
  %4638 = vmatpush2.msra.mxu0 %v2538
  %4639 = vmatprep.subr.mxu0 %v2508
  %4640 = vmatpush2.msra.mxu0 %v2507
  %4641 = vmatprep.subr.mxu0 %v2477
  %4642 = vmatpush2.msra.mxu0 %v2476
  %4643 = vmatprep.subr.mxu0 %v2446
  %4644 = vmatpush2.msra.mxu0 %v2445
  %4645 = vmatprep.subr.mxu0 %v2415
  %4646 = vmatpush2.msra.mxu0 %v2414
  %4647 = vmatprep.subr.mxu0 %v2384
  %4648 = vmatpush2.msra.mxu0 %v2383
  %4649 = vmatprep.subr.mxu0 %v1764
  %4650 = vmatpush2.msra.mxu0 %v1763
  %4651 = vmatprep.subr.mxu0 %v1733
  %4652 = vmatpush2.msra.mxu0 %v1732
  %4653 = vmatprep.mubr.f32.mxu0 %v2773
  %4654 = vmatmul.mubr.f32.gmra.mxu0 %v2747
  %v4655 = vpop.f32.mrf.mxu0
  %v4656 = vadd.f32 0.0, %v4655
  %v4657 = vpop.f32.mrf.mxu0
  %v4658 = vadd.f32 0.0, %v4657
  %4659 = vmatprep.mubr.f32.mxu0 %v2776
  %4660 = vmatmul.mubr.f32.gmra.mxu0 %v2749
  %v4661 = vpop.f32.mrf.mxu0
  %v4662 = vadd.f32 0.0, %v4661
  %v4663 = vpop.f32.mrf.mxu0
  %v4664 = vadd.f32 0.0, %v4663
  %4665 = vmatprep.mubr.f32.mxu0 %v2779
  %4666 = vmatmul.mubr.f32.gmra.mxu0 %v2751
  %v4667 = vpop.f32.mrf.mxu0
  %v4668 = vadd.f32 0.0, %v4667
  %v4669 = vpop.f32.mrf.mxu0
  %v4670 = vadd.f32 0.0, %v4669
  %4671 = vmatprep.mubr.f32.mxu0 %v2782
  %4672 = vmatmul.mubr.f32.gmra.mxu0 %v2753
  %v4673 = vpop.f32.mrf.mxu0
  %v4674 = vadd.f32 0.0, %v4673
  %v4675 = vpop.f32.mrf.mxu0
  %v4676 = vadd.f32 0.0, %v4675
  %4677 = vmatprep.mubr.f32.mxu0 %v2785
  %4678 = vmatmul.mubr.f32.gmra.mxu0 %v2755
  %v4679 = vpop.f32.mrf.mxu0
  %v4680 = vadd.f32 0.0, %v4679
  %v4681 = vpop.f32.mrf.mxu0
  %v4682 = vadd.f32 0.0, %v4681
  %4683 = vmatprep.mubr.f32.mxu0 %v2788
  %4684 = vmatmul.mubr.f32.gmra.mxu0 %v2757
  %v4685 = vpop.f32.mrf.mxu0
  %v4686 = vadd.f32 0.0, %v4685
  %v4687 = vpop.f32.mrf.mxu0
  %v4688 = vadd.f32 0.0, %v4687
  %4689 = vmatprep.mubr.f32.mxu0 %v2791
  %4690 = vmatmul.mubr.f32.gmra.mxu0 %v2759
  %v4691 = vpop.f32.mrf.mxu0
  %v4692 = vadd.f32 0.0, %v4691
  %v4693 = vpop.f32.mrf.mxu0
  %v4694 = vadd.f32 0.0, %v4693
  %4695 = vmatprep.mubr.f32.mxu0 %v2794
  %4696 = vmatmul.mubr.f32.gmra.mxu0 %v2761
  %v4697 = vpop.f32.mrf.mxu0
  %v4698 = vadd.f32 0.0, %v4697
  %v4699 = vpop.f32.mrf.mxu0
  %v4700 = vadd.f32 0.0, %v4699
  %4701 = vmatprep.mubr.f32.mxu0 %v2797
  %4702 = vmatmul.mubr.f32.gmra.mxu0 %v2763
  %v4703 = vpop.f32.mrf.mxu0
  %v4704 = vadd.f32 0.0, %v4703
  %v4705 = vpop.f32.mrf.mxu0
  %v4706 = vadd.f32 0.0, %v4705
  %4707 = vmatprep.mubr.f32.mxu0 %v2800
  %4708 = vmatmul.mubr.f32.gmra.mxu0 %v2765
  %v4709 = vpop.f32.mrf.mxu0
  %v4710 = vadd.f32 0.0, %v4709
  %v4711 = vpop.f32.mrf.mxu0
  %v4712 = vadd.f32 0.0, %v4711
  %4713 = vmatprep.mubr.f32.mxu0 %v2803
  %4714 = vmatmul.mubr.f32.gmra.mxu0 %v2767
  %v4715 = vpop.f32.mrf.mxu0
  %v4716 = vadd.f32 0.0, %v4715
  %v4717 = vpop.f32.mrf.mxu0
  %v4718 = vadd.f32 0.0, %v4717
  %4719 = vmatprep.mubr.f32.mxu0 %v2806
  %4720 = vmatmul.mubr.f32.gmra.mxu0 %v2769
  %v4721 = vpop.f32.mrf.mxu0
  %v4722 = vadd.f32 0.0, %v4721
  %v4723 = vpop.f32.mrf.mxu0
  %v4724 = vadd.f32 0.0, %v4723
  %4725 = vdwg.mxu0
  %4726 = vmatprep.subr.mxu0 %v1704
  %4727 = vmatpush1.msra.mxu0 %v1703
  %4728 = vmatprep.subr.mxu0 %v1673
  %4729 = vmatpush1.msra.mxu0 %v1672
  %4730 = vmatprep.subr.mxu0 %v1642
  %4731 = vmatpush1.msra.mxu0 %v1641
  %4732 = vmatprep.subr.mxu0 %v1611
  %4733 = vmatpush1.msra.mxu0 %v1610
  %4734 = vmatprep.subr.mxu0 %v991
  %4735 = vmatpush1.msra.mxu0 %v990
  %4736 = vmatprep.subr.mxu0 %v960
  %4737 = vmatpush1.msra.mxu0 %v959
  %4738 = vmatprep.subr.mxu0 %v929
  %4739 = vmatpush1.msra.mxu0 %v928
  %4740 = vmatprep.subr.mxu0 %v898
  %4741 = vmatpush1.msra.mxu0 %v897
  %4742 = vmatprep.subr.mxu0 %v867
  %4743 = vmatpush1.msra.mxu0 %v866
  %4744 = vmatprep.subr.mxu0 %v836
  %4745 = vmatpush1.msra.mxu0 %v835
  %4746 = vmatprep.subr.mxu0 %v227
  %4747 = vmatpush1.msra.mxu0 %v226
  %4748 = vmatprep.subr.mxu0 %v195
  %4749 = vmatpush1.msra.mxu0 %v194
  %4750 = vmatprep.subr.mxu0 %v163
  %4751 = vmatpush1.msra.mxu0 %v162
  %4752 = vmatprep.subr.mxu0 %v131
  %4753 = vmatpush1.msra.mxu0 %v130
  %4754 = vmatprep.subr.mxu0 %v99
  %4755 = vmatpush1.msra.mxu0 %v98
  %4756 = vmatprep.subr.mxu0 %v67
  %4757 = vmatpush1.msra.mxu0 %v66
  %4758 = vmatprep.subr.mxu0 0.0
  %4759 = vmatpush2.msra.mxu0 0.0
  %4760 = vmatprep.subr.mxu0 0.0
  %4761 = vmatpush2.msra.mxu0 0.0
  %4762 = vmatprep.subr.mxu0 0.0
  %4763 = vmatpush2.msra.mxu0 0.0
  %4764 = vmatprep.subr.mxu0 0.0
  %4765 = vmatpush2.msra.mxu0 0.0
  %4766 = vmatprep.subr.mxu0 0.0
  %4767 = vmatpush2.msra.mxu0 0.0
  %4768 = vmatprep.subr.mxu0 0.0
  %4769 = vmatpush2.msra.mxu0 0.0
  %4770 = vmatprep.subr.mxu0 0.0
  %4771 = vmatpush2.msra.mxu0 0.0
  %4772 = vmatprep.subr.mxu0 0.0
  %4773 = vmatpush2.msra.mxu0 0.0
  %4774 = vmatprep.subr.mxu0 %v2541
  %4775 = vmatpush2.msra.mxu0 %v2540
  %4776 = vmatprep.subr.mxu0 %v2510
  %4777 = vmatpush2.msra.mxu0 %v2509
  %4778 = vmatprep.subr.mxu0 %v2479
  %4779 = vmatpush2.msra.mxu0 %v2478
  %4780 = vmatprep.subr.mxu0 %v2448
  %4781 = vmatpush2.msra.mxu0 %v2447
  %4782 = vmatprep.subr.mxu0 %v2417
  %4783 = vmatpush2.msra.mxu0 %v2416
  %4784 = vmatprep.subr.mxu0 %v2386
  %4785 = vmatpush2.msra.mxu0 %v2385
  %4786 = vmatprep.subr.mxu0 %v1766
  %4787 = vmatpush2.msra.mxu0 %v1765
  %4788 = vmatprep.subr.mxu0 %v1735
  %4789 = vmatpush2.msra.mxu0 %v1734
  %4790 = vmatprep.mubr.f32.mxu0 %v2773
  %4791 = vmatmul.mubr.f32.gmra.mxu0 %v2747
  %v4792 = vpop.f32.mrf.mxu0
  %v4793 = vadd.f32 0.0, %v4792
  %v4794 = vpop.f32.mrf.mxu0
  %v4795 = vadd.f32 0.0, %v4794
  %4796 = vmatprep.mubr.f32.mxu0 %v2776
  %4797 = vmatmul.mubr.f32.gmra.mxu0 %v2749
  %v4798 = vpop.f32.mrf.mxu0
  %v4799 = vadd.f32 0.0, %v4798
  %v4800 = vpop.f32.mrf.mxu0
  %v4801 = vadd.f32 0.0, %v4800
  %4802 = vmatprep.mubr.f32.mxu0 %v2779
  %4803 = vmatmul.mubr.f32.gmra.mxu0 %v2751
  %v4804 = vpop.f32.mrf.mxu0
  %v4805 = vadd.f32 0.0, %v4804
  %v4806 = vpop.f32.mrf.mxu0
  %v4807 = vadd.f32 0.0, %v4806
  %4808 = vmatprep.mubr.f32.mxu0 %v2782
  %4809 = vmatmul.mubr.f32.gmra.mxu0 %v2753
  %v4810 = vpop.f32.mrf.mxu0
  %v4811 = vadd.f32 0.0, %v4810
  %v4812 = vpop.f32.mrf.mxu0
  %v4813 = vadd.f32 0.0, %v4812
  %4814 = vmatprep.mubr.f32.mxu0 %v2785
  %4815 = vmatmul.mubr.f32.gmra.mxu0 %v2755
  %v4816 = vpop.f32.mrf.mxu0
  %v4817 = vadd.f32 0.0, %v4816
  %v4818 = vpop.f32.mrf.mxu0
  %v4819 = vadd.f32 0.0, %v4818
  %4820 = vmatprep.mubr.f32.mxu0 %v2788
  %4821 = vmatmul.mubr.f32.gmra.mxu0 %v2757
  %v4822 = vpop.f32.mrf.mxu0
  %v4823 = vadd.f32 0.0, %v4822
  %v4824 = vpop.f32.mrf.mxu0
  %v4825 = vadd.f32 0.0, %v4824
  %4826 = vmatprep.mubr.f32.mxu0 %v2791
  %4827 = vmatmul.mubr.f32.gmra.mxu0 %v2759
  %v4828 = vpop.f32.mrf.mxu0
  %v4829 = vadd.f32 0.0, %v4828
  %v4830 = vpop.f32.mrf.mxu0
  %v4831 = vadd.f32 0.0, %v4830
  %4832 = vmatprep.mubr.f32.mxu0 %v2794
  %4833 = vmatmul.mubr.f32.gmra.mxu0 %v2761
  %v4834 = vpop.f32.mrf.mxu0
  %v4835 = vadd.f32 0.0, %v4834
  %v4836 = vpop.f32.mrf.mxu0
  %v4837 = vadd.f32 0.0, %v4836
  %4838 = vmatprep.mubr.f32.mxu0 %v2797
  %4839 = vmatmul.mubr.f32.gmra.mxu0 %v2763
  %v4840 = vpop.f32.mrf.mxu0
  %v4841 = vadd.f32 0.0, %v4840
  %v4842 = vpop.f32.mrf.mxu0
  %v4843 = vadd.f32 0.0, %v4842
  %4844 = vmatprep.mubr.f32.mxu0 %v2800
  %4845 = vmatmul.mubr.f32.gmra.mxu0 %v2765
  %v4846 = vpop.f32.mrf.mxu0
  %v4847 = vadd.f32 0.0, %v4846
  %v4848 = vpop.f32.mrf.mxu0
  %v4849 = vadd.f32 0.0, %v4848
  %4850 = vmatprep.mubr.f32.mxu0 %v2803
  %4851 = vmatmul.mubr.f32.gmra.mxu0 %v2767
  %v4852 = vpop.f32.mrf.mxu0
  %v4853 = vadd.f32 0.0, %v4852
  %v4854 = vpop.f32.mrf.mxu0
  %v4855 = vadd.f32 0.0, %v4854
  %4856 = vmatprep.mubr.f32.mxu0 %v2806
  %4857 = vmatmul.mubr.f32.gmra.mxu0 %v2769
  %v4858 = vpop.f32.mrf.mxu0
  %v4859 = vadd.f32 0.0, %v4858
  %v4860 = vpop.f32.mrf.mxu0
  %v4861 = vadd.f32 0.0, %v4860
  %4862 = vdwg.mxu0
  %4863 = vmatprep.subr.mxu0 %v1969
  %4864 = vmatpush1.msra.mxu0 %v1705
  %4865 = vmatprep.subr.mxu0 %v1968
  %4866 = vmatpush1.msra.mxu0 %v1674
  %4867 = vmatprep.subr.mxu0 %v1967
  %4868 = vmatpush1.msra.mxu0 %v1643
  %4869 = vmatprep.subr.mxu0 %v1966
  %4870 = vmatpush1.msra.mxu0 %v1612
  %4871 = vmatprep.subr.mxu0 %v1196
  %4872 = vmatpush1.msra.mxu0 %v992
  %4873 = vmatprep.subr.mxu0 %v1195
  %4874 = vmatpush1.msra.mxu0 %v961
  %4875 = vmatprep.subr.mxu0 %v1194
  %4876 = vmatpush1.msra.mxu0 %v930
  %4877 = vmatprep.subr.mxu0 %v1193
  %4878 = vmatpush1.msra.mxu0 %v899
  %4879 = vmatprep.subr.mxu0 %v1192
  %4880 = vmatpush1.msra.mxu0 %v868
  %4881 = vmatprep.subr.mxu0 %v1191
  %4882 = vmatpush1.msra.mxu0 %v837
  %4883 = vmatprep.subr.mxu0 %v229
  %4884 = vmatpush1.msra.mxu0 %v228
  %4885 = vmatprep.subr.mxu0 %v197
  %4886 = vmatpush1.msra.mxu0 %v196
  %4887 = vmatprep.subr.mxu0 %v165
  %4888 = vmatpush1.msra.mxu0 %v164
  %4889 = vmatprep.subr.mxu0 %v133
  %4890 = vmatpush1.msra.mxu0 %v132
  %4891 = vmatprep.subr.mxu0 %v101
  %4892 = vmatpush1.msra.mxu0 %v100
  %4893 = vmatprep.subr.mxu0 %v69
  %4894 = vmatpush1.msra.mxu0 %v68
  %4895 = vmatprep.subr.mxu0 0.0
  %4896 = vmatpush2.msra.mxu0 0.0
  %4897 = vmatprep.subr.mxu0 0.0
  %4898 = vmatpush2.msra.mxu0 0.0
  %4899 = vmatprep.subr.mxu0 0.0
  %4900 = vmatpush2.msra.mxu0 0.0
  %4901 = vmatprep.subr.mxu0 0.0
  %4902 = vmatpush2.msra.mxu0 0.0
  %4903 = vmatprep.subr.mxu0 0.0
  %4904 = vmatpush2.msra.mxu0 0.0
  %4905 = vmatprep.subr.mxu0 0.0
  %4906 = vmatpush2.msra.mxu0 0.0
  %4907 = vmatprep.subr.mxu0 0.0
  %4908 = vmatpush2.msra.mxu0 0.0
  %4909 = vmatprep.subr.mxu0 0.0
  %4910 = vmatpush2.msra.mxu0 0.0
  %4911 = vmatprep.subr.mxu0 %v2746
  %4912 = vmatpush2.msra.mxu0 %v2542
  %4913 = vmatprep.subr.mxu0 %v2745
  %4914 = vmatpush2.msra.mxu0 %v2511
  %4915 = vmatprep.subr.mxu0 %v2744
  %4916 = vmatpush2.msra.mxu0 %v2480
  %4917 = vmatprep.subr.mxu0 %v2743
  %4918 = vmatpush2.msra.mxu0 %v2449
  %4919 = vmatprep.subr.mxu0 %v2742
  %4920 = vmatpush2.msra.mxu0 %v2418
  %4921 = vmatprep.subr.mxu0 %v2741
  %4922 = vmatpush2.msra.mxu0 %v2387
  %4923 = vmatprep.subr.mxu0 %v1971
  %4924 = vmatpush2.msra.mxu0 %v1767
  %4925 = vmatprep.subr.mxu0 %v1970
  %4926 = vmatpush2.msra.mxu0 %v1736
  %4927 = vmatprep.mubr.f32.mxu0 %v2773
  %4928 = vmatmul.mubr.f32.gmra.mxu0 %v2747
  %v4929 = vpop.f32.mrf.mxu0
  %v4930 = vadd.f32 0.0, %v4929
  %v4931 = vpop.f32.mrf.mxu0
  %v4932 = vadd.f32 0.0, %v4931
  %4933 = vmatprep.mubr.f32.mxu0 %v2776
  %4934 = vmatmul.mubr.f32.gmra.mxu0 %v2749
  %v4935 = vpop.f32.mrf.mxu0
  %v4936 = vadd.f32 0.0, %v4935
  %v4937 = vpop.f32.mrf.mxu0
  %v4938 = vadd.f32 0.0, %v4937
  %4939 = vmatprep.mubr.f32.mxu0 %v2779
  %4940 = vmatmul.mubr.f32.gmra.mxu0 %v2751
  %v4941 = vpop.f32.mrf.mxu0
  %v4942 = vadd.f32 0.0, %v4941
  %v4943 = vpop.f32.mrf.mxu0
  %v4944 = vadd.f32 0.0, %v4943
  %4945 = vmatprep.mubr.f32.mxu0 %v2782
  %4946 = vmatmul.mubr.f32.gmra.mxu0 %v2753
  %v4947 = vpop.f32.mrf.mxu0
  %v4948 = vadd.f32 0.0, %v4947
  %v4949 = vpop.f32.mrf.mxu0
  %v4950 = vadd.f32 0.0, %v4949
  %4951 = vmatprep.mubr.f32.mxu0 %v2785
  %4952 = vmatmul.mubr.f32.gmra.mxu0 %v2755
  %v4953 = vpop.f32.mrf.mxu0
  %v4954 = vadd.f32 0.0, %v4953
  %v4955 = vpop.f32.mrf.mxu0
  %v4956 = vadd.f32 0.0, %v4955
  %4957 = vmatprep.mubr.f32.mxu0 %v2788
  %4958 = vmatmul.mubr.f32.gmra.mxu0 %v2757
  %v4959 = vpop.f32.mrf.mxu0
  %v4960 = vadd.f32 0.0, %v4959
  %v4961 = vpop.f32.mrf.mxu0
  %v4962 = vadd.f32 0.0, %v4961
  %4963 = vmatprep.mubr.f32.mxu0 %v2791
  %4964 = vmatmul.mubr.f32.gmra.mxu0 %v2759
  %v4965 = vpop.f32.mrf.mxu0
  %v4966 = vadd.f32 0.0, %v4965
  %v4967 = vpop.f32.mrf.mxu0
  %v4968 = vadd.f32 0.0, %v4967
  %4969 = vmatprep.mubr.f32.mxu0 %v2794
  %4970 = vmatmul.mubr.f32.gmra.mxu0 %v2761
  %v4971 = vpop.f32.mrf.mxu0
  %v4972 = vadd.f32 0.0, %v4971
  %v4973 = vpop.f32.mrf.mxu0
  %v4974 = vadd.f32 0.0, %v4973
  %4975 = vmatprep.mubr.f32.mxu0 %v2797
  %4976 = vmatmul.mubr.f32.gmra.mxu0 %v2763
  %v4977 = vpop.f32.mrf.mxu0
  %v4978 = vadd.f32 0.0, %v4977
  %v4979 = vpop.f32.mrf.mxu0
  %v4980 = vadd.f32 0.0, %v4979
  %4981 = vmatprep.mubr.f32.mxu0 %v2800
  %4982 = vmatmul.mubr.f32.gmra.mxu0 %v2765
  %v4983 = vpop.f32.mrf.mxu0
  %v4984 = vadd.f32 0.0, %v4983
  %v4985 = vpop.f32.mrf.mxu0
  %v4986 = vadd.f32 0.0, %v4985
  %4987 = vmatprep.mubr.f32.mxu0 %v2803
  %4988 = vmatmul.mubr.f32.gmra.mxu0 %v2767
  %v4989 = vpop.f32.mrf.mxu0
  %v4990 = vadd.f32 0.0, %v4989
  %v4991 = vpop.f32.mrf.mxu0
  %v4992 = vadd.f32 0.0, %v4991
  %4993 = vmatprep.mubr.f32.mxu0 %v2806
  %4994 = vmatmul.mubr.f32.gmra.mxu0 %v2769
  %v4995 = vpop.f32.mrf.mxu0
  %v4996 = vadd.f32 0.0, %v4995
  %v4997 = vpop.f32.mrf.mxu0
  %v4998 = vadd.f32 0.0, %v4997
  %4999 = vdwg.mxu0
  %v5000 = vmax.f32 %v2875, %v2893
  %v5001 = vmax.f32 %v2877, %v2895
  %v5002 = vmax.f32 %v3012, %v3030
  %v5003 = vmax.f32 %v3014, %v3032
  %v5004 = vmax.f32 %v3149, %v3167
  %v5005 = vmax.f32 %v3151, %v3169
  %v5006 = vmax.f32 %v3286, %v3304
  %v5007 = vmax.f32 %v3288, %v3306
  %v5008 = vmax.f32 %v3423, %v3441
  %v5009 = vmax.f32 %v3425, %v3443
  %v5010 = vmax.f32 %v3560, %v3578
  %v5011 = vmax.f32 %v3562, %v3580
  %v5012 = vmax.f32 %v3697, %v3715
  %v5013 = vmax.f32 %v3699, %v3717
  %v5014 = vmax.f32 %v3834, %v3852
  %v5015 = vmax.f32 %v3836, %v3854
  %v5016 = vmax.f32 %v3971, %v3989
  %v5017 = vmax.f32 %v3973, %v3991
  %v5018 = vmax.f32 %v4108, %v4126
  %v5019 = vmax.f32 %v4110, %v4128
  %v5020 = vmax.f32 %v4245, %v4263
  %v5021 = vmax.f32 %v4247, %v4265
  %v5022 = vmax.f32 %v4382, %v4400
  %v5023 = vmax.f32 %v4384, %v4402
  %v5024 = vmax.f32 %v4519, %v4537
  %v5025 = vmax.f32 %v4521, %v4539
  %v5026 = vmax.f32 %v4656, %v4674
  %v5027 = vmax.f32 %v4658, %v4676
  %v5028 = vmax.f32 %v4793, %v4811
  %v5029 = vmax.f32 %v4795, %v4813
  %v5030 = vmax.f32 %v4930, %v4948
  %v5031 = vmax.f32 %v4932, %v4950
  %v5032 = vmax.f32 %v2881, %v2899
  %v5033 = vmax.f32 %v2883, %v2901
  %v5034 = vmax.f32 %v3018, %v3036
  %v5035 = vmax.f32 %v3020, %v3038
  %v5036 = vmax.f32 %v3155, %v3173
  %v5037 = vmax.f32 %v3157, %v3175
  %v5038 = vmax.f32 %v3292, %v3310
  %v5039 = vmax.f32 %v3294, %v3312
  %v5040 = vmax.f32 %v3429, %v3447
  %v5041 = vmax.f32 %v3431, %v3449
  %v5042 = vmax.f32 %v3566, %v3584
  %v5043 = vmax.f32 %v3568, %v3586
  %v5044 = vmax.f32 %v3703, %v3721
  %v5045 = vmax.f32 %v3705, %v3723
  %v5046 = vmax.f32 %v3840, %v3858
  %v5047 = vmax.f32 %v3842, %v3860
  %v5048 = vmax.f32 %v3977, %v3995
  %v5049 = vmax.f32 %v3979, %v3997
  %v5050 = vmax.f32 %v4114, %v4132
  %v5051 = vmax.f32 %v4116, %v4134
  %v5052 = vmax.f32 %v4251, %v4269
  %v5053 = vmax.f32 %v4253, %v4271
  %v5054 = vmax.f32 %v4388, %v4406
  %v5055 = vmax.f32 %v4390, %v4408
  %v5056 = vmax.f32 %v4525, %v4543
  %v5057 = vmax.f32 %v4527, %v4545
  %v5058 = vmax.f32 %v4662, %v4680
  %v5059 = vmax.f32 %v4664, %v4682
  %v5060 = vmax.f32 %v4799, %v4817
  %v5061 = vmax.f32 %v4801, %v4819
  %v5062 = vmax.f32 %v4936, %v4954
  %v5063 = vmax.f32 %v4938, %v4956
  %v5064 = vmax.f32 %v2887, %v2905
  %v5065 = vmax.f32 %v2889, %v2907
  %v5066 = vmax.f32 %v3024, %v3042
  %v5067 = vmax.f32 %v3026, %v3044
  %v5068 = vmax.f32 %v3161, %v3179
  %v5069 = vmax.f32 %v3163, %v3181
  %v5070 = vmax.f32 %v3298, %v3316
  %v5071 = vmax.f32 %v3300, %v3318
  %v5072 = vmax.f32 %v3435, %v3453
  %v5073 = vmax.f32 %v3437, %v3455
  %v5074 = vmax.f32 %v3572, %v3590
  %v5075 = vmax.f32 %v3574, %v3592
  %v5076 = vmax.f32 %v3709, %v3727
  %v5077 = vmax.f32 %v3711, %v3729
  %v5078 = vmax.f32 %v3846, %v3864
  %v5079 = vmax.f32 %v3848, %v3866
  %v5080 = vmax.f32 %v3983, %v4001
  %v5081 = vmax.f32 %v3985, %v4003
  %v5082 = vmax.f32 %v4120, %v4138
  %v5083 = vmax.f32 %v4122, %v4140
  %v5084 = vmax.f32 %v4257, %v4275
  %v5085 = vmax.f32 %v4259, %v4277
  %v5086 = vmax.f32 %v4394, %v4412
  %v5087 = vmax.f32 %v4396, %v4414
  %v5088 = vmax.f32 %v4531, %v4549
  %v5089 = vmax.f32 %v4533, %v4551
  %v5090 = vmax.f32 %v4668, %v4686
  %v5091 = vmax.f32 %v4670, %v4688
  %v5092 = vmax.f32 %v4805, %v4823
  %v5093 = vmax.f32 %v4807, %v4825
  %v5094 = vmax.f32 %v4942, %v4960
  %v5095 = vmax.f32 %v4944, %v4962
  %v5096 = vmax.f32 %v2911, %v2929
  %v5097 = vmax.f32 %v2913, %v2931
  %v5098 = vmax.f32 %v3048, %v3066
  %v5099 = vmax.f32 %v3050, %v3068
  %v5100 = vmax.f32 %v3185, %v3203
  %v5101 = vmax.f32 %v3187, %v3205
  %v5102 = vmax.f32 %v3322, %v3340
  %v5103 = vmax.f32 %v3324, %v3342
  %v5104 = vmax.f32 %v3459, %v3477
  %v5105 = vmax.f32 %v3461, %v3479
  %v5106 = vmax.f32 %v3596, %v3614
  %v5107 = vmax.f32 %v3598, %v3616
  %v5108 = vmax.f32 %v3733, %v3751
  %v5109 = vmax.f32 %v3735, %v3753
  %v5110 = vmax.f32 %v3870, %v3888
  %v5111 = vmax.f32 %v3872, %v3890
  %v5112 = vmax.f32 %v4007, %v4025
  %v5113 = vmax.f32 %v4009, %v4027
  %v5114 = vmax.f32 %v4144, %v4162
  %v5115 = vmax.f32 %v4146, %v4164
  %v5116 = vmax.f32 %v4281, %v4299
  %v5117 = vmax.f32 %v4283, %v4301
  %v5118 = vmax.f32 %v4418, %v4436
  %v5119 = vmax.f32 %v4420, %v4438
  %v5120 = vmax.f32 %v4555, %v4573
  %v5121 = vmax.f32 %v4557, %v4575
  %v5122 = vmax.f32 %v4692, %v4710
  %v5123 = vmax.f32 %v4694, %v4712
  %v5124 = vmax.f32 %v4829, %v4847
  %v5125 = vmax.f32 %v4831, %v4849
  %v5126 = vmax.f32 %v4966, %v4984
  %v5127 = vmax.f32 %v4968, %v4986
  %v5128 = vmax.f32 %v2917, %v2935
  %v5129 = vmax.f32 %v2919, %v2937
  %v5130 = vmax.f32 %v3054, %v3072
  %v5131 = vmax.f32 %v3056, %v3074
  %v5132 = vmax.f32 %v3191, %v3209
  %v5133 = vmax.f32 %v3193, %v3211
  %v5134 = vmax.f32 %v3328, %v3346
  %v5135 = vmax.f32 %v3330, %v3348
  %v5136 = vmax.f32 %v3465, %v3483
  %v5137 = vmax.f32 %v3467, %v3485
  %v5138 = vmax.f32 %v3602, %v3620
  %v5139 = vmax.f32 %v3604, %v3622
  %v5140 = vmax.f32 %v3739, %v3757
  %v5141 = vmax.f32 %v3741, %v3759
  %v5142 = vmax.f32 %v3876, %v3894
  %v5143 = vmax.f32 %v3878, %v3896
  %v5144 = vmax.f32 %v4013, %v4031
  %v5145 = vmax.f32 %v4015, %v4033
  %v5146 = vmax.f32 %v4150, %v4168
  %v5147 = vmax.f32 %v4152, %v4170
  %v5148 = vmax.f32 %v4287, %v4305
  %v5149 = vmax.f32 %v4289, %v4307
  %v5150 = vmax.f32 %v4424, %v4442
  %v5151 = vmax.f32 %v4426, %v4444
  %v5152 = vmax.f32 %v4561, %v4579
  %v5153 = vmax.f32 %v4563, %v4581
  %v5154 = vmax.f32 %v4698, %v4716
  %v5155 = vmax.f32 %v4700, %v4718
  %v5156 = vmax.f32 %v4835, %v4853
  %v5157 = vmax.f32 %v4837, %v4855
  %v5158 = vmax.f32 %v4972, %v4990
  %v5159 = vmax.f32 %v4974, %v4992
  %v5160 = vmax.f32 %v2923, %v2941
  %v5161 = vmax.f32 %v2925, %v2943
  %v5162 = vmax.f32 %v3060, %v3078
  %v5163 = vmax.f32 %v3062, %v3080
  %v5164 = vmax.f32 %v3197, %v3215
  %v5165 = vmax.f32 %v3199, %v3217
  %v5166 = vmax.f32 %v3334, %v3352
  %v5167 = vmax.f32 %v3336, %v3354
  %v5168 = vmax.f32 %v3471, %v3489
  %v5169 = vmax.f32 %v3473, %v3491
  %v5170 = vmax.f32 %v3608, %v3626
  %v5171 = vmax.f32 %v3610, %v3628
  %v5172 = vmax.f32 %v3745, %v3763
  %v5173 = vmax.f32 %v3747, %v3765
  %v5174 = vmax.f32 %v3882, %v3900
  %v5175 = vmax.f32 %v3884, %v3902
  %v5176 = vmax.f32 %v4019, %v4037
  %v5177 = vmax.f32 %v4021, %v4039
  %v5178 = vmax.f32 %v4156, %v4174
  %v5179 = vmax.f32 %v4158, %v4176
  %v5180 = vmax.f32 %v4293, %v4311
  %v5181 = vmax.f32 %v4295, %v4313
  %v5182 = vmax.f32 %v4430, %v4448
  %v5183 = vmax.f32 %v4432, %v4450
  %v5184 = vmax.f32 %v4567, %v4585
  %v5185 = vmax.f32 %v4569, %v4587
  %v5186 = vmax.f32 %v4704, %v4722
  %v5187 = vmax.f32 %v4706, %v4724
  %v5188 = vmax.f32 %v4841, %v4859
  %v5189 = vmax.f32 %v4843, %v4861
  %v5190 = vmax.f32 %v4978, %v4996
  %v5191 = vmax.f32 %v4980, %v4998
  %v5192 = vmax.f32 %v5000, %v5096
  %v5193 = vmax.f32 %v5001, %v5097
  %v5194 = vmax.f32 %v5002, %v5098
  %v5195 = vmax.f32 %v5003, %v5099
  %v5196 = vmax.f32 %v5004, %v5100
  %v5197 = vmax.f32 %v5005, %v5101
  %v5198 = vmax.f32 %v5006, %v5102
  %v5199 = vmax.f32 %v5007, %v5103
  %v5200 = vmax.f32 %v5008, %v5104
  %v5201 = vmax.f32 %v5009, %v5105
  %v5202 = vmax.f32 %v5010, %v5106
  %v5203 = vmax.f32 %v5011, %v5107
  %v5204 = vmax.f32 %v5012, %v5108
  %v5205 = vmax.f32 %v5013, %v5109
  %v5206 = vmax.f32 %v5014, %v5110
  %v5207 = vmax.f32 %v5015, %v5111
  %v5208 = vmax.f32 %v5016, %v5112
  %v5209 = vmax.f32 %v5017, %v5113
  %v5210 = vmax.f32 %v5018, %v5114
  %v5211 = vmax.f32 %v5019, %v5115
  %v5212 = vmax.f32 %v5020, %v5116
  %v5213 = vmax.f32 %v5021, %v5117
  %v5214 = vmax.f32 %v5022, %v5118
  %v5215 = vmax.f32 %v5023, %v5119
  %v5216 = vmax.f32 %v5024, %v5120
  %v5217 = vmax.f32 %v5025, %v5121
  %v5218 = vmax.f32 %v5026, %v5122
  %v5219 = vmax.f32 %v5027, %v5123
  %v5220 = vmax.f32 %v5028, %v5124
  %v5221 = vmax.f32 %v5029, %v5125
  %v5222 = vmax.f32 %v5030, %v5126
  %v5223 = vmax.f32 %v5031, %v5127
  %v5224 = vmax.f32 %v5032, %v5128
  %v5225 = vmax.f32 %v5033, %v5129
  %v5226 = vmax.f32 %v5034, %v5130
  %v5227 = vmax.f32 %v5035, %v5131
  %v5228 = vmax.f32 %v5036, %v5132
  %v5229 = vmax.f32 %v5037, %v5133
  %v5230 = vmax.f32 %v5038, %v5134
  %v5231 = vmax.f32 %v5039, %v5135
  %v5232 = vmax.f32 %v5040, %v5136
  %v5233 = vmax.f32 %v5041, %v5137
  %v5234 = vmax.f32 %v5042, %v5138
  %v5235 = vmax.f32 %v5043, %v5139
  %v5236 = vmax.f32 %v5044, %v5140
  %v5237 = vmax.f32 %v5045, %v5141
  %v5238 = vmax.f32 %v5046, %v5142
  %v5239 = vmax.f32 %v5047, %v5143
  %v5240 = vmax.f32 %v5048, %v5144
  %v5241 = vmax.f32 %v5049, %v5145
  %v5242 = vmax.f32 %v5050, %v5146
  %v5243 = vmax.f32 %v5051, %v5147
  %v5244 = vmax.f32 %v5052, %v5148
  %v5245 = vmax.f32 %v5053, %v5149
  %v5246 = vmax.f32 %v5054, %v5150
  %v5247 = vmax.f32 %v5055, %v5151
  %v5248 = vmax.f32 %v5056, %v5152
  %v5249 = vmax.f32 %v5057, %v5153
  %v5250 = vmax.f32 %v5058, %v5154
  %v5251 = vmax.f32 %v5059, %v5155
  %v5252 = vmax.f32 %v5060, %v5156
  %v5253 = vmax.f32 %v5061, %v5157
  %v5254 = vmax.f32 %v5062, %v5158
  %v5255 = vmax.f32 %v5063, %v5159
  %v5256 = vmax.f32 %v5064, %v5160
  %v5257 = vmax.f32 %v5065, %v5161
  %v5258 = vmax.f32 %v5066, %v5162
  %v5259 = vmax.f32 %v5067, %v5163
  %v5260 = vmax.f32 %v5068, %v5164
  %v5261 = vmax.f32 %v5069, %v5165
  %v5262 = vmax.f32 %v5070, %v5166
  %v5263 = vmax.f32 %v5071, %v5167
  %v5264 = vmax.f32 %v5072, %v5168
  %v5265 = vmax.f32 %v5073, %v5169
  %v5266 = vmax.f32 %v5074, %v5170
  %v5267 = vmax.f32 %v5075, %v5171
  %v5268 = vmax.f32 %v5076, %v5172
  %v5269 = vmax.f32 %v5077, %v5173
  %v5270 = vmax.f32 %v5078, %v5174
  %v5271 = vmax.f32 %v5079, %v5175
  %v5272 = vmax.f32 %v5080, %v5176
  %v5273 = vmax.f32 %v5081, %v5177
  %v5274 = vmax.f32 %v5082, %v5178
  %v5275 = vmax.f32 %v5083, %v5179
  %v5276 = vmax.f32 %v5084, %v5180
  %v5277 = vmax.f32 %v5085, %v5181
  %v5278 = vmax.f32 %v5086, %v5182
  %v5279 = vmax.f32 %v5087, %v5183
  %v5280 = vmax.f32 %v5088, %v5184
  %v5281 = vmax.f32 %v5089, %v5185
  %v5282 = vmax.f32 %v5090, %v5186
  %v5283 = vmax.f32 %v5091, %v5187
  %v5284 = vmax.f32 %v5092, %v5188
  %v5285 = vmax.f32 %v5093, %v5189
  %v5286 = vmax.f32 %v5094, %v5190
  %v5287 = vmax.f32 %v5095, %v5191
  %v5288 = vld [vmem:[%s2] sm:$0xff]
  %v5289 = vld [vmem:[%s2 + $0x8] sm:$0xff]
  %v5290 = vld [vmem:[%s2 + $0x10] sm:$0xff]
  %5292 = vset.pattern.permute.xlu0 0
  %5293 = vperm.xlu0 %5292, %v5288
  %v5294 = vpop.permute.xlu0 %5293
  %5297 = vset.pattern.permute.xlu0 0
  %5298 = vperm.xlu0 %5297, %v5289
  %v5299 = vpop.permute.xlu0 %5298
  %5302 = vset.pattern.permute.xlu0 0
  %5303 = vperm.xlu0 %5302, %v5290
  %v5304 = vpop.permute.xlu0 %5303
  %v5306 = vadd.f32 %v5192, %v5294
  %v5307 = vadd.f32 %v5193, %v5294
  %v5308 = vadd.f32 %v5194, %v5294
  %v5309 = vadd.f32 %v5195, %v5294
  %v5310 = vadd.f32 %v5196, %v5294
  %v5311 = vadd.f32 %v5197, %v5294
  %v5312 = vadd.f32 %v5198, %v5294
  %v5313 = vadd.f32 %v5199, %v5294
  %v5314 = vadd.f32 %v5200, %v5294
  %v5315 = vadd.f32 %v5201, %v5294
  %v5316 = vadd.f32 %v5202, %v5294
  %v5317 = vadd.f32 %v5203, %v5294
  %v5318 = vadd.f32 %v5204, %v5294
  %v5319 = vadd.f32 %v5205, %v5294
  %v5320 = vadd.f32 %v5206, %v5294
  %v5321 = vadd.f32 %v5207, %v5294
  %v5322 = vadd.f32 %v5208, %v5294
  %v5323 = vadd.f32 %v5209, %v5294
  %v5324 = vadd.f32 %v5210, %v5294
  %v5325 = vadd.f32 %v5211, %v5294
  %v5326 = vadd.f32 %v5212, %v5294
  %v5327 = vadd.f32 %v5213, %v5294
  %v5328 = vadd.f32 %v5214, %v5294
  %v5329 = vadd.f32 %v5215, %v5294
  %v5330 = vadd.f32 %v5216, %v5294
  %v5331 = vadd.f32 %v5217, %v5294
  %v5332 = vadd.f32 %v5218, %v5294
  %v5333 = vadd.f32 %v5219, %v5294
  %v5334 = vadd.f32 %v5220, %v5294
  %v5335 = vadd.f32 %v5221, %v5294
  %v5336 = vadd.f32 %v5222, %v5294
  %v5337 = vadd.f32 %v5223, %v5294
  %v5338 = vadd.f32 %v5224, %v5299
  %v5339 = vadd.f32 %v5225, %v5299
  %v5340 = vadd.f32 %v5226, %v5299
  %v5341 = vadd.f32 %v5227, %v5299
  %v5342 = vadd.f32 %v5228, %v5299
  %v5343 = vadd.f32 %v5229, %v5299
  %v5344 = vadd.f32 %v5230, %v5299
  %v5345 = vadd.f32 %v5231, %v5299
  %v5346 = vadd.f32 %v5232, %v5299
  %v5347 = vadd.f32 %v5233, %v5299
  %v5348 = vadd.f32 %v5234, %v5299
  %v5349 = vadd.f32 %v5235, %v5299
  %v5350 = vadd.f32 %v5236, %v5299
  %v5351 = vadd.f32 %v5237, %v5299
  %v5352 = vadd.f32 %v5238, %v5299
  %v5353 = vadd.f32 %v5239, %v5299
  %v5354 = vadd.f32 %v5240, %v5299
  %v5355 = vadd.f32 %v5241, %v5299
  %v5356 = vadd.f32 %v5242, %v5299
  %v5357 = vadd.f32 %v5243, %v5299
  %v5358 = vadd.f32 %v5244, %v5299
  %v5359 = vadd.f32 %v5245, %v5299
  %v5360 = vadd.f32 %v5246, %v5299
  %v5361 = vadd.f32 %v5247, %v5299
  %v5362 = vadd.f32 %v5248, %v5299
  %v5363 = vadd.f32 %v5249, %v5299
  %v5364 = vadd.f32 %v5250, %v5299
  %v5365 = vadd.f32 %v5251, %v5299
  %v5366 = vadd.f32 %v5252, %v5299
  %v5367 = vadd.f32 %v5253, %v5299
  %v5368 = vadd.f32 %v5254, %v5299
  %v5369 = vadd.f32 %v5255, %v5299
  %v5370 = vadd.f32 %v5256, %v5304
  %v5371 = vadd.f32 %v5257, %v5304
  %v5372 = vadd.f32 %v5258, %v5304
  %v5373 = vadd.f32 %v5259, %v5304
  %v5374 = vadd.f32 %v5260, %v5304
  %v5375 = vadd.f32 %v5261, %v5304
  %v5376 = vadd.f32 %v5262, %v5304
  %v5377 = vadd.f32 %v5263, %v5304
  %v5378 = vadd.f32 %v5264, %v5304
  %v5379 = vadd.f32 %v5265, %v5304
  %v5380 = vadd.f32 %v5266, %v5304
  %v5381 = vadd.f32 %v5267, %v5304
  %v5382 = vadd.f32 %v5268, %v5304
  %v5383 = vadd.f32 %v5269, %v5304
  %v5384 = vadd.f32 %v5270, %v5304
  %v5385 = vadd.f32 %v5271, %v5304
  %v5386 = vadd.f32 %v5272, %v5304
  %v5387 = vadd.f32 %v5273, %v5304
  %v5388 = vadd.f32 %v5274, %v5304
  %v5389 = vadd.f32 %v5275, %v5304
  %v5390 = vadd.f32 %v5276, %v5304
  %v5391 = vadd.f32 %v5277, %v5304
  %v5392 = vadd.f32 %v5278, %v5304
  %v5393 = vadd.f32 %v5279, %v5304
  %v5394 = vadd.f32 %v5280, %v5304
  %v5395 = vadd.f32 %v5281, %v5304
  %v5396 = vadd.f32 %v5282, %v5304
  %v5397 = vadd.f32 %v5283, %v5304
  %v5398 = vadd.f32 %v5284, %v5304
  %v5399 = vadd.f32 %v5285, %v5304
  %v5400 = vadd.f32 %v5286, %v5304
  %v5401 = vadd.f32 %v5287, %v5304
  %v5402 = vmax.f32 %v5306, 0.0
  %v5403 = vmax.f32 %v5307, 0.0
  %v5404 = vmax.f32 %v5308, 0.0
  %v5405 = vmax.f32 %v5309, 0.0
  %v5406 = vmax.f32 %v5310, 0.0
  %v5407 = vmax.f32 %v5311, 0.0
  %v5408 = vmax.f32 %v5312, 0.0
  %v5409 = vmax.f32 %v5313, 0.0
  %v5410 = vmax.f32 %v5314, 0.0
  %v5411 = vmax.f32 %v5315, 0.0
  %v5412 = vmax.f32 %v5316, 0.0
  %v5413 = vmax.f32 %v5317, 0.0
  %v5414 = vmax.f32 %v5318, 0.0
  %v5415 = vmax.f32 %v5319, 0.0
  %v5416 = vmax.f32 %v5320, 0.0
  %v5417 = vmax.f32 %v5321, 0.0
  %v5418 = vmax.f32 %v5322, 0.0
  %v5419 = vmax.f32 %v5323, 0.0
  %v5420 = vmax.f32 %v5324, 0.0
  %v5421 = vmax.f32 %v5325, 0.0
  %v5422 = vmax.f32 %v5326, 0.0
  %v5423 = vmax.f32 %v5327, 0.0
  %v5424 = vmax.f32 %v5328, 0.0
  %v5425 = vmax.f32 %v5329, 0.0
  %v5426 = vmax.f32 %v5330, 0.0
  %v5427 = vmax.f32 %v5331, 0.0
  %v5428 = vmax.f32 %v5332, 0.0
  %v5429 = vmax.f32 %v5333, 0.0
  %v5430 = vmax.f32 %v5334, 0.0
  %v5431 = vmax.f32 %v5335, 0.0
  %v5432 = vmax.f32 %v5336, 0.0
  %v5433 = vmax.f32 %v5337, 0.0
  %v5434 = vmax.f32 %v5338, 0.0
  %v5435 = vmax.f32 %v5339, 0.0
  %v5436 = vmax.f32 %v5340, 0.0
  %v5437 = vmax.f32 %v5341, 0.0
  %v5438 = vmax.f32 %v5342, 0.0
  %v5439 = vmax.f32 %v5343, 0.0
  %v5440 = vmax.f32 %v5344, 0.0
  %v5441 = vmax.f32 %v5345, 0.0
  %v5442 = vmax.f32 %v5346, 0.0
  %v5443 = vmax.f32 %v5347, 0.0
  %v5444 = vmax.f32 %v5348, 0.0
  %v5445 = vmax.f32 %v5349, 0.0
  %v5446 = vmax.f32 %v5350, 0.0
  %v5447 = vmax.f32 %v5351, 0.0
  %v5448 = vmax.f32 %v5352, 0.0
  %v5449 = vmax.f32 %v5353, 0.0
  %v5450 = vmax.f32 %v5354, 0.0
  %v5451 = vmax.f32 %v5355, 0.0
  %v5452 = vmax.f32 %v5356, 0.0
  %v5453 = vmax.f32 %v5357, 0.0
  %v5454 = vmax.f32 %v5358, 0.0
  %v5455 = vmax.f32 %v5359, 0.0
  %v5456 = vmax.f32 %v5360, 0.0
  %v5457 = vmax.f32 %v5361, 0.0
  %v5458 = vmax.f32 %v5362, 0.0
  %v5459 = vmax.f32 %v5363, 0.0
  %v5460 = vmax.f32 %v5364, 0.0
  %v5461 = vmax.f32 %v5365, 0.0
  %v5462 = vmax.f32 %v5366, 0.0
  %v5463 = vmax.f32 %v5367, 0.0
  %v5464 = vmax.f32 %v5368, 0.0
  %v5465 = vmax.f32 %v5369, 0.0
  %v5466 = vmax.f32 %v5370, 0.0
  %v5467 = vmax.f32 %v5371, 0.0
  %v5468 = vmax.f32 %v5372, 0.0
  %v5469 = vmax.f32 %v5373, 0.0
  %v5470 = vmax.f32 %v5374, 0.0
  %v5471 = vmax.f32 %v5375, 0.0
  %v5472 = vmax.f32 %v5376, 0.0
  %v5473 = vmax.f32 %v5377, 0.0
  %v5474 = vmax.f32 %v5378, 0.0
  %v5475 = vmax.f32 %v5379, 0.0
  %v5476 = vmax.f32 %v5380, 0.0
  %v5477 = vmax.f32 %v5381, 0.0
  %v5478 = vmax.f32 %v5382, 0.0
  %v5479 = vmax.f32 %v5383, 0.0
  %v5480 = vmax.f32 %v5384, 0.0
  %v5481 = vmax.f32 %v5385, 0.0
  %v5482 = vmax.f32 %v5386, 0.0
  %v5483 = vmax.f32 %v5387, 0.0
  %v5484 = vmax.f32 %v5388, 0.0
  %v5485 = vmax.f32 %v5389, 0.0
  %v5486 = vmax.f32 %v5390, 0.0
  %v5487 = vmax.f32 %v5391, 0.0
  %v5488 = vmax.f32 %v5392, 0.0
  %v5489 = vmax.f32 %v5393, 0.0
  %v5490 = vmax.f32 %v5394, 0.0
  %v5491 = vmax.f32 %v5395, 0.0
  %v5492 = vmax.f32 %v5396, 0.0
  %v5493 = vmax.f32 %v5397, 0.0
  %v5494 = vmax.f32 %v5398, 0.0
  %v5495 = vmax.f32 %v5399, 0.0
  %v5496 = vmax.f32 %v5400, 0.0
  %v5497 = vmax.f32 %v5401, 0.0
  %5594 = vrot.lane.b32.xlu0 %v5402, 127
  %v5595 = vpop.permute.xlu0 %5594
  %5596 = vrot.lane.b32.xlu0 %v5403, 127
  %v5597 = vpop.permute.xlu0 %5596
  %5598 = vrot.lane.b32.xlu0 %v5404, 127
  %v5599 = vpop.permute.xlu0 %5598
  %5600 = vrot.lane.b32.xlu0 %v5405, 127
  %v5601 = vpop.permute.xlu0 %5600
  %5602 = vrot.lane.b32.xlu0 %v5406, 127
  %v5603 = vpop.permute.xlu0 %5602
  %5604 = vrot.lane.b32.xlu0 %v5407, 127
  %v5605 = vpop.permute.xlu0 %5604
  %5606 = vrot.lane.b32.xlu0 %v5408, 127
  %v5607 = vpop.permute.xlu0 %5606
  %5608 = vrot.lane.b32.xlu0 %v5409, 127
  %v5609 = vpop.permute.xlu0 %5608
  %5610 = vrot.lane.b32.xlu0 %v5410, 127
  %v5611 = vpop.permute.xlu0 %5610
  %5612 = vrot.lane.b32.xlu0 %v5411, 127
  %v5613 = vpop.permute.xlu0 %5612
  %5614 = vrot.lane.b32.xlu0 %v5412, 127
  %v5615 = vpop.permute.xlu0 %5614
  %5616 = vrot.lane.b32.xlu0 %v5413, 127
  %v5617 = vpop.permute.xlu0 %5616
  %5618 = vrot.lane.b32.xlu0 %v5414, 127
  %v5619 = vpop.permute.xlu0 %5618
  %5620 = vrot.lane.b32.xlu0 %v5415, 127
  %v5621 = vpop.permute.xlu0 %5620
  %5622 = vrot.lane.b32.xlu0 %v5416, 127
  %v5623 = vpop.permute.xlu0 %5622
  %5624 = vrot.lane.b32.xlu0 %v5417, 127
  %v5625 = vpop.permute.xlu0 %5624
  %5626 = vrot.lane.b32.xlu0 %v5418, 127
  %v5627 = vpop.permute.xlu0 %5626
  %5628 = vrot.lane.b32.xlu0 %v5419, 127
  %v5629 = vpop.permute.xlu0 %5628
  %5630 = vrot.lane.b32.xlu0 %v5420, 127
  %v5631 = vpop.permute.xlu0 %5630
  %5632 = vrot.lane.b32.xlu0 %v5421, 127
  %v5633 = vpop.permute.xlu0 %5632
  %5634 = vrot.lane.b32.xlu0 %v5422, 127
  %v5635 = vpop.permute.xlu0 %5634
  %5636 = vrot.lane.b32.xlu0 %v5423, 127
  %v5637 = vpop.permute.xlu0 %5636
  %5638 = vrot.lane.b32.xlu0 %v5424, 127
  %v5639 = vpop.permute.xlu0 %5638
  %5640 = vrot.lane.b32.xlu0 %v5425, 127
  %v5641 = vpop.permute.xlu0 %5640
  %5642 = vrot.lane.b32.xlu0 %v5426, 127
  %v5643 = vpop.permute.xlu0 %5642
  %5644 = vrot.lane.b32.xlu0 %v5427, 127
  %v5645 = vpop.permute.xlu0 %5644
  %5646 = vrot.lane.b32.xlu0 %v5428, 127
  %v5647 = vpop.permute.xlu0 %5646
  %5648 = vrot.lane.b32.xlu0 %v5429, 127
  %v5649 = vpop.permute.xlu0 %5648
  %5650 = vrot.lane.b32.xlu0 %v5430, 127
  %v5651 = vpop.permute.xlu0 %5650
  %5652 = vrot.lane.b32.xlu0 %v5431, 127
  %v5653 = vpop.permute.xlu0 %5652
  %5654 = vrot.lane.b32.xlu0 %v5432, 127
  %v5655 = vpop.permute.xlu0 %5654
  %5656 = vrot.lane.b32.xlu0 %v5433, 127
  %v5657 = vpop.permute.xlu0 %5656
  %5658 = vrot.lane.b32.xlu0 %v5434, 127
  %v5659 = vpop.permute.xlu0 %5658
  %5660 = vrot.lane.b32.xlu0 %v5435, 127
  %v5661 = vpop.permute.xlu0 %5660
  %5662 = vrot.lane.b32.xlu0 %v5436, 127
  %v5663 = vpop.permute.xlu0 %5662
  %5664 = vrot.lane.b32.xlu0 %v5437, 127
  %v5665 = vpop.permute.xlu0 %5664
  %5666 = vrot.lane.b32.xlu0 %v5438, 127
  %v5667 = vpop.permute.xlu0 %5666
  %5668 = vrot.lane.b32.xlu0 %v5439, 127
  %v5669 = vpop.permute.xlu0 %5668
  %5670 = vrot.lane.b32.xlu0 %v5440, 127
  %v5671 = vpop.permute.xlu0 %5670
  %5672 = vrot.lane.b32.xlu0 %v5441, 127
  %v5673 = vpop.permute.xlu0 %5672
  %5674 = vrot.lane.b32.xlu0 %v5442, 127
  %v5675 = vpop.permute.xlu0 %5674
  %5676 = vrot.lane.b32.xlu0 %v5443, 127
  %v5677 = vpop.permute.xlu0 %5676
  %5678 = vrot.lane.b32.xlu0 %v5444, 127
  %v5679 = vpop.permute.xlu0 %5678
  %5680 = vrot.lane.b32.xlu0 %v5445, 127
  %v5681 = vpop.permute.xlu0 %5680
  %5682 = vrot.lane.b32.xlu0 %v5446, 127
  %v5683 = vpop.permute.xlu0 %5682
  %5684 = vrot.lane.b32.xlu0 %v5447, 127
  %v5685 = vpop.permute.xlu0 %5684
  %5686 = vrot.lane.b32.xlu0 %v5448, 127
  %v5687 = vpop.permute.xlu0 %5686
  %5688 = vrot.lane.b32.xlu0 %v5449, 127
  %v5689 = vpop.permute.xlu0 %5688
  %5690 = vrot.lane.b32.xlu0 %v5450, 127
  %v5691 = vpop.permute.xlu0 %5690
  %5692 = vrot.lane.b32.xlu0 %v5451, 127
  %v5693 = vpop.permute.xlu0 %5692
  %5694 = vrot.lane.b32.xlu0 %v5452, 127
  %v5695 = vpop.permute.xlu0 %5694
  %5696 = vrot.lane.b32.xlu0 %v5453, 127
  %v5697 = vpop.permute.xlu0 %5696
  %5698 = vrot.lane.b32.xlu0 %v5454, 127
  %v5699 = vpop.permute.xlu0 %5698
  %5700 = vrot.lane.b32.xlu0 %v5455, 127
  %v5701 = vpop.permute.xlu0 %5700
  %5702 = vrot.lane.b32.xlu0 %v5456, 127
  %v5703 = vpop.permute.xlu0 %5702
  %5704 = vrot.lane.b32.xlu0 %v5457, 127
  %v5705 = vpop.permute.xlu0 %5704
  %5706 = vrot.lane.b32.xlu0 %v5458, 127
  %v5707 = vpop.permute.xlu0 %5706
  %5708 = vrot.lane.b32.xlu0 %v5459, 127
  %v5709 = vpop.permute.xlu0 %5708
  %5710 = vrot.lane.b32.xlu0 %v5460, 127
  %v5711 = vpop.permute.xlu0 %5710
  %5712 = vrot.lane.b32.xlu0 %v5461, 127
  %v5713 = vpop.permute.xlu0 %5712
  %5714 = vrot.lane.b32.xlu0 %v5462, 127
  %v5715 = vpop.permute.xlu0 %5714
  %5716 = vrot.lane.b32.xlu0 %v5463, 127
  %v5717 = vpop.permute.xlu0 %5716
  %5718 = vrot.lane.b32.xlu0 %v5464, 127
  %v5719 = vpop.permute.xlu0 %5718
  %5720 = vrot.lane.b32.xlu0 %v5465, 127
  %v5721 = vpop.permute.xlu0 %5720
  %5722 = vrot.lane.b32.xlu0 %v5466, 127
  %v5723 = vpop.permute.xlu0 %5722
  %5724 = vrot.lane.b32.xlu0 %v5467, 127
  %v5725 = vpop.permute.xlu0 %5724
  %5726 = vrot.lane.b32.xlu0 %v5468, 127
  %v5727 = vpop.permute.xlu0 %5726
  %5728 = vrot.lane.b32.xlu0 %v5469, 127
  %v5729 = vpop.permute.xlu0 %5728
  %5730 = vrot.lane.b32.xlu0 %v5470, 127
  %v5731 = vpop.permute.xlu0 %5730
  %5732 = vrot.lane.b32.xlu0 %v5471, 127
  %v5733 = vpop.permute.xlu0 %5732
  %5734 = vrot.lane.b32.xlu0 %v5472, 127
  %v5735 = vpop.permute.xlu0 %5734
  %5736 = vrot.lane.b32.xlu0 %v5473, 127
  %v5737 = vpop.permute.xlu0 %5736
  %5738 = vrot.lane.b32.xlu0 %v5474, 127
  %v5739 = vpop.permute.xlu0 %5738
  %5740 = vrot.lane.b32.xlu0 %v5475, 127
  %v5741 = vpop.permute.xlu0 %5740
  %5742 = vrot.lane.b32.xlu0 %v5476, 127
  %v5743 = vpop.permute.xlu0 %5742
  %5744 = vrot.lane.b32.xlu0 %v5477, 127
  %v5745 = vpop.permute.xlu0 %5744
  %5746 = vrot.lane.b32.xlu0 %v5478, 127
  %v5747 = vpop.permute.xlu0 %5746
  %5748 = vrot.lane.b32.xlu0 %v5479, 127
  %v5749 = vpop.permute.xlu0 %5748
  %5750 = vrot.lane.b32.xlu0 %v5480, 127
  %v5751 = vpop.permute.xlu0 %5750
  %5752 = vrot.lane.b32.xlu0 %v5481, 127
  %v5753 = vpop.permute.xlu0 %5752
  %5754 = vrot.lane.b32.xlu0 %v5482, 127
  %v5755 = vpop.permute.xlu0 %5754
  %5756 = vrot.lane.b32.xlu0 %v5483, 127
  %v5757 = vpop.permute.xlu0 %5756
  %5758 = vrot.lane.b32.xlu0 %v5484, 127
  %v5759 = vpop.permute.xlu0 %5758
  %5760 = vrot.lane.b32.xlu0 %v5485, 127
  %v5761 = vpop.permute.xlu0 %5760
  %5762 = vrot.lane.b32.xlu0 %v5486, 127
  %v5763 = vpop.permute.xlu0 %5762
  %5764 = vrot.lane.b32.xlu0 %v5487, 127
  %v5765 = vpop.permute.xlu0 %5764
  %5766 = vrot.lane.b32.xlu0 %v5488, 127
  %v5767 = vpop.permute.xlu0 %5766
  %5768 = vrot.lane.b32.xlu0 %v5489, 127
  %v5769 = vpop.permute.xlu0 %5768
  %5770 = vrot.lane.b32.xlu0 %v5490, 127
  %v5771 = vpop.permute.xlu0 %5770
  %5772 = vrot.lane.b32.xlu0 %v5491, 127
  %v5773 = vpop.permute.xlu0 %5772
  %5774 = vrot.lane.b32.xlu0 %v5492, 127
  %v5775 = vpop.permute.xlu0 %5774
  %5776 = vrot.lane.b32.xlu0 %v5493, 127
  %v5777 = vpop.permute.xlu0 %5776
  %5778 = vrot.lane.b32.xlu0 %v5494, 127
  %v5779 = vpop.permute.xlu0 %5778
  %5780 = vrot.lane.b32.xlu0 %v5495, 127
  %v5781 = vpop.permute.xlu0 %5780
  %5782 = vrot.lane.b32.xlu0 %v5496, 127
  %v5783 = vpop.permute.xlu0 %5782
  %5784 = vrot.lane.b32.xlu0 %v5497, 127
  %v5785 = vpop.permute.xlu0 %5784
  %v5786 = vsel %vm806, %v5595, %v5597
  %v5787 = vsel %vm806, %v5597, %v5599
  %v5788 = vsel %vm806, %v5599, %v5601
  %v5789 = vsel %vm806, %v5601, %v5603
  %v5790 = vsel %vm806, %v5603, %v5605
  %v5791 = vsel %vm806, %v5605, %v5607
  %v5792 = vsel %vm806, %v5607, %v5609
  %v5793 = vsel %vm806, %v5609, %v5611
  %v5794 = vsel %vm806, %v5611, %v5613
  %v5795 = vsel %vm806, %v5613, %v5615
  %v5796 = vsel %vm806, %v5615, %v5617
  %v5797 = vsel %vm806, %v5617, %v5619
  %v5798 = vsel %vm806, %v5619, %v5621
  %v5799 = vsel %vm806, %v5621, %v5623
  %v5800 = vsel %vm806, %v5623, %v5625
  %v5801 = vsel %vm806, %v5625, %v5627
  %v5802 = vsel %vm806, %v5627, %v5629
  %v5803 = vsel %vm806, %v5629, %v5631
  %v5804 = vsel %vm806, %v5631, %v5633
  %v5805 = vsel %vm806, %v5633, %v5635
  %v5806 = vsel %vm806, %v5635, %v5637
  %v5807 = vsel %vm806, %v5637, %v5639
  %v5808 = vsel %vm806, %v5639, %v5641
  %v5809 = vsel %vm806, %v5641, %v5643
  %v5810 = vsel %vm806, %v5643, %v5645
  %v5811 = vsel %vm806, %v5645, %v5647
  %v5812 = vsel %vm806, %v5647, %v5649
  %v5813 = vsel %vm806, %v5649, %v5651
  %v5814 = vsel %vm806, %v5651, %v5653
  %v5815 = vsel %vm806, %v5653, %v5655
  %v5816 = vsel %vm806, %v5655, %v5657
  %v5817 = vsel %vm806, %v5659, %v5661
  %v5818 = vsel %vm806, %v5661, %v5663
  %v5819 = vsel %vm806, %v5663, %v5665
  %v5820 = vsel %vm806, %v5665, %v5667
  %v5821 = vsel %vm806, %v5667, %v5669
  %v5822 = vsel %vm806, %v5669, %v5671
  %v5823 = vsel %vm806, %v5671, %v5673
  %v5824 = vsel %vm806, %v5673, %v5675
  %v5825 = vsel %vm806, %v5675, %v5677
  %v5826 = vsel %vm806, %v5677, %v5679
  %v5827 = vsel %vm806, %v5679, %v5681
  %v5828 = vsel %vm806, %v5681, %v5683
  %v5829 = vsel %vm806, %v5683, %v5685
  %v5830 = vsel %vm806, %v5685, %v5687
  %v5831 = vsel %vm806, %v5687, %v5689
  %v5832 = vsel %vm806, %v5689, %v5691
  %v5833 = vsel %vm806, %v5691, %v5693
  %v5834 = vsel %vm806, %v5693, %v5695
  %v5835 = vsel %vm806, %v5695, %v5697
  %v5836 = vsel %vm806, %v5697, %v5699
  %v5837 = vsel %vm806, %v5699, %v5701
  %v5838 = vsel %vm806, %v5701, %v5703
  %v5839 = vsel %vm806, %v5703, %v5705
  %v5840 = vsel %vm806, %v5705, %v5707
  %v5841 = vsel %vm806, %v5707, %v5709
  %v5842 = vsel %vm806, %v5709, %v5711
  %v5843 = vsel %vm806, %v5711, %v5713
  %v5844 = vsel %vm806, %v5713, %v5715
  %v5845 = vsel %vm806, %v5715, %v5717
  %v5846 = vsel %vm806, %v5717, %v5719
  %v5847 = vsel %vm806, %v5719, %v5721
  %v5848 = vsel %vm806, %v5723, %v5725
  %v5849 = vsel %vm806, %v5725, %v5727
  %v5850 = vsel %vm806, %v5727, %v5729
  %v5851 = vsel %vm806, %v5729, %v5731
  %v5852 = vsel %vm806, %v5731, %v5733
  %v5853 = vsel %vm806, %v5733, %v5735
  %v5854 = vsel %vm806, %v5735, %v5737
  %v5855 = vsel %vm806, %v5737, %v5739
  %v5856 = vsel %vm806, %v5739, %v5741
  %v5857 = vsel %vm806, %v5741, %v5743
  %v5858 = vsel %vm806, %v5743, %v5745
  %v5859 = vsel %vm806, %v5745, %v5747
  %v5860 = vsel %vm806, %v5747, %v5749
  %v5861 = vsel %vm806, %v5749, %v5751
  %v5862 = vsel %vm806, %v5751, %v5753
  %v5863 = vsel %vm806, %v5753, %v5755
  %v5864 = vsel %vm806, %v5755, %v5757
  %v5865 = vsel %vm806, %v5757, %v5759
  %v5866 = vsel %vm806, %v5759, %v5761
  %v5867 = vsel %vm806, %v5761, %v5763
  %v5868 = vsel %vm806, %v5763, %v5765
  %v5869 = vsel %vm806, %v5765, %v5767
  %v5870 = vsel %vm806, %v5767, %v5769
  %v5871 = vsel %vm806, %v5769, %v5771
  %v5872 = vsel %vm806, %v5771, %v5773
  %v5873 = vsel %vm806, %v5773, %v5775
  %v5874 = vsel %vm806, %v5775, %v5777
  %v5875 = vsel %vm806, %v5777, %v5779
  %v5876 = vsel %vm806, %v5779, %v5781
  %v5877 = vsel %vm806, %v5781, %v5783
  %v5878 = vsel %vm806, %v5783, %v5785
  %v5978 = vsel %vm806, %v5657, %v5595
  %v5979 = vsel %vm806, %v5721, %v5659
  %v5980 = vsel %vm806, %v5785, %v5723
  %5981 = vrot.lane.b32.xlu0 %v5402, 126
  %v5982 = vpop.permute.xlu0 %5981
  %5983 = vrot.lane.b32.xlu0 %v5403, 126
  %v5984 = vpop.permute.xlu0 %5983
  %5985 = vrot.lane.b32.xlu0 %v5404, 126
  %v5986 = vpop.permute.xlu0 %5985
  %5987 = vrot.lane.b32.xlu0 %v5405, 126
  %v5988 = vpop.permute.xlu0 %5987
  %5989 = vrot.lane.b32.xlu0 %v5406, 126
  %v5990 = vpop.permute.xlu0 %5989
  %5991 = vrot.lane.b32.xlu0 %v5407, 126
  %v5992 = vpop.permute.xlu0 %5991
  %5993 = vrot.lane.b32.xlu0 %v5408, 126
  %v5994 = vpop.permute.xlu0 %5993
  %5995 = vrot.lane.b32.xlu0 %v5409, 126
  %v5996 = vpop.permute.xlu0 %5995
  %5997 = vrot.lane.b32.xlu0 %v5410, 126
  %v5998 = vpop.permute.xlu0 %5997
  %5999 = vrot.lane.b32.xlu0 %v5411, 126
  %v6000 = vpop.permute.xlu0 %5999
  %6001 = vrot.lane.b32.xlu0 %v5412, 126
  %v6002 = vpop.permute.xlu0 %6001
  %6003 = vrot.lane.b32.xlu0 %v5413, 126
  %v6004 = vpop.permute.xlu0 %6003
  %6005 = vrot.lane.b32.xlu0 %v5414, 126
  %v6006 = vpop.permute.xlu0 %6005
  %6007 = vrot.lane.b32.xlu0 %v5415, 126
  %v6008 = vpop.permute.xlu0 %6007
  %6009 = vrot.lane.b32.xlu0 %v5416, 126
  %v6010 = vpop.permute.xlu0 %6009
  %6011 = vrot.lane.b32.xlu0 %v5417, 126
  %v6012 = vpop.permute.xlu0 %6011
  %6013 = vrot.lane.b32.xlu0 %v5418, 126
  %v6014 = vpop.permute.xlu0 %6013
  %6015 = vrot.lane.b32.xlu0 %v5419, 126
  %v6016 = vpop.permute.xlu0 %6015
  %6017 = vrot.lane.b32.xlu0 %v5420, 126
  %v6018 = vpop.permute.xlu0 %6017
  %6019 = vrot.lane.b32.xlu0 %v5421, 126
  %v6020 = vpop.permute.xlu0 %6019
  %6021 = vrot.lane.b32.xlu0 %v5422, 126
  %v6022 = vpop.permute.xlu0 %6021
  %6023 = vrot.lane.b32.xlu0 %v5423, 126
  %v6024 = vpop.permute.xlu0 %6023
  %6025 = vrot.lane.b32.xlu0 %v5424, 126
  %v6026 = vpop.permute.xlu0 %6025
  %6027 = vrot.lane.b32.xlu0 %v5425, 126
  %v6028 = vpop.permute.xlu0 %6027
  %6029 = vrot.lane.b32.xlu0 %v5426, 126
  %v6030 = vpop.permute.xlu0 %6029
  %6031 = vrot.lane.b32.xlu0 %v5427, 126
  %v6032 = vpop.permute.xlu0 %6031
  %6033 = vrot.lane.b32.xlu0 %v5428, 126
  %v6034 = vpop.permute.xlu0 %6033
  %6035 = vrot.lane.b32.xlu0 %v5429, 126
  %v6036 = vpop.permute.xlu0 %6035
  %6037 = vrot.lane.b32.xlu0 %v5430, 126
  %v6038 = vpop.permute.xlu0 %6037
  %6039 = vrot.lane.b32.xlu0 %v5431, 126
  %v6040 = vpop.permute.xlu0 %6039
  %6041 = vrot.lane.b32.xlu0 %v5432, 126
  %v6042 = vpop.permute.xlu0 %6041
  %6043 = vrot.lane.b32.xlu0 %v5433, 126
  %v6044 = vpop.permute.xlu0 %6043
  %6045 = vrot.lane.b32.xlu0 %v5434, 126
  %v6046 = vpop.permute.xlu0 %6045
  %6047 = vrot.lane.b32.xlu0 %v5435, 126
  %v6048 = vpop.permute.xlu0 %6047
  %6049 = vrot.lane.b32.xlu0 %v5436, 126
  %v6050 = vpop.permute.xlu0 %6049
  %6051 = vrot.lane.b32.xlu0 %v5437, 126
  %v6052 = vpop.permute.xlu0 %6051
  %6053 = vrot.lane.b32.xlu0 %v5438, 126
  %v6054 = vpop.permute.xlu0 %6053
  %6055 = vrot.lane.b32.xlu0 %v5439, 126
  %v6056 = vpop.permute.xlu0 %6055
  %6057 = vrot.lane.b32.xlu0 %v5440, 126
  %v6058 = vpop.permute.xlu0 %6057
  %6059 = vrot.lane.b32.xlu0 %v5441, 126
  %v6060 = vpop.permute.xlu0 %6059
  %6061 = vrot.lane.b32.xlu0 %v5442, 126
  %v6062 = vpop.permute.xlu0 %6061
  %6063 = vrot.lane.b32.xlu0 %v5443, 126
  %v6064 = vpop.permute.xlu0 %6063
  %6065 = vrot.lane.b32.xlu0 %v5444, 126
  %v6066 = vpop.permute.xlu0 %6065
  %6067 = vrot.lane.b32.xlu0 %v5445, 126
  %v6068 = vpop.permute.xlu0 %6067
  %6069 = vrot.lane.b32.xlu0 %v5446, 126
  %v6070 = vpop.permute.xlu0 %6069
  %6071 = vrot.lane.b32.xlu0 %v5447, 126
  %v6072 = vpop.permute.xlu0 %6071
  %6073 = vrot.lane.b32.xlu0 %v5448, 126
  %v6074 = vpop.permute.xlu0 %6073
  %6075 = vrot.lane.b32.xlu0 %v5449, 126
  %v6076 = vpop.permute.xlu0 %6075
  %6077 = vrot.lane.b32.xlu0 %v5450, 126
  %v6078 = vpop.permute.xlu0 %6077
  %6079 = vrot.lane.b32.xlu0 %v5451, 126
  %v6080 = vpop.permute.xlu0 %6079
  %6081 = vrot.lane.b32.xlu0 %v5452, 126
  %v6082 = vpop.permute.xlu0 %6081
  %6083 = vrot.lane.b32.xlu0 %v5453, 126
  %v6084 = vpop.permute.xlu0 %6083
  %6085 = vrot.lane.b32.xlu0 %v5454, 126
  %v6086 = vpop.permute.xlu0 %6085
  %6087 = vrot.lane.b32.xlu0 %v5455, 126
  %v6088 = vpop.permute.xlu0 %6087
  %6089 = vrot.lane.b32.xlu0 %v5456, 126
  %v6090 = vpop.permute.xlu0 %6089
  %6091 = vrot.lane.b32.xlu0 %v5457, 126
  %v6092 = vpop.permute.xlu0 %6091
  %6093 = vrot.lane.b32.xlu0 %v5458, 126
  %v6094 = vpop.permute.xlu0 %6093
  %6095 = vrot.lane.b32.xlu0 %v5459, 126
  %v6096 = vpop.permute.xlu0 %6095
  %6097 = vrot.lane.b32.xlu0 %v5460, 126
  %v6098 = vpop.permute.xlu0 %6097
  %6099 = vrot.lane.b32.xlu0 %v5461, 126
  %v6100 = vpop.permute.xlu0 %6099
  %6101 = vrot.lane.b32.xlu0 %v5462, 126
  %v6102 = vpop.permute.xlu0 %6101
  %6103 = vrot.lane.b32.xlu0 %v5463, 126
  %v6104 = vpop.permute.xlu0 %6103
  %6105 = vrot.lane.b32.xlu0 %v5464, 126
  %v6106 = vpop.permute.xlu0 %6105
  %6107 = vrot.lane.b32.xlu0 %v5465, 126
  %v6108 = vpop.permute.xlu0 %6107
  %6109 = vrot.lane.b32.xlu0 %v5466, 126
  %v6110 = vpop.permute.xlu0 %6109
  %6111 = vrot.lane.b32.xlu0 %v5467, 126
  %v6112 = vpop.permute.xlu0 %6111
  %6113 = vrot.lane.b32.xlu0 %v5468, 126
  %v6114 = vpop.permute.xlu0 %6113
  %6115 = vrot.lane.b32.xlu0 %v5469, 126
  %v6116 = vpop.permute.xlu0 %6115
  %6117 = vrot.lane.b32.xlu0 %v5470, 126
  %v6118 = vpop.permute.xlu0 %6117
  %6119 = vrot.lane.b32.xlu0 %v5471, 126
  %v6120 = vpop.permute.xlu0 %6119
  %6121 = vrot.lane.b32.xlu0 %v5472, 126
  %v6122 = vpop.permute.xlu0 %6121
  %6123 = vrot.lane.b32.xlu0 %v5473, 126
  %v6124 = vpop.permute.xlu0 %6123
  %6125 = vrot.lane.b32.xlu0 %v5474, 126
  %v6126 = vpop.permute.xlu0 %6125
  %6127 = vrot.lane.b32.xlu0 %v5475, 126
  %v6128 = vpop.permute.xlu0 %6127
  %6129 = vrot.lane.b32.xlu0 %v5476, 126
  %v6130 = vpop.permute.xlu0 %6129
  %6131 = vrot.lane.b32.xlu0 %v5477, 126
  %v6132 = vpop.permute.xlu0 %6131
  %6133 = vrot.lane.b32.xlu0 %v5478, 126
  %v6134 = vpop.permute.xlu0 %6133
  %6135 = vrot.lane.b32.xlu0 %v5479, 126
  %v6136 = vpop.permute.xlu0 %6135
  %6137 = vrot.lane.b32.xlu0 %v5480, 126
  %v6138 = vpop.permute.xlu0 %6137
  %6139 = vrot.lane.b32.xlu0 %v5481, 126
  %v6140 = vpop.permute.xlu0 %6139
  %6141 = vrot.lane.b32.xlu0 %v5482, 126
  %v6142 = vpop.permute.xlu0 %6141
  %6143 = vrot.lane.b32.xlu0 %v5483, 126
  %v6144 = vpop.permute.xlu0 %6143
  %6145 = vrot.lane.b32.xlu0 %v5484, 126
  %v6146 = vpop.permute.xlu0 %6145
  %6147 = vrot.lane.b32.xlu0 %v5485, 126
  %v6148 = vpop.permute.xlu0 %6147
  %6149 = vrot.lane.b32.xlu0 %v5486, 126
  %v6150 = vpop.permute.xlu0 %6149
  %6151 = vrot.lane.b32.xlu0 %v5487, 126
  %v6152 = vpop.permute.xlu0 %6151
  %6153 = vrot.lane.b32.xlu0 %v5488, 126
  %v6154 = vpop.permute.xlu0 %6153
  %6155 = vrot.lane.b32.xlu0 %v5489, 126
  %v6156 = vpop.permute.xlu0 %6155
  %6157 = vrot.lane.b32.xlu0 %v5490, 126
  %v6158 = vpop.permute.xlu0 %6157
  %6159 = vrot.lane.b32.xlu0 %v5491, 126
  %v6160 = vpop.permute.xlu0 %6159
  %6161 = vrot.lane.b32.xlu0 %v5492, 126
  %v6162 = vpop.permute.xlu0 %6161
  %6163 = vrot.lane.b32.xlu0 %v5493, 126
  %v6164 = vpop.permute.xlu0 %6163
  %6165 = vrot.lane.b32.xlu0 %v5494, 126
  %v6166 = vpop.permute.xlu0 %6165
  %6167 = vrot.lane.b32.xlu0 %v5495, 126
  %v6168 = vpop.permute.xlu0 %6167
  %6169 = vrot.lane.b32.xlu0 %v5496, 126
  %v6170 = vpop.permute.xlu0 %6169
  %6171 = vrot.lane.b32.xlu0 %v5497, 126
  %v6172 = vpop.permute.xlu0 %6171
  %vm6173 = vcmask 1031168
  %v6174 = vsel %vm6173, %v5982, %v5984
  %v6175 = vsel %vm6173, %v5984, %v5986
  %v6176 = vsel %vm6173, %v5986, %v5988
  %v6177 = vsel %vm6173, %v5988, %v5990
  %v6178 = vsel %vm6173, %v5990, %v5992
  %v6179 = vsel %vm6173, %v5992, %v5994
  %v6180 = vsel %vm6173, %v5994, %v5996
  %v6181 = vsel %vm6173, %v5996, %v5998
  %v6182 = vsel %vm6173, %v5998, %v6000
  %v6183 = vsel %vm6173, %v6000, %v6002
  %v6184 = vsel %vm6173, %v6002, %v6004
  %v6185 = vsel %vm6173, %v6004, %v6006
  %v6186 = vsel %vm6173, %v6006, %v6008
  %v6187 = vsel %vm6173, %v6008, %v6010
  %v6188 = vsel %vm6173, %v6010, %v6012
  %v6189 = vsel %vm6173, %v6012, %v6014
  %v6190 = vsel %vm6173, %v6014, %v6016
  %v6191 = vsel %vm6173, %v6016, %v6018
  %v6192 = vsel %vm6173, %v6018, %v6020
  %v6193 = vsel %vm6173, %v6020, %v6022
  %v6194 = vsel %vm6173, %v6022, %v6024
  %v6195 = vsel %vm6173, %v6024, %v6026
  %v6196 = vsel %vm6173, %v6026, %v6028
  %v6197 = vsel %vm6173, %v6028, %v6030
  %v6198 = vsel %vm6173, %v6030, %v6032
  %v6199 = vsel %vm6173, %v6032, %v6034
  %v6200 = vsel %vm6173, %v6034, %v6036
  %v6201 = vsel %vm6173, %v6036, %v6038
  %v6202 = vsel %vm6173, %v6038, %v6040
  %v6203 = vsel %vm6173, %v6040, %v6042
  %v6204 = vsel %vm6173, %v6042, %v6044
  %v6205 = vsel %vm6173, %v6046, %v6048
  %v6206 = vsel %vm6173, %v6048, %v6050
  %v6207 = vsel %vm6173, %v6050, %v6052
  %v6208 = vsel %vm6173, %v6052, %v6054
  %v6209 = vsel %vm6173, %v6054, %v6056
  %v6210 = vsel %vm6173, %v6056, %v6058
  %v6211 = vsel %vm6173, %v6058, %v6060
  %v6212 = vsel %vm6173, %v6060, %v6062
  %v6213 = vsel %vm6173, %v6062, %v6064
  %v6214 = vsel %vm6173, %v6064, %v6066
  %v6215 = vsel %vm6173, %v6066, %v6068
  %v6216 = vsel %vm6173, %v6068, %v6070
  %v6217 = vsel %vm6173, %v6070, %v6072
  %v6218 = vsel %vm6173, %v6072, %v6074
  %v6219 = vsel %vm6173, %v6074, %v6076
  %v6220 = vsel %vm6173, %v6076, %v6078
  %v6221 = vsel %vm6173, %v6078, %v6080
  %v6222 = vsel %vm6173, %v6080, %v6082
  %v6223 = vsel %vm6173, %v6082, %v6084
  %v6224 = vsel %vm6173, %v6084, %v6086
  %v6225 = vsel %vm6173, %v6086, %v6088
  %v6226 = vsel %vm6173, %v6088, %v6090
  %v6227 = vsel %vm6173, %v6090, %v6092
  %v6228 = vsel %vm6173, %v6092, %v6094
  %v6229 = vsel %vm6173, %v6094, %v6096
  %v6230 = vsel %vm6173, %v6096, %v6098
  %v6231 = vsel %vm6173, %v6098, %v6100
  %v6232 = vsel %vm6173, %v6100, %v6102
  %v6233 = vsel %vm6173, %v6102, %v6104
  %v6234 = vsel %vm6173, %v6104, %v6106
  %v6235 = vsel %vm6173, %v6106, %v6108
  %v6236 = vsel %vm6173, %v6110, %v6112
  %v6237 = vsel %vm6173, %v6112, %v6114
  %v6238 = vsel %vm6173, %v6114, %v6116
  %v6239 = vsel %vm6173, %v6116, %v6118
  %v6240 = vsel %vm6173, %v6118, %v6120
  %v6241 = vsel %vm6173, %v6120, %v6122
  %v6242 = vsel %vm6173, %v6122, %v6124
  %v6243 = vsel %vm6173, %v6124, %v6126
  %v6244 = vsel %vm6173, %v6126, %v6128
  %v6245 = vsel %vm6173, %v6128, %v6130
  %v6246 = vsel %vm6173, %v6130, %v6132
  %v6247 = vsel %vm6173, %v6132, %v6134
  %v6248 = vsel %vm6173, %v6134, %v6136
  %v6249 = vsel %vm6173, %v6136, %v6138
  %v6250 = vsel %vm6173, %v6138, %v6140
  %v6251 = vsel %vm6173, %v6140, %v6142
  %v6252 = vsel %vm6173, %v6142, %v6144
  %v6253 = vsel %vm6173, %v6144, %v6146
  %v6254 = vsel %vm6173, %v6146, %v6148
  %v6255 = vsel %vm6173, %v6148, %v6150
  %v6256 = vsel %vm6173, %v6150, %v6152
  %v6257 = vsel %vm6173, %v6152, %v6154
  %v6258 = vsel %vm6173, %v6154, %v6156
  %v6259 = vsel %vm6173, %v6156, %v6158
  %v6260 = vsel %vm6173, %v6158, %v6160
  %v6261 = vsel %vm6173, %v6160, %v6162
  %v6262 = vsel %vm6173, %v6162, %v6164
  %v6263 = vsel %vm6173, %v6164, %v6166
  %v6264 = vsel %vm6173, %v6166, %v6168
  %v6265 = vsel %vm6173, %v6168, %v6170
  %v6266 = vsel %vm6173, %v6170, %v6172
  %v6366 = vsel %vm6173, %v6044, %v5982
  %v6367 = vsel %vm6173, %v6108, %v6046
  %v6368 = vsel %vm6173, %v6172, %v6110
  %6369 = vrot.lane.b32.xlu0 %v5402, 112
  %v6370 = vpop.permute.xlu0 %6369
  %6371 = vrot.lane.b32.xlu0 %v5403, 112
  %v6372 = vpop.permute.xlu0 %6371
  %6373 = vrot.lane.b32.xlu0 %v5404, 112
  %v6374 = vpop.permute.xlu0 %6373
  %6375 = vrot.lane.b32.xlu0 %v5405, 112
  %v6376 = vpop.permute.xlu0 %6375
  %6377 = vrot.lane.b32.xlu0 %v5406, 112
  %v6378 = vpop.permute.xlu0 %6377
  %6379 = vrot.lane.b32.xlu0 %v5407, 112
  %v6380 = vpop.permute.xlu0 %6379
  %6381 = vrot.lane.b32.xlu0 %v5408, 112
  %v6382 = vpop.permute.xlu0 %6381
  %6383 = vrot.lane.b32.xlu0 %v5409, 112
  %v6384 = vpop.permute.xlu0 %6383
  %6385 = vrot.lane.b32.xlu0 %v5410, 112
  %v6386 = vpop.permute.xlu0 %6385
  %6387 = vrot.lane.b32.xlu0 %v5411, 112
  %v6388 = vpop.permute.xlu0 %6387
  %6389 = vrot.lane.b32.xlu0 %v5412, 112
  %v6390 = vpop.permute.xlu0 %6389
  %6391 = vrot.lane.b32.xlu0 %v5413, 112
  %v6392 = vpop.permute.xlu0 %6391
  %6393 = vrot.lane.b32.xlu0 %v5414, 112
  %v6394 = vpop.permute.xlu0 %6393
  %6395 = vrot.lane.b32.xlu0 %v5415, 112
  %v6396 = vpop.permute.xlu0 %6395
  %6397 = vrot.lane.b32.xlu0 %v5416, 112
  %v6398 = vpop.permute.xlu0 %6397
  %6399 = vrot.lane.b32.xlu0 %v5417, 112
  %v6400 = vpop.permute.xlu0 %6399
  %6401 = vrot.lane.b32.xlu0 %v5418, 112
  %v6402 = vpop.permute.xlu0 %6401
  %6403 = vrot.lane.b32.xlu0 %v5419, 112
  %v6404 = vpop.permute.xlu0 %6403
  %6405 = vrot.lane.b32.xlu0 %v5420, 112
  %v6406 = vpop.permute.xlu0 %6405
  %6407 = vrot.lane.b32.xlu0 %v5421, 112
  %v6408 = vpop.permute.xlu0 %6407
  %6409 = vrot.lane.b32.xlu0 %v5422, 112
  %v6410 = vpop.permute.xlu0 %6409
  %6411 = vrot.lane.b32.xlu0 %v5423, 112
  %v6412 = vpop.permute.xlu0 %6411
  %6413 = vrot.lane.b32.xlu0 %v5424, 112
  %v6414 = vpop.permute.xlu0 %6413
  %6415 = vrot.lane.b32.xlu0 %v5425, 112
  %v6416 = vpop.permute.xlu0 %6415
  %6417 = vrot.lane.b32.xlu0 %v5426, 112
  %v6418 = vpop.permute.xlu0 %6417
  %6419 = vrot.lane.b32.xlu0 %v5427, 112
  %v6420 = vpop.permute.xlu0 %6419
  %6421 = vrot.lane.b32.xlu0 %v5428, 112
  %v6422 = vpop.permute.xlu0 %6421
  %6423 = vrot.lane.b32.xlu0 %v5429, 112
  %v6424 = vpop.permute.xlu0 %6423
  %6425 = vrot.lane.b32.xlu0 %v5430, 112
  %v6426 = vpop.permute.xlu0 %6425
  %6427 = vrot.lane.b32.xlu0 %v5431, 112
  %v6428 = vpop.permute.xlu0 %6427
  %6429 = vrot.lane.b32.xlu0 %v5432, 112
  %v6430 = vpop.permute.xlu0 %6429
  %6431 = vrot.lane.b32.xlu0 %v5433, 112
  %v6432 = vpop.permute.xlu0 %6431
  %6433 = vrot.lane.b32.xlu0 %v5434, 112
  %v6434 = vpop.permute.xlu0 %6433
  %6435 = vrot.lane.b32.xlu0 %v5435, 112
  %v6436 = vpop.permute.xlu0 %6435
  %6437 = vrot.lane.b32.xlu0 %v5436, 112
  %v6438 = vpop.permute.xlu0 %6437
  %6439 = vrot.lane.b32.xlu0 %v5437, 112
  %v6440 = vpop.permute.xlu0 %6439
  %6441 = vrot.lane.b32.xlu0 %v5438, 112
  %v6442 = vpop.permute.xlu0 %6441
  %6443 = vrot.lane.b32.xlu0 %v5439, 112
  %v6444 = vpop.permute.xlu0 %6443
  %6445 = vrot.lane.b32.xlu0 %v5440, 112
  %v6446 = vpop.permute.xlu0 %6445
  %6447 = vrot.lane.b32.xlu0 %v5441, 112
  %v6448 = vpop.permute.xlu0 %6447
  %6449 = vrot.lane.b32.xlu0 %v5442, 112
  %v6450 = vpop.permute.xlu0 %6449
  %6451 = vrot.lane.b32.xlu0 %v5443, 112
  %v6452 = vpop.permute.xlu0 %6451
  %6453 = vrot.lane.b32.xlu0 %v5444, 112
  %v6454 = vpop.permute.xlu0 %6453
  %6455 = vrot.lane.b32.xlu0 %v5445, 112
  %v6456 = vpop.permute.xlu0 %6455
  %6457 = vrot.lane.b32.xlu0 %v5446, 112
  %v6458 = vpop.permute.xlu0 %6457
  %6459 = vrot.lane.b32.xlu0 %v5447, 112
  %v6460 = vpop.permute.xlu0 %6459
  %6461 = vrot.lane.b32.xlu0 %v5448, 112
  %v6462 = vpop.permute.xlu0 %6461
  %6463 = vrot.lane.b32.xlu0 %v5449, 112
  %v6464 = vpop.permute.xlu0 %6463
  %6465 = vrot.lane.b32.xlu0 %v5450, 112
  %v6466 = vpop.permute.xlu0 %6465
  %6467 = vrot.lane.b32.xlu0 %v5451, 112
  %v6468 = vpop.permute.xlu0 %6467
  %6469 = vrot.lane.b32.xlu0 %v5452, 112
  %v6470 = vpop.permute.xlu0 %6469
  %6471 = vrot.lane.b32.xlu0 %v5453, 112
  %v6472 = vpop.permute.xlu0 %6471
  %6473 = vrot.lane.b32.xlu0 %v5454, 112
  %v6474 = vpop.permute.xlu0 %6473
  %6475 = vrot.lane.b32.xlu0 %v5455, 112
  %v6476 = vpop.permute.xlu0 %6475
  %6477 = vrot.lane.b32.xlu0 %v5456, 112
  %v6478 = vpop.permute.xlu0 %6477
  %6479 = vrot.lane.b32.xlu0 %v5457, 112
  %v6480 = vpop.permute.xlu0 %6479
  %6481 = vrot.lane.b32.xlu0 %v5458, 112
  %v6482 = vpop.permute.xlu0 %6481
  %6483 = vrot.lane.b32.xlu0 %v5459, 112
  %v6484 = vpop.permute.xlu0 %6483
  %6485 = vrot.lane.b32.xlu0 %v5460, 112
  %v6486 = vpop.permute.xlu0 %6485
  %6487 = vrot.lane.b32.xlu0 %v5461, 112
  %v6488 = vpop.permute.xlu0 %6487
  %6489 = vrot.lane.b32.xlu0 %v5462, 112
  %v6490 = vpop.permute.xlu0 %6489
  %6491 = vrot.lane.b32.xlu0 %v5463, 112
  %v6492 = vpop.permute.xlu0 %6491
  %6493 = vrot.lane.b32.xlu0 %v5464, 112
  %v6494 = vpop.permute.xlu0 %6493
  %6495 = vrot.lane.b32.xlu0 %v5465, 112
  %v6496 = vpop.permute.xlu0 %6495
  %6497 = vrot.lane.b32.xlu0 %v5466, 112
  %v6498 = vpop.permute.xlu0 %6497
  %6499 = vrot.lane.b32.xlu0 %v5467, 112
  %v6500 = vpop.permute.xlu0 %6499
  %6501 = vrot.lane.b32.xlu0 %v5468, 112
  %v6502 = vpop.permute.xlu0 %6501
  %6503 = vrot.lane.b32.xlu0 %v5469, 112
  %v6504 = vpop.permute.xlu0 %6503
  %6505 = vrot.lane.b32.xlu0 %v5470, 112
  %v6506 = vpop.permute.xlu0 %6505
  %6507 = vrot.lane.b32.xlu0 %v5471, 112
  %v6508 = vpop.permute.xlu0 %6507
  %6509 = vrot.lane.b32.xlu0 %v5472, 112
  %v6510 = vpop.permute.xlu0 %6509
  %6511 = vrot.lane.b32.xlu0 %v5473, 112
  %v6512 = vpop.permute.xlu0 %6511
  %6513 = vrot.lane.b32.xlu0 %v5474, 112
  %v6514 = vpop.permute.xlu0 %6513
  %6515 = vrot.lane.b32.xlu0 %v5475, 112
  %v6516 = vpop.permute.xlu0 %6515
  %6517 = vrot.lane.b32.xlu0 %v5476, 112
  %v6518 = vpop.permute.xlu0 %6517
  %6519 = vrot.lane.b32.xlu0 %v5477, 112
  %v6520 = vpop.permute.xlu0 %6519
  %6521 = vrot.lane.b32.xlu0 %v5478, 112
  %v6522 = vpop.permute.xlu0 %6521
  %6523 = vrot.lane.b32.xlu0 %v5479, 112
  %v6524 = vpop.permute.xlu0 %6523
  %6525 = vrot.lane.b32.xlu0 %v5480, 112
  %v6526 = vpop.permute.xlu0 %6525
  %6527 = vrot.lane.b32.xlu0 %v5481, 112
  %v6528 = vpop.permute.xlu0 %6527
  %6529 = vrot.lane.b32.xlu0 %v5482, 112
  %v6530 = vpop.permute.xlu0 %6529
  %6531 = vrot.lane.b32.xlu0 %v5483, 112
  %v6532 = vpop.permute.xlu0 %6531
  %6533 = vrot.lane.b32.xlu0 %v5484, 112
  %v6534 = vpop.permute.xlu0 %6533
  %6535 = vrot.lane.b32.xlu0 %v5485, 112
  %v6536 = vpop.permute.xlu0 %6535
  %6537 = vrot.lane.b32.xlu0 %v5486, 112
  %v6538 = vpop.permute.xlu0 %6537
  %6539 = vrot.lane.b32.xlu0 %v5487, 112
  %v6540 = vpop.permute.xlu0 %6539
  %6541 = vrot.lane.b32.xlu0 %v5488, 112
  %v6542 = vpop.permute.xlu0 %6541
  %6543 = vrot.lane.b32.xlu0 %v5489, 112
  %v6544 = vpop.permute.xlu0 %6543
  %6545 = vrot.lane.b32.xlu0 %v5490, 112
  %v6546 = vpop.permute.xlu0 %6545
  %6547 = vrot.lane.b32.xlu0 %v5491, 112
  %v6548 = vpop.permute.xlu0 %6547
  %6549 = vrot.lane.b32.xlu0 %v5492, 112
  %v6550 = vpop.permute.xlu0 %6549
  %6551 = vrot.lane.b32.xlu0 %v5493, 112
  %v6552 = vpop.permute.xlu0 %6551
  %6553 = vrot.lane.b32.xlu0 %v5494, 112
  %v6554 = vpop.permute.xlu0 %6553
  %6555 = vrot.lane.b32.xlu0 %v5495, 112
  %v6556 = vpop.permute.xlu0 %6555
  %6557 = vrot.lane.b32.xlu0 %v5496, 112
  %v6558 = vpop.permute.xlu0 %6557
  %6559 = vrot.lane.b32.xlu0 %v5497, 112
  %v6560 = vpop.permute.xlu0 %6559
  %v6561 = vsel %vm1581, %v6370, %v6372
  %v6562 = vsel %vm1581, %v6372, %v6374
  %v6563 = vsel %vm1581, %v6374, %v6376
  %v6564 = vsel %vm1581, %v6376, %v6378
  %v6565 = vsel %vm1581, %v6378, %v6380
  %v6566 = vsel %vm1581, %v6380, %v6382
  %v6567 = vsel %vm1581, %v6382, %v6384
  %v6568 = vsel %vm1581, %v6384, %v6386
  %v6569 = vsel %vm1581, %v6386, %v6388
  %v6570 = vsel %vm1581, %v6388, %v6390
  %v6571 = vsel %vm1581, %v6390, %v6392
  %v6572 = vsel %vm1581, %v6392, %v6394
  %v6573 = vsel %vm1581, %v6394, %v6396
  %v6574 = vsel %vm1581, %v6396, %v6398
  %v6575 = vsel %vm1581, %v6398, %v6400
  %v6576 = vsel %vm1581, %v6400, %v6402
  %v6577 = vsel %vm1581, %v6402, %v6404
  %v6578 = vsel %vm1581, %v6404, %v6406
  %v6579 = vsel %vm1581, %v6406, %v6408
  %v6580 = vsel %vm1581, %v6408, %v6410
  %v6581 = vsel %vm1581, %v6410, %v6412
  %v6582 = vsel %vm1581, %v6412, %v6414
  %v6583 = vsel %vm1581, %v6414, %v6416
  %v6584 = vsel %vm1581, %v6416, %v6418
  %v6585 = vsel %vm1581, %v6418, %v6420
  %v6586 = vsel %vm1581, %v6420, %v6422
  %v6587 = vsel %vm1581, %v6422, %v6424
  %v6588 = vsel %vm1581, %v6424, %v6426
  %v6589 = vsel %vm1581, %v6426, %v6428
  %v6590 = vsel %vm1581, %v6428, %v6430
  %v6591 = vsel %vm1581, %v6430, %v6432
  %v6592 = vsel %vm1581, %v6434, %v6436
  %v6593 = vsel %vm1581, %v6436, %v6438
  %v6594 = vsel %vm1581, %v6438, %v6440
  %v6595 = vsel %vm1581, %v6440, %v6442
  %v6596 = vsel %vm1581, %v6442, %v6444
  %v6597 = vsel %vm1581, %v6444, %v6446
  %v6598 = vsel %vm1581, %v6446, %v6448
  %v6599 = vsel %vm1581, %v6448, %v6450
  %v6600 = vsel %vm1581, %v6450, %v6452
  %v6601 = vsel %vm1581, %v6452, %v6454
  %v6602 = vsel %vm1581, %v6454, %v6456
  %v6603 = vsel %vm1581, %v6456, %v6458
  %v6604 = vsel %vm1581, %v6458, %v6460
  %v6605 = vsel %vm1581, %v6460, %v6462
  %v6606 = vsel %vm1581, %v6462, %v6464
  %v6607 = vsel %vm1581, %v6464, %v6466
  %v6608 = vsel %vm1581, %v6466, %v6468
  %v6609 = vsel %vm1581, %v6468, %v6470
  %v6610 = vsel %vm1581, %v6470, %v6472
  %v6611 = vsel %vm1581, %v6472, %v6474
  %v6612 = vsel %vm1581, %v6474, %v6476
  %v6613 = vsel %vm1581, %v6476, %v6478
  %v6614 = vsel %vm1581, %v6478, %v6480
  %v6615 = vsel %vm1581, %v6480, %v6482
  %v6616 = vsel %vm1581, %v6482, %v6484
  %v6617 = vsel %vm1581, %v6484, %v6486
  %v6618 = vsel %vm1581, %v6486, %v6488
  %v6619 = vsel %vm1581, %v6488, %v6490
  %v6620 = vsel %vm1581, %v6490, %v6492
  %v6621 = vsel %vm1581, %v6492, %v6494
  %v6622 = vsel %vm1581, %v6494, %v6496
  %v6623 = vsel %vm1581, %v6498, %v6500
  %v6624 = vsel %vm1581, %v6500, %v6502
  %v6625 = vsel %vm1581, %v6502, %v6504
  %v6626 = vsel %vm1581, %v6504, %v6506
  %v6627 = vsel %vm1581, %v6506, %v6508
  %v6628 = vsel %vm1581, %v6508, %v6510
  %v6629 = vsel %vm1581, %v6510, %v6512
  %v6630 = vsel %vm1581, %v6512, %v6514
  %v6631 = vsel %vm1581, %v6514, %v6516
  %v6632 = vsel %vm1581, %v6516, %v6518
  %v6633 = vsel %vm1581, %v6518, %v6520
  %v6634 = vsel %vm1581, %v6520, %v6522
  %v6635 = vsel %vm1581, %v6522, %v6524
  %v6636 = vsel %vm1581, %v6524, %v6526
  %v6637 = vsel %vm1581, %v6526, %v6528
  %v6638 = vsel %vm1581, %v6528, %v6530
  %v6639 = vsel %vm1581, %v6530, %v6532
  %v6640 = vsel %vm1581, %v6532, %v6534
  %v6641 = vsel %vm1581, %v6534, %v6536
  %v6642 = vsel %vm1581, %v6536, %v6538
  %v6643 = vsel %vm1581, %v6538, %v6540
  %v6644 = vsel %vm1581, %v6540, %v6542
  %v6645 = vsel %vm1581, %v6542, %v6544
  %v6646 = vsel %vm1581, %v6544, %v6546
  %v6647 = vsel %vm1581, %v6546, %v6548
  %v6648 = vsel %vm1581, %v6548, %v6550
  %v6649 = vsel %vm1581, %v6550, %v6552
  %v6650 = vsel %vm1581, %v6552, %v6554
  %v6651 = vsel %vm1581, %v6554, %v6556
  %v6652 = vsel %vm1581, %v6556, %v6558
  %v6653 = vsel %vm1581, %v6558, %v6560
  %v6753 = vsel %vm1581, %v6432, %v6370
  %v6754 = vsel %vm1581, %v6496, %v6434
  %v6755 = vsel %vm1581, %v6560, %v6498
  %6756 = vrot.lane.b32.xlu0 %v5402, 111
  %v6757 = vpop.permute.xlu0 %6756
  %6758 = vrot.lane.b32.xlu0 %v5403, 111
  %v6759 = vpop.permute.xlu0 %6758
  %6760 = vrot.lane.b32.xlu0 %v5404, 111
  %v6761 = vpop.permute.xlu0 %6760
  %6762 = vrot.lane.b32.xlu0 %v5405, 111
  %v6763 = vpop.permute.xlu0 %6762
  %6764 = vrot.lane.b32.xlu0 %v5406, 111
  %v6765 = vpop.permute.xlu0 %6764
  %6766 = vrot.lane.b32.xlu0 %v5407, 111
  %v6767 = vpop.permute.xlu0 %6766
  %6768 = vrot.lane.b32.xlu0 %v5408, 111
  %v6769 = vpop.permute.xlu0 %6768
  %6770 = vrot.lane.b32.xlu0 %v5409, 111
  %v6771 = vpop.permute.xlu0 %6770
  %6772 = vrot.lane.b32.xlu0 %v5410, 111
  %v6773 = vpop.permute.xlu0 %6772
  %6774 = vrot.lane.b32.xlu0 %v5411, 111
  %v6775 = vpop.permute.xlu0 %6774
  %6776 = vrot.lane.b32.xlu0 %v5412, 111
  %v6777 = vpop.permute.xlu0 %6776
  %6778 = vrot.lane.b32.xlu0 %v5413, 111
  %v6779 = vpop.permute.xlu0 %6778
  %6780 = vrot.lane.b32.xlu0 %v5414, 111
  %v6781 = vpop.permute.xlu0 %6780
  %6782 = vrot.lane.b32.xlu0 %v5415, 111
  %v6783 = vpop.permute.xlu0 %6782
  %6784 = vrot.lane.b32.xlu0 %v5416, 111
  %v6785 = vpop.permute.xlu0 %6784
  %6786 = vrot.lane.b32.xlu0 %v5417, 111
  %v6787 = vpop.permute.xlu0 %6786
  %6788 = vrot.lane.b32.xlu0 %v5418, 111
  %v6789 = vpop.permute.xlu0 %6788
  %6790 = vrot.lane.b32.xlu0 %v5419, 111
  %v6791 = vpop.permute.xlu0 %6790
  %6792 = vrot.lane.b32.xlu0 %v5420, 111
  %v6793 = vpop.permute.xlu0 %6792
  %6794 = vrot.lane.b32.xlu0 %v5421, 111
  %v6795 = vpop.permute.xlu0 %6794
  %6796 = vrot.lane.b32.xlu0 %v5422, 111
  %v6797 = vpop.permute.xlu0 %6796
  %6798 = vrot.lane.b32.xlu0 %v5423, 111
  %v6799 = vpop.permute.xlu0 %6798
  %6800 = vrot.lane.b32.xlu0 %v5424, 111
  %v6801 = vpop.permute.xlu0 %6800
  %6802 = vrot.lane.b32.xlu0 %v5425, 111
  %v6803 = vpop.permute.xlu0 %6802
  %6804 = vrot.lane.b32.xlu0 %v5426, 111
  %v6805 = vpop.permute.xlu0 %6804
  %6806 = vrot.lane.b32.xlu0 %v5427, 111
  %v6807 = vpop.permute.xlu0 %6806
  %6808 = vrot.lane.b32.xlu0 %v5428, 111
  %v6809 = vpop.permute.xlu0 %6808
  %6810 = vrot.lane.b32.xlu0 %v5429, 111
  %v6811 = vpop.permute.xlu0 %6810
  %6812 = vrot.lane.b32.xlu0 %v5430, 111
  %v6813 = vpop.permute.xlu0 %6812
  %6814 = vrot.lane.b32.xlu0 %v5431, 111
  %v6815 = vpop.permute.xlu0 %6814
  %6816 = vrot.lane.b32.xlu0 %v5432, 111
  %v6817 = vpop.permute.xlu0 %6816
  %6818 = vrot.lane.b32.xlu0 %v5433, 111
  %v6819 = vpop.permute.xlu0 %6818
  %6820 = vrot.lane.b32.xlu0 %v5434, 111
  %v6821 = vpop.permute.xlu0 %6820
  %6822 = vrot.lane.b32.xlu0 %v5435, 111
  %v6823 = vpop.permute.xlu0 %6822
  %6824 = vrot.lane.b32.xlu0 %v5436, 111
  %v6825 = vpop.permute.xlu0 %6824
  %6826 = vrot.lane.b32.xlu0 %v5437, 111
  %v6827 = vpop.permute.xlu0 %6826
  %6828 = vrot.lane.b32.xlu0 %v5438, 111
  %v6829 = vpop.permute.xlu0 %6828
  %6830 = vrot.lane.b32.xlu0 %v5439, 111
  %v6831 = vpop.permute.xlu0 %6830
  %6832 = vrot.lane.b32.xlu0 %v5440, 111
  %v6833 = vpop.permute.xlu0 %6832
  %6834 = vrot.lane.b32.xlu0 %v5441, 111
  %v6835 = vpop.permute.xlu0 %6834
  %6836 = vrot.lane.b32.xlu0 %v5442, 111
  %v6837 = vpop.permute.xlu0 %6836
  %6838 = vrot.lane.b32.xlu0 %v5443, 111
  %v6839 = vpop.permute.xlu0 %6838
  %6840 = vrot.lane.b32.xlu0 %v5444, 111
  %v6841 = vpop.permute.xlu0 %6840
  %6842 = vrot.lane.b32.xlu0 %v5445, 111
  %v6843 = vpop.permute.xlu0 %6842
  %6844 = vrot.lane.b32.xlu0 %v5446, 111
  %v6845 = vpop.permute.xlu0 %6844
  %6846 = vrot.lane.b32.xlu0 %v5447, 111
  %v6847 = vpop.permute.xlu0 %6846
  %6848 = vrot.lane.b32.xlu0 %v5448, 111
  %v6849 = vpop.permute.xlu0 %6848
  %6850 = vrot.lane.b32.xlu0 %v5449, 111
  %v6851 = vpop.permute.xlu0 %6850
  %6852 = vrot.lane.b32.xlu0 %v5450, 111
  %v6853 = vpop.permute.xlu0 %6852
  %6854 = vrot.lane.b32.xlu0 %v5451, 111
  %v6855 = vpop.permute.xlu0 %6854
  %6856 = vrot.lane.b32.xlu0 %v5452, 111
  %v6857 = vpop.permute.xlu0 %6856
  %6858 = vrot.lane.b32.xlu0 %v5453, 111
  %v6859 = vpop.permute.xlu0 %6858
  %6860 = vrot.lane.b32.xlu0 %v5454, 111
  %v6861 = vpop.permute.xlu0 %6860
  %6862 = vrot.lane.b32.xlu0 %v5455, 111
  %v6863 = vpop.permute.xlu0 %6862
  %6864 = vrot.lane.b32.xlu0 %v5456, 111
  %v6865 = vpop.permute.xlu0 %6864
  %6866 = vrot.lane.b32.xlu0 %v5457, 111
  %v6867 = vpop.permute.xlu0 %6866
  %6868 = vrot.lane.b32.xlu0 %v5458, 111
  %v6869 = vpop.permute.xlu0 %6868
  %6870 = vrot.lane.b32.xlu0 %v5459, 111
  %v6871 = vpop.permute.xlu0 %6870
  %6872 = vrot.lane.b32.xlu0 %v5460, 111
  %v6873 = vpop.permute.xlu0 %6872
  %6874 = vrot.lane.b32.xlu0 %v5461, 111
  %v6875 = vpop.permute.xlu0 %6874
  %6876 = vrot.lane.b32.xlu0 %v5462, 111
  %v6877 = vpop.permute.xlu0 %6876
  %6878 = vrot.lane.b32.xlu0 %v5463, 111
  %v6879 = vpop.permute.xlu0 %6878
  %6880 = vrot.lane.b32.xlu0 %v5464, 111
  %v6881 = vpop.permute.xlu0 %6880
  %6882 = vrot.lane.b32.xlu0 %v5465, 111
  %v6883 = vpop.permute.xlu0 %6882
  %6884 = vrot.lane.b32.xlu0 %v5466, 111
  %v6885 = vpop.permute.xlu0 %6884
  %6886 = vrot.lane.b32.xlu0 %v5467, 111
  %v6887 = vpop.permute.xlu0 %6886
  %6888 = vrot.lane.b32.xlu0 %v5468, 111
  %v6889 = vpop.permute.xlu0 %6888
  %6890 = vrot.lane.b32.xlu0 %v5469, 111
  %v6891 = vpop.permute.xlu0 %6890
  %6892 = vrot.lane.b32.xlu0 %v5470, 111
  %v6893 = vpop.permute.xlu0 %6892
  %6894 = vrot.lane.b32.xlu0 %v5471, 111
  %v6895 = vpop.permute.xlu0 %6894
  %6896 = vrot.lane.b32.xlu0 %v5472, 111
  %v6897 = vpop.permute.xlu0 %6896
  %6898 = vrot.lane.b32.xlu0 %v5473, 111
  %v6899 = vpop.permute.xlu0 %6898
  %6900 = vrot.lane.b32.xlu0 %v5474, 111
  %v6901 = vpop.permute.xlu0 %6900
  %6902 = vrot.lane.b32.xlu0 %v5475, 111
  %v6903 = vpop.permute.xlu0 %6902
  %6904 = vrot.lane.b32.xlu0 %v5476, 111
  %v6905 = vpop.permute.xlu0 %6904
  %6906 = vrot.lane.b32.xlu0 %v5477, 111
  %v6907 = vpop.permute.xlu0 %6906
  %6908 = vrot.lane.b32.xlu0 %v5478, 111
  %v6909 = vpop.permute.xlu0 %6908
  %6910 = vrot.lane.b32.xlu0 %v5479, 111
  %v6911 = vpop.permute.xlu0 %6910
  %6912 = vrot.lane.b32.xlu0 %v5480, 111
  %v6913 = vpop.permute.xlu0 %6912
  %6914 = vrot.lane.b32.xlu0 %v5481, 111
  %v6915 = vpop.permute.xlu0 %6914
  %6916 = vrot.lane.b32.xlu0 %v5482, 111
  %v6917 = vpop.permute.xlu0 %6916
  %6918 = vrot.lane.b32.xlu0 %v5483, 111
  %v6919 = vpop.permute.xlu0 %6918
  %6920 = vrot.lane.b32.xlu0 %v5484, 111
  %v6921 = vpop.permute.xlu0 %6920
  %6922 = vrot.lane.b32.xlu0 %v5485, 111
  %v6923 = vpop.permute.xlu0 %6922
  %6924 = vrot.lane.b32.xlu0 %v5486, 111
  %v6925 = vpop.permute.xlu0 %6924
  %6926 = vrot.lane.b32.xlu0 %v5487, 111
  %v6927 = vpop.permute.xlu0 %6926
  %6928 = vrot.lane.b32.xlu0 %v5488, 111
  %v6929 = vpop.permute.xlu0 %6928
  %6930 = vrot.lane.b32.xlu0 %v5489, 111
  %v6931 = vpop.permute.xlu0 %6930
  %6932 = vrot.lane.b32.xlu0 %v5490, 111
  %v6933 = vpop.permute.xlu0 %6932
  %6934 = vrot.lane.b32.xlu0 %v5491, 111
  %v6935 = vpop.permute.xlu0 %6934
  %6936 = vrot.lane.b32.xlu0 %v5492, 111
  %v6937 = vpop.permute.xlu0 %6936
  %6938 = vrot.lane.b32.xlu0 %v5493, 111
  %v6939 = vpop.permute.xlu0 %6938
  %6940 = vrot.lane.b32.xlu0 %v5494, 111
  %v6941 = vpop.permute.xlu0 %6940
  %6942 = vrot.lane.b32.xlu0 %v5495, 111
  %v6943 = vpop.permute.xlu0 %6942
  %6944 = vrot.lane.b32.xlu0 %v5496, 111
  %v6945 = vpop.permute.xlu0 %6944
  %6946 = vrot.lane.b32.xlu0 %v5497, 111
  %v6947 = vpop.permute.xlu0 %6946
  %v6948 = vsel %vm2356, %v6757, %v6759
  %v6949 = vsel %vm2356, %v6759, %v6761
  %v6950 = vsel %vm2356, %v6761, %v6763
  %v6951 = vsel %vm2356, %v6763, %v6765
  %v6952 = vsel %vm2356, %v6765, %v6767
  %v6953 = vsel %vm2356, %v6767, %v6769
  %v6954 = vsel %vm2356, %v6769, %v6771
  %v6955 = vsel %vm2356, %v6771, %v6773
  %v6956 = vsel %vm2356, %v6773, %v6775
  %v6957 = vsel %vm2356, %v6775, %v6777
  %v6958 = vsel %vm2356, %v6777, %v6779
  %v6959 = vsel %vm2356, %v6779, %v6781
  %v6960 = vsel %vm2356, %v6781, %v6783
  %v6961 = vsel %vm2356, %v6783, %v6785
  %v6962 = vsel %vm2356, %v6785, %v6787
  %v6963 = vsel %vm2356, %v6787, %v6789
  %v6964 = vsel %vm2356, %v6789, %v6791
  %v6965 = vsel %vm2356, %v6791, %v6793
  %v6966 = vsel %vm2356, %v6793, %v6795
  %v6967 = vsel %vm2356, %v6795, %v6797
  %v6968 = vsel %vm2356, %v6797, %v6799
  %v6969 = vsel %vm2356, %v6799, %v6801
  %v6970 = vsel %vm2356, %v6801, %v6803
  %v6971 = vsel %vm2356, %v6803, %v6805
  %v6972 = vsel %vm2356, %v6805, %v6807
  %v6973 = vsel %vm2356, %v6807, %v6809
  %v6974 = vsel %vm2356, %v6809, %v6811
  %v6975 = vsel %vm2356, %v6811, %v6813
  %v6976 = vsel %vm2356, %v6813, %v6815
  %v6977 = vsel %vm2356, %v6815, %v6817
  %v6978 = vsel %vm2356, %v6817, %v6819
  %v6979 = vsel %vm2356, %v6821, %v6823
  %v6980 = vsel %vm2356, %v6823, %v6825
  %v6981 = vsel %vm2356, %v6825, %v6827
  %v6982 = vsel %vm2356, %v6827, %v6829
  %v6983 = vsel %vm2356, %v6829, %v6831
  %v6984 = vsel %vm2356, %v6831, %v6833
  %v6985 = vsel %vm2356, %v6833, %v6835
  %v6986 = vsel %vm2356, %v6835, %v6837
  %v6987 = vsel %vm2356, %v6837, %v6839
  %v6988 = vsel %vm2356, %v6839, %v6841
  %v6989 = vsel %vm2356, %v6841, %v6843
  %v6990 = vsel %vm2356, %v6843, %v6845
  %v6991 = vsel %vm2356, %v6845, %v6847
  %v6992 = vsel %vm2356, %v6847, %v6849
  %v6993 = vsel %vm2356, %v6849, %v6851
  %v6994 = vsel %vm2356, %v6851, %v6853
  %v6995 = vsel %vm2356, %v6853, %v6855
  %v6996 = vsel %vm2356, %v6855, %v6857
  %v6997 = vsel %vm2356, %v6857, %v6859
  %v6998 = vsel %vm2356, %v6859, %v6861
  %v6999 = vsel %vm2356, %v6861, %v6863
  %v7000 = vsel %vm2356, %v6863, %v6865
  %v7001 = vsel %vm2356, %v6865, %v6867
  %v7002 = vsel %vm2356, %v6867, %v6869
  %v7003 = vsel %vm2356, %v6869, %v6871
  %v7004 = vsel %vm2356, %v6871, %v6873
  %v7005 = vsel %vm2356, %v6873, %v6875
  %v7006 = vsel %vm2356, %v6875, %v6877
  %v7007 = vsel %vm2356, %v6877, %v6879
  %v7008 = vsel %vm2356, %v6879, %v6881
  %v7009 = vsel %vm2356, %v6881, %v6883
  %v7010 = vsel %vm2356, %v6885, %v6887
  %v7011 = vsel %vm2356, %v6887, %v6889
  %v7012 = vsel %vm2356, %v6889, %v6891
  %v7013 = vsel %vm2356, %v6891, %v6893
  %v7014 = vsel %vm2356, %v6893, %v6895
  %v7015 = vsel %vm2356, %v6895, %v6897
  %v7016 = vsel %vm2356, %v6897, %v6899
  %v7017 = vsel %vm2356, %v6899, %v6901
  %v7018 = vsel %vm2356, %v6901, %v6903
  %v7019 = vsel %vm2356, %v6903, %v6905
  %v7020 = vsel %vm2356, %v6905, %v6907
  %v7021 = vsel %vm2356, %v6907, %v6909
  %v7022 = vsel %vm2356, %v6909, %v6911
  %v7023 = vsel %vm2356, %v6911, %v6913
  %v7024 = vsel %vm2356, %v6913, %v6915
  %v7025 = vsel %vm2356, %v6915, %v6917
  %v7026 = vsel %vm2356, %v6917, %v6919
  %v7027 = vsel %vm2356, %v6919, %v6921
  %v7028 = vsel %vm2356, %v6921, %v6923
  %v7029 = vsel %vm2356, %v6923, %v6925
  %v7030 = vsel %vm2356, %v6925, %v6927
  %v7031 = vsel %vm2356, %v6927, %v6929
  %v7032 = vsel %vm2356, %v6929, %v6931
  %v7033 = vsel %vm2356, %v6931, %v6933
  %v7034 = vsel %vm2356, %v6933, %v6935
  %v7035 = vsel %vm2356, %v6935, %v6937
  %v7036 = vsel %vm2356, %v6937, %v6939
  %v7037 = vsel %vm2356, %v6939, %v6941
  %v7038 = vsel %vm2356, %v6941, %v6943
  %v7039 = vsel %vm2356, %v6943, %v6945
  %v7040 = vsel %vm2356, %v6945, %v6947
  %v7140 = vsel %vm2356, %v6819, %v6757
  %v7141 = vsel %vm2356, %v6883, %v6821
  %v7142 = vsel %vm2356, %v6947, %v6885
  %7143 = vrot.lane.b32.xlu0 %v5402, 110
  %v7144 = vpop.permute.xlu0 %7143
  %7145 = vrot.lane.b32.xlu0 %v5403, 110
  %v7146 = vpop.permute.xlu0 %7145
  %7147 = vrot.lane.b32.xlu0 %v5404, 110
  %v7148 = vpop.permute.xlu0 %7147
  %7149 = vrot.lane.b32.xlu0 %v5405, 110
  %v7150 = vpop.permute.xlu0 %7149
  %7151 = vrot.lane.b32.xlu0 %v5406, 110
  %v7152 = vpop.permute.xlu0 %7151
  %7153 = vrot.lane.b32.xlu0 %v5407, 110
  %v7154 = vpop.permute.xlu0 %7153
  %7155 = vrot.lane.b32.xlu0 %v5408, 110
  %v7156 = vpop.permute.xlu0 %7155
  %7157 = vrot.lane.b32.xlu0 %v5409, 110
  %v7158 = vpop.permute.xlu0 %7157
  %7159 = vrot.lane.b32.xlu0 %v5410, 110
  %v7160 = vpop.permute.xlu0 %7159
  %7161 = vrot.lane.b32.xlu0 %v5411, 110
  %v7162 = vpop.permute.xlu0 %7161
  %7163 = vrot.lane.b32.xlu0 %v5412, 110
  %v7164 = vpop.permute.xlu0 %7163
  %7165 = vrot.lane.b32.xlu0 %v5413, 110
  %v7166 = vpop.permute.xlu0 %7165
  %7167 = vrot.lane.b32.xlu0 %v5414, 110
  %v7168 = vpop.permute.xlu0 %7167
  %7169 = vrot.lane.b32.xlu0 %v5415, 110
  %v7170 = vpop.permute.xlu0 %7169
  %7171 = vrot.lane.b32.xlu0 %v5416, 110
  %v7172 = vpop.permute.xlu0 %7171
  %7173 = vrot.lane.b32.xlu0 %v5417, 110
  %v7174 = vpop.permute.xlu0 %7173
  %7175 = vrot.lane.b32.xlu0 %v5418, 110
  %v7176 = vpop.permute.xlu0 %7175
  %7177 = vrot.lane.b32.xlu0 %v5419, 110
  %v7178 = vpop.permute.xlu0 %7177
  %7179 = vrot.lane.b32.xlu0 %v5420, 110
  %v7180 = vpop.permute.xlu0 %7179
  %7181 = vrot.lane.b32.xlu0 %v5421, 110
  %v7182 = vpop.permute.xlu0 %7181
  %7183 = vrot.lane.b32.xlu0 %v5422, 110
  %v7184 = vpop.permute.xlu0 %7183
  %7185 = vrot.lane.b32.xlu0 %v5423, 110
  %v7186 = vpop.permute.xlu0 %7185
  %7187 = vrot.lane.b32.xlu0 %v5424, 110
  %v7188 = vpop.permute.xlu0 %7187
  %7189 = vrot.lane.b32.xlu0 %v5425, 110
  %v7190 = vpop.permute.xlu0 %7189
  %7191 = vrot.lane.b32.xlu0 %v5426, 110
  %v7192 = vpop.permute.xlu0 %7191
  %7193 = vrot.lane.b32.xlu0 %v5427, 110
  %v7194 = vpop.permute.xlu0 %7193
  %7195 = vrot.lane.b32.xlu0 %v5428, 110
  %v7196 = vpop.permute.xlu0 %7195
  %7197 = vrot.lane.b32.xlu0 %v5429, 110
  %v7198 = vpop.permute.xlu0 %7197
  %7199 = vrot.lane.b32.xlu0 %v5430, 110
  %v7200 = vpop.permute.xlu0 %7199
  %7201 = vrot.lane.b32.xlu0 %v5431, 110
  %v7202 = vpop.permute.xlu0 %7201
  %7203 = vrot.lane.b32.xlu0 %v5432, 110
  %v7204 = vpop.permute.xlu0 %7203
  %7205 = vrot.lane.b32.xlu0 %v5433, 110
  %v7206 = vpop.permute.xlu0 %7205
  %7207 = vrot.lane.b32.xlu0 %v5434, 110
  %v7208 = vpop.permute.xlu0 %7207
  %7209 = vrot.lane.b32.xlu0 %v5435, 110
  %v7210 = vpop.permute.xlu0 %7209
  %7211 = vrot.lane.b32.xlu0 %v5436, 110
  %v7212 = vpop.permute.xlu0 %7211
  %7213 = vrot.lane.b32.xlu0 %v5437, 110
  %v7214 = vpop.permute.xlu0 %7213
  %7215 = vrot.lane.b32.xlu0 %v5438, 110
  %v7216 = vpop.permute.xlu0 %7215
  %7217 = vrot.lane.b32.xlu0 %v5439, 110
  %v7218 = vpop.permute.xlu0 %7217
  %7219 = vrot.lane.b32.xlu0 %v5440, 110
  %v7220 = vpop.permute.xlu0 %7219
  %7221 = vrot.lane.b32.xlu0 %v5441, 110
  %v7222 = vpop.permute.xlu0 %7221
  %7223 = vrot.lane.b32.xlu0 %v5442, 110
  %v7224 = vpop.permute.xlu0 %7223
  %7225 = vrot.lane.b32.xlu0 %v5443, 110
  %v7226 = vpop.permute.xlu0 %7225
  %7227 = vrot.lane.b32.xlu0 %v5444, 110
  %v7228 = vpop.permute.xlu0 %7227
  %7229 = vrot.lane.b32.xlu0 %v5445, 110
  %v7230 = vpop.permute.xlu0 %7229
  %7231 = vrot.lane.b32.xlu0 %v5446, 110
  %v7232 = vpop.permute.xlu0 %7231
  %7233 = vrot.lane.b32.xlu0 %v5447, 110
  %v7234 = vpop.permute.xlu0 %7233
  %7235 = vrot.lane.b32.xlu0 %v5448, 110
  %v7236 = vpop.permute.xlu0 %7235
  %7237 = vrot.lane.b32.xlu0 %v5449, 110
  %v7238 = vpop.permute.xlu0 %7237
  %7239 = vrot.lane.b32.xlu0 %v5450, 110
  %v7240 = vpop.permute.xlu0 %7239
  %7241 = vrot.lane.b32.xlu0 %v5451, 110
  %v7242 = vpop.permute.xlu0 %7241
  %7243 = vrot.lane.b32.xlu0 %v5452, 110
  %v7244 = vpop.permute.xlu0 %7243
  %7245 = vrot.lane.b32.xlu0 %v5453, 110
  %v7246 = vpop.permute.xlu0 %7245
  %7247 = vrot.lane.b32.xlu0 %v5454, 110
  %v7248 = vpop.permute.xlu0 %7247
  %7249 = vrot.lane.b32.xlu0 %v5455, 110
  %v7250 = vpop.permute.xlu0 %7249
  %7251 = vrot.lane.b32.xlu0 %v5456, 110
  %v7252 = vpop.permute.xlu0 %7251
  %7253 = vrot.lane.b32.xlu0 %v5457, 110
  %v7254 = vpop.permute.xlu0 %7253
  %7255 = vrot.lane.b32.xlu0 %v5458, 110
  %v7256 = vpop.permute.xlu0 %7255
  %7257 = vrot.lane.b32.xlu0 %v5459, 110
  %v7258 = vpop.permute.xlu0 %7257
  %7259 = vrot.lane.b32.xlu0 %v5460, 110
  %v7260 = vpop.permute.xlu0 %7259
  %7261 = vrot.lane.b32.xlu0 %v5461, 110
  %v7262 = vpop.permute.xlu0 %7261
  %7263 = vrot.lane.b32.xlu0 %v5462, 110
  %v7264 = vpop.permute.xlu0 %7263
  %7265 = vrot.lane.b32.xlu0 %v5463, 110
  %v7266 = vpop.permute.xlu0 %7265
  %7267 = vrot.lane.b32.xlu0 %v5464, 110
  %v7268 = vpop.permute.xlu0 %7267
  %7269 = vrot.lane.b32.xlu0 %v5465, 110
  %v7270 = vpop.permute.xlu0 %7269
  %7271 = vrot.lane.b32.xlu0 %v5466, 110
  %v7272 = vpop.permute.xlu0 %7271
  %7273 = vrot.lane.b32.xlu0 %v5467, 110
  %v7274 = vpop.permute.xlu0 %7273
  %7275 = vrot.lane.b32.xlu0 %v5468, 110
  %v7276 = vpop.permute.xlu0 %7275
  %7277 = vrot.lane.b32.xlu0 %v5469, 110
  %v7278 = vpop.permute.xlu0 %7277
  %7279 = vrot.lane.b32.xlu0 %v5470, 110
  %v7280 = vpop.permute.xlu0 %7279
  %7281 = vrot.lane.b32.xlu0 %v5471, 110
  %v7282 = vpop.permute.xlu0 %7281
  %7283 = vrot.lane.b32.xlu0 %v5472, 110
  %v7284 = vpop.permute.xlu0 %7283
  %7285 = vrot.lane.b32.xlu0 %v5473, 110
  %v7286 = vpop.permute.xlu0 %7285
  %7287 = vrot.lane.b32.xlu0 %v5474, 110
  %v7288 = vpop.permute.xlu0 %7287
  %7289 = vrot.lane.b32.xlu0 %v5475, 110
  %v7290 = vpop.permute.xlu0 %7289
  %7291 = vrot.lane.b32.xlu0 %v5476, 110
  %v7292 = vpop.permute.xlu0 %7291
  %7293 = vrot.lane.b32.xlu0 %v5477, 110
  %v7294 = vpop.permute.xlu0 %7293
  %7295 = vrot.lane.b32.xlu0 %v5478, 110
  %v7296 = vpop.permute.xlu0 %7295
  %7297 = vrot.lane.b32.xlu0 %v5479, 110
  %v7298 = vpop.permute.xlu0 %7297
  %7299 = vrot.lane.b32.xlu0 %v5480, 110
  %v7300 = vpop.permute.xlu0 %7299
  %7301 = vrot.lane.b32.xlu0 %v5481, 110
  %v7302 = vpop.permute.xlu0 %7301
  %7303 = vrot.lane.b32.xlu0 %v5482, 110
  %v7304 = vpop.permute.xlu0 %7303
  %7305 = vrot.lane.b32.xlu0 %v5483, 110
  %v7306 = vpop.permute.xlu0 %7305
  %7307 = vrot.lane.b32.xlu0 %v5484, 110
  %v7308 = vpop.permute.xlu0 %7307
  %7309 = vrot.lane.b32.xlu0 %v5485, 110
  %v7310 = vpop.permute.xlu0 %7309
  %7311 = vrot.lane.b32.xlu0 %v5486, 110
  %v7312 = vpop.permute.xlu0 %7311
  %7313 = vrot.lane.b32.xlu0 %v5487, 110
  %v7314 = vpop.permute.xlu0 %7313
  %7315 = vrot.lane.b32.xlu0 %v5488, 110
  %v7316 = vpop.permute.xlu0 %7315
  %7317 = vrot.lane.b32.xlu0 %v5489, 110
  %v7318 = vpop.permute.xlu0 %7317
  %7319 = vrot.lane.b32.xlu0 %v5490, 110
  %v7320 = vpop.permute.xlu0 %7319
  %7321 = vrot.lane.b32.xlu0 %v5491, 110
  %v7322 = vpop.permute.xlu0 %7321
  %7323 = vrot.lane.b32.xlu0 %v5492, 110
  %v7324 = vpop.permute.xlu0 %7323
  %7325 = vrot.lane.b32.xlu0 %v5493, 110
  %v7326 = vpop.permute.xlu0 %7325
  %7327 = vrot.lane.b32.xlu0 %v5494, 110
  %v7328 = vpop.permute.xlu0 %7327
  %7329 = vrot.lane.b32.xlu0 %v5495, 110
  %v7330 = vpop.permute.xlu0 %7329
  %7331 = vrot.lane.b32.xlu0 %v5496, 110
  %v7332 = vpop.permute.xlu0 %7331
  %7333 = vrot.lane.b32.xlu0 %v5497, 110
  %v7334 = vpop.permute.xlu0 %7333
  %vm7335 = vcmask 900096
  %v7336 = vsel %vm7335, %v7144, %v7146
  %v7337 = vsel %vm7335, %v7146, %v7148
  %v7338 = vsel %vm7335, %v7148, %v7150
  %v7339 = vsel %vm7335, %v7150, %v7152
  %v7340 = vsel %vm7335, %v7152, %v7154
  %v7341 = vsel %vm7335, %v7154, %v7156
  %v7342 = vsel %vm7335, %v7156, %v7158
  %v7343 = vsel %vm7335, %v7158, %v7160
  %v7344 = vsel %vm7335, %v7160, %v7162
  %v7345 = vsel %vm7335, %v7162, %v7164
  %v7346 = vsel %vm7335, %v7164, %v7166
  %v7347 = vsel %vm7335, %v7166, %v7168
  %v7348 = vsel %vm7335, %v7168, %v7170
  %v7349 = vsel %vm7335, %v7170, %v7172
  %v7350 = vsel %vm7335, %v7172, %v7174
  %v7351 = vsel %vm7335, %v7174, %v7176
  %v7352 = vsel %vm7335, %v7176, %v7178
  %v7353 = vsel %vm7335, %v7178, %v7180
  %v7354 = vsel %vm7335, %v7180, %v7182
  %v7355 = vsel %vm7335, %v7182, %v7184
  %v7356 = vsel %vm7335, %v7184, %v7186
  %v7357 = vsel %vm7335, %v7186, %v7188
  %v7358 = vsel %vm7335, %v7188, %v7190
  %v7359 = vsel %vm7335, %v7190, %v7192
  %v7360 = vsel %vm7335, %v7192, %v7194
  %v7361 = vsel %vm7335, %v7194, %v7196
  %v7362 = vsel %vm7335, %v7196, %v7198
  %v7363 = vsel %vm7335, %v7198, %v7200
  %v7364 = vsel %vm7335, %v7200, %v7202
  %v7365 = vsel %vm7335, %v7202, %v7204
  %v7366 = vsel %vm7335, %v7204, %v7206
  %v7367 = vsel %vm7335, %v7208, %v7210
  %v7368 = vsel %vm7335, %v7210, %v7212
  %v7369 = vsel %vm7335, %v7212, %v7214
  %v7370 = vsel %vm7335, %v7214, %v7216
  %v7371 = vsel %vm7335, %v7216, %v7218
  %v7372 = vsel %vm7335, %v7218, %v7220
  %v7373 = vsel %vm7335, %v7220, %v7222
  %v7374 = vsel %vm7335, %v7222, %v7224
  %v7375 = vsel %vm7335, %v7224, %v7226
  %v7376 = vsel %vm7335, %v7226, %v7228
  %v7377 = vsel %vm7335, %v7228, %v7230
  %v7378 = vsel %vm7335, %v7230, %v7232
  %v7379 = vsel %vm7335, %v7232, %v7234
  %v7380 = vsel %vm7335, %v7234, %v7236
  %v7381 = vsel %vm7335, %v7236, %v7238
  %v7382 = vsel %vm7335, %v7238, %v7240
  %v7383 = vsel %vm7335, %v7240, %v7242
  %v7384 = vsel %vm7335, %v7242, %v7244
  %v7385 = vsel %vm7335, %v7244, %v7246
  %v7386 = vsel %vm7335, %v7246, %v7248
  %v7387 = vsel %vm7335, %v7248, %v7250
  %v7388 = vsel %vm7335, %v7250, %v7252
  %v7389 = vsel %vm7335, %v7252, %v7254
  %v7390 = vsel %vm7335, %v7254, %v7256
  %v7391 = vsel %vm7335, %v7256, %v7258
  %v7392 = vsel %vm7335, %v7258, %v7260
  %v7393 = vsel %vm7335, %v7260, %v7262
  %v7394 = vsel %vm7335, %v7262, %v7264
  %v7395 = vsel %vm7335, %v7264, %v7266
  %v7396 = vsel %vm7335, %v7266, %v7268
  %v7397 = vsel %vm7335, %v7268, %v7270
  %v7398 = vsel %vm7335, %v7272, %v7274
  %v7399 = vsel %vm7335, %v7274, %v7276
  %v7400 = vsel %vm7335, %v7276, %v7278
  %v7401 = vsel %vm7335, %v7278, %v7280
  %v7402 = vsel %vm7335, %v7280, %v7282
  %v7403 = vsel %vm7335, %v7282, %v7284
  %v7404 = vsel %vm7335, %v7284, %v7286
  %v7405 = vsel %vm7335, %v7286, %v7288
  %v7406 = vsel %vm7335, %v7288, %v7290
  %v7407 = vsel %vm7335, %v7290, %v7292
  %v7408 = vsel %vm7335, %v7292, %v7294
  %v7409 = vsel %vm7335, %v7294, %v7296
  %v7410 = vsel %vm7335, %v7296, %v7298
  %v7411 = vsel %vm7335, %v7298, %v7300
  %v7412 = vsel %vm7335, %v7300, %v7302
  %v7413 = vsel %vm7335, %v7302, %v7304
  %v7414 = vsel %vm7335, %v7304, %v7306
  %v7415 = vsel %vm7335, %v7306, %v7308
  %v7416 = vsel %vm7335, %v7308, %v7310
  %v7417 = vsel %vm7335, %v7310, %v7312
  %v7418 = vsel %vm7335, %v7312, %v7314
  %v7419 = vsel %vm7335, %v7314, %v7316
  %v7420 = vsel %vm7335, %v7316, %v7318
  %v7421 = vsel %vm7335, %v7318, %v7320
  %v7422 = vsel %vm7335, %v7320, %v7322
  %v7423 = vsel %vm7335, %v7322, %v7324
  %v7424 = vsel %vm7335, %v7324, %v7326
  %v7425 = vsel %vm7335, %v7326, %v7328
  %v7426 = vsel %vm7335, %v7328, %v7330
  %v7427 = vsel %vm7335, %v7330, %v7332
  %v7428 = vsel %vm7335, %v7332, %v7334
  %v7528 = vsel %vm7335, %v7206, %v7144
  %v7529 = vsel %vm7335, %v7270, %v7208
  %v7530 = vsel %vm7335, %v7334, %v7272
  %7531 = vrot.lane.b32.xlu0 %v5402, 96
  %v7532 = vpop.permute.xlu0 %7531
  %7533 = vrot.lane.b32.xlu0 %v5403, 96
  %v7534 = vpop.permute.xlu0 %7533
  %7535 = vrot.lane.b32.xlu0 %v5404, 96
  %v7536 = vpop.permute.xlu0 %7535
  %7537 = vrot.lane.b32.xlu0 %v5405, 96
  %v7538 = vpop.permute.xlu0 %7537
  %7539 = vrot.lane.b32.xlu0 %v5406, 96
  %v7540 = vpop.permute.xlu0 %7539
  %7541 = vrot.lane.b32.xlu0 %v5407, 96
  %v7542 = vpop.permute.xlu0 %7541
  %7543 = vrot.lane.b32.xlu0 %v5408, 96
  %v7544 = vpop.permute.xlu0 %7543
  %7545 = vrot.lane.b32.xlu0 %v5409, 96
  %v7546 = vpop.permute.xlu0 %7545
  %7547 = vrot.lane.b32.xlu0 %v5410, 96
  %v7548 = vpop.permute.xlu0 %7547
  %7549 = vrot.lane.b32.xlu0 %v5411, 96
  %v7550 = vpop.permute.xlu0 %7549
  %7551 = vrot.lane.b32.xlu0 %v5412, 96
  %v7552 = vpop.permute.xlu0 %7551
  %7553 = vrot.lane.b32.xlu0 %v5413, 96
  %v7554 = vpop.permute.xlu0 %7553
  %7555 = vrot.lane.b32.xlu0 %v5414, 96
  %v7556 = vpop.permute.xlu0 %7555
  %7557 = vrot.lane.b32.xlu0 %v5415, 96
  %v7558 = vpop.permute.xlu0 %7557
  %7559 = vrot.lane.b32.xlu0 %v5416, 96
  %v7560 = vpop.permute.xlu0 %7559
  %7561 = vrot.lane.b32.xlu0 %v5417, 96
  %v7562 = vpop.permute.xlu0 %7561
  %7563 = vrot.lane.b32.xlu0 %v5418, 96
  %v7564 = vpop.permute.xlu0 %7563
  %7565 = vrot.lane.b32.xlu0 %v5419, 96
  %v7566 = vpop.permute.xlu0 %7565
  %7567 = vrot.lane.b32.xlu0 %v5420, 96
  %v7568 = vpop.permute.xlu0 %7567
  %7569 = vrot.lane.b32.xlu0 %v5421, 96
  %v7570 = vpop.permute.xlu0 %7569
  %7571 = vrot.lane.b32.xlu0 %v5422, 96
  %v7572 = vpop.permute.xlu0 %7571
  %7573 = vrot.lane.b32.xlu0 %v5423, 96
  %v7574 = vpop.permute.xlu0 %7573
  %7575 = vrot.lane.b32.xlu0 %v5424, 96
  %v7576 = vpop.permute.xlu0 %7575
  %7577 = vrot.lane.b32.xlu0 %v5425, 96
  %v7578 = vpop.permute.xlu0 %7577
  %7579 = vrot.lane.b32.xlu0 %v5426, 96
  %v7580 = vpop.permute.xlu0 %7579
  %7581 = vrot.lane.b32.xlu0 %v5427, 96
  %v7582 = vpop.permute.xlu0 %7581
  %7583 = vrot.lane.b32.xlu0 %v5428, 96
  %v7584 = vpop.permute.xlu0 %7583
  %7585 = vrot.lane.b32.xlu0 %v5429, 96
  %v7586 = vpop.permute.xlu0 %7585
  %7587 = vrot.lane.b32.xlu0 %v5430, 96
  %v7588 = vpop.permute.xlu0 %7587
  %7589 = vrot.lane.b32.xlu0 %v5431, 96
  %v7590 = vpop.permute.xlu0 %7589
  %7591 = vrot.lane.b32.xlu0 %v5432, 96
  %v7592 = vpop.permute.xlu0 %7591
  %7593 = vrot.lane.b32.xlu0 %v5433, 96
  %v7594 = vpop.permute.xlu0 %7593
  %7595 = vrot.lane.b32.xlu0 %v5434, 96
  %v7596 = vpop.permute.xlu0 %7595
  %7597 = vrot.lane.b32.xlu0 %v5435, 96
  %v7598 = vpop.permute.xlu0 %7597
  %7599 = vrot.lane.b32.xlu0 %v5436, 96
  %v7600 = vpop.permute.xlu0 %7599
  %7601 = vrot.lane.b32.xlu0 %v5437, 96
  %v7602 = vpop.permute.xlu0 %7601
  %7603 = vrot.lane.b32.xlu0 %v5438, 96
  %v7604 = vpop.permute.xlu0 %7603
  %7605 = vrot.lane.b32.xlu0 %v5439, 96
  %v7606 = vpop.permute.xlu0 %7605
  %7607 = vrot.lane.b32.xlu0 %v5440, 96
  %v7608 = vpop.permute.xlu0 %7607
  %7609 = vrot.lane.b32.xlu0 %v5441, 96
  %v7610 = vpop.permute.xlu0 %7609
  %7611 = vrot.lane.b32.xlu0 %v5442, 96
  %v7612 = vpop.permute.xlu0 %7611
  %7613 = vrot.lane.b32.xlu0 %v5443, 96
  %v7614 = vpop.permute.xlu0 %7613
  %7615 = vrot.lane.b32.xlu0 %v5444, 96
  %v7616 = vpop.permute.xlu0 %7615
  %7617 = vrot.lane.b32.xlu0 %v5445, 96
  %v7618 = vpop.permute.xlu0 %7617
  %7619 = vrot.lane.b32.xlu0 %v5446, 96
  %v7620 = vpop.permute.xlu0 %7619
  %7621 = vrot.lane.b32.xlu0 %v5447, 96
  %v7622 = vpop.permute.xlu0 %7621
  %7623 = vrot.lane.b32.xlu0 %v5448, 96
  %v7624 = vpop.permute.xlu0 %7623
  %7625 = vrot.lane.b32.xlu0 %v5449, 96
  %v7626 = vpop.permute.xlu0 %7625
  %7627 = vrot.lane.b32.xlu0 %v5450, 96
  %v7628 = vpop.permute.xlu0 %7627
  %7629 = vrot.lane.b32.xlu0 %v5451, 96
  %v7630 = vpop.permute.xlu0 %7629
  %7631 = vrot.lane.b32.xlu0 %v5452, 96
  %v7632 = vpop.permute.xlu0 %7631
  %7633 = vrot.lane.b32.xlu0 %v5453, 96
  %v7634 = vpop.permute.xlu0 %7633
  %7635 = vrot.lane.b32.xlu0 %v5454, 96
  %v7636 = vpop.permute.xlu0 %7635
  %7637 = vrot.lane.b32.xlu0 %v5455, 96
  %v7638 = vpop.permute.xlu0 %7637
  %7639 = vrot.lane.b32.xlu0 %v5456, 96
  %v7640 = vpop.permute.xlu0 %7639
  %7641 = vrot.lane.b32.xlu0 %v5457, 96
  %v7642 = vpop.permute.xlu0 %7641
  %7643 = vrot.lane.b32.xlu0 %v5458, 96
  %v7644 = vpop.permute.xlu0 %7643
  %7645 = vrot.lane.b32.xlu0 %v5459, 96
  %v7646 = vpop.permute.xlu0 %7645
  %7647 = vrot.lane.b32.xlu0 %v5460, 96
  %v7648 = vpop.permute.xlu0 %7647
  %7649 = vrot.lane.b32.xlu0 %v5461, 96
  %v7650 = vpop.permute.xlu0 %7649
  %7651 = vrot.lane.b32.xlu0 %v5462, 96
  %v7652 = vpop.permute.xlu0 %7651
  %7653 = vrot.lane.b32.xlu0 %v5463, 96
  %v7654 = vpop.permute.xlu0 %7653
  %7655 = vrot.lane.b32.xlu0 %v5464, 96
  %v7656 = vpop.permute.xlu0 %7655
  %7657 = vrot.lane.b32.xlu0 %v5465, 96
  %v7658 = vpop.permute.xlu0 %7657
  %7659 = vrot.lane.b32.xlu0 %v5466, 96
  %v7660 = vpop.permute.xlu0 %7659
  %7661 = vrot.lane.b32.xlu0 %v5467, 96
  %v7662 = vpop.permute.xlu0 %7661
  %7663 = vrot.lane.b32.xlu0 %v5468, 96
  %v7664 = vpop.permute.xlu0 %7663
  %7665 = vrot.lane.b32.xlu0 %v5469, 96
  %v7666 = vpop.permute.xlu0 %7665
  %7667 = vrot.lane.b32.xlu0 %v5470, 96
  %v7668 = vpop.permute.xlu0 %7667
  %7669 = vrot.lane.b32.xlu0 %v5471, 96
  %v7670 = vpop.permute.xlu0 %7669
  %7671 = vrot.lane.b32.xlu0 %v5472, 96
  %v7672 = vpop.permute.xlu0 %7671
  %7673 = vrot.lane.b32.xlu0 %v5473, 96
  %v7674 = vpop.permute.xlu0 %7673
  %7675 = vrot.lane.b32.xlu0 %v5474, 96
  %v7676 = vpop.permute.xlu0 %7675
  %7677 = vrot.lane.b32.xlu0 %v5475, 96
  %v7678 = vpop.permute.xlu0 %7677
  %7679 = vrot.lane.b32.xlu0 %v5476, 96
  %v7680 = vpop.permute.xlu0 %7679
  %7681 = vrot.lane.b32.xlu0 %v5477, 96
  %v7682 = vpop.permute.xlu0 %7681
  %7683 = vrot.lane.b32.xlu0 %v5478, 96
  %v7684 = vpop.permute.xlu0 %7683
  %7685 = vrot.lane.b32.xlu0 %v5479, 96
  %v7686 = vpop.permute.xlu0 %7685
  %7687 = vrot.lane.b32.xlu0 %v5480, 96
  %v7688 = vpop.permute.xlu0 %7687
  %7689 = vrot.lane.b32.xlu0 %v5481, 96
  %v7690 = vpop.permute.xlu0 %7689
  %7691 = vrot.lane.b32.xlu0 %v5482, 96
  %v7692 = vpop.permute.xlu0 %7691
  %7693 = vrot.lane.b32.xlu0 %v5483, 96
  %v7694 = vpop.permute.xlu0 %7693
  %7695 = vrot.lane.b32.xlu0 %v5484, 96
  %v7696 = vpop.permute.xlu0 %7695
  %7697 = vrot.lane.b32.xlu0 %v5485, 96
  %v7698 = vpop.permute.xlu0 %7697
  %7699 = vrot.lane.b32.xlu0 %v5486, 96
  %v7700 = vpop.permute.xlu0 %7699
  %7701 = vrot.lane.b32.xlu0 %v5487, 96
  %v7702 = vpop.permute.xlu0 %7701
  %7703 = vrot.lane.b32.xlu0 %v5488, 96
  %v7704 = vpop.permute.xlu0 %7703
  %7705 = vrot.lane.b32.xlu0 %v5489, 96
  %v7706 = vpop.permute.xlu0 %7705
  %7707 = vrot.lane.b32.xlu0 %v5490, 96
  %v7708 = vpop.permute.xlu0 %7707
  %7709 = vrot.lane.b32.xlu0 %v5491, 96
  %v7710 = vpop.permute.xlu0 %7709
  %7711 = vrot.lane.b32.xlu0 %v5492, 96
  %v7712 = vpop.permute.xlu0 %7711
  %7713 = vrot.lane.b32.xlu0 %v5493, 96
  %v7714 = vpop.permute.xlu0 %7713
  %7715 = vrot.lane.b32.xlu0 %v5494, 96
  %v7716 = vpop.permute.xlu0 %7715
  %7717 = vrot.lane.b32.xlu0 %v5495, 96
  %v7718 = vpop.permute.xlu0 %7717
  %7719 = vrot.lane.b32.xlu0 %v5496, 96
  %v7720 = vpop.permute.xlu0 %7719
  %7721 = vrot.lane.b32.xlu0 %v5497, 96
  %v7722 = vpop.permute.xlu0 %7721
  %vm7723 = vcmask 785408
  %v7724 = vsel %vm7723, %v7532, %v7534
  %v7725 = vsel %vm7723, %v7534, %v7536
  %v7726 = vsel %vm7723, %v7536, %v7538
  %v7727 = vsel %vm7723, %v7538, %v7540
  %v7728 = vsel %vm7723, %v7540, %v7542
  %v7729 = vsel %vm7723, %v7542, %v7544
  %v7730 = vsel %vm7723, %v7544, %v7546
  %v7731 = vsel %vm7723, %v7546, %v7548
  %v7732 = vsel %vm7723, %v7548, %v7550
  %v7733 = vsel %vm7723, %v7550, %v7552
  %v7734 = vsel %vm7723, %v7552, %v7554
  %v7735 = vsel %vm7723, %v7554, %v7556
  %v7736 = vsel %vm7723, %v7556, %v7558
  %v7737 = vsel %vm7723, %v7558, %v7560
  %v7738 = vsel %vm7723, %v7560, %v7562
  %v7739 = vsel %vm7723, %v7562, %v7564
  %v7740 = vsel %vm7723, %v7564, %v7566
  %v7741 = vsel %vm7723, %v7566, %v7568
  %v7742 = vsel %vm7723, %v7568, %v7570
  %v7743 = vsel %vm7723, %v7570, %v7572
  %v7744 = vsel %vm7723, %v7572, %v7574
  %v7745 = vsel %vm7723, %v7574, %v7576
  %v7746 = vsel %vm7723, %v7576, %v7578
  %v7747 = vsel %vm7723, %v7578, %v7580
  %v7748 = vsel %vm7723, %v7580, %v7582
  %v7749 = vsel %vm7723, %v7582, %v7584
  %v7750 = vsel %vm7723, %v7584, %v7586
  %v7751 = vsel %vm7723, %v7586, %v7588
  %v7752 = vsel %vm7723, %v7588, %v7590
  %v7753 = vsel %vm7723, %v7590, %v7592
  %v7754 = vsel %vm7723, %v7592, %v7594
  %v7755 = vsel %vm7723, %v7596, %v7598
  %v7756 = vsel %vm7723, %v7598, %v7600
  %v7757 = vsel %vm7723, %v7600, %v7602
  %v7758 = vsel %vm7723, %v7602, %v7604
  %v7759 = vsel %vm7723, %v7604, %v7606
  %v7760 = vsel %vm7723, %v7606, %v7608
  %v7761 = vsel %vm7723, %v7608, %v7610
  %v7762 = vsel %vm7723, %v7610, %v7612
  %v7763 = vsel %vm7723, %v7612, %v7614
  %v7764 = vsel %vm7723, %v7614, %v7616
  %v7765 = vsel %vm7723, %v7616, %v7618
  %v7766 = vsel %vm7723, %v7618, %v7620
  %v7767 = vsel %vm7723, %v7620, %v7622
  %v7768 = vsel %vm7723, %v7622, %v7624
  %v7769 = vsel %vm7723, %v7624, %v7626
  %v7770 = vsel %vm7723, %v7626, %v7628
  %v7771 = vsel %vm7723, %v7628, %v7630
  %v7772 = vsel %vm7723, %v7630, %v7632
  %v7773 = vsel %vm7723, %v7632, %v7634
  %v7774 = vsel %vm7723, %v7634, %v7636
  %v7775 = vsel %vm7723, %v7636, %v7638
  %v7776 = vsel %vm7723, %v7638, %v7640
  %v7777 = vsel %vm7723, %v7640, %v7642
  %v7778 = vsel %vm7723, %v7642, %v7644
  %v7779 = vsel %vm7723, %v7644, %v7646
  %v7780 = vsel %vm7723, %v7646, %v7648
  %v7781 = vsel %vm7723, %v7648, %v7650
  %v7782 = vsel %vm7723, %v7650, %v7652
  %v7783 = vsel %vm7723, %v7652, %v7654
  %v7784 = vsel %vm7723, %v7654, %v7656
  %v7785 = vsel %vm7723, %v7656, %v7658
  %v7786 = vsel %vm7723, %v7660, %v7662
  %v7787 = vsel %vm7723, %v7662, %v7664
  %v7788 = vsel %vm7723, %v7664, %v7666
  %v7789 = vsel %vm7723, %v7666, %v7668
  %v7790 = vsel %vm7723, %v7668, %v7670
  %v7791 = vsel %vm7723, %v7670, %v7672
  %v7792 = vsel %vm7723, %v7672, %v7674
  %v7793 = vsel %vm7723, %v7674, %v7676
  %v7794 = vsel %vm7723, %v7676, %v7678
  %v7795 = vsel %vm7723, %v7678, %v7680
  %v7796 = vsel %vm7723, %v7680, %v7682
  %v7797 = vsel %vm7723, %v7682, %v7684
  %v7798 = vsel %vm7723, %v7684, %v7686
  %v7799 = vsel %vm7723, %v7686, %v7688
  %v7800 = vsel %vm7723, %v7688, %v7690
  %v7801 = vsel %vm7723, %v7690, %v7692
  %v7802 = vsel %vm7723, %v7692, %v7694
  %v7803 = vsel %vm7723, %v7694, %v7696
  %v7804 = vsel %vm7723, %v7696, %v7698
  %v7805 = vsel %vm7723, %v7698, %v7700
  %v7806 = vsel %vm7723, %v7700, %v7702
  %v7807 = vsel %vm7723, %v7702, %v7704
  %v7808 = vsel %vm7723, %v7704, %v7706
  %v7809 = vsel %vm7723, %v7706, %v7708
  %v7810 = vsel %vm7723, %v7708, %v7710
  %v7811 = vsel %vm7723, %v7710, %v7712
  %v7812 = vsel %vm7723, %v7712, %v7714
  %v7813 = vsel %vm7723, %v7714, %v7716
  %v7814 = vsel %vm7723, %v7716, %v7718
  %v7815 = vsel %vm7723, %v7718, %v7720
  %v7816 = vsel %vm7723, %v7720, %v7722
  %v7916 = vsel %vm7723, %v7594, %v7532
  %v7917 = vsel %vm7723, %v7658, %v7596
  %v7918 = vsel %vm7723, %v7722, %v7660
  %7919 = vrot.lane.b32.xlu0 %v5402, 95
  %v7920 = vpop.permute.xlu0 %7919
  %7921 = vrot.lane.b32.xlu0 %v5403, 95
  %v7922 = vpop.permute.xlu0 %7921
  %7923 = vrot.lane.b32.xlu0 %v5404, 95
  %v7924 = vpop.permute.xlu0 %7923
  %7925 = vrot.lane.b32.xlu0 %v5405, 95
  %v7926 = vpop.permute.xlu0 %7925
  %7927 = vrot.lane.b32.xlu0 %v5406, 95
  %v7928 = vpop.permute.xlu0 %7927
  %7929 = vrot.lane.b32.xlu0 %v5407, 95
  %v7930 = vpop.permute.xlu0 %7929
  %7931 = vrot.lane.b32.xlu0 %v5408, 95
  %v7932 = vpop.permute.xlu0 %7931
  %7933 = vrot.lane.b32.xlu0 %v5409, 95
  %v7934 = vpop.permute.xlu0 %7933
  %7935 = vrot.lane.b32.xlu0 %v5410, 95
  %v7936 = vpop.permute.xlu0 %7935
  %7937 = vrot.lane.b32.xlu0 %v5411, 95
  %v7938 = vpop.permute.xlu0 %7937
  %7939 = vrot.lane.b32.xlu0 %v5412, 95
  %v7940 = vpop.permute.xlu0 %7939
  %7941 = vrot.lane.b32.xlu0 %v5413, 95
  %v7942 = vpop.permute.xlu0 %7941
  %7943 = vrot.lane.b32.xlu0 %v5414, 95
  %v7944 = vpop.permute.xlu0 %7943
  %7945 = vrot.lane.b32.xlu0 %v5415, 95
  %v7946 = vpop.permute.xlu0 %7945
  %7947 = vrot.lane.b32.xlu0 %v5416, 95
  %v7948 = vpop.permute.xlu0 %7947
  %7949 = vrot.lane.b32.xlu0 %v5417, 95
  %v7950 = vpop.permute.xlu0 %7949
  %7951 = vrot.lane.b32.xlu0 %v5418, 95
  %v7952 = vpop.permute.xlu0 %7951
  %7953 = vrot.lane.b32.xlu0 %v5419, 95
  %v7954 = vpop.permute.xlu0 %7953
  %7955 = vrot.lane.b32.xlu0 %v5420, 95
  %v7956 = vpop.permute.xlu0 %7955
  %7957 = vrot.lane.b32.xlu0 %v5421, 95
  %v7958 = vpop.permute.xlu0 %7957
  %7959 = vrot.lane.b32.xlu0 %v5422, 95
  %v7960 = vpop.permute.xlu0 %7959
  %7961 = vrot.lane.b32.xlu0 %v5423, 95
  %v7962 = vpop.permute.xlu0 %7961
  %7963 = vrot.lane.b32.xlu0 %v5424, 95
  %v7964 = vpop.permute.xlu0 %7963
  %7965 = vrot.lane.b32.xlu0 %v5425, 95
  %v7966 = vpop.permute.xlu0 %7965
  %7967 = vrot.lane.b32.xlu0 %v5426, 95
  %v7968 = vpop.permute.xlu0 %7967
  %7969 = vrot.lane.b32.xlu0 %v5427, 95
  %v7970 = vpop.permute.xlu0 %7969
  %7971 = vrot.lane.b32.xlu0 %v5428, 95
  %v7972 = vpop.permute.xlu0 %7971
  %7973 = vrot.lane.b32.xlu0 %v5429, 95
  %v7974 = vpop.permute.xlu0 %7973
  %7975 = vrot.lane.b32.xlu0 %v5430, 95
  %v7976 = vpop.permute.xlu0 %7975
  %7977 = vrot.lane.b32.xlu0 %v5431, 95
  %v7978 = vpop.permute.xlu0 %7977
  %7979 = vrot.lane.b32.xlu0 %v5432, 95
  %v7980 = vpop.permute.xlu0 %7979
  %7981 = vrot.lane.b32.xlu0 %v5433, 95
  %v7982 = vpop.permute.xlu0 %7981
  %7983 = vrot.lane.b32.xlu0 %v5434, 95
  %v7984 = vpop.permute.xlu0 %7983
  %7985 = vrot.lane.b32.xlu0 %v5435, 95
  %v7986 = vpop.permute.xlu0 %7985
  %7987 = vrot.lane.b32.xlu0 %v5436, 95
  %v7988 = vpop.permute.xlu0 %7987
  %7989 = vrot.lane.b32.xlu0 %v5437, 95
  %v7990 = vpop.permute.xlu0 %7989
  %7991 = vrot.lane.b32.xlu0 %v5438, 95
  %v7992 = vpop.permute.xlu0 %7991
  %7993 = vrot.lane.b32.xlu0 %v5439, 95
  %v7994 = vpop.permute.xlu0 %7993
  %7995 = vrot.lane.b32.xlu0 %v5440, 95
  %v7996 = vpop.permute.xlu0 %7995
  %7997 = vrot.lane.b32.xlu0 %v5441, 95
  %v7998 = vpop.permute.xlu0 %7997
  %7999 = vrot.lane.b32.xlu0 %v5442, 95
  %v8000 = vpop.permute.xlu0 %7999
  %8001 = vrot.lane.b32.xlu0 %v5443, 95
  %v8002 = vpop.permute.xlu0 %8001
  %8003 = vrot.lane.b32.xlu0 %v5444, 95
  %v8004 = vpop.permute.xlu0 %8003
  %8005 = vrot.lane.b32.xlu0 %v5445, 95
  %v8006 = vpop.permute.xlu0 %8005
  %8007 = vrot.lane.b32.xlu0 %v5446, 95
  %v8008 = vpop.permute.xlu0 %8007
  %8009 = vrot.lane.b32.xlu0 %v5447, 95
  %v8010 = vpop.permute.xlu0 %8009
  %8011 = vrot.lane.b32.xlu0 %v5448, 95
  %v8012 = vpop.permute.xlu0 %8011
  %8013 = vrot.lane.b32.xlu0 %v5449, 95
  %v8014 = vpop.permute.xlu0 %8013
  %8015 = vrot.lane.b32.xlu0 %v5450, 95
  %v8016 = vpop.permute.xlu0 %8015
  %8017 = vrot.lane.b32.xlu0 %v5451, 95
  %v8018 = vpop.permute.xlu0 %8017
  %8019 = vrot.lane.b32.xlu0 %v5452, 95
  %v8020 = vpop.permute.xlu0 %8019
  %8021 = vrot.lane.b32.xlu0 %v5453, 95
  %v8022 = vpop.permute.xlu0 %8021
  %8023 = vrot.lane.b32.xlu0 %v5454, 95
  %v8024 = vpop.permute.xlu0 %8023
  %8025 = vrot.lane.b32.xlu0 %v5455, 95
  %v8026 = vpop.permute.xlu0 %8025
  %8027 = vrot.lane.b32.xlu0 %v5456, 95
  %v8028 = vpop.permute.xlu0 %8027
  %8029 = vrot.lane.b32.xlu0 %v5457, 95
  %v8030 = vpop.permute.xlu0 %8029
  %8031 = vrot.lane.b32.xlu0 %v5458, 95
  %v8032 = vpop.permute.xlu0 %8031
  %8033 = vrot.lane.b32.xlu0 %v5459, 95
  %v8034 = vpop.permute.xlu0 %8033
  %8035 = vrot.lane.b32.xlu0 %v5460, 95
  %v8036 = vpop.permute.xlu0 %8035
  %8037 = vrot.lane.b32.xlu0 %v5461, 95
  %v8038 = vpop.permute.xlu0 %8037
  %8039 = vrot.lane.b32.xlu0 %v5462, 95
  %v8040 = vpop.permute.xlu0 %8039
  %8041 = vrot.lane.b32.xlu0 %v5463, 95
  %v8042 = vpop.permute.xlu0 %8041
  %8043 = vrot.lane.b32.xlu0 %v5464, 95
  %v8044 = vpop.permute.xlu0 %8043
  %8045 = vrot.lane.b32.xlu0 %v5465, 95
  %v8046 = vpop.permute.xlu0 %8045
  %8047 = vrot.lane.b32.xlu0 %v5466, 95
  %v8048 = vpop.permute.xlu0 %8047
  %8049 = vrot.lane.b32.xlu0 %v5467, 95
  %v8050 = vpop.permute.xlu0 %8049
  %8051 = vrot.lane.b32.xlu0 %v5468, 95
  %v8052 = vpop.permute.xlu0 %8051
  %8053 = vrot.lane.b32.xlu0 %v5469, 95
  %v8054 = vpop.permute.xlu0 %8053
  %8055 = vrot.lane.b32.xlu0 %v5470, 95
  %v8056 = vpop.permute.xlu0 %8055
  %8057 = vrot.lane.b32.xlu0 %v5471, 95
  %v8058 = vpop.permute.xlu0 %8057
  %8059 = vrot.lane.b32.xlu0 %v5472, 95
  %v8060 = vpop.permute.xlu0 %8059
  %8061 = vrot.lane.b32.xlu0 %v5473, 95
  %v8062 = vpop.permute.xlu0 %8061
  %8063 = vrot.lane.b32.xlu0 %v5474, 95
  %v8064 = vpop.permute.xlu0 %8063
  %8065 = vrot.lane.b32.xlu0 %v5475, 95
  %v8066 = vpop.permute.xlu0 %8065
  %8067 = vrot.lane.b32.xlu0 %v5476, 95
  %v8068 = vpop.permute.xlu0 %8067
  %8069 = vrot.lane.b32.xlu0 %v5477, 95
  %v8070 = vpop.permute.xlu0 %8069
  %8071 = vrot.lane.b32.xlu0 %v5478, 95
  %v8072 = vpop.permute.xlu0 %8071
  %8073 = vrot.lane.b32.xlu0 %v5479, 95
  %v8074 = vpop.permute.xlu0 %8073
  %8075 = vrot.lane.b32.xlu0 %v5480, 95
  %v8076 = vpop.permute.xlu0 %8075
  %8077 = vrot.lane.b32.xlu0 %v5481, 95
  %v8078 = vpop.permute.xlu0 %8077
  %8079 = vrot.lane.b32.xlu0 %v5482, 95
  %v8080 = vpop.permute.xlu0 %8079
  %8081 = vrot.lane.b32.xlu0 %v5483, 95
  %v8082 = vpop.permute.xlu0 %8081
  %8083 = vrot.lane.b32.xlu0 %v5484, 95
  %v8084 = vpop.permute.xlu0 %8083
  %8085 = vrot.lane.b32.xlu0 %v5485, 95
  %v8086 = vpop.permute.xlu0 %8085
  %8087 = vrot.lane.b32.xlu0 %v5486, 95
  %v8088 = vpop.permute.xlu0 %8087
  %8089 = vrot.lane.b32.xlu0 %v5487, 95
  %v8090 = vpop.permute.xlu0 %8089
  %8091 = vrot.lane.b32.xlu0 %v5488, 95
  %v8092 = vpop.permute.xlu0 %8091
  %8093 = vrot.lane.b32.xlu0 %v5489, 95
  %v8094 = vpop.permute.xlu0 %8093
  %8095 = vrot.lane.b32.xlu0 %v5490, 95
  %v8096 = vpop.permute.xlu0 %8095
  %8097 = vrot.lane.b32.xlu0 %v5491, 95
  %v8098 = vpop.permute.xlu0 %8097
  %8099 = vrot.lane.b32.xlu0 %v5492, 95
  %v8100 = vpop.permute.xlu0 %8099
  %8101 = vrot.lane.b32.xlu0 %v5493, 95
  %v8102 = vpop.permute.xlu0 %8101
  %8103 = vrot.lane.b32.xlu0 %v5494, 95
  %v8104 = vpop.permute.xlu0 %8103
  %8105 = vrot.lane.b32.xlu0 %v5495, 95
  %v8106 = vpop.permute.xlu0 %8105
  %8107 = vrot.lane.b32.xlu0 %v5496, 95
  %v8108 = vpop.permute.xlu0 %8107
  %8109 = vrot.lane.b32.xlu0 %v5497, 95
  %v8110 = vpop.permute.xlu0 %8109
  %vm8111 = vcmask 777216
  %v8112 = vsel %vm8111, %v7920, %v7922
  %v8113 = vsel %vm8111, %v7922, %v7924
  %v8114 = vsel %vm8111, %v7924, %v7926
  %v8115 = vsel %vm8111, %v7926, %v7928
  %v8116 = vsel %vm8111, %v7928, %v7930
  %v8117 = vsel %vm8111, %v7930, %v7932
  %v8118 = vsel %vm8111, %v7932, %v7934
  %v8119 = vsel %vm8111, %v7934, %v7936
  %v8120 = vsel %vm8111, %v7936, %v7938
  %v8121 = vsel %vm8111, %v7938, %v7940
  %v8122 = vsel %vm8111, %v7940, %v7942
  %v8123 = vsel %vm8111, %v7942, %v7944
  %v8124 = vsel %vm8111, %v7944, %v7946
  %v8125 = vsel %vm8111, %v7946, %v7948
  %v8126 = vsel %vm8111, %v7948, %v7950
  %v8127 = vsel %vm8111, %v7950, %v7952
  %v8128 = vsel %vm8111, %v7952, %v7954
  %v8129 = vsel %vm8111, %v7954, %v7956
  %v8130 = vsel %vm8111, %v7956, %v7958
  %v8131 = vsel %vm8111, %v7958, %v7960
  %v8132 = vsel %vm8111, %v7960, %v7962
  %v8133 = vsel %vm8111, %v7962, %v7964
  %v8134 = vsel %vm8111, %v7964, %v7966
  %v8135 = vsel %vm8111, %v7966, %v7968
  %v8136 = vsel %vm8111, %v7968, %v7970
  %v8137 = vsel %vm8111, %v7970, %v7972
  %v8138 = vsel %vm8111, %v7972, %v7974
  %v8139 = vsel %vm8111, %v7974, %v7976
  %v8140 = vsel %vm8111, %v7976, %v7978
  %v8141 = vsel %vm8111, %v7978, %v7980
  %v8142 = vsel %vm8111, %v7980, %v7982
  %v8143 = vsel %vm8111, %v7984, %v7986
  %v8144 = vsel %vm8111, %v7986, %v7988
  %v8145 = vsel %vm8111, %v7988, %v7990
  %v8146 = vsel %vm8111, %v7990, %v7992
  %v8147 = vsel %vm8111, %v7992, %v7994
  %v8148 = vsel %vm8111, %v7994, %v7996
  %v8149 = vsel %vm8111, %v7996, %v7998
  %v8150 = vsel %vm8111, %v7998, %v8000
  %v8151 = vsel %vm8111, %v8000, %v8002
  %v8152 = vsel %vm8111, %v8002, %v8004
  %v8153 = vsel %vm8111, %v8004, %v8006
  %v8154 = vsel %vm8111, %v8006, %v8008
  %v8155 = vsel %vm8111, %v8008, %v8010
  %v8156 = vsel %vm8111, %v8010, %v8012
  %v8157 = vsel %vm8111, %v8012, %v8014
  %v8158 = vsel %vm8111, %v8014, %v8016
  %v8159 = vsel %vm8111, %v8016, %v8018
  %v8160 = vsel %vm8111, %v8018, %v8020
  %v8161 = vsel %vm8111, %v8020, %v8022
  %v8162 = vsel %vm8111, %v8022, %v8024
  %v8163 = vsel %vm8111, %v8024, %v8026
  %v8164 = vsel %vm8111, %v8026, %v8028
  %v8165 = vsel %vm8111, %v8028, %v8030
  %v8166 = vsel %vm8111, %v8030, %v8032
  %v8167 = vsel %vm8111, %v8032, %v8034
  %v8168 = vsel %vm8111, %v8034, %v8036
  %v8169 = vsel %vm8111, %v8036, %v8038
  %v8170 = vsel %vm8111, %v8038, %v8040
  %v8171 = vsel %vm8111, %v8040, %v8042
  %v8172 = vsel %vm8111, %v8042, %v8044
  %v8173 = vsel %vm8111, %v8044, %v8046
  %v8174 = vsel %vm8111, %v8048, %v8050
  %v8175 = vsel %vm8111, %v8050, %v8052
  %v8176 = vsel %vm8111, %v8052, %v8054
  %v8177 = vsel %vm8111, %v8054, %v8056
  %v8178 = vsel %vm8111, %v8056, %v8058
  %v8179 = vsel %vm8111, %v8058, %v8060
  %v8180 = vsel %vm8111, %v8060, %v8062
  %v8181 = vsel %vm8111, %v8062, %v8064
  %v8182 = vsel %vm8111, %v8064, %v8066
  %v8183 = vsel %vm8111, %v8066, %v8068
  %v8184 = vsel %vm8111, %v8068, %v8070
  %v8185 = vsel %vm8111, %v8070, %v8072
  %v8186 = vsel %vm8111, %v8072, %v8074
  %v8187 = vsel %vm8111, %v8074, %v8076
  %v8188 = vsel %vm8111, %v8076, %v8078
  %v8189 = vsel %vm8111, %v8078, %v8080
  %v8190 = vsel %vm8111, %v8080, %v8082
  %v8191 = vsel %vm8111, %v8082, %v8084
  %v8192 = vsel %vm8111, %v8084, %v8086
  %v8193 = vsel %vm8111, %v8086, %v8088
  %v8194 = vsel %vm8111, %v8088, %v8090
  %v8195 = vsel %vm8111, %v8090, %v8092
  %v8196 = vsel %vm8111, %v8092, %v8094
  %v8197 = vsel %vm8111, %v8094, %v8096
  %v8198 = vsel %vm8111, %v8096, %v8098
  %v8199 = vsel %vm8111, %v8098, %v8100
  %v8200 = vsel %vm8111, %v8100, %v8102
  %v8201 = vsel %vm8111, %v8102, %v8104
  %v8202 = vsel %vm8111, %v8104, %v8106
  %v8203 = vsel %vm8111, %v8106, %v8108
  %v8204 = vsel %vm8111, %v8108, %v8110
  %v8304 = vsel %vm8111, %v7982, %v7920
  %v8305 = vsel %vm8111, %v8046, %v7984
  %v8306 = vsel %vm8111, %v8110, %v8048
  %8307 = vrot.lane.b32.xlu0 %v5402, 94
  %v8308 = vpop.permute.xlu0 %8307
  %8309 = vrot.lane.b32.xlu0 %v5403, 94
  %v8310 = vpop.permute.xlu0 %8309
  %8311 = vrot.lane.b32.xlu0 %v5404, 94
  %v8312 = vpop.permute.xlu0 %8311
  %8313 = vrot.lane.b32.xlu0 %v5405, 94
  %v8314 = vpop.permute.xlu0 %8313
  %8315 = vrot.lane.b32.xlu0 %v5406, 94
  %v8316 = vpop.permute.xlu0 %8315
  %8317 = vrot.lane.b32.xlu0 %v5407, 94
  %v8318 = vpop.permute.xlu0 %8317
  %8319 = vrot.lane.b32.xlu0 %v5408, 94
  %v8320 = vpop.permute.xlu0 %8319
  %8321 = vrot.lane.b32.xlu0 %v5409, 94
  %v8322 = vpop.permute.xlu0 %8321
  %8323 = vrot.lane.b32.xlu0 %v5410, 94
  %v8324 = vpop.permute.xlu0 %8323
  %8325 = vrot.lane.b32.xlu0 %v5411, 94
  %v8326 = vpop.permute.xlu0 %8325
  %8327 = vrot.lane.b32.xlu0 %v5412, 94
  %v8328 = vpop.permute.xlu0 %8327
  %8329 = vrot.lane.b32.xlu0 %v5413, 94
  %v8330 = vpop.permute.xlu0 %8329
  %8331 = vrot.lane.b32.xlu0 %v5414, 94
  %v8332 = vpop.permute.xlu0 %8331
  %8333 = vrot.lane.b32.xlu0 %v5415, 94
  %v8334 = vpop.permute.xlu0 %8333
  %8335 = vrot.lane.b32.xlu0 %v5416, 94
  %v8336 = vpop.permute.xlu0 %8335
  %8337 = vrot.lane.b32.xlu0 %v5417, 94
  %v8338 = vpop.permute.xlu0 %8337
  %8339 = vrot.lane.b32.xlu0 %v5418, 94
  %v8340 = vpop.permute.xlu0 %8339
  %8341 = vrot.lane.b32.xlu0 %v5419, 94
  %v8342 = vpop.permute.xlu0 %8341
  %8343 = vrot.lane.b32.xlu0 %v5420, 94
  %v8344 = vpop.permute.xlu0 %8343
  %8345 = vrot.lane.b32.xlu0 %v5421, 94
  %v8346 = vpop.permute.xlu0 %8345
  %8347 = vrot.lane.b32.xlu0 %v5422, 94
  %v8348 = vpop.permute.xlu0 %8347
  %8349 = vrot.lane.b32.xlu0 %v5423, 94
  %v8350 = vpop.permute.xlu0 %8349
  %8351 = vrot.lane.b32.xlu0 %v5424, 94
  %v8352 = vpop.permute.xlu0 %8351
  %8353 = vrot.lane.b32.xlu0 %v5425, 94
  %v8354 = vpop.permute.xlu0 %8353
  %8355 = vrot.lane.b32.xlu0 %v5426, 94
  %v8356 = vpop.permute.xlu0 %8355
  %8357 = vrot.lane.b32.xlu0 %v5427, 94
  %v8358 = vpop.permute.xlu0 %8357
  %8359 = vrot.lane.b32.xlu0 %v5428, 94
  %v8360 = vpop.permute.xlu0 %8359
  %8361 = vrot.lane.b32.xlu0 %v5429, 94
  %v8362 = vpop.permute.xlu0 %8361
  %8363 = vrot.lane.b32.xlu0 %v5430, 94
  %v8364 = vpop.permute.xlu0 %8363
  %8365 = vrot.lane.b32.xlu0 %v5431, 94
  %v8366 = vpop.permute.xlu0 %8365
  %8367 = vrot.lane.b32.xlu0 %v5432, 94
  %v8368 = vpop.permute.xlu0 %8367
  %8369 = vrot.lane.b32.xlu0 %v5433, 94
  %v8370 = vpop.permute.xlu0 %8369
  %8371 = vrot.lane.b32.xlu0 %v5434, 94
  %v8372 = vpop.permute.xlu0 %8371
  %8373 = vrot.lane.b32.xlu0 %v5435, 94
  %v8374 = vpop.permute.xlu0 %8373
  %8375 = vrot.lane.b32.xlu0 %v5436, 94
  %v8376 = vpop.permute.xlu0 %8375
  %8377 = vrot.lane.b32.xlu0 %v5437, 94
  %v8378 = vpop.permute.xlu0 %8377
  %8379 = vrot.lane.b32.xlu0 %v5438, 94
  %v8380 = vpop.permute.xlu0 %8379
  %8381 = vrot.lane.b32.xlu0 %v5439, 94
  %v8382 = vpop.permute.xlu0 %8381
  %8383 = vrot.lane.b32.xlu0 %v5440, 94
  %v8384 = vpop.permute.xlu0 %8383
  %8385 = vrot.lane.b32.xlu0 %v5441, 94
  %v8386 = vpop.permute.xlu0 %8385
  %8387 = vrot.lane.b32.xlu0 %v5442, 94
  %v8388 = vpop.permute.xlu0 %8387
  %8389 = vrot.lane.b32.xlu0 %v5443, 94
  %v8390 = vpop.permute.xlu0 %8389
  %8391 = vrot.lane.b32.xlu0 %v5444, 94
  %v8392 = vpop.permute.xlu0 %8391
  %8393 = vrot.lane.b32.xlu0 %v5445, 94
  %v8394 = vpop.permute.xlu0 %8393
  %8395 = vrot.lane.b32.xlu0 %v5446, 94
  %v8396 = vpop.permute.xlu0 %8395
  %8397 = vrot.lane.b32.xlu0 %v5447, 94
  %v8398 = vpop.permute.xlu0 %8397
  %8399 = vrot.lane.b32.xlu0 %v5448, 94
  %v8400 = vpop.permute.xlu0 %8399
  %8401 = vrot.lane.b32.xlu0 %v5449, 94
  %v8402 = vpop.permute.xlu0 %8401
  %8403 = vrot.lane.b32.xlu0 %v5450, 94
  %v8404 = vpop.permute.xlu0 %8403
  %8405 = vrot.lane.b32.xlu0 %v5451, 94
  %v8406 = vpop.permute.xlu0 %8405
  %8407 = vrot.lane.b32.xlu0 %v5452, 94
  %v8408 = vpop.permute.xlu0 %8407
  %8409 = vrot.lane.b32.xlu0 %v5453, 94
  %v8410 = vpop.permute.xlu0 %8409
  %8411 = vrot.lane.b32.xlu0 %v5454, 94
  %v8412 = vpop.permute.xlu0 %8411
  %8413 = vrot.lane.b32.xlu0 %v5455, 94
  %v8414 = vpop.permute.xlu0 %8413
  %8415 = vrot.lane.b32.xlu0 %v5456, 94
  %v8416 = vpop.permute.xlu0 %8415
  %8417 = vrot.lane.b32.xlu0 %v5457, 94
  %v8418 = vpop.permute.xlu0 %8417
  %8419 = vrot.lane.b32.xlu0 %v5458, 94
  %v8420 = vpop.permute.xlu0 %8419
  %8421 = vrot.lane.b32.xlu0 %v5459, 94
  %v8422 = vpop.permute.xlu0 %8421
  %8423 = vrot.lane.b32.xlu0 %v5460, 94
  %v8424 = vpop.permute.xlu0 %8423
  %8425 = vrot.lane.b32.xlu0 %v5461, 94
  %v8426 = vpop.permute.xlu0 %8425
  %8427 = vrot.lane.b32.xlu0 %v5462, 94
  %v8428 = vpop.permute.xlu0 %8427
  %8429 = vrot.lane.b32.xlu0 %v5463, 94
  %v8430 = vpop.permute.xlu0 %8429
  %8431 = vrot.lane.b32.xlu0 %v5464, 94
  %v8432 = vpop.permute.xlu0 %8431
  %8433 = vrot.lane.b32.xlu0 %v5465, 94
  %v8434 = vpop.permute.xlu0 %8433
  %8435 = vrot.lane.b32.xlu0 %v5466, 94
  %v8436 = vpop.permute.xlu0 %8435
  %8437 = vrot.lane.b32.xlu0 %v5467, 94
  %v8438 = vpop.permute.xlu0 %8437
  %8439 = vrot.lane.b32.xlu0 %v5468, 94
  %v8440 = vpop.permute.xlu0 %8439
  %8441 = vrot.lane.b32.xlu0 %v5469, 94
  %v8442 = vpop.permute.xlu0 %8441
  %8443 = vrot.lane.b32.xlu0 %v5470, 94
  %v8444 = vpop.permute.xlu0 %8443
  %8445 = vrot.lane.b32.xlu0 %v5471, 94
  %v8446 = vpop.permute.xlu0 %8445
  %8447 = vrot.lane.b32.xlu0 %v5472, 94
  %v8448 = vpop.permute.xlu0 %8447
  %8449 = vrot.lane.b32.xlu0 %v5473, 94
  %v8450 = vpop.permute.xlu0 %8449
  %8451 = vrot.lane.b32.xlu0 %v5474, 94
  %v8452 = vpop.permute.xlu0 %8451
  %8453 = vrot.lane.b32.xlu0 %v5475, 94
  %v8454 = vpop.permute.xlu0 %8453
  %8455 = vrot.lane.b32.xlu0 %v5476, 94
  %v8456 = vpop.permute.xlu0 %8455
  %8457 = vrot.lane.b32.xlu0 %v5477, 94
  %v8458 = vpop.permute.xlu0 %8457
  %8459 = vrot.lane.b32.xlu0 %v5478, 94
  %v8460 = vpop.permute.xlu0 %8459
  %8461 = vrot.lane.b32.xlu0 %v5479, 94
  %v8462 = vpop.permute.xlu0 %8461
  %8463 = vrot.lane.b32.xlu0 %v5480, 94
  %v8464 = vpop.permute.xlu0 %8463
  %8465 = vrot.lane.b32.xlu0 %v5481, 94
  %v8466 = vpop.permute.xlu0 %8465
  %8467 = vrot.lane.b32.xlu0 %v5482, 94
  %v8468 = vpop.permute.xlu0 %8467
  %8469 = vrot.lane.b32.xlu0 %v5483, 94
  %v8470 = vpop.permute.xlu0 %8469
  %8471 = vrot.lane.b32.xlu0 %v5484, 94
  %v8472 = vpop.permute.xlu0 %8471
  %8473 = vrot.lane.b32.xlu0 %v5485, 94
  %v8474 = vpop.permute.xlu0 %8473
  %8475 = vrot.lane.b32.xlu0 %v5486, 94
  %v8476 = vpop.permute.xlu0 %8475
  %8477 = vrot.lane.b32.xlu0 %v5487, 94
  %v8478 = vpop.permute.xlu0 %8477
  %8479 = vrot.lane.b32.xlu0 %v5488, 94
  %v8480 = vpop.permute.xlu0 %8479
  %8481 = vrot.lane.b32.xlu0 %v5489, 94
  %v8482 = vpop.permute.xlu0 %8481
  %8483 = vrot.lane.b32.xlu0 %v5490, 94
  %v8484 = vpop.permute.xlu0 %8483
  %8485 = vrot.lane.b32.xlu0 %v5491, 94
  %v8486 = vpop.permute.xlu0 %8485
  %8487 = vrot.lane.b32.xlu0 %v5492, 94
  %v8488 = vpop.permute.xlu0 %8487
  %8489 = vrot.lane.b32.xlu0 %v5493, 94
  %v8490 = vpop.permute.xlu0 %8489
  %8491 = vrot.lane.b32.xlu0 %v5494, 94
  %v8492 = vpop.permute.xlu0 %8491
  %8493 = vrot.lane.b32.xlu0 %v5495, 94
  %v8494 = vpop.permute.xlu0 %8493
  %8495 = vrot.lane.b32.xlu0 %v5496, 94
  %v8496 = vpop.permute.xlu0 %8495
  %8497 = vrot.lane.b32.xlu0 %v5497, 94
  %v8498 = vpop.permute.xlu0 %8497
  %vm8499 = vcmask 769024
  %v8500 = vsel %vm8499, %v8308, %v8310
  %v8501 = vsel %vm8499, %v8310, %v8312
  %v8502 = vsel %vm8499, %v8312, %v8314
  %v8503 = vsel %vm8499, %v8314, %v8316
  %v8504 = vsel %vm8499, %v8316, %v8318
  %v8505 = vsel %vm8499, %v8318, %v8320
  %v8506 = vsel %vm8499, %v8320, %v8322
  %v8507 = vsel %vm8499, %v8322, %v8324
  %v8508 = vsel %vm8499, %v8324, %v8326
  %v8509 = vsel %vm8499, %v8326, %v8328
  %v8510 = vsel %vm8499, %v8328, %v8330
  %v8511 = vsel %vm8499, %v8330, %v8332
  %v8512 = vsel %vm8499, %v8332, %v8334
  %v8513 = vsel %vm8499, %v8334, %v8336
  %v8514 = vsel %vm8499, %v8336, %v8338
  %v8515 = vsel %vm8499, %v8338, %v8340
  %v8516 = vsel %vm8499, %v8340, %v8342
  %v8517 = vsel %vm8499, %v8342, %v8344
  %v8518 = vsel %vm8499, %v8344, %v8346
  %v8519 = vsel %vm8499, %v8346, %v8348
  %v8520 = vsel %vm8499, %v8348, %v8350
  %v8521 = vsel %vm8499, %v8350, %v8352
  %v8522 = vsel %vm8499, %v8352, %v8354
  %v8523 = vsel %vm8499, %v8354, %v8356
  %v8524 = vsel %vm8499, %v8356, %v8358
  %v8525 = vsel %vm8499, %v8358, %v8360
  %v8526 = vsel %vm8499, %v8360, %v8362
  %v8527 = vsel %vm8499, %v8362, %v8364
  %v8528 = vsel %vm8499, %v8364, %v8366
  %v8529 = vsel %vm8499, %v8366, %v8368
  %v8530 = vsel %vm8499, %v8368, %v8370
  %v8531 = vsel %vm8499, %v8372, %v8374
  %v8532 = vsel %vm8499, %v8374, %v8376
  %v8533 = vsel %vm8499, %v8376, %v8378
  %v8534 = vsel %vm8499, %v8378, %v8380
  %v8535 = vsel %vm8499, %v8380, %v8382
  %v8536 = vsel %vm8499, %v8382, %v8384
  %v8537 = vsel %vm8499, %v8384, %v8386
  %v8538 = vsel %vm8499, %v8386, %v8388
  %v8539 = vsel %vm8499, %v8388, %v8390
  %v8540 = vsel %vm8499, %v8390, %v8392
  %v8541 = vsel %vm8499, %v8392, %v8394
  %v8542 = vsel %vm8499, %v8394, %v8396
  %v8543 = vsel %vm8499, %v8396, %v8398
  %v8544 = vsel %vm8499, %v8398, %v8400
  %v8545 = vsel %vm8499, %v8400, %v8402
  %v8546 = vsel %vm8499, %v8402, %v8404
  %v8547 = vsel %vm8499, %v8404, %v8406
  %v8548 = vsel %vm8499, %v8406, %v8408
  %v8549 = vsel %vm8499, %v8408, %v8410
  %v8550 = vsel %vm8499, %v8410, %v8412
  %v8551 = vsel %vm8499, %v8412, %v8414
  %v8552 = vsel %vm8499, %v8414, %v8416
  %v8553 = vsel %vm8499, %v8416, %v8418
  %v8554 = vsel %vm8499, %v8418, %v8420
  %v8555 = vsel %vm8499, %v8420, %v8422
  %v8556 = vsel %vm8499, %v8422, %v8424
  %v8557 = vsel %vm8499, %v8424, %v8426
  %v8558 = vsel %vm8499, %v8426, %v8428
  %v8559 = vsel %vm8499, %v8428, %v8430
  %v8560 = vsel %vm8499, %v8430, %v8432
  %v8561 = vsel %vm8499, %v8432, %v8434
  %v8562 = vsel %vm8499, %v8436, %v8438
  %v8563 = vsel %vm8499, %v8438, %v8440
  %v8564 = vsel %vm8499, %v8440, %v8442
  %v8565 = vsel %vm8499, %v8442, %v8444
  %v8566 = vsel %vm8499, %v8444, %v8446
  %v8567 = vsel %vm8499, %v8446, %v8448
  %v8568 = vsel %vm8499, %v8448, %v8450
  %v8569 = vsel %vm8499, %v8450, %v8452
  %v8570 = vsel %vm8499, %v8452, %v8454
  %v8571 = vsel %vm8499, %v8454, %v8456
  %v8572 = vsel %vm8499, %v8456, %v8458
  %v8573 = vsel %vm8499, %v8458, %v8460
  %v8574 = vsel %vm8499, %v8460, %v8462
  %v8575 = vsel %vm8499, %v8462, %v8464
  %v8576 = vsel %vm8499, %v8464, %v8466
  %v8577 = vsel %vm8499, %v8466, %v8468
  %v8578 = vsel %vm8499, %v8468, %v8470
  %v8579 = vsel %vm8499, %v8470, %v8472
  %v8580 = vsel %vm8499, %v8472, %v8474
  %v8581 = vsel %vm8499, %v8474, %v8476
  %v8582 = vsel %vm8499, %v8476, %v8478
  %v8583 = vsel %vm8499, %v8478, %v8480
  %v8584 = vsel %vm8499, %v8480, %v8482
  %v8585 = vsel %vm8499, %v8482, %v8484
  %v8586 = vsel %vm8499, %v8484, %v8486
  %v8587 = vsel %vm8499, %v8486, %v8488
  %v8588 = vsel %vm8499, %v8488, %v8490
  %v8589 = vsel %vm8499, %v8490, %v8492
  %v8590 = vsel %vm8499, %v8492, %v8494
  %v8591 = vsel %vm8499, %v8494, %v8496
  %v8592 = vsel %vm8499, %v8496, %v8498
  %v8692 = vsel %vm8499, %v8370, %v8308
  %v8693 = vsel %vm8499, %v8434, %v8372
  %v8694 = vsel %vm8499, %v8498, %v8436
  %v8695 = vld [vmem:[%s3] sm:$0xff]
  %v8696 = vld [vmem:[%s3 + $0x8] sm:$0xff]
  %v8697 = vld [vmem:[%s3 + $0x10] sm:$0xff]
  %v8698 = vld [vmem:[%s3 + $0x18] sm:$0xff]
  %v8699 = vld [vmem:[%s3 + $0x20] sm:$0xff]
  %v8700 = vld [vmem:[%s3 + $0x28] sm:$0xff]
  %v8701 = vld [vmem:[%s3 + $0x30] sm:$0xff]
  %v8702 = vld [vmem:[%s3 + $0x38] sm:$0xff]
  %v8703 = vld [vmem:[%s3 + $0x40] sm:$0xff]
  %v8704 = vld [vmem:[%s3 + $0x48] sm:$0xff]
  %v8705 = vld [vmem:[%s3 + $0x50] sm:$0xff]
  %v8706 = vld [vmem:[%s3 + $0x58] sm:$0xff]
  %v8707 = vld [vmem:[%s3 + $0x60] sm:$0xff]
  %v8708 = vld [vmem:[%s3 + $0x68] sm:$0xff]
  %v8709 = vld [vmem:[%s3 + $0x70] sm:$0xff]
  %v8710 = vld [vmem:[%s3 + $0x78] sm:$0xff]
  %vm8711 = vcmask 719872
  %v8713 = vsel %vm8711, %v8696, 0
  %v8716 = vsel %vm8711, %v8698, 0
  %v8719 = vsel %vm8711, %v8700, 0
  %v8722 = vsel %vm8711, %v8702, 0
  %v8725 = vsel %vm8711, %v8704, 0
  %v8728 = vsel %vm8711, %v8706, 0
  %v8731 = vsel %vm8711, %v8708, 0
  %v8734 = vsel %vm8711, %v8710, 0
  %8736 = vmatprep.subr.mxu0 %v7337
  %8737 = vmatpush1.msra.mxu0 %v7336
  %8738 = vmatprep.subr.mxu0 %v7011
  %8739 = vmatpush1.msra.mxu0 %v7010
  %8740 = vmatprep.subr.mxu0 %v6980
  %8741 = vmatpush1.msra.mxu0 %v6979
  %8742 = vmatprep.subr.mxu0 %v6949
  %8743 = vmatpush1.msra.mxu0 %v6948
  %8744 = vmatprep.subr.mxu0 %v6624
  %8745 = vmatpush1.msra.mxu0 %v6623
  %8746 = vmatprep.subr.mxu0 %v6593
  %8747 = vmatpush1.msra.mxu0 %v6592
  %8748 = vmatprep.subr.mxu0 %v6562
  %8749 = vmatpush1.msra.mxu0 %v6561
  %8750 = vmatprep.subr.mxu0 %v6237
  %8751 = vmatpush1.msra.mxu0 %v6236
  %8752 = vmatprep.subr.mxu0 %v6206
  %8753 = vmatpush1.msra.mxu0 %v6205
  %8754 = vmatprep.subr.mxu0 %v6175
  %8755 = vmatpush1.msra.mxu0 %v6174
  %8756 = vmatprep.subr.mxu0 %v5849
  %8757 = vmatpush1.msra.mxu0 %v5848
  %8758 = vmatprep.subr.mxu0 %v5818
  %8759 = vmatpush1.msra.mxu0 %v5817
  %8760 = vmatprep.subr.mxu0 %v5787
  %8761 = vmatpush1.msra.mxu0 %v5786
  %8762 = vmatprep.subr.mxu0 %v5467
  %8763 = vmatpush1.msra.mxu0 %v5466
  %8764 = vmatprep.subr.mxu0 %v5435
  %8765 = vmatpush1.msra.mxu0 %v5434
  %8766 = vmatprep.subr.mxu0 %v5403
  %8767 = vmatpush1.msra.mxu0 %v5402
  %8768 = vmatprep.subr.mxu0 0.0
  %8769 = vmatpush2.msra.mxu0 0.0
  %8770 = vmatprep.subr.mxu0 0.0
  %8771 = vmatpush2.msra.mxu0 0.0
  %8772 = vmatprep.subr.mxu0 0.0
  %8773 = vmatpush2.msra.mxu0 0.0
  %8774 = vmatprep.subr.mxu0 0.0
  %8775 = vmatpush2.msra.mxu0 0.0
  %8776 = vmatprep.subr.mxu0 0.0
  %8777 = vmatpush2.msra.mxu0 0.0
  %8778 = vmatprep.subr.mxu0 %v8563
  %8779 = vmatpush2.msra.mxu0 %v8562
  %8780 = vmatprep.subr.mxu0 %v8532
  %8781 = vmatpush2.msra.mxu0 %v8531
  %8782 = vmatprep.subr.mxu0 %v8501
  %8783 = vmatpush2.msra.mxu0 %v8500
  %8784 = vmatprep.subr.mxu0 %v8175
  %8785 = vmatpush2.msra.mxu0 %v8174
  %8786 = vmatprep.subr.mxu0 %v8144
  %8787 = vmatpush2.msra.mxu0 %v8143
  %8788 = vmatprep.subr.mxu0 %v8113
  %8789 = vmatpush2.msra.mxu0 %v8112
  %8790 = vmatprep.subr.mxu0 %v7787
  %8791 = vmatpush2.msra.mxu0 %v7786
  %8792 = vmatprep.subr.mxu0 %v7756
  %8793 = vmatpush2.msra.mxu0 %v7755
  %8794 = vmatprep.subr.mxu0 %v7725
  %8795 = vmatpush2.msra.mxu0 %v7724
  %8796 = vmatprep.subr.mxu0 %v7399
  %8797 = vmatpush2.msra.mxu0 %v7398
  %8798 = vmatprep.subr.mxu0 %v7368
  %8799 = vmatpush2.msra.mxu0 %v7367
  %8800 = vmatprep.mubr.f32.mxu0 %v8713
  %8801 = vmatmul.mubr.f32.gmra.mxu0 %v8695
  %v8802 = vpop.f32.mrf.mxu0
  %v8803 = vadd.f32 0.0, %v8802
  %v8804 = vpop.f32.mrf.mxu0
  %v8805 = vadd.f32 0.0, %v8804
  %8806 = vmatprep.mubr.f32.mxu0 %v8716
  %8807 = vmatmul.mubr.f32.gmra.mxu0 %v8697
  %v8808 = vpop.f32.mrf.mxu0
  %v8809 = vadd.f32 0.0, %v8808
  %v8810 = vpop.f32.mrf.mxu0
  %v8811 = vadd.f32 0.0, %v8810
  %8812 = vmatprep.mubr.f32.mxu0 %v8719
  %8813 = vmatmul.mubr.f32.gmra.mxu0 %v8699
  %v8814 = vpop.f32.mrf.mxu0
  %v8815 = vadd.f32 0.0, %v8814
  %v8816 = vpop.f32.mrf.mxu0
  %v8817 = vadd.f32 0.0, %v8816
  %8818 = vmatprep.mubr.f32.mxu0 %v8722
  %8819 = vmatmul.mubr.f32.gmra.mxu0 %v8701
  %v8820 = vpop.f32.mrf.mxu0
  %v8821 = vadd.f32 0.0, %v8820
  %v8822 = vpop.f32.mrf.mxu0
  %v8823 = vadd.f32 0.0, %v8822
  %8824 = vmatprep.mubr.f32.mxu0 %v8725
  %8825 = vmatmul.mubr.f32.gmra.mxu0 %v8703
  %v8826 = vpop.f32.mrf.mxu0
  %v8827 = vadd.f32 0.0, %v8826
  %v8828 = vpop.f32.mrf.mxu0
  %v8829 = vadd.f32 0.0, %v8828
  %8830 = vmatprep.mubr.f32.mxu0 %v8728
  %8831 = vmatmul.mubr.f32.gmra.mxu0 %v8705
  %v8832 = vpop.f32.mrf.mxu0
  %v8833 = vadd.f32 0.0, %v8832
  %v8834 = vpop.f32.mrf.mxu0
  %v8835 = vadd.f32 0.0, %v8834
  %8836 = vmatprep.mubr.f32.mxu0 %v8731
  %8837 = vmatmul.mubr.f32.gmra.mxu0 %v8707
  %v8838 = vpop.f32.mrf.mxu0
  %v8839 = vadd.f32 0.0, %v8838
  %v8840 = vpop.f32.mrf.mxu0
  %v8841 = vadd.f32 0.0, %v8840
  %8842 = vmatprep.mubr.f32.mxu0 %v8734
  %8843 = vmatmul.mubr.f32.gmra.mxu0 %v8709
  %v8844 = vpop.f32.mrf.mxu0
  %v8845 = vadd.f32 0.0, %v8844
  %v8846 = vpop.f32.mrf.mxu0
  %v8847 = vadd.f32 0.0, %v8846
  %8848 = vdwg.mxu0
  %8849 = vmatprep.subr.mxu0 %v7339
  %8850 = vmatpush1.msra.mxu0 %v7338
  %8851 = vmatprep.subr.mxu0 %v7013
  %8852 = vmatpush1.msra.mxu0 %v7012
  %8853 = vmatprep.subr.mxu0 %v6982
  %8854 = vmatpush1.msra.mxu0 %v6981
  %8855 = vmatprep.subr.mxu0 %v6951
  %8856 = vmatpush1.msra.mxu0 %v6950
  %8857 = vmatprep.subr.mxu0 %v6626
  %8858 = vmatpush1.msra.mxu0 %v6625
  %8859 = vmatprep.subr.mxu0 %v6595
  %8860 = vmatpush1.msra.mxu0 %v6594
  %8861 = vmatprep.subr.mxu0 %v6564
  %8862 = vmatpush1.msra.mxu0 %v6563
  %8863 = vmatprep.subr.mxu0 %v6239
  %8864 = vmatpush1.msra.mxu0 %v6238
  %8865 = vmatprep.subr.mxu0 %v6208
  %8866 = vmatpush1.msra.mxu0 %v6207
  %8867 = vmatprep.subr.mxu0 %v6177
  %8868 = vmatpush1.msra.mxu0 %v6176
  %8869 = vmatprep.subr.mxu0 %v5851
  %8870 = vmatpush1.msra.mxu0 %v5850
  %8871 = vmatprep.subr.mxu0 %v5820
  %8872 = vmatpush1.msra.mxu0 %v5819
  %8873 = vmatprep.subr.mxu0 %v5789
  %8874 = vmatpush1.msra.mxu0 %v5788
  %8875 = vmatprep.subr.mxu0 %v5469
  %8876 = vmatpush1.msra.mxu0 %v5468
  %8877 = vmatprep.subr.mxu0 %v5437
  %8878 = vmatpush1.msra.mxu0 %v5436
  %8879 = vmatprep.subr.mxu0 %v5405
  %8880 = vmatpush1.msra.mxu0 %v5404
  %8881 = vmatprep.subr.mxu0 0.0
  %8882 = vmatpush2.msra.mxu0 0.0
  %8883 = vmatprep.subr.mxu0 0.0
  %8884 = vmatpush2.msra.mxu0 0.0
  %8885 = vmatprep.subr.mxu0 0.0
  %8886 = vmatpush2.msra.mxu0 0.0
  %8887 = vmatprep.subr.mxu0 0.0
  %8888 = vmatpush2.msra.mxu0 0.0
  %8889 = vmatprep.subr.mxu0 0.0
  %8890 = vmatpush2.msra.mxu0 0.0
  %8891 = vmatprep.subr.mxu0 %v8565
  %8892 = vmatpush2.msra.mxu0 %v8564
  %8893 = vmatprep.subr.mxu0 %v8534
  %8894 = vmatpush2.msra.mxu0 %v8533
  %8895 = vmatprep.subr.mxu0 %v8503
  %8896 = vmatpush2.msra.mxu0 %v8502
  %8897 = vmatprep.subr.mxu0 %v8177
  %8898 = vmatpush2.msra.mxu0 %v8176
  %8899 = vmatprep.subr.mxu0 %v8146
  %8900 = vmatpush2.msra.mxu0 %v8145
  %8901 = vmatprep.subr.mxu0 %v8115
  %8902 = vmatpush2.msra.mxu0 %v8114
  %8903 = vmatprep.subr.mxu0 %v7789
  %8904 = vmatpush2.msra.mxu0 %v7788
  %8905 = vmatprep.subr.mxu0 %v7758
  %8906 = vmatpush2.msra.mxu0 %v7757
  %8907 = vmatprep.subr.mxu0 %v7727
  %8908 = vmatpush2.msra.mxu0 %v7726
  %8909 = vmatprep.subr.mxu0 %v7401
  %8910 = vmatpush2.msra.mxu0 %v7400
  %8911 = vmatprep.subr.mxu0 %v7370
  %8912 = vmatpush2.msra.mxu0 %v7369
  %8913 = vmatprep.mubr.f32.mxu0 %v8713
  %8914 = vmatmul.mubr.f32.gmra.mxu0 %v8695
  %v8915 = vpop.f32.mrf.mxu0
  %v8916 = vadd.f32 0.0, %v8915
  %v8917 = vpop.f32.mrf.mxu0
  %v8918 = vadd.f32 0.0, %v8917
  %8919 = vmatprep.mubr.f32.mxu0 %v8716
  %8920 = vmatmul.mubr.f32.gmra.mxu0 %v8697
  %v8921 = vpop.f32.mrf.mxu0
  %v8922 = vadd.f32 0.0, %v8921
  %v8923 = vpop.f32.mrf.mxu0
  %v8924 = vadd.f32 0.0, %v8923
  %8925 = vmatprep.mubr.f32.mxu0 %v8719
  %8926 = vmatmul.mubr.f32.gmra.mxu0 %v8699
  %v8927 = vpop.f32.mrf.mxu0
  %v8928 = vadd.f32 0.0, %v8927
  %v8929 = vpop.f32.mrf.mxu0
  %v8930 = vadd.f32 0.0, %v8929
  %8931 = vmatprep.mubr.f32.mxu0 %v8722
  %8932 = vmatmul.mubr.f32.gmra.mxu0 %v8701
  %v8933 = vpop.f32.mrf.mxu0
  %v8934 = vadd.f32 0.0, %v8933
  %v8935 = vpop.f32.mrf.mxu0
  %v8936 = vadd.f32 0.0, %v8935
  %8937 = vmatprep.mubr.f32.mxu0 %v8725
  %8938 = vmatmul.mubr.f32.gmra.mxu0 %v8703
  %v8939 = vpop.f32.mrf.mxu0
  %v8940 = vadd.f32 0.0, %v8939
  %v8941 = vpop.f32.mrf.mxu0
  %v8942 = vadd.f32 0.0, %v8941
  %8943 = vmatprep.mubr.f32.mxu0 %v8728
  %8944 = vmatmul.mubr.f32.gmra.mxu0 %v8705
  %v8945 = vpop.f32.mrf.mxu0
  %v8946 = vadd.f32 0.0, %v8945
  %v8947 = vpop.f32.mrf.mxu0
  %v8948 = vadd.f32 0.0, %v8947
  %8949 = vmatprep.mubr.f32.mxu0 %v8731
  %8950 = vmatmul.mubr.f32.gmra.mxu0 %v8707
  %v8951 = vpop.f32.mrf.mxu0
  %v8952 = vadd.f32 0.0, %v8951
  %v8953 = vpop.f32.mrf.mxu0
  %v8954 = vadd.f32 0.0, %v8953
  %8955 = vmatprep.mubr.f32.mxu0 %v8734
  %8956 = vmatmul.mubr.f32.gmra.mxu0 %v8709
  %v8957 = vpop.f32.mrf.mxu0
  %v8958 = vadd.f32 0.0, %v8957
  %v8959 = vpop.f32.mrf.mxu0
  %v8960 = vadd.f32 0.0, %v8959
  %8961 = vdwg.mxu0
  %8962 = vmatprep.subr.mxu0 %v7341
  %8963 = vmatpush1.msra.mxu0 %v7340
  %8964 = vmatprep.subr.mxu0 %v7015
  %8965 = vmatpush1.msra.mxu0 %v7014
  %8966 = vmatprep.subr.mxu0 %v6984
  %8967 = vmatpush1.msra.mxu0 %v6983
  %8968 = vmatprep.subr.mxu0 %v6953
  %8969 = vmatpush1.msra.mxu0 %v6952
  %8970 = vmatprep.subr.mxu0 %v6628
  %8971 = vmatpush1.msra.mxu0 %v6627
  %8972 = vmatprep.subr.mxu0 %v6597
  %8973 = vmatpush1.msra.mxu0 %v6596
  %8974 = vmatprep.subr.mxu0 %v6566
  %8975 = vmatpush1.msra.mxu0 %v6565
  %8976 = vmatprep.subr.mxu0 %v6241
  %8977 = vmatpush1.msra.mxu0 %v6240
  %8978 = vmatprep.subr.mxu0 %v6210
  %8979 = vmatpush1.msra.mxu0 %v6209
  %8980 = vmatprep.subr.mxu0 %v6179
  %8981 = vmatpush1.msra.mxu0 %v6178
  %8982 = vmatprep.subr.mxu0 %v5853
  %8983 = vmatpush1.msra.mxu0 %v5852
  %8984 = vmatprep.subr.mxu0 %v5822
  %8985 = vmatpush1.msra.mxu0 %v5821
  %8986 = vmatprep.subr.mxu0 %v5791
  %8987 = vmatpush1.msra.mxu0 %v5790
  %8988 = vmatprep.subr.mxu0 %v5471
  %8989 = vmatpush1.msra.mxu0 %v5470
  %8990 = vmatprep.subr.mxu0 %v5439
  %8991 = vmatpush1.msra.mxu0 %v5438
  %8992 = vmatprep.subr.mxu0 %v5407
  %8993 = vmatpush1.msra.mxu0 %v5406
  %8994 = vmatprep.subr.mxu0 0.0
  %8995 = vmatpush2.msra.mxu0 0.0
  %8996 = vmatprep.subr.mxu0 0.0
  %8997 = vmatpush2.msra.mxu0 0.0
  %8998 = vmatprep.subr.mxu0 0.0
  %8999 = vmatpush2.msra.mxu0 0.0
  %9000 = vmatprep.subr.mxu0 0.0
  %9001 = vmatpush2.msra.mxu0 0.0
  %9002 = vmatprep.subr.mxu0 0.0
  %9003 = vmatpush2.msra.mxu0 0.0
  %9004 = vmatprep.subr.mxu0 %v8567
  %9005 = vmatpush2.msra.mxu0 %v8566
  %9006 = vmatprep.subr.mxu0 %v8536
  %9007 = vmatpush2.msra.mxu0 %v8535
  %9008 = vmatprep.subr.mxu0 %v8505
  %9009 = vmatpush2.msra.mxu0 %v8504
  %9010 = vmatprep.subr.mxu0 %v8179
  %9011 = vmatpush2.msra.mxu0 %v8178
  %9012 = vmatprep.subr.mxu0 %v8148
  %9013 = vmatpush2.msra.mxu0 %v8147
  %9014 = vmatprep.subr.mxu0 %v8117
  %9015 = vmatpush2.msra.mxu0 %v8116
  %9016 = vmatprep.subr.mxu0 %v7791
  %9017 = vmatpush2.msra.mxu0 %v7790
  %9018 = vmatprep.subr.mxu0 %v7760
  %9019 = vmatpush2.msra.mxu0 %v7759
  %9020 = vmatprep.subr.mxu0 %v7729
  %9021 = vmatpush2.msra.mxu0 %v7728
  %9022 = vmatprep.subr.mxu0 %v7403
  %9023 = vmatpush2.msra.mxu0 %v7402
  %9024 = vmatprep.subr.mxu0 %v7372
  %9025 = vmatpush2.msra.mxu0 %v7371
  %9026 = vmatprep.mubr.f32.mxu0 %v8713
  %9027 = vmatmul.mubr.f32.gmra.mxu0 %v8695
  %v9028 = vpop.f32.mrf.mxu0
  %v9029 = vadd.f32 0.0, %v9028
  %v9030 = vpop.f32.mrf.mxu0
  %v9031 = vadd.f32 0.0, %v9030
  %9032 = vmatprep.mubr.f32.mxu0 %v8716
  %9033 = vmatmul.mubr.f32.gmra.mxu0 %v8697
  %v9034 = vpop.f32.mrf.mxu0
  %v9035 = vadd.f32 0.0, %v9034
  %v9036 = vpop.f32.mrf.mxu0
  %v9037 = vadd.f32 0.0, %v9036
  %9038 = vmatprep.mubr.f32.mxu0 %v8719
  %9039 = vmatmul.mubr.f32.gmra.mxu0 %v8699
  %v9040 = vpop.f32.mrf.mxu0
  %v9041 = vadd.f32 0.0, %v9040
  %v9042 = vpop.f32.mrf.mxu0
  %v9043 = vadd.f32 0.0, %v9042
  %9044 = vmatprep.mubr.f32.mxu0 %v8722
  %9045 = vmatmul.mubr.f32.gmra.mxu0 %v8701
  %v9046 = vpop.f32.mrf.mxu0
  %v9047 = vadd.f32 0.0, %v9046
  %v9048 = vpop.f32.mrf.mxu0
  %v9049 = vadd.f32 0.0, %v9048
  %9050 = vmatprep.mubr.f32.mxu0 %v8725
  %9051 = vmatmul.mubr.f32.gmra.mxu0 %v8703
  %v9052 = vpop.f32.mrf.mxu0
  %v9053 = vadd.f32 0.0, %v9052
  %v9054 = vpop.f32.mrf.mxu0
  %v9055 = vadd.f32 0.0, %v9054
  %9056 = vmatprep.mubr.f32.mxu0 %v8728
  %9057 = vmatmul.mubr.f32.gmra.mxu0 %v8705
  %v9058 = vpop.f32.mrf.mxu0
  %v9059 = vadd.f32 0.0, %v9058
  %v9060 = vpop.f32.mrf.mxu0
  %v9061 = vadd.f32 0.0, %v9060
  %9062 = vmatprep.mubr.f32.mxu0 %v8731
  %9063 = vmatmul.mubr.f32.gmra.mxu0 %v8707
  %v9064 = vpop.f32.mrf.mxu0
  %v9065 = vadd.f32 0.0, %v9064
  %v9066 = vpop.f32.mrf.mxu0
  %v9067 = vadd.f32 0.0, %v9066
  %9068 = vmatprep.mubr.f32.mxu0 %v8734
  %9069 = vmatmul.mubr.f32.gmra.mxu0 %v8709
  %v9070 = vpop.f32.mrf.mxu0
  %v9071 = vadd.f32 0.0, %v9070
  %v9072 = vpop.f32.mrf.mxu0
  %v9073 = vadd.f32 0.0, %v9072
  %9074 = vdwg.mxu0
  %9075 = vmatprep.subr.mxu0 %v7343
  %9076 = vmatpush1.msra.mxu0 %v7342
  %9077 = vmatprep.subr.mxu0 %v7017
  %9078 = vmatpush1.msra.mxu0 %v7016
  %9079 = vmatprep.subr.mxu0 %v6986
  %9080 = vmatpush1.msra.mxu0 %v6985
  %9081 = vmatprep.subr.mxu0 %v6955
  %9082 = vmatpush1.msra.mxu0 %v6954
  %9083 = vmatprep.subr.mxu0 %v6630
  %9084 = vmatpush1.msra.mxu0 %v6629
  %9085 = vmatprep.subr.mxu0 %v6599
  %9086 = vmatpush1.msra.mxu0 %v6598
  %9087 = vmatprep.subr.mxu0 %v6568
  %9088 = vmatpush1.msra.mxu0 %v6567
  %9089 = vmatprep.subr.mxu0 %v6243
  %9090 = vmatpush1.msra.mxu0 %v6242
  %9091 = vmatprep.subr.mxu0 %v6212
  %9092 = vmatpush1.msra.mxu0 %v6211
  %9093 = vmatprep.subr.mxu0 %v6181
  %9094 = vmatpush1.msra.mxu0 %v6180
  %9095 = vmatprep.subr.mxu0 %v5855
  %9096 = vmatpush1.msra.mxu0 %v5854
  %9097 = vmatprep.subr.mxu0 %v5824
  %9098 = vmatpush1.msra.mxu0 %v5823
  %9099 = vmatprep.subr.mxu0 %v5793
  %9100 = vmatpush1.msra.mxu0 %v5792
  %9101 = vmatprep.subr.mxu0 %v5473
  %9102 = vmatpush1.msra.mxu0 %v5472
  %9103 = vmatprep.subr.mxu0 %v5441
  %9104 = vmatpush1.msra.mxu0 %v5440
  %9105 = vmatprep.subr.mxu0 %v5409
  %9106 = vmatpush1.msra.mxu0 %v5408
  %9107 = vmatprep.subr.mxu0 0.0
  %9108 = vmatpush2.msra.mxu0 0.0
  %9109 = vmatprep.subr.mxu0 0.0
  %9110 = vmatpush2.msra.mxu0 0.0
  %9111 = vmatprep.subr.mxu0 0.0
  %9112 = vmatpush2.msra.mxu0 0.0
  %9113 = vmatprep.subr.mxu0 0.0
  %9114 = vmatpush2.msra.mxu0 0.0
  %9115 = vmatprep.subr.mxu0 0.0
  %9116 = vmatpush2.msra.mxu0 0.0
  %9117 = vmatprep.subr.mxu0 %v8569
  %9118 = vmatpush2.msra.mxu0 %v8568
  %9119 = vmatprep.subr.mxu0 %v8538
  %9120 = vmatpush2.msra.mxu0 %v8537
  %9121 = vmatprep.subr.mxu0 %v8507
  %9122 = vmatpush2.msra.mxu0 %v8506
  %9123 = vmatprep.subr.mxu0 %v8181
  %9124 = vmatpush2.msra.mxu0 %v8180
  %9125 = vmatprep.subr.mxu0 %v8150
  %9126 = vmatpush2.msra.mxu0 %v8149
  %9127 = vmatprep.subr.mxu0 %v8119
  %9128 = vmatpush2.msra.mxu0 %v8118
  %9129 = vmatprep.subr.mxu0 %v7793
  %9130 = vmatpush2.msra.mxu0 %v7792
  %9131 = vmatprep.subr.mxu0 %v7762
  %9132 = vmatpush2.msra.mxu0 %v7761
  %9133 = vmatprep.subr.mxu0 %v7731
  %9134 = vmatpush2.msra.mxu0 %v7730
  %9135 = vmatprep.subr.mxu0 %v7405
  %9136 = vmatpush2.msra.mxu0 %v7404
  %9137 = vmatprep.subr.mxu0 %v7374
  %9138 = vmatpush2.msra.mxu0 %v7373
  %9139 = vmatprep.mubr.f32.mxu0 %v8713
  %9140 = vmatmul.mubr.f32.gmra.mxu0 %v8695
  %v9141 = vpop.f32.mrf.mxu0
  %v9142 = vadd.f32 0.0, %v9141
  %v9143 = vpop.f32.mrf.mxu0
  %v9144 = vadd.f32 0.0, %v9143
  %9145 = vmatprep.mubr.f32.mxu0 %v8716
  %9146 = vmatmul.mubr.f32.gmra.mxu0 %v8697
  %v9147 = vpop.f32.mrf.mxu0
  %v9148 = vadd.f32 0.0, %v9147
  %v9149 = vpop.f32.mrf.mxu0
  %v9150 = vadd.f32 0.0, %v9149
  %9151 = vmatprep.mubr.f32.mxu0 %v8719
  %9152 = vmatmul.mubr.f32.gmra.mxu0 %v8699
  %v9153 = vpop.f32.mrf.mxu0
  %v9154 = vadd.f32 0.0, %v9153
  %v9155 = vpop.f32.mrf.mxu0
  %v9156 = vadd.f32 0.0, %v9155
  %9157 = vmatprep.mubr.f32.mxu0 %v8722
  %9158 = vmatmul.mubr.f32.gmra.mxu0 %v8701
  %v9159 = vpop.f32.mrf.mxu0
  %v9160 = vadd.f32 0.0, %v9159
  %v9161 = vpop.f32.mrf.mxu0
  %v9162 = vadd.f32 0.0, %v9161
  %9163 = vmatprep.mubr.f32.mxu0 %v8725
  %9164 = vmatmul.mubr.f32.gmra.mxu0 %v8703
  %v9165 = vpop.f32.mrf.mxu0
  %v9166 = vadd.f32 0.0, %v9165
  %v9167 = vpop.f32.mrf.mxu0
  %v9168 = vadd.f32 0.0, %v9167
  %9169 = vmatprep.mubr.f32.mxu0 %v8728
  %9170 = vmatmul.mubr.f32.gmra.mxu0 %v8705
  %v9171 = vpop.f32.mrf.mxu0
  %v9172 = vadd.f32 0.0, %v9171
  %v9173 = vpop.f32.mrf.mxu0
  %v9174 = vadd.f32 0.0, %v9173
  %9175 = vmatprep.mubr.f32.mxu0 %v8731
  %9176 = vmatmul.mubr.f32.gmra.mxu0 %v8707
  %v9177 = vpop.f32.mrf.mxu0
  %v9178 = vadd.f32 0.0, %v9177
  %v9179 = vpop.f32.mrf.mxu0
  %v9180 = vadd.f32 0.0, %v9179
  %9181 = vmatprep.mubr.f32.mxu0 %v8734
  %9182 = vmatmul.mubr.f32.gmra.mxu0 %v8709
  %v9183 = vpop.f32.mrf.mxu0
  %v9184 = vadd.f32 0.0, %v9183
  %v9185 = vpop.f32.mrf.mxu0
  %v9186 = vadd.f32 0.0, %v9185
  %9187 = vdwg.mxu0
  %9188 = vmatprep.subr.mxu0 %v7345
  %9189 = vmatpush1.msra.mxu0 %v7344
  %9190 = vmatprep.subr.mxu0 %v7019
  %9191 = vmatpush1.msra.mxu0 %v7018
  %9192 = vmatprep.subr.mxu0 %v6988
  %9193 = vmatpush1.msra.mxu0 %v6987
  %9194 = vmatprep.subr.mxu0 %v6957
  %9195 = vmatpush1.msra.mxu0 %v6956
  %9196 = vmatprep.subr.mxu0 %v6632
  %9197 = vmatpush1.msra.mxu0 %v6631
  %9198 = vmatprep.subr.mxu0 %v6601
  %9199 = vmatpush1.msra.mxu0 %v6600
  %9200 = vmatprep.subr.mxu0 %v6570
  %9201 = vmatpush1.msra.mxu0 %v6569
  %9202 = vmatprep.subr.mxu0 %v6245
  %9203 = vmatpush1.msra.mxu0 %v6244
  %9204 = vmatprep.subr.mxu0 %v6214
  %9205 = vmatpush1.msra.mxu0 %v6213
  %9206 = vmatprep.subr.mxu0 %v6183
  %9207 = vmatpush1.msra.mxu0 %v6182
  %9208 = vmatprep.subr.mxu0 %v5857
  %9209 = vmatpush1.msra.mxu0 %v5856
  %9210 = vmatprep.subr.mxu0 %v5826
  %9211 = vmatpush1.msra.mxu0 %v5825
  %9212 = vmatprep.subr.mxu0 %v5795
  %9213 = vmatpush1.msra.mxu0 %v5794
  %9214 = vmatprep.subr.mxu0 %v5475
  %9215 = vmatpush1.msra.mxu0 %v5474
  %9216 = vmatprep.subr.mxu0 %v5443
  %9217 = vmatpush1.msra.mxu0 %v5442
  %9218 = vmatprep.subr.mxu0 %v5411
  %9219 = vmatpush1.msra.mxu0 %v5410
  %9220 = vmatprep.subr.mxu0 0.0
  %9221 = vmatpush2.msra.mxu0 0.0
  %9222 = vmatprep.subr.mxu0 0.0
  %9223 = vmatpush2.msra.mxu0 0.0
  %9224 = vmatprep.subr.mxu0 0.0
  %9225 = vmatpush2.msra.mxu0 0.0
  %9226 = vmatprep.subr.mxu0 0.0
  %9227 = vmatpush2.msra.mxu0 0.0
  %9228 = vmatprep.subr.mxu0 0.0
  %9229 = vmatpush2.msra.mxu0 0.0
  %9230 = vmatprep.subr.mxu0 %v8571
  %9231 = vmatpush2.msra.mxu0 %v8570
  %9232 = vmatprep.subr.mxu0 %v8540
  %9233 = vmatpush2.msra.mxu0 %v8539
  %9234 = vmatprep.subr.mxu0 %v8509
  %9235 = vmatpush2.msra.mxu0 %v8508
  %9236 = vmatprep.subr.mxu0 %v8183
  %9237 = vmatpush2.msra.mxu0 %v8182
  %9238 = vmatprep.subr.mxu0 %v8152
  %9239 = vmatpush2.msra.mxu0 %v8151
  %9240 = vmatprep.subr.mxu0 %v8121
  %9241 = vmatpush2.msra.mxu0 %v8120
  %9242 = vmatprep.subr.mxu0 %v7795
  %9243 = vmatpush2.msra.mxu0 %v7794
  %9244 = vmatprep.subr.mxu0 %v7764
  %9245 = vmatpush2.msra.mxu0 %v7763
  %9246 = vmatprep.subr.mxu0 %v7733
  %9247 = vmatpush2.msra.mxu0 %v7732
  %9248 = vmatprep.subr.mxu0 %v7407
  %9249 = vmatpush2.msra.mxu0 %v7406
  %9250 = vmatprep.subr.mxu0 %v7376
  %9251 = vmatpush2.msra.mxu0 %v7375
  %9252 = vmatprep.mubr.f32.mxu0 %v8713
  %9253 = vmatmul.mubr.f32.gmra.mxu0 %v8695
  %v9254 = vpop.f32.mrf.mxu0
  %v9255 = vadd.f32 0.0, %v9254
  %v9256 = vpop.f32.mrf.mxu0
  %v9257 = vadd.f32 0.0, %v9256
  %9258 = vmatprep.mubr.f32.mxu0 %v8716
  %9259 = vmatmul.mubr.f32.gmra.mxu0 %v8697
  %v9260 = vpop.f32.mrf.mxu0
  %v9261 = vadd.f32 0.0, %v9260
  %v9262 = vpop.f32.mrf.mxu0
  %v9263 = vadd.f32 0.0, %v9262
  %9264 = vmatprep.mubr.f32.mxu0 %v8719
  %9265 = vmatmul.mubr.f32.gmra.mxu0 %v8699
  %v9266 = vpop.f32.mrf.mxu0
  %v9267 = vadd.f32 0.0, %v9266
  %v9268 = vpop.f32.mrf.mxu0
  %v9269 = vadd.f32 0.0, %v9268
  %9270 = vmatprep.mubr.f32.mxu0 %v8722
  %9271 = vmatmul.mubr.f32.gmra.mxu0 %v8701
  %v9272 = vpop.f32.mrf.mxu0
  %v9273 = vadd.f32 0.0, %v9272
  %v9274 = vpop.f32.mrf.mxu0
  %v9275 = vadd.f32 0.0, %v9274
  %9276 = vmatprep.mubr.f32.mxu0 %v8725
  %9277 = vmatmul.mubr.f32.gmra.mxu0 %v8703
  %v9278 = vpop.f32.mrf.mxu0
  %v9279 = vadd.f32 0.0, %v9278
  %v9280 = vpop.f32.mrf.mxu0
  %v9281 = vadd.f32 0.0, %v9280
  %9282 = vmatprep.mubr.f32.mxu0 %v8728
  %9283 = vmatmul.mubr.f32.gmra.mxu0 %v8705
  %v9284 = vpop.f32.mrf.mxu0
  %v9285 = vadd.f32 0.0, %v9284
  %v9286 = vpop.f32.mrf.mxu0
  %v9287 = vadd.f32 0.0, %v9286
  %9288 = vmatprep.mubr.f32.mxu0 %v8731
  %9289 = vmatmul.mubr.f32.gmra.mxu0 %v8707
  %v9290 = vpop.f32.mrf.mxu0
  %v9291 = vadd.f32 0.0, %v9290
  %v9292 = vpop.f32.mrf.mxu0
  %v9293 = vadd.f32 0.0, %v9292
  %9294 = vmatprep.mubr.f32.mxu0 %v8734
  %9295 = vmatmul.mubr.f32.gmra.mxu0 %v8709
  %v9296 = vpop.f32.mrf.mxu0
  %v9297 = vadd.f32 0.0, %v9296
  %v9298 = vpop.f32.mrf.mxu0
  %v9299 = vadd.f32 0.0, %v9298
  %9300 = vdwg.mxu0
  %9301 = vmatprep.subr.mxu0 %v7347
  %9302 = vmatpush1.msra.mxu0 %v7346
  %9303 = vmatprep.subr.mxu0 %v7021
  %9304 = vmatpush1.msra.mxu0 %v7020
  %9305 = vmatprep.subr.mxu0 %v6990
  %9306 = vmatpush1.msra.mxu0 %v6989
  %9307 = vmatprep.subr.mxu0 %v6959
  %9308 = vmatpush1.msra.mxu0 %v6958
  %9309 = vmatprep.subr.mxu0 %v6634
  %9310 = vmatpush1.msra.mxu0 %v6633
  %9311 = vmatprep.subr.mxu0 %v6603
  %9312 = vmatpush1.msra.mxu0 %v6602
  %9313 = vmatprep.subr.mxu0 %v6572
  %9314 = vmatpush1.msra.mxu0 %v6571
  %9315 = vmatprep.subr.mxu0 %v6247
  %9316 = vmatpush1.msra.mxu0 %v6246
  %9317 = vmatprep.subr.mxu0 %v6216
  %9318 = vmatpush1.msra.mxu0 %v6215
  %9319 = vmatprep.subr.mxu0 %v6185
  %9320 = vmatpush1.msra.mxu0 %v6184
  %9321 = vmatprep.subr.mxu0 %v5859
  %9322 = vmatpush1.msra.mxu0 %v5858
  %9323 = vmatprep.subr.mxu0 %v5828
  %9324 = vmatpush1.msra.mxu0 %v5827
  %9325 = vmatprep.subr.mxu0 %v5797
  %9326 = vmatpush1.msra.mxu0 %v5796
  %9327 = vmatprep.subr.mxu0 %v5477
  %9328 = vmatpush1.msra.mxu0 %v5476
  %9329 = vmatprep.subr.mxu0 %v5445
  %9330 = vmatpush1.msra.mxu0 %v5444
  %9331 = vmatprep.subr.mxu0 %v5413
  %9332 = vmatpush1.msra.mxu0 %v5412
  %9333 = vmatprep.subr.mxu0 0.0
  %9334 = vmatpush2.msra.mxu0 0.0
  %9335 = vmatprep.subr.mxu0 0.0
  %9336 = vmatpush2.msra.mxu0 0.0
  %9337 = vmatprep.subr.mxu0 0.0
  %9338 = vmatpush2.msra.mxu0 0.0
  %9339 = vmatprep.subr.mxu0 0.0
  %9340 = vmatpush2.msra.mxu0 0.0
  %9341 = vmatprep.subr.mxu0 0.0
  %9342 = vmatpush2.msra.mxu0 0.0
  %9343 = vmatprep.subr.mxu0 %v8573
  %9344 = vmatpush2.msra.mxu0 %v8572
  %9345 = vmatprep.subr.mxu0 %v8542
  %9346 = vmatpush2.msra.mxu0 %v8541
  %9347 = vmatprep.subr.mxu0 %v8511
  %9348 = vmatpush2.msra.mxu0 %v8510
  %9349 = vmatprep.subr.mxu0 %v8185
  %9350 = vmatpush2.msra.mxu0 %v8184
  %9351 = vmatprep.subr.mxu0 %v8154
  %9352 = vmatpush2.msra.mxu0 %v8153
  %9353 = vmatprep.subr.mxu0 %v8123
  %9354 = vmatpush2.msra.mxu0 %v8122
  %9355 = vmatprep.subr.mxu0 %v7797
  %9356 = vmatpush2.msra.mxu0 %v7796
  %9357 = vmatprep.subr.mxu0 %v7766
  %9358 = vmatpush2.msra.mxu0 %v7765
  %9359 = vmatprep.subr.mxu0 %v7735
  %9360 = vmatpush2.msra.mxu0 %v7734
  %9361 = vmatprep.subr.mxu0 %v7409
  %9362 = vmatpush2.msra.mxu0 %v7408
  %9363 = vmatprep.subr.mxu0 %v7378
  %9364 = vmatpush2.msra.mxu0 %v7377
  %9365 = vmatprep.mubr.f32.mxu0 %v8713
  %9366 = vmatmul.mubr.f32.gmra.mxu0 %v8695
  %v9367 = vpop.f32.mrf.mxu0
  %v9368 = vadd.f32 0.0, %v9367
  %v9369 = vpop.f32.mrf.mxu0
  %v9370 = vadd.f32 0.0, %v9369
  %9371 = vmatprep.mubr.f32.mxu0 %v8716
  %9372 = vmatmul.mubr.f32.gmra.mxu0 %v8697
  %v9373 = vpop.f32.mrf.mxu0
  %v9374 = vadd.f32 0.0, %v9373
  %v9375 = vpop.f32.mrf.mxu0
  %v9376 = vadd.f32 0.0, %v9375
  %9377 = vmatprep.mubr.f32.mxu0 %v8719
  %9378 = vmatmul.mubr.f32.gmra.mxu0 %v8699
  %v9379 = vpop.f32.mrf.mxu0
  %v9380 = vadd.f32 0.0, %v9379
  %v9381 = vpop.f32.mrf.mxu0
  %v9382 = vadd.f32 0.0, %v9381
  %9383 = vmatprep.mubr.f32.mxu0 %v8722
  %9384 = vmatmul.mubr.f32.gmra.mxu0 %v8701
  %v9385 = vpop.f32.mrf.mxu0
  %v9386 = vadd.f32 0.0, %v9385
  %v9387 = vpop.f32.mrf.mxu0
  %v9388 = vadd.f32 0.0, %v9387
  %9389 = vmatprep.mubr.f32.mxu0 %v8725
  %9390 = vmatmul.mubr.f32.gmra.mxu0 %v8703
  %v9391 = vpop.f32.mrf.mxu0
  %v9392 = vadd.f32 0.0, %v9391
  %v9393 = vpop.f32.mrf.mxu0
  %v9394 = vadd.f32 0.0, %v9393
  %9395 = vmatprep.mubr.f32.mxu0 %v8728
  %9396 = vmatmul.mubr.f32.gmra.mxu0 %v8705
  %v9397 = vpop.f32.mrf.mxu0
  %v9398 = vadd.f32 0.0, %v9397
  %v9399 = vpop.f32.mrf.mxu0
  %v9400 = vadd.f32 0.0, %v9399
  %9401 = vmatprep.mubr.f32.mxu0 %v8731
  %9402 = vmatmul.mubr.f32.gmra.mxu0 %v8707
  %v9403 = vpop.f32.mrf.mxu0
  %v9404 = vadd.f32 0.0, %v9403
  %v9405 = vpop.f32.mrf.mxu0
  %v9406 = vadd.f32 0.0, %v9405
  %9407 = vmatprep.mubr.f32.mxu0 %v8734
  %9408 = vmatmul.mubr.f32.gmra.mxu0 %v8709
  %v9409 = vpop.f32.mrf.mxu0
  %v9410 = vadd.f32 0.0, %v9409
  %v9411 = vpop.f32.mrf.mxu0
  %v9412 = vadd.f32 0.0, %v9411
  %9413 = vdwg.mxu0
  %9414 = vmatprep.subr.mxu0 %v7349
  %9415 = vmatpush1.msra.mxu0 %v7348
  %9416 = vmatprep.subr.mxu0 %v7023
  %9417 = vmatpush1.msra.mxu0 %v7022
  %9418 = vmatprep.subr.mxu0 %v6992
  %9419 = vmatpush1.msra.mxu0 %v6991
  %9420 = vmatprep.subr.mxu0 %v6961
  %9421 = vmatpush1.msra.mxu0 %v6960
  %9422 = vmatprep.subr.mxu0 %v6636
  %9423 = vmatpush1.msra.mxu0 %v6635
  %9424 = vmatprep.subr.mxu0 %v6605
  %9425 = vmatpush1.msra.mxu0 %v6604
  %9426 = vmatprep.subr.mxu0 %v6574
  %9427 = vmatpush1.msra.mxu0 %v6573
  %9428 = vmatprep.subr.mxu0 %v6249
  %9429 = vmatpush1.msra.mxu0 %v6248
  %9430 = vmatprep.subr.mxu0 %v6218
  %9431 = vmatpush1.msra.mxu0 %v6217
  %9432 = vmatprep.subr.mxu0 %v6187
  %9433 = vmatpush1.msra.mxu0 %v6186
  %9434 = vmatprep.subr.mxu0 %v5861
  %9435 = vmatpush1.msra.mxu0 %v5860
  %9436 = vmatprep.subr.mxu0 %v5830
  %9437 = vmatpush1.msra.mxu0 %v5829
  %9438 = vmatprep.subr.mxu0 %v5799
  %9439 = vmatpush1.msra.mxu0 %v5798
  %9440 = vmatprep.subr.mxu0 %v5479
  %9441 = vmatpush1.msra.mxu0 %v5478
  %9442 = vmatprep.subr.mxu0 %v5447
  %9443 = vmatpush1.msra.mxu0 %v5446
  %9444 = vmatprep.subr.mxu0 %v5415
  %9445 = vmatpush1.msra.mxu0 %v5414
  %9446 = vmatprep.subr.mxu0 0.0
  %9447 = vmatpush2.msra.mxu0 0.0
  %9448 = vmatprep.subr.mxu0 0.0
  %9449 = vmatpush2.msra.mxu0 0.0
  %9450 = vmatprep.subr.mxu0 0.0
  %9451 = vmatpush2.msra.mxu0 0.0
  %9452 = vmatprep.subr.mxu0 0.0
  %9453 = vmatpush2.msra.mxu0 0.0
  %9454 = vmatprep.subr.mxu0 0.0
  %9455 = vmatpush2.msra.mxu0 0.0
  %9456 = vmatprep.subr.mxu0 %v8575
  %9457 = vmatpush2.msra.mxu0 %v8574
  %9458 = vmatprep.subr.mxu0 %v8544
  %9459 = vmatpush2.msra.mxu0 %v8543
  %9460 = vmatprep.subr.mxu0 %v8513
  %9461 = vmatpush2.msra.mxu0 %v8512
  %9462 = vmatprep.subr.mxu0 %v8187
  %9463 = vmatpush2.msra.mxu0 %v8186
  %9464 = vmatprep.subr.mxu0 %v8156
  %9465 = vmatpush2.msra.mxu0 %v8155
  %9466 = vmatprep.subr.mxu0 %v8125
  %9467 = vmatpush2.msra.mxu0 %v8124
  %9468 = vmatprep.subr.mxu0 %v7799
  %9469 = vmatpush2.msra.mxu0 %v7798
  %9470 = vmatprep.subr.mxu0 %v7768
  %9471 = vmatpush2.msra.mxu0 %v7767
  %9472 = vmatprep.subr.mxu0 %v7737
  %9473 = vmatpush2.msra.mxu0 %v7736
  %9474 = vmatprep.subr.mxu0 %v7411
  %9475 = vmatpush2.msra.mxu0 %v7410
  %9476 = vmatprep.subr.mxu0 %v7380
  %9477 = vmatpush2.msra.mxu0 %v7379
  %9478 = vmatprep.mubr.f32.mxu0 %v8713
  %9479 = vmatmul.mubr.f32.gmra.mxu0 %v8695
  %v9480 = vpop.f32.mrf.mxu0
  %v9481 = vadd.f32 0.0, %v9480
  %v9482 = vpop.f32.mrf.mxu0
  %v9483 = vadd.f32 0.0, %v9482
  %9484 = vmatprep.mubr.f32.mxu0 %v8716
  %9485 = vmatmul.mubr.f32.gmra.mxu0 %v8697
  %v9486 = vpop.f32.mrf.mxu0
  %v9487 = vadd.f32 0.0, %v9486
  %v9488 = vpop.f32.mrf.mxu0
  %v9489 = vadd.f32 0.0, %v9488
  %9490 = vmatprep.mubr.f32.mxu0 %v8719
  %9491 = vmatmul.mubr.f32.gmra.mxu0 %v8699
  %v9492 = vpop.f32.mrf.mxu0
  %v9493 = vadd.f32 0.0, %v9492
  %v9494 = vpop.f32.mrf.mxu0
  %v9495 = vadd.f32 0.0, %v9494
  %9496 = vmatprep.mubr.f32.mxu0 %v8722
  %9497 = vmatmul.mubr.f32.gmra.mxu0 %v8701
  %v9498 = vpop.f32.mrf.mxu0
  %v9499 = vadd.f32 0.0, %v9498
  %v9500 = vpop.f32.mrf.mxu0
  %v9501 = vadd.f32 0.0, %v9500
  %9502 = vmatprep.mubr.f32.mxu0 %v8725
  %9503 = vmatmul.mubr.f32.gmra.mxu0 %v8703
  %v9504 = vpop.f32.mrf.mxu0
  %v9505 = vadd.f32 0.0, %v9504
  %v9506 = vpop.f32.mrf.mxu0
  %v9507 = vadd.f32 0.0, %v9506
  %9508 = vmatprep.mubr.f32.mxu0 %v8728
  %9509 = vmatmul.mubr.f32.gmra.mxu0 %v8705
  %v9510 = vpop.f32.mrf.mxu0
  %v9511 = vadd.f32 0.0, %v9510
  %v9512 = vpop.f32.mrf.mxu0
  %v9513 = vadd.f32 0.0, %v9512
  %9514 = vmatprep.mubr.f32.mxu0 %v8731
  %9515 = vmatmul.mubr.f32.gmra.mxu0 %v8707
  %v9516 = vpop.f32.mrf.mxu0
  %v9517 = vadd.f32 0.0, %v9516
  %v9518 = vpop.f32.mrf.mxu0
  %v9519 = vadd.f32 0.0, %v9518
  %9520 = vmatprep.mubr.f32.mxu0 %v8734
  %9521 = vmatmul.mubr.f32.gmra.mxu0 %v8709
  %v9522 = vpop.f32.mrf.mxu0
  %v9523 = vadd.f32 0.0, %v9522
  %v9524 = vpop.f32.mrf.mxu0
  %v9525 = vadd.f32 0.0, %v9524
  %9526 = vdwg.mxu0
  %9527 = vmatprep.subr.mxu0 %v7351
  %9528 = vmatpush1.msra.mxu0 %v7350
  %9529 = vmatprep.subr.mxu0 %v7025
  %9530 = vmatpush1.msra.mxu0 %v7024
  %9531 = vmatprep.subr.mxu0 %v6994
  %9532 = vmatpush1.msra.mxu0 %v6993
  %9533 = vmatprep.subr.mxu0 %v6963
  %9534 = vmatpush1.msra.mxu0 %v6962
  %9535 = vmatprep.subr.mxu0 %v6638
  %9536 = vmatpush1.msra.mxu0 %v6637
  %9537 = vmatprep.subr.mxu0 %v6607
  %9538 = vmatpush1.msra.mxu0 %v6606
  %9539 = vmatprep.subr.mxu0 %v6576
  %9540 = vmatpush1.msra.mxu0 %v6575
  %9541 = vmatprep.subr.mxu0 %v6251
  %9542 = vmatpush1.msra.mxu0 %v6250
  %9543 = vmatprep.subr.mxu0 %v6220
  %9544 = vmatpush1.msra.mxu0 %v6219
  %9545 = vmatprep.subr.mxu0 %v6189
  %9546 = vmatpush1.msra.mxu0 %v6188
  %9547 = vmatprep.subr.mxu0 %v5863
  %9548 = vmatpush1.msra.mxu0 %v5862
  %9549 = vmatprep.subr.mxu0 %v5832
  %9550 = vmatpush1.msra.mxu0 %v5831
  %9551 = vmatprep.subr.mxu0 %v5801
  %9552 = vmatpush1.msra.mxu0 %v5800
  %9553 = vmatprep.subr.mxu0 %v5481
  %9554 = vmatpush1.msra.mxu0 %v5480
  %9555 = vmatprep.subr.mxu0 %v5449
  %9556 = vmatpush1.msra.mxu0 %v5448
  %9557 = vmatprep.subr.mxu0 %v5417
  %9558 = vmatpush1.msra.mxu0 %v5416
  %9559 = vmatprep.subr.mxu0 0.0
  %9560 = vmatpush2.msra.mxu0 0.0
  %9561 = vmatprep.subr.mxu0 0.0
  %9562 = vmatpush2.msra.mxu0 0.0
  %9563 = vmatprep.subr.mxu0 0.0
  %9564 = vmatpush2.msra.mxu0 0.0
  %9565 = vmatprep.subr.mxu0 0.0
  %9566 = vmatpush2.msra.mxu0 0.0
  %9567 = vmatprep.subr.mxu0 0.0
  %9568 = vmatpush2.msra.mxu0 0.0
  %9569 = vmatprep.subr.mxu0 %v8577
  %9570 = vmatpush2.msra.mxu0 %v8576
  %9571 = vmatprep.subr.mxu0 %v8546
  %9572 = vmatpush2.msra.mxu0 %v8545
  %9573 = vmatprep.subr.mxu0 %v8515
  %9574 = vmatpush2.msra.mxu0 %v8514
  %9575 = vmatprep.subr.mxu0 %v8189
  %9576 = vmatpush2.msra.mxu0 %v8188
  %9577 = vmatprep.subr.mxu0 %v8158
  %9578 = vmatpush2.msra.mxu0 %v8157
  %9579 = vmatprep.subr.mxu0 %v8127
  %9580 = vmatpush2.msra.mxu0 %v8126
  %9581 = vmatprep.subr.mxu0 %v7801
  %9582 = vmatpush2.msra.mxu0 %v7800
  %9583 = vmatprep.subr.mxu0 %v7770
  %9584 = vmatpush2.msra.mxu0 %v7769
  %9585 = vmatprep.subr.mxu0 %v7739
  %9586 = vmatpush2.msra.mxu0 %v7738
  %9587 = vmatprep.subr.mxu0 %v7413
  %9588 = vmatpush2.msra.mxu0 %v7412
  %9589 = vmatprep.subr.mxu0 %v7382
  %9590 = vmatpush2.msra.mxu0 %v7381
  %9591 = vmatprep.mubr.f32.mxu0 %v8713
  %9592 = vmatmul.mubr.f32.gmra.mxu0 %v8695
  %v9593 = vpop.f32.mrf.mxu0
  %v9594 = vadd.f32 0.0, %v9593
  %v9595 = vpop.f32.mrf.mxu0
  %v9596 = vadd.f32 0.0, %v9595
  %9597 = vmatprep.mubr.f32.mxu0 %v8716
  %9598 = vmatmul.mubr.f32.gmra.mxu0 %v8697
  %v9599 = vpop.f32.mrf.mxu0
  %v9600 = vadd.f32 0.0, %v9599
  %v9601 = vpop.f32.mrf.mxu0
  %v9602 = vadd.f32 0.0, %v9601
  %9603 = vmatprep.mubr.f32.mxu0 %v8719
  %9604 = vmatmul.mubr.f32.gmra.mxu0 %v8699
  %v9605 = vpop.f32.mrf.mxu0
  %v9606 = vadd.f32 0.0, %v9605
  %v9607 = vpop.f32.mrf.mxu0
  %v9608 = vadd.f32 0.0, %v9607
  %9609 = vmatprep.mubr.f32.mxu0 %v8722
  %9610 = vmatmul.mubr.f32.gmra.mxu0 %v8701
  %v9611 = vpop.f32.mrf.mxu0
  %v9612 = vadd.f32 0.0, %v9611
  %v9613 = vpop.f32.mrf.mxu0
  %v9614 = vadd.f32 0.0, %v9613
  %9615 = vmatprep.mubr.f32.mxu0 %v8725
  %9616 = vmatmul.mubr.f32.gmra.mxu0 %v8703
  %v9617 = vpop.f32.mrf.mxu0
  %v9618 = vadd.f32 0.0, %v9617
  %v9619 = vpop.f32.mrf.mxu0
  %v9620 = vadd.f32 0.0, %v9619
  %9621 = vmatprep.mubr.f32.mxu0 %v8728
  %9622 = vmatmul.mubr.f32.gmra.mxu0 %v8705
  %v9623 = vpop.f32.mrf.mxu0
  %v9624 = vadd.f32 0.0, %v9623
  %v9625 = vpop.f32.mrf.mxu0
  %v9626 = vadd.f32 0.0, %v9625
  %9627 = vmatprep.mubr.f32.mxu0 %v8731
  %9628 = vmatmul.mubr.f32.gmra.mxu0 %v8707
  %v9629 = vpop.f32.mrf.mxu0
  %v9630 = vadd.f32 0.0, %v9629
  %v9631 = vpop.f32.mrf.mxu0
  %v9632 = vadd.f32 0.0, %v9631
  %9633 = vmatprep.mubr.f32.mxu0 %v8734
  %9634 = vmatmul.mubr.f32.gmra.mxu0 %v8709
  %v9635 = vpop.f32.mrf.mxu0
  %v9636 = vadd.f32 0.0, %v9635
  %v9637 = vpop.f32.mrf.mxu0
  %v9638 = vadd.f32 0.0, %v9637
  %9639 = vdwg.mxu0
  %9640 = vmatprep.subr.mxu0 %v7353
  %9641 = vmatpush1.msra.mxu0 %v7352
  %9642 = vmatprep.subr.mxu0 %v7027
  %9643 = vmatpush1.msra.mxu0 %v7026
  %9644 = vmatprep.subr.mxu0 %v6996
  %9645 = vmatpush1.msra.mxu0 %v6995
  %9646 = vmatprep.subr.mxu0 %v6965
  %9647 = vmatpush1.msra.mxu0 %v6964
  %9648 = vmatprep.subr.mxu0 %v6640
  %9649 = vmatpush1.msra.mxu0 %v6639
  %9650 = vmatprep.subr.mxu0 %v6609
  %9651 = vmatpush1.msra.mxu0 %v6608
  %9652 = vmatprep.subr.mxu0 %v6578
  %9653 = vmatpush1.msra.mxu0 %v6577
  %9654 = vmatprep.subr.mxu0 %v6253
  %9655 = vmatpush1.msra.mxu0 %v6252
  %9656 = vmatprep.subr.mxu0 %v6222
  %9657 = vmatpush1.msra.mxu0 %v6221
  %9658 = vmatprep.subr.mxu0 %v6191
  %9659 = vmatpush1.msra.mxu0 %v6190
  %9660 = vmatprep.subr.mxu0 %v5865
  %9661 = vmatpush1.msra.mxu0 %v5864
  %9662 = vmatprep.subr.mxu0 %v5834
  %9663 = vmatpush1.msra.mxu0 %v5833
  %9664 = vmatprep.subr.mxu0 %v5803
  %9665 = vmatpush1.msra.mxu0 %v5802
  %9666 = vmatprep.subr.mxu0 %v5483
  %9667 = vmatpush1.msra.mxu0 %v5482
  %9668 = vmatprep.subr.mxu0 %v5451
  %9669 = vmatpush1.msra.mxu0 %v5450
  %9670 = vmatprep.subr.mxu0 %v5419
  %9671 = vmatpush1.msra.mxu0 %v5418
  %9672 = vmatprep.subr.mxu0 0.0
  %9673 = vmatpush2.msra.mxu0 0.0
  %9674 = vmatprep.subr.mxu0 0.0
  %9675 = vmatpush2.msra.mxu0 0.0
  %9676 = vmatprep.subr.mxu0 0.0
  %9677 = vmatpush2.msra.mxu0 0.0
  %9678 = vmatprep.subr.mxu0 0.0
  %9679 = vmatpush2.msra.mxu0 0.0
  %9680 = vmatprep.subr.mxu0 0.0
  %9681 = vmatpush2.msra.mxu0 0.0
  %9682 = vmatprep.subr.mxu0 %v8579
  %9683 = vmatpush2.msra.mxu0 %v8578
  %9684 = vmatprep.subr.mxu0 %v8548
  %9685 = vmatpush2.msra.mxu0 %v8547
  %9686 = vmatprep.subr.mxu0 %v8517
  %9687 = vmatpush2.msra.mxu0 %v8516
  %9688 = vmatprep.subr.mxu0 %v8191
  %9689 = vmatpush2.msra.mxu0 %v8190
  %9690 = vmatprep.subr.mxu0 %v8160
  %9691 = vmatpush2.msra.mxu0 %v8159
  %9692 = vmatprep.subr.mxu0 %v8129
  %9693 = vmatpush2.msra.mxu0 %v8128
  %9694 = vmatprep.subr.mxu0 %v7803
  %9695 = vmatpush2.msra.mxu0 %v7802
  %9696 = vmatprep.subr.mxu0 %v7772
  %9697 = vmatpush2.msra.mxu0 %v7771
  %9698 = vmatprep.subr.mxu0 %v7741
  %9699 = vmatpush2.msra.mxu0 %v7740
  %9700 = vmatprep.subr.mxu0 %v7415
  %9701 = vmatpush2.msra.mxu0 %v7414
  %9702 = vmatprep.subr.mxu0 %v7384
  %9703 = vmatpush2.msra.mxu0 %v7383
  %9704 = vmatprep.mubr.f32.mxu0 %v8713
  %9705 = vmatmul.mubr.f32.gmra.mxu0 %v8695
  %v9706 = vpop.f32.mrf.mxu0
  %v9707 = vadd.f32 0.0, %v9706
  %v9708 = vpop.f32.mrf.mxu0
  %v9709 = vadd.f32 0.0, %v9708
  %9710 = vmatprep.mubr.f32.mxu0 %v8716
  %9711 = vmatmul.mubr.f32.gmra.mxu0 %v8697
  %v9712 = vpop.f32.mrf.mxu0
  %v9713 = vadd.f32 0.0, %v9712
  %v9714 = vpop.f32.mrf.mxu0
  %v9715 = vadd.f32 0.0, %v9714
  %9716 = vmatprep.mubr.f32.mxu0 %v8719
  %9717 = vmatmul.mubr.f32.gmra.mxu0 %v8699
  %v9718 = vpop.f32.mrf.mxu0
  %v9719 = vadd.f32 0.0, %v9718
  %v9720 = vpop.f32.mrf.mxu0
  %v9721 = vadd.f32 0.0, %v9720
  %9722 = vmatprep.mubr.f32.mxu0 %v8722
  %9723 = vmatmul.mubr.f32.gmra.mxu0 %v8701
  %v9724 = vpop.f32.mrf.mxu0
  %v9725 = vadd.f32 0.0, %v9724
  %v9726 = vpop.f32.mrf.mxu0
  %v9727 = vadd.f32 0.0, %v9726
  %9728 = vmatprep.mubr.f32.mxu0 %v8725
  %9729 = vmatmul.mubr.f32.gmra.mxu0 %v8703
  %v9730 = vpop.f32.mrf.mxu0
  %v9731 = vadd.f32 0.0, %v9730
  %v9732 = vpop.f32.mrf.mxu0
  %v9733 = vadd.f32 0.0, %v9732
  %9734 = vmatprep.mubr.f32.mxu0 %v8728
  %9735 = vmatmul.mubr.f32.gmra.mxu0 %v8705
  %v9736 = vpop.f32.mrf.mxu0
  %v9737 = vadd.f32 0.0, %v9736
  %v9738 = vpop.f32.mrf.mxu0
  %v9739 = vadd.f32 0.0, %v9738
  %9740 = vmatprep.mubr.f32.mxu0 %v8731
  %9741 = vmatmul.mubr.f32.gmra.mxu0 %v8707
  %v9742 = vpop.f32.mrf.mxu0
  %v9743 = vadd.f32 0.0, %v9742
  %v9744 = vpop.f32.mrf.mxu0
  %v9745 = vadd.f32 0.0, %v9744
  %9746 = vmatprep.mubr.f32.mxu0 %v8734
  %9747 = vmatmul.mubr.f32.gmra.mxu0 %v8709
  %v9748 = vpop.f32.mrf.mxu0
  %v9749 = vadd.f32 0.0, %v9748
  %v9750 = vpop.f32.mrf.mxu0
  %v9751 = vadd.f32 0.0, %v9750
  %9752 = vdwg.mxu0
  %9753 = vmatprep.subr.mxu0 %v7355
  %9754 = vmatpush1.msra.mxu0 %v7354
  %9755 = vmatprep.subr.mxu0 %v7029
  %9756 = vmatpush1.msra.mxu0 %v7028
  %9757 = vmatprep.subr.mxu0 %v6998
  %9758 = vmatpush1.msra.mxu0 %v6997
  %9759 = vmatprep.subr.mxu0 %v6967
  %9760 = vmatpush1.msra.mxu0 %v6966
  %9761 = vmatprep.subr.mxu0 %v6642
  %9762 = vmatpush1.msra.mxu0 %v6641
  %9763 = vmatprep.subr.mxu0 %v6611
  %9764 = vmatpush1.msra.mxu0 %v6610
  %9765 = vmatprep.subr.mxu0 %v6580
  %9766 = vmatpush1.msra.mxu0 %v6579
  %9767 = vmatprep.subr.mxu0 %v6255
  %9768 = vmatpush1.msra.mxu0 %v6254
  %9769 = vmatprep.subr.mxu0 %v6224
  %9770 = vmatpush1.msra.mxu0 %v6223
  %9771 = vmatprep.subr.mxu0 %v6193
  %9772 = vmatpush1.msra.mxu0 %v6192
  %9773 = vmatprep.subr.mxu0 %v5867
  %9774 = vmatpush1.msra.mxu0 %v5866
  %9775 = vmatprep.subr.mxu0 %v5836
  %9776 = vmatpush1.msra.mxu0 %v5835
  %9777 = vmatprep.subr.mxu0 %v5805
  %9778 = vmatpush1.msra.mxu0 %v5804
  %9779 = vmatprep.subr.mxu0 %v5485
  %9780 = vmatpush1.msra.mxu0 %v5484
  %9781 = vmatprep.subr.mxu0 %v5453
  %9782 = vmatpush1.msra.mxu0 %v5452
  %9783 = vmatprep.subr.mxu0 %v5421
  %9784 = vmatpush1.msra.mxu0 %v5420
  %9785 = vmatprep.subr.mxu0 0.0
  %9786 = vmatpush2.msra.mxu0 0.0
  %9787 = vmatprep.subr.mxu0 0.0
  %9788 = vmatpush2.msra.mxu0 0.0
  %9789 = vmatprep.subr.mxu0 0.0
  %9790 = vmatpush2.msra.mxu0 0.0
  %9791 = vmatprep.subr.mxu0 0.0
  %9792 = vmatpush2.msra.mxu0 0.0
  %9793 = vmatprep.subr.mxu0 0.0
  %9794 = vmatpush2.msra.mxu0 0.0
  %9795 = vmatprep.subr.mxu0 %v8581
  %9796 = vmatpush2.msra.mxu0 %v8580
  %9797 = vmatprep.subr.mxu0 %v8550
  %9798 = vmatpush2.msra.mxu0 %v8549
  %9799 = vmatprep.subr.mxu0 %v8519
  %9800 = vmatpush2.msra.mxu0 %v8518
  %9801 = vmatprep.subr.mxu0 %v8193
  %9802 = vmatpush2.msra.mxu0 %v8192
  %9803 = vmatprep.subr.mxu0 %v8162
  %9804 = vmatpush2.msra.mxu0 %v8161
  %9805 = vmatprep.subr.mxu0 %v8131
  %9806 = vmatpush2.msra.mxu0 %v8130
  %9807 = vmatprep.subr.mxu0 %v7805
  %9808 = vmatpush2.msra.mxu0 %v7804
  %9809 = vmatprep.subr.mxu0 %v7774
  %9810 = vmatpush2.msra.mxu0 %v7773
  %9811 = vmatprep.subr.mxu0 %v7743
  %9812 = vmatpush2.msra.mxu0 %v7742
  %9813 = vmatprep.subr.mxu0 %v7417
  %9814 = vmatpush2.msra.mxu0 %v7416
  %9815 = vmatprep.subr.mxu0 %v7386
  %9816 = vmatpush2.msra.mxu0 %v7385
  %9817 = vmatprep.mubr.f32.mxu0 %v8713
  %9818 = vmatmul.mubr.f32.gmra.mxu0 %v8695
  %v9819 = vpop.f32.mrf.mxu0
  %v9820 = vadd.f32 0.0, %v9819
  %v9821 = vpop.f32.mrf.mxu0
  %v9822 = vadd.f32 0.0, %v9821
  %9823 = vmatprep.mubr.f32.mxu0 %v8716
  %9824 = vmatmul.mubr.f32.gmra.mxu0 %v8697
  %v9825 = vpop.f32.mrf.mxu0
  %v9826 = vadd.f32 0.0, %v9825
  %v9827 = vpop.f32.mrf.mxu0
  %v9828 = vadd.f32 0.0, %v9827
  %9829 = vmatprep.mubr.f32.mxu0 %v8719
  %9830 = vmatmul.mubr.f32.gmra.mxu0 %v8699
  %v9831 = vpop.f32.mrf.mxu0
  %v9832 = vadd.f32 0.0, %v9831
  %v9833 = vpop.f32.mrf.mxu0
  %v9834 = vadd.f32 0.0, %v9833
  %9835 = vmatprep.mubr.f32.mxu0 %v8722
  %9836 = vmatmul.mubr.f32.gmra.mxu0 %v8701
  %v9837 = vpop.f32.mrf.mxu0
  %v9838 = vadd.f32 0.0, %v9837
  %v9839 = vpop.f32.mrf.mxu0
  %v9840 = vadd.f32 0.0, %v9839
  %9841 = vmatprep.mubr.f32.mxu0 %v8725
  %9842 = vmatmul.mubr.f32.gmra.mxu0 %v8703
  %v9843 = vpop.f32.mrf.mxu0
  %v9844 = vadd.f32 0.0, %v9843
  %v9845 = vpop.f32.mrf.mxu0
  %v9846 = vadd.f32 0.0, %v9845
  %9847 = vmatprep.mubr.f32.mxu0 %v8728
  %9848 = vmatmul.mubr.f32.gmra.mxu0 %v8705
  %v9849 = vpop.f32.mrf.mxu0
  %v9850 = vadd.f32 0.0, %v9849
  %v9851 = vpop.f32.mrf.mxu0
  %v9852 = vadd.f32 0.0, %v9851
  %9853 = vmatprep.mubr.f32.mxu0 %v8731
  %9854 = vmatmul.mubr.f32.gmra.mxu0 %v8707
  %v9855 = vpop.f32.mrf.mxu0
  %v9856 = vadd.f32 0.0, %v9855
  %v9857 = vpop.f32.mrf.mxu0
  %v9858 = vadd.f32 0.0, %v9857
  %9859 = vmatprep.mubr.f32.mxu0 %v8734
  %9860 = vmatmul.mubr.f32.gmra.mxu0 %v8709
  %v9861 = vpop.f32.mrf.mxu0
  %v9862 = vadd.f32 0.0, %v9861
  %v9863 = vpop.f32.mrf.mxu0
  %v9864 = vadd.f32 0.0, %v9863
  %9865 = vdwg.mxu0
  %9866 = vmatprep.subr.mxu0 %v7357
  %9867 = vmatpush1.msra.mxu0 %v7356
  %9868 = vmatprep.subr.mxu0 %v7031
  %9869 = vmatpush1.msra.mxu0 %v7030
  %9870 = vmatprep.subr.mxu0 %v7000
  %9871 = vmatpush1.msra.mxu0 %v6999
  %9872 = vmatprep.subr.mxu0 %v6969
  %9873 = vmatpush1.msra.mxu0 %v6968
  %9874 = vmatprep.subr.mxu0 %v6644
  %9875 = vmatpush1.msra.mxu0 %v6643
  %9876 = vmatprep.subr.mxu0 %v6613
  %9877 = vmatpush1.msra.mxu0 %v6612
  %9878 = vmatprep.subr.mxu0 %v6582
  %9879 = vmatpush1.msra.mxu0 %v6581
  %9880 = vmatprep.subr.mxu0 %v6257
  %9881 = vmatpush1.msra.mxu0 %v6256
  %9882 = vmatprep.subr.mxu0 %v6226
  %9883 = vmatpush1.msra.mxu0 %v6225
  %9884 = vmatprep.subr.mxu0 %v6195
  %9885 = vmatpush1.msra.mxu0 %v6194
  %9886 = vmatprep.subr.mxu0 %v5869
  %9887 = vmatpush1.msra.mxu0 %v5868
  %9888 = vmatprep.subr.mxu0 %v5838
  %9889 = vmatpush1.msra.mxu0 %v5837
  %9890 = vmatprep.subr.mxu0 %v5807
  %9891 = vmatpush1.msra.mxu0 %v5806
  %9892 = vmatprep.subr.mxu0 %v5487
  %9893 = vmatpush1.msra.mxu0 %v5486
  %9894 = vmatprep.subr.mxu0 %v5455
  %9895 = vmatpush1.msra.mxu0 %v5454
  %9896 = vmatprep.subr.mxu0 %v5423
  %9897 = vmatpush1.msra.mxu0 %v5422
  %9898 = vmatprep.subr.mxu0 0.0
  %9899 = vmatpush2.msra.mxu0 0.0
  %9900 = vmatprep.subr.mxu0 0.0
  %9901 = vmatpush2.msra.mxu0 0.0
  %9902 = vmatprep.subr.mxu0 0.0
  %9903 = vmatpush2.msra.mxu0 0.0
  %9904 = vmatprep.subr.mxu0 0.0
  %9905 = vmatpush2.msra.mxu0 0.0
  %9906 = vmatprep.subr.mxu0 0.0
  %9907 = vmatpush2.msra.mxu0 0.0
  %9908 = vmatprep.subr.mxu0 %v8583
  %9909 = vmatpush2.msra.mxu0 %v8582
  %9910 = vmatprep.subr.mxu0 %v8552
  %9911 = vmatpush2.msra.mxu0 %v8551
  %9912 = vmatprep.subr.mxu0 %v8521
  %9913 = vmatpush2.msra.mxu0 %v8520
  %9914 = vmatprep.subr.mxu0 %v8195
  %9915 = vmatpush2.msra.mxu0 %v8194
  %9916 = vmatprep.subr.mxu0 %v8164
  %9917 = vmatpush2.msra.mxu0 %v8163
  %9918 = vmatprep.subr.mxu0 %v8133
  %9919 = vmatpush2.msra.mxu0 %v8132
  %9920 = vmatprep.subr.mxu0 %v7807
  %9921 = vmatpush2.msra.mxu0 %v7806
  %9922 = vmatprep.subr.mxu0 %v7776
  %9923 = vmatpush2.msra.mxu0 %v7775
  %9924 = vmatprep.subr.mxu0 %v7745
  %9925 = vmatpush2.msra.mxu0 %v7744
  %9926 = vmatprep.subr.mxu0 %v7419
  %9927 = vmatpush2.msra.mxu0 %v7418
  %9928 = vmatprep.subr.mxu0 %v7388
  %9929 = vmatpush2.msra.mxu0 %v7387
  %9930 = vmatprep.mubr.f32.mxu0 %v8713
  %9931 = vmatmul.mubr.f32.gmra.mxu0 %v8695
  %v9932 = vpop.f32.mrf.mxu0
  %v9933 = vadd.f32 0.0, %v9932
  %v9934 = vpop.f32.mrf.mxu0
  %v9935 = vadd.f32 0.0, %v9934
  %9936 = vmatprep.mubr.f32.mxu0 %v8716
  %9937 = vmatmul.mubr.f32.gmra.mxu0 %v8697
  %v9938 = vpop.f32.mrf.mxu0
  %v9939 = vadd.f32 0.0, %v9938
  %v9940 = vpop.f32.mrf.mxu0
  %v9941 = vadd.f32 0.0, %v9940
  %9942 = vmatprep.mubr.f32.mxu0 %v8719
  %9943 = vmatmul.mubr.f32.gmra.mxu0 %v8699
  %v9944 = vpop.f32.mrf.mxu0
  %v9945 = vadd.f32 0.0, %v9944
  %v9946 = vpop.f32.mrf.mxu0
  %v9947 = vadd.f32 0.0, %v9946
  %9948 = vmatprep.mubr.f32.mxu0 %v8722
  %9949 = vmatmul.mubr.f32.gmra.mxu0 %v8701
  %v9950 = vpop.f32.mrf.mxu0
  %v9951 = vadd.f32 0.0, %v9950
  %v9952 = vpop.f32.mrf.mxu0
  %v9953 = vadd.f32 0.0, %v9952
  %9954 = vmatprep.mubr.f32.mxu0 %v8725
  %9955 = vmatmul.mubr.f32.gmra.mxu0 %v8703
  %v9956 = vpop.f32.mrf.mxu0
  %v9957 = vadd.f32 0.0, %v9956
  %v9958 = vpop.f32.mrf.mxu0
  %v9959 = vadd.f32 0.0, %v9958
  %9960 = vmatprep.mubr.f32.mxu0 %v8728
  %9961 = vmatmul.mubr.f32.gmra.mxu0 %v8705
  %v9962 = vpop.f32.mrf.mxu0
  %v9963 = vadd.f32 0.0, %v9962
  %v9964 = vpop.f32.mrf.mxu0
  %v9965 = vadd.f32 0.0, %v9964
  %9966 = vmatprep.mubr.f32.mxu0 %v8731
  %9967 = vmatmul.mubr.f32.gmra.mxu0 %v8707
  %v9968 = vpop.f32.mrf.mxu0
  %v9969 = vadd.f32 0.0, %v9968
  %v9970 = vpop.f32.mrf.mxu0
  %v9971 = vadd.f32 0.0, %v9970
  %9972 = vmatprep.mubr.f32.mxu0 %v8734
  %9973 = vmatmul.mubr.f32.gmra.mxu0 %v8709
  %v9974 = vpop.f32.mrf.mxu0
  %v9975 = vadd.f32 0.0, %v9974
  %v9976 = vpop.f32.mrf.mxu0
  %v9977 = vadd.f32 0.0, %v9976
  %9978 = vdwg.mxu0
  %9979 = vmatprep.subr.mxu0 %v7359
  %9980 = vmatpush1.msra.mxu0 %v7358
  %9981 = vmatprep.subr.mxu0 %v7033
  %9982 = vmatpush1.msra.mxu0 %v7032
  %9983 = vmatprep.subr.mxu0 %v7002
  %9984 = vmatpush1.msra.mxu0 %v7001
  %9985 = vmatprep.subr.mxu0 %v6971
  %9986 = vmatpush1.msra.mxu0 %v6970
  %9987 = vmatprep.subr.mxu0 %v6646
  %9988 = vmatpush1.msra.mxu0 %v6645
  %9989 = vmatprep.subr.mxu0 %v6615
  %9990 = vmatpush1.msra.mxu0 %v6614
  %9991 = vmatprep.subr.mxu0 %v6584
  %9992 = vmatpush1.msra.mxu0 %v6583
  %9993 = vmatprep.subr.mxu0 %v6259
  %9994 = vmatpush1.msra.mxu0 %v6258
  %9995 = vmatprep.subr.mxu0 %v6228
  %9996 = vmatpush1.msra.mxu0 %v6227
  %9997 = vmatprep.subr.mxu0 %v6197
  %9998 = vmatpush1.msra.mxu0 %v6196
  %9999 = vmatprep.subr.mxu0 %v5871
  %10000 = vmatpush1.msra.mxu0 %v5870
  %10001 = vmatprep.subr.mxu0 %v5840
  %10002 = vmatpush1.msra.mxu0 %v5839
  %10003 = vmatprep.subr.mxu0 %v5809
  %10004 = vmatpush1.msra.mxu0 %v5808
  %10005 = vmatprep.subr.mxu0 %v5489
  %10006 = vmatpush1.msra.mxu0 %v5488
  %10007 = vmatprep.subr.mxu0 %v5457
  %10008 = vmatpush1.msra.mxu0 %v5456
  %10009 = vmatprep.subr.mxu0 %v5425
  %10010 = vmatpush1.msra.mxu0 %v5424
  %10011 = vmatprep.subr.mxu0 0.0
  %10012 = vmatpush2.msra.mxu0 0.0
  %10013 = vmatprep.subr.mxu0 0.0
  %10014 = vmatpush2.msra.mxu0 0.0
  %10015 = vmatprep.subr.mxu0 0.0
  %10016 = vmatpush2.msra.mxu0 0.0
  %10017 = vmatprep.subr.mxu0 0.0
  %10018 = vmatpush2.msra.mxu0 0.0
  %10019 = vmatprep.subr.mxu0 0.0
  %10020 = vmatpush2.msra.mxu0 0.0
  %10021 = vmatprep.subr.mxu0 %v8585
  %10022 = vmatpush2.msra.mxu0 %v8584
  %10023 = vmatprep.subr.mxu0 %v8554
  %10024 = vmatpush2.msra.mxu0 %v8553
  %10025 = vmatprep.subr.mxu0 %v8523
  %10026 = vmatpush2.msra.mxu0 %v8522
  %10027 = vmatprep.subr.mxu0 %v8197
  %10028 = vmatpush2.msra.mxu0 %v8196
  %10029 = vmatprep.subr.mxu0 %v8166
  %10030 = vmatpush2.msra.mxu0 %v8165
  %10031 = vmatprep.subr.mxu0 %v8135
  %10032 = vmatpush2.msra.mxu0 %v8134
  %10033 = vmatprep.subr.mxu0 %v7809
  %10034 = vmatpush2.msra.mxu0 %v7808
  %10035 = vmatprep.subr.mxu0 %v7778
  %10036 = vmatpush2.msra.mxu0 %v7777
  %10037 = vmatprep.subr.mxu0 %v7747
  %10038 = vmatpush2.msra.mxu0 %v7746
  %10039 = vmatprep.subr.mxu0 %v7421
  %10040 = vmatpush2.msra.mxu0 %v7420
  %10041 = vmatprep.subr.mxu0 %v7390
  %10042 = vmatpush2.msra.mxu0 %v7389
  %10043 = vmatprep.mubr.f32.mxu0 %v8713
  %10044 = vmatmul.mubr.f32.gmra.mxu0 %v8695
  %v10045 = vpop.f32.mrf.mxu0
  %v10046 = vadd.f32 0.0, %v10045
  %v10047 = vpop.f32.mrf.mxu0
  %v10048 = vadd.f32 0.0, %v10047
  %10049 = vmatprep.mubr.f32.mxu0 %v8716
  %10050 = vmatmul.mubr.f32.gmra.mxu0 %v8697
  %v10051 = vpop.f32.mrf.mxu0
  %v10052 = vadd.f32 0.0, %v10051
  %v10053 = vpop.f32.mrf.mxu0
  %v10054 = vadd.f32 0.0, %v10053
  %10055 = vmatprep.mubr.f32.mxu0 %v8719
  %10056 = vmatmul.mubr.f32.gmra.mxu0 %v8699
  %v10057 = vpop.f32.mrf.mxu0
  %v10058 = vadd.f32 0.0, %v10057
  %v10059 = vpop.f32.mrf.mxu0
  %v10060 = vadd.f32 0.0, %v10059
  %10061 = vmatprep.mubr.f32.mxu0 %v8722
  %10062 = vmatmul.mubr.f32.gmra.mxu0 %v8701
  %v10063 = vpop.f32.mrf.mxu0
  %v10064 = vadd.f32 0.0, %v10063
  %v10065 = vpop.f32.mrf.mxu0
  %v10066 = vadd.f32 0.0, %v10065
  %10067 = vmatprep.mubr.f32.mxu0 %v8725
  %10068 = vmatmul.mubr.f32.gmra.mxu0 %v8703
  %v10069 = vpop.f32.mrf.mxu0
  %v10070 = vadd.f32 0.0, %v10069
  %v10071 = vpop.f32.mrf.mxu0
  %v10072 = vadd.f32 0.0, %v10071
  %10073 = vmatprep.mubr.f32.mxu0 %v8728
  %10074 = vmatmul.mubr.f32.gmra.mxu0 %v8705
  %v10075 = vpop.f32.mrf.mxu0
  %v10076 = vadd.f32 0.0, %v10075
  %v10077 = vpop.f32.mrf.mxu0
  %v10078 = vadd.f32 0.0, %v10077
  %10079 = vmatprep.mubr.f32.mxu0 %v8731
  %10080 = vmatmul.mubr.f32.gmra.mxu0 %v8707
  %v10081 = vpop.f32.mrf.mxu0
  %v10082 = vadd.f32 0.0, %v10081
  %v10083 = vpop.f32.mrf.mxu0
  %v10084 = vadd.f32 0.0, %v10083
  %10085 = vmatprep.mubr.f32.mxu0 %v8734
  %10086 = vmatmul.mubr.f32.gmra.mxu0 %v8709
  %v10087 = vpop.f32.mrf.mxu0
  %v10088 = vadd.f32 0.0, %v10087
  %v10089 = vpop.f32.mrf.mxu0
  %v10090 = vadd.f32 0.0, %v10089
  %10091 = vdwg.mxu0
  %10092 = vmatprep.subr.mxu0 %v7361
  %10093 = vmatpush1.msra.mxu0 %v7360
  %10094 = vmatprep.subr.mxu0 %v7035
  %10095 = vmatpush1.msra.mxu0 %v7034
  %10096 = vmatprep.subr.mxu0 %v7004
  %10097 = vmatpush1.msra.mxu0 %v7003
  %10098 = vmatprep.subr.mxu0 %v6973
  %10099 = vmatpush1.msra.mxu0 %v6972
  %10100 = vmatprep.subr.mxu0 %v6648
  %10101 = vmatpush1.msra.mxu0 %v6647
  %10102 = vmatprep.subr.mxu0 %v6617
  %10103 = vmatpush1.msra.mxu0 %v6616
  %10104 = vmatprep.subr.mxu0 %v6586
  %10105 = vmatpush1.msra.mxu0 %v6585
  %10106 = vmatprep.subr.mxu0 %v6261
  %10107 = vmatpush1.msra.mxu0 %v6260
  %10108 = vmatprep.subr.mxu0 %v6230
  %10109 = vmatpush1.msra.mxu0 %v6229
  %10110 = vmatprep.subr.mxu0 %v6199
  %10111 = vmatpush1.msra.mxu0 %v6198
  %10112 = vmatprep.subr.mxu0 %v5873
  %10113 = vmatpush1.msra.mxu0 %v5872
  %10114 = vmatprep.subr.mxu0 %v5842
  %10115 = vmatpush1.msra.mxu0 %v5841
  %10116 = vmatprep.subr.mxu0 %v5811
  %10117 = vmatpush1.msra.mxu0 %v5810
  %10118 = vmatprep.subr.mxu0 %v5491
  %10119 = vmatpush1.msra.mxu0 %v5490
  %10120 = vmatprep.subr.mxu0 %v5459
  %10121 = vmatpush1.msra.mxu0 %v5458
  %10122 = vmatprep.subr.mxu0 %v5427
  %10123 = vmatpush1.msra.mxu0 %v5426
  %10124 = vmatprep.subr.mxu0 0.0
  %10125 = vmatpush2.msra.mxu0 0.0
  %10126 = vmatprep.subr.mxu0 0.0
  %10127 = vmatpush2.msra.mxu0 0.0
  %10128 = vmatprep.subr.mxu0 0.0
  %10129 = vmatpush2.msra.mxu0 0.0
  %10130 = vmatprep.subr.mxu0 0.0
  %10131 = vmatpush2.msra.mxu0 0.0
  %10132 = vmatprep.subr.mxu0 0.0
  %10133 = vmatpush2.msra.mxu0 0.0
  %10134 = vmatprep.subr.mxu0 %v8587
  %10135 = vmatpush2.msra.mxu0 %v8586
  %10136 = vmatprep.subr.mxu0 %v8556
  %10137 = vmatpush2.msra.mxu0 %v8555
  %10138 = vmatprep.subr.mxu0 %v8525
  %10139 = vmatpush2.msra.mxu0 %v8524
  %10140 = vmatprep.subr.mxu0 %v8199
  %10141 = vmatpush2.msra.mxu0 %v8198
  %10142 = vmatprep.subr.mxu0 %v8168
  %10143 = vmatpush2.msra.mxu0 %v8167
  %10144 = vmatprep.subr.mxu0 %v8137
  %10145 = vmatpush2.msra.mxu0 %v8136
  %10146 = vmatprep.subr.mxu0 %v7811
  %10147 = vmatpush2.msra.mxu0 %v7810
  %10148 = vmatprep.subr.mxu0 %v7780
  %10149 = vmatpush2.msra.mxu0 %v7779
  %10150 = vmatprep.subr.mxu0 %v7749
  %10151 = vmatpush2.msra.mxu0 %v7748
  %10152 = vmatprep.subr.mxu0 %v7423
  %10153 = vmatpush2.msra.mxu0 %v7422
  %10154 = vmatprep.subr.mxu0 %v7392
  %10155 = vmatpush2.msra.mxu0 %v7391
  %10156 = vmatprep.mubr.f32.mxu0 %v8713
  %10157 = vmatmul.mubr.f32.gmra.mxu0 %v8695
  %v10158 = vpop.f32.mrf.mxu0
  %v10159 = vadd.f32 0.0, %v10158
  %v10160 = vpop.f32.mrf.mxu0
  %v10161 = vadd.f32 0.0, %v10160
  %10162 = vmatprep.mubr.f32.mxu0 %v8716
  %10163 = vmatmul.mubr.f32.gmra.mxu0 %v8697
  %v10164 = vpop.f32.mrf.mxu0
  %v10165 = vadd.f32 0.0, %v10164
  %v10166 = vpop.f32.mrf.mxu0
  %v10167 = vadd.f32 0.0, %v10166
  %10168 = vmatprep.mubr.f32.mxu0 %v8719
  %10169 = vmatmul.mubr.f32.gmra.mxu0 %v8699
  %v10170 = vpop.f32.mrf.mxu0
  %v10171 = vadd.f32 0.0, %v10170
  %v10172 = vpop.f32.mrf.mxu0
  %v10173 = vadd.f32 0.0, %v10172
  %10174 = vmatprep.mubr.f32.mxu0 %v8722
  %10175 = vmatmul.mubr.f32.gmra.mxu0 %v8701
  %v10176 = vpop.f32.mrf.mxu0
  %v10177 = vadd.f32 0.0, %v10176
  %v10178 = vpop.f32.mrf.mxu0
  %v10179 = vadd.f32 0.0, %v10178
  %10180 = vmatprep.mubr.f32.mxu0 %v8725
  %10181 = vmatmul.mubr.f32.gmra.mxu0 %v8703
  %v10182 = vpop.f32.mrf.mxu0
  %v10183 = vadd.f32 0.0, %v10182
  %v10184 = vpop.f32.mrf.mxu0
  %v10185 = vadd.f32 0.0, %v10184
  %10186 = vmatprep.mubr.f32.mxu0 %v8728
  %10187 = vmatmul.mubr.f32.gmra.mxu0 %v8705
  %v10188 = vpop.f32.mrf.mxu0
  %v10189 = vadd.f32 0.0, %v10188
  %v10190 = vpop.f32.mrf.mxu0
  %v10191 = vadd.f32 0.0, %v10190
  %10192 = vmatprep.mubr.f32.mxu0 %v8731
  %10193 = vmatmul.mubr.f32.gmra.mxu0 %v8707
  %v10194 = vpop.f32.mrf.mxu0
  %v10195 = vadd.f32 0.0, %v10194
  %v10196 = vpop.f32.mrf.mxu0
  %v10197 = vadd.f32 0.0, %v10196
  %10198 = vmatprep.mubr.f32.mxu0 %v8734
  %10199 = vmatmul.mubr.f32.gmra.mxu0 %v8709
  %v10200 = vpop.f32.mrf.mxu0
  %v10201 = vadd.f32 0.0, %v10200
  %v10202 = vpop.f32.mrf.mxu0
  %v10203 = vadd.f32 0.0, %v10202
  %10204 = vdwg.mxu0
  %10205 = vmatprep.subr.mxu0 %v7363
  %10206 = vmatpush1.msra.mxu0 %v7362
  %10207 = vmatprep.subr.mxu0 %v7037
  %10208 = vmatpush1.msra.mxu0 %v7036
  %10209 = vmatprep.subr.mxu0 %v7006
  %10210 = vmatpush1.msra.mxu0 %v7005
  %10211 = vmatprep.subr.mxu0 %v6975
  %10212 = vmatpush1.msra.mxu0 %v6974
  %10213 = vmatprep.subr.mxu0 %v6650
  %10214 = vmatpush1.msra.mxu0 %v6649
  %10215 = vmatprep.subr.mxu0 %v6619
  %10216 = vmatpush1.msra.mxu0 %v6618
  %10217 = vmatprep.subr.mxu0 %v6588
  %10218 = vmatpush1.msra.mxu0 %v6587
  %10219 = vmatprep.subr.mxu0 %v6263
  %10220 = vmatpush1.msra.mxu0 %v6262
  %10221 = vmatprep.subr.mxu0 %v6232
  %10222 = vmatpush1.msra.mxu0 %v6231
  %10223 = vmatprep.subr.mxu0 %v6201
  %10224 = vmatpush1.msra.mxu0 %v6200
  %10225 = vmatprep.subr.mxu0 %v5875
  %10226 = vmatpush1.msra.mxu0 %v5874
  %10227 = vmatprep.subr.mxu0 %v5844
  %10228 = vmatpush1.msra.mxu0 %v5843
  %10229 = vmatprep.subr.mxu0 %v5813
  %10230 = vmatpush1.msra.mxu0 %v5812
  %10231 = vmatprep.subr.mxu0 %v5493
  %10232 = vmatpush1.msra.mxu0 %v5492
  %10233 = vmatprep.subr.mxu0 %v5461
  %10234 = vmatpush1.msra.mxu0 %v5460
  %10235 = vmatprep.subr.mxu0 %v5429
  %10236 = vmatpush1.msra.mxu0 %v5428
  %10237 = vmatprep.subr.mxu0 0.0
  %10238 = vmatpush2.msra.mxu0 0.0
  %10239 = vmatprep.subr.mxu0 0.0
  %10240 = vmatpush2.msra.mxu0 0.0
  %10241 = vmatprep.subr.mxu0 0.0
  %10242 = vmatpush2.msra.mxu0 0.0
  %10243 = vmatprep.subr.mxu0 0.0
  %10244 = vmatpush2.msra.mxu0 0.0
  %10245 = vmatprep.subr.mxu0 0.0
  %10246 = vmatpush2.msra.mxu0 0.0
  %10247 = vmatprep.subr.mxu0 %v8589
  %10248 = vmatpush2.msra.mxu0 %v8588
  %10249 = vmatprep.subr.mxu0 %v8558
  %10250 = vmatpush2.msra.mxu0 %v8557
  %10251 = vmatprep.subr.mxu0 %v8527
  %10252 = vmatpush2.msra.mxu0 %v8526
  %10253 = vmatprep.subr.mxu0 %v8201
  %10254 = vmatpush2.msra.mxu0 %v8200
  %10255 = vmatprep.subr.mxu0 %v8170
  %10256 = vmatpush2.msra.mxu0 %v8169
  %10257 = vmatprep.subr.mxu0 %v8139
  %10258 = vmatpush2.msra.mxu0 %v8138
  %10259 = vmatprep.subr.mxu0 %v7813
  %10260 = vmatpush2.msra.mxu0 %v7812
  %10261 = vmatprep.subr.mxu0 %v7782
  %10262 = vmatpush2.msra.mxu0 %v7781
  %10263 = vmatprep.subr.mxu0 %v7751
  %10264 = vmatpush2.msra.mxu0 %v7750
  %10265 = vmatprep.subr.mxu0 %v7425
  %10266 = vmatpush2.msra.mxu0 %v7424
  %10267 = vmatprep.subr.mxu0 %v7394
  %10268 = vmatpush2.msra.mxu0 %v7393
  %10269 = vmatprep.mubr.f32.mxu0 %v8713
  %10270 = vmatmul.mubr.f32.gmra.mxu0 %v8695
  %v10271 = vpop.f32.mrf.mxu0
  %v10272 = vadd.f32 0.0, %v10271
  %v10273 = vpop.f32.mrf.mxu0
  %v10274 = vadd.f32 0.0, %v10273
  %10275 = vmatprep.mubr.f32.mxu0 %v8716
  %10276 = vmatmul.mubr.f32.gmra.mxu0 %v8697
  %v10277 = vpop.f32.mrf.mxu0
  %v10278 = vadd.f32 0.0, %v10277
  %v10279 = vpop.f32.mrf.mxu0
  %v10280 = vadd.f32 0.0, %v10279
  %10281 = vmatprep.mubr.f32.mxu0 %v8719
  %10282 = vmatmul.mubr.f32.gmra.mxu0 %v8699
  %v10283 = vpop.f32.mrf.mxu0
  %v10284 = vadd.f32 0.0, %v10283
  %v10285 = vpop.f32.mrf.mxu0
  %v10286 = vadd.f32 0.0, %v10285
  %10287 = vmatprep.mubr.f32.mxu0 %v8722
  %10288 = vmatmul.mubr.f32.gmra.mxu0 %v8701
  %v10289 = vpop.f32.mrf.mxu0
  %v10290 = vadd.f32 0.0, %v10289
  %v10291 = vpop.f32.mrf.mxu0
  %v10292 = vadd.f32 0.0, %v10291
  %10293 = vmatprep.mubr.f32.mxu0 %v8725
  %10294 = vmatmul.mubr.f32.gmra.mxu0 %v8703
  %v10295 = vpop.f32.mrf.mxu0
  %v10296 = vadd.f32 0.0, %v10295
  %v10297 = vpop.f32.mrf.mxu0
  %v10298 = vadd.f32 0.0, %v10297
  %10299 = vmatprep.mubr.f32.mxu0 %v8728
  %10300 = vmatmul.mubr.f32.gmra.mxu0 %v8705
  %v10301 = vpop.f32.mrf.mxu0
  %v10302 = vadd.f32 0.0, %v10301
  %v10303 = vpop.f32.mrf.mxu0
  %v10304 = vadd.f32 0.0, %v10303
  %10305 = vmatprep.mubr.f32.mxu0 %v8731
  %10306 = vmatmul.mubr.f32.gmra.mxu0 %v8707
  %v10307 = vpop.f32.mrf.mxu0
  %v10308 = vadd.f32 0.0, %v10307
  %v10309 = vpop.f32.mrf.mxu0
  %v10310 = vadd.f32 0.0, %v10309
  %10311 = vmatprep.mubr.f32.mxu0 %v8734
  %10312 = vmatmul.mubr.f32.gmra.mxu0 %v8709
  %v10313 = vpop.f32.mrf.mxu0
  %v10314 = vadd.f32 0.0, %v10313
  %v10315 = vpop.f32.mrf.mxu0
  %v10316 = vadd.f32 0.0, %v10315
  %10317 = vdwg.mxu0
  %10318 = vmatprep.subr.mxu0 %v7365
  %10319 = vmatpush1.msra.mxu0 %v7364
  %10320 = vmatprep.subr.mxu0 %v7039
  %10321 = vmatpush1.msra.mxu0 %v7038
  %10322 = vmatprep.subr.mxu0 %v7008
  %10323 = vmatpush1.msra.mxu0 %v7007
  %10324 = vmatprep.subr.mxu0 %v6977
  %10325 = vmatpush1.msra.mxu0 %v6976
  %10326 = vmatprep.subr.mxu0 %v6652
  %10327 = vmatpush1.msra.mxu0 %v6651
  %10328 = vmatprep.subr.mxu0 %v6621
  %10329 = vmatpush1.msra.mxu0 %v6620
  %10330 = vmatprep.subr.mxu0 %v6590
  %10331 = vmatpush1.msra.mxu0 %v6589
  %10332 = vmatprep.subr.mxu0 %v6265
  %10333 = vmatpush1.msra.mxu0 %v6264
  %10334 = vmatprep.subr.mxu0 %v6234
  %10335 = vmatpush1.msra.mxu0 %v6233
  %10336 = vmatprep.subr.mxu0 %v6203
  %10337 = vmatpush1.msra.mxu0 %v6202
  %10338 = vmatprep.subr.mxu0 %v5877
  %10339 = vmatpush1.msra.mxu0 %v5876
  %10340 = vmatprep.subr.mxu0 %v5846
  %10341 = vmatpush1.msra.mxu0 %v5845
  %10342 = vmatprep.subr.mxu0 %v5815
  %10343 = vmatpush1.msra.mxu0 %v5814
  %10344 = vmatprep.subr.mxu0 %v5495
  %10345 = vmatpush1.msra.mxu0 %v5494
  %10346 = vmatprep.subr.mxu0 %v5463
  %10347 = vmatpush1.msra.mxu0 %v5462
  %10348 = vmatprep.subr.mxu0 %v5431
  %10349 = vmatpush1.msra.mxu0 %v5430
  %10350 = vmatprep.subr.mxu0 0.0
  %10351 = vmatpush2.msra.mxu0 0.0
  %10352 = vmatprep.subr.mxu0 0.0
  %10353 = vmatpush2.msra.mxu0 0.0
  %10354 = vmatprep.subr.mxu0 0.0
  %10355 = vmatpush2.msra.mxu0 0.0
  %10356 = vmatprep.subr.mxu0 0.0
  %10357 = vmatpush2.msra.mxu0 0.0
  %10358 = vmatprep.subr.mxu0 0.0
  %10359 = vmatpush2.msra.mxu0 0.0
  %10360 = vmatprep.subr.mxu0 %v8591
  %10361 = vmatpush2.msra.mxu0 %v8590
  %10362 = vmatprep.subr.mxu0 %v8560
  %10363 = vmatpush2.msra.mxu0 %v8559
  %10364 = vmatprep.subr.mxu0 %v8529
  %10365 = vmatpush2.msra.mxu0 %v8528
  %10366 = vmatprep.subr.mxu0 %v8203
  %10367 = vmatpush2.msra.mxu0 %v8202
  %10368 = vmatprep.subr.mxu0 %v8172
  %10369 = vmatpush2.msra.mxu0 %v8171
  %10370 = vmatprep.subr.mxu0 %v8141
  %10371 = vmatpush2.msra.mxu0 %v8140
  %10372 = vmatprep.subr.mxu0 %v7815
  %10373 = vmatpush2.msra.mxu0 %v7814
  %10374 = vmatprep.subr.mxu0 %v7784
  %10375 = vmatpush2.msra.mxu0 %v7783
  %10376 = vmatprep.subr.mxu0 %v7753
  %10377 = vmatpush2.msra.mxu0 %v7752
  %10378 = vmatprep.subr.mxu0 %v7427
  %10379 = vmatpush2.msra.mxu0 %v7426
  %10380 = vmatprep.subr.mxu0 %v7396
  %10381 = vmatpush2.msra.mxu0 %v7395
  %10382 = vmatprep.mubr.f32.mxu0 %v8713
  %10383 = vmatmul.mubr.f32.gmra.mxu0 %v8695
  %v10384 = vpop.f32.mrf.mxu0
  %v10385 = vadd.f32 0.0, %v10384
  %v10386 = vpop.f32.mrf.mxu0
  %v10387 = vadd.f32 0.0, %v10386
  %10388 = vmatprep.mubr.f32.mxu0 %v8716
  %10389 = vmatmul.mubr.f32.gmra.mxu0 %v8697
  %v10390 = vpop.f32.mrf.mxu0
  %v10391 = vadd.f32 0.0, %v10390
  %v10392 = vpop.f32.mrf.mxu0
  %v10393 = vadd.f32 0.0, %v10392
  %10394 = vmatprep.mubr.f32.mxu0 %v8719
  %10395 = vmatmul.mubr.f32.gmra.mxu0 %v8699
  %v10396 = vpop.f32.mrf.mxu0
  %v10397 = vadd.f32 0.0, %v10396
  %v10398 = vpop.f32.mrf.mxu0
  %v10399 = vadd.f32 0.0, %v10398
  %10400 = vmatprep.mubr.f32.mxu0 %v8722
  %10401 = vmatmul.mubr.f32.gmra.mxu0 %v8701
  %v10402 = vpop.f32.mrf.mxu0
  %v10403 = vadd.f32 0.0, %v10402
  %v10404 = vpop.f32.mrf.mxu0
  %v10405 = vadd.f32 0.0, %v10404
  %10406 = vmatprep.mubr.f32.mxu0 %v8725
  %10407 = vmatmul.mubr.f32.gmra.mxu0 %v8703
  %v10408 = vpop.f32.mrf.mxu0
  %v10409 = vadd.f32 0.0, %v10408
  %v10410 = vpop.f32.mrf.mxu0
  %v10411 = vadd.f32 0.0, %v10410
  %10412 = vmatprep.mubr.f32.mxu0 %v8728
  %10413 = vmatmul.mubr.f32.gmra.mxu0 %v8705
  %v10414 = vpop.f32.mrf.mxu0
  %v10415 = vadd.f32 0.0, %v10414
  %v10416 = vpop.f32.mrf.mxu0
  %v10417 = vadd.f32 0.0, %v10416
  %10418 = vmatprep.mubr.f32.mxu0 %v8731
  %10419 = vmatmul.mubr.f32.gmra.mxu0 %v8707
  %v10420 = vpop.f32.mrf.mxu0
  %v10421 = vadd.f32 0.0, %v10420
  %v10422 = vpop.f32.mrf.mxu0
  %v10423 = vadd.f32 0.0, %v10422
  %10424 = vmatprep.mubr.f32.mxu0 %v8734
  %10425 = vmatmul.mubr.f32.gmra.mxu0 %v8709
  %v10426 = vpop.f32.mrf.mxu0
  %v10427 = vadd.f32 0.0, %v10426
  %v10428 = vpop.f32.mrf.mxu0
  %v10429 = vadd.f32 0.0, %v10428
  %10430 = vdwg.mxu0
  %10431 = vmatprep.subr.mxu0 %v7528
  %10432 = vmatpush1.msra.mxu0 %v7366
  %10433 = vmatprep.subr.mxu0 %v7142
  %10434 = vmatpush1.msra.mxu0 %v7040
  %10435 = vmatprep.subr.mxu0 %v7141
  %10436 = vmatpush1.msra.mxu0 %v7009
  %10437 = vmatprep.subr.mxu0 %v7140
  %10438 = vmatpush1.msra.mxu0 %v6978
  %10439 = vmatprep.subr.mxu0 %v6755
  %10440 = vmatpush1.msra.mxu0 %v6653
  %10441 = vmatprep.subr.mxu0 %v6754
  %10442 = vmatpush1.msra.mxu0 %v6622
  %10443 = vmatprep.subr.mxu0 %v6753
  %10444 = vmatpush1.msra.mxu0 %v6591
  %10445 = vmatprep.subr.mxu0 %v6368
  %10446 = vmatpush1.msra.mxu0 %v6266
  %10447 = vmatprep.subr.mxu0 %v6367
  %10448 = vmatpush1.msra.mxu0 %v6235
  %10449 = vmatprep.subr.mxu0 %v6366
  %10450 = vmatpush1.msra.mxu0 %v6204
  %10451 = vmatprep.subr.mxu0 %v5980
  %10452 = vmatpush1.msra.mxu0 %v5878
  %10453 = vmatprep.subr.mxu0 %v5979
  %10454 = vmatpush1.msra.mxu0 %v5847
  %10455 = vmatprep.subr.mxu0 %v5978
  %10456 = vmatpush1.msra.mxu0 %v5816
  %10457 = vmatprep.subr.mxu0 %v5497
  %10458 = vmatpush1.msra.mxu0 %v5496
  %10459 = vmatprep.subr.mxu0 %v5465
  %10460 = vmatpush1.msra.mxu0 %v5464
  %10461 = vmatprep.subr.mxu0 %v5433
  %10462 = vmatpush1.msra.mxu0 %v5432
  %10463 = vmatprep.subr.mxu0 0.0
  %10464 = vmatpush2.msra.mxu0 0.0
  %10465 = vmatprep.subr.mxu0 0.0
  %10466 = vmatpush2.msra.mxu0 0.0
  %10467 = vmatprep.subr.mxu0 0.0
  %10468 = vmatpush2.msra.mxu0 0.0
  %10469 = vmatprep.subr.mxu0 0.0
  %10470 = vmatpush2.msra.mxu0 0.0
  %10471 = vmatprep.subr.mxu0 0.0
  %10472 = vmatpush2.msra.mxu0 0.0
  %10473 = vmatprep.subr.mxu0 %v8694
  %10474 = vmatpush2.msra.mxu0 %v8592
  %10475 = vmatprep.subr.mxu0 %v8693
  %10476 = vmatpush2.msra.mxu0 %v8561
  %10477 = vmatprep.subr.mxu0 %v8692
  %10478 = vmatpush2.msra.mxu0 %v8530
  %10479 = vmatprep.subr.mxu0 %v8306
  %10480 = vmatpush2.msra.mxu0 %v8204
  %10481 = vmatprep.subr.mxu0 %v8305
  %10482 = vmatpush2.msra.mxu0 %v8173
  %10483 = vmatprep.subr.mxu0 %v8304
  %10484 = vmatpush2.msra.mxu0 %v8142
  %10485 = vmatprep.subr.mxu0 %v7918
  %10486 = vmatpush2.msra.mxu0 %v7816
  %10487 = vmatprep.subr.mxu0 %v7917
  %10488 = vmatpush2.msra.mxu0 %v7785
  %10489 = vmatprep.subr.mxu0 %v7916
  %10490 = vmatpush2.msra.mxu0 %v7754
  %10491 = vmatprep.subr.mxu0 %v7530
  %10492 = vmatpush2.msra.mxu0 %v7428
  %10493 = vmatprep.subr.mxu0 %v7529
  %10494 = vmatpush2.msra.mxu0 %v7397
  %10495 = vmatprep.mubr.f32.mxu0 %v8713
  %10496 = vmatmul.mubr.f32.gmra.mxu0 %v8695
  %v10497 = vpop.f32.mrf.mxu0
  %v10498 = vadd.f32 0.0, %v10497
  %v10499 = vpop.f32.mrf.mxu0
  %v10500 = vadd.f32 0.0, %v10499
  %10501 = vmatprep.mubr.f32.mxu0 %v8716
  %10502 = vmatmul.mubr.f32.gmra.mxu0 %v8697
  %v10503 = vpop.f32.mrf.mxu0
  %v10504 = vadd.f32 0.0, %v10503
  %v10505 = vpop.f32.mrf.mxu0
  %v10506 = vadd.f32 0.0, %v10505
  %10507 = vmatprep.mubr.f32.mxu0 %v8719
  %10508 = vmatmul.mubr.f32.gmra.mxu0 %v8699
  %v10509 = vpop.f32.mrf.mxu0
  %v10510 = vadd.f32 0.0, %v10509
  %v10511 = vpop.f32.mrf.mxu0
  %v10512 = vadd.f32 0.0, %v10511
  %10513 = vmatprep.mubr.f32.mxu0 %v8722
  %10514 = vmatmul.mubr.f32.gmra.mxu0 %v8701
  %v10515 = vpop.f32.mrf.mxu0
  %v10516 = vadd.f32 0.0, %v10515
  %v10517 = vpop.f32.mrf.mxu0
  %v10518 = vadd.f32 0.0, %v10517
  %10519 = vmatprep.mubr.f32.mxu0 %v8725
  %10520 = vmatmul.mubr.f32.gmra.mxu0 %v8703
  %v10521 = vpop.f32.mrf.mxu0
  %v10522 = vadd.f32 0.0, %v10521
  %v10523 = vpop.f32.mrf.mxu0
  %v10524 = vadd.f32 0.0, %v10523
  %10525 = vmatprep.mubr.f32.mxu0 %v8728
  %10526 = vmatmul.mubr.f32.gmra.mxu0 %v8705
  %v10527 = vpop.f32.mrf.mxu0
  %v10528 = vadd.f32 0.0, %v10527
  %v10529 = vpop.f32.mrf.mxu0
  %v10530 = vadd.f32 0.0, %v10529
  %10531 = vmatprep.mubr.f32.mxu0 %v8731
  %10532 = vmatmul.mubr.f32.gmra.mxu0 %v8707
  %v10533 = vpop.f32.mrf.mxu0
  %v10534 = vadd.f32 0.0, %v10533
  %v10535 = vpop.f32.mrf.mxu0
  %v10536 = vadd.f32 0.0, %v10535
  %10537 = vmatprep.mubr.f32.mxu0 %v8734
  %10538 = vmatmul.mubr.f32.gmra.mxu0 %v8709
  %v10539 = vpop.f32.mrf.mxu0
  %v10540 = vadd.f32 0.0, %v10539
  %v10541 = vpop.f32.mrf.mxu0
  %v10542 = vadd.f32 0.0, %v10541
  %10543 = vdwg.mxu0
  %v10544 = vmax.f32 %v8803, %v8815
  %v10545 = vmax.f32 %v8805, %v8817
  %v10546 = vmax.f32 %v8916, %v8928
  %v10547 = vmax.f32 %v8918, %v8930
  %v10548 = vmax.f32 %v9029, %v9041
  %v10549 = vmax.f32 %v9031, %v9043
  %v10550 = vmax.f32 %v9142, %v9154
  %v10551 = vmax.f32 %v9144, %v9156
  %v10552 = vmax.f32 %v9255, %v9267
  %v10553 = vmax.f32 %v9257, %v9269
  %v10554 = vmax.f32 %v9368, %v9380
  %v10555 = vmax.f32 %v9370, %v9382
  %v10556 = vmax.f32 %v9481, %v9493
  %v10557 = vmax.f32 %v9483, %v9495
  %v10558 = vmax.f32 %v9594, %v9606
  %v10559 = vmax.f32 %v9596, %v9608
  %v10560 = vmax.f32 %v9707, %v9719
  %v10561 = vmax.f32 %v9709, %v9721
  %v10562 = vmax.f32 %v9820, %v9832
  %v10563 = vmax.f32 %v9822, %v9834
  %v10564 = vmax.f32 %v9933, %v9945
  %v10565 = vmax.f32 %v9935, %v9947
  %v10566 = vmax.f32 %v10046, %v10058
  %v10567 = vmax.f32 %v10048, %v10060
  %v10568 = vmax.f32 %v10159, %v10171
  %v10569 = vmax.f32 %v10161, %v10173
  %v10570 = vmax.f32 %v10272, %v10284
  %v10571 = vmax.f32 %v10274, %v10286
  %v10572 = vmax.f32 %v10385, %v10397
  %v10573 = vmax.f32 %v10387, %v10399
  %v10574 = vmax.f32 %v10498, %v10510
  %v10575 = vmax.f32 %v10500, %v10512
  %v10576 = vmax.f32 %v8809, %v8821
  %v10577 = vmax.f32 %v8811, %v8823
  %v10578 = vmax.f32 %v8922, %v8934
  %v10579 = vmax.f32 %v8924, %v8936
  %v10580 = vmax.f32 %v9035, %v9047
  %v10581 = vmax.f32 %v9037, %v9049
  %v10582 = vmax.f32 %v9148, %v9160
  %v10583 = vmax.f32 %v9150, %v9162
  %v10584 = vmax.f32 %v9261, %v9273
  %v10585 = vmax.f32 %v9263, %v9275
  %v10586 = vmax.f32 %v9374, %v9386
  %v10587 = vmax.f32 %v9376, %v9388
  %v10588 = vmax.f32 %v9487, %v9499
  %v10589 = vmax.f32 %v9489, %v9501
  %v10590 = vmax.f32 %v9600, %v9612
  %v10591 = vmax.f32 %v9602, %v9614
  %v10592 = vmax.f32 %v9713, %v9725
  %v10593 = vmax.f32 %v9715, %v9727
  %v10594 = vmax.f32 %v9826, %v9838
  %v10595 = vmax.f32 %v9828, %v9840
  %v10596 = vmax.f32 %v9939, %v9951
  %v10597 = vmax.f32 %v9941, %v9953
  %v10598 = vmax.f32 %v10052, %v10064
  %v10599 = vmax.f32 %v10054, %v10066
  %v10600 = vmax.f32 %v10165, %v10177
  %v10601 = vmax.f32 %v10167, %v10179
  %v10602 = vmax.f32 %v10278, %v10290
  %v10603 = vmax.f32 %v10280, %v10292
  %v10604 = vmax.f32 %v10391, %v10403
  %v10605 = vmax.f32 %v10393, %v10405
  %v10606 = vmax.f32 %v10504, %v10516
  %v10607 = vmax.f32 %v10506, %v10518
  %v10608 = vmax.f32 %v8827, %v8839
  %v10609 = vmax.f32 %v8829, %v8841
  %v10610 = vmax.f32 %v8940, %v8952
  %v10611 = vmax.f32 %v8942, %v8954
  %v10612 = vmax.f32 %v9053, %v9065
  %v10613 = vmax.f32 %v9055, %v9067
  %v10614 = vmax.f32 %v9166, %v9178
  %v10615 = vmax.f32 %v9168, %v9180
  %v10616 = vmax.f32 %v9279, %v9291
  %v10617 = vmax.f32 %v9281, %v9293
  %v10618 = vmax.f32 %v9392, %v9404
  %v10619 = vmax.f32 %v9394, %v9406
  %v10620 = vmax.f32 %v9505, %v9517
  %v10621 = vmax.f32 %v9507, %v9519
  %v10622 = vmax.f32 %v9618, %v9630
  %v10623 = vmax.f32 %v9620, %v9632
  %v10624 = vmax.f32 %v9731, %v9743
  %v10625 = vmax.f32 %v9733, %v9745
  %v10626 = vmax.f32 %v9844, %v9856
  %v10627 = vmax.f32 %v9846, %v9858
  %v10628 = vmax.f32 %v9957, %v9969
  %v10629 = vmax.f32 %v9959, %v9971
  %v10630 = vmax.f32 %v10070, %v10082
  %v10631 = vmax.f32 %v10072, %v10084
  %v10632 = vmax.f32 %v10183, %v10195
  %v10633 = vmax.f32 %v10185, %v10197
  %v10634 = vmax.f32 %v10296, %v10308
  %v10635 = vmax.f32 %v10298, %v10310
  %v10636 = vmax.f32 %v10409, %v10421
  %v10637 = vmax.f32 %v10411, %v10423
  %v10638 = vmax.f32 %v10522, %v10534
  %v10639 = vmax.f32 %v10524, %v10536
  %v10640 = vmax.f32 %v8833, %v8845
  %v10641 = vmax.f32 %v8835, %v8847
  %v10642 = vmax.f32 %v8946, %v8958
  %v10643 = vmax.f32 %v8948, %v8960
  %v10644 = vmax.f32 %v9059, %v9071
  %v10645 = vmax.f32 %v9061, %v9073
  %v10646 = vmax.f32 %v9172, %v9184
  %v10647 = vmax.f32 %v9174, %v9186
  %v10648 = vmax.f32 %v9285, %v9297
  %v10649 = vmax.f32 %v9287, %v9299
  %v10650 = vmax.f32 %v9398, %v9410
  %v10651 = vmax.f32 %v9400, %v9412
  %v10652 = vmax.f32 %v9511, %v9523
  %v10653 = vmax.f32 %v9513, %v9525
  %v10654 = vmax.f32 %v9624, %v9636
  %v10655 = vmax.f32 %v9626, %v9638
  %v10656 = vmax.f32 %v9737, %v9749
  %v10657 = vmax.f32 %v9739, %v9751
  %v10658 = vmax.f32 %v9850, %v9862
  %v10659 = vmax.f32 %v9852, %v9864
  %v10660 = vmax.f32 %v9963, %v9975
  %v10661 = vmax.f32 %v9965, %v9977
  %v10662 = vmax.f32 %v10076, %v10088
  %v10663 = vmax.f32 %v10078, %v10090
  %v10664 = vmax.f32 %v10189, %v10201
  %v10665 = vmax.f32 %v10191, %v10203
  %v10666 = vmax.f32 %v10302, %v10314
  %v10667 = vmax.f32 %v10304, %v10316
  %v10668 = vmax.f32 %v10415, %v10427
  %v10669 = vmax.f32 %v10417, %v10429
  %v10670 = vmax.f32 %v10528, %v10540
  %v10671 = vmax.f32 %v10530, %v10542
  %v10672 = vmax.f32 %v10544, %v10608
  %v10673 = vmax.f32 %v10545, %v10609
  %v10674 = vmax.f32 %v10546, %v10610
  %v10675 = vmax.f32 %v10547, %v10611
  %v10676 = vmax.f32 %v10548, %v10612
  %v10677 = vmax.f32 %v10549, %v10613
  %v10678 = vmax.f32 %v10550, %v10614
  %v10679 = vmax.f32 %v10551, %v10615
  %v10680 = vmax.f32 %v10552, %v10616
  %v10681 = vmax.f32 %v10553, %v10617
  %v10682 = vmax.f32 %v10554, %v10618
  %v10683 = vmax.f32 %v10555, %v10619
  %v10684 = vmax.f32 %v10556, %v10620
  %v10685 = vmax.f32 %v10557, %v10621
  %v10686 = vmax.f32 %v10558, %v10622
  %v10687 = vmax.f32 %v10559, %v10623
  %v10688 = vmax.f32 %v10560, %v10624
  %v10689 = vmax.f32 %v10561, %v10625
  %v10690 = vmax.f32 %v10562, %v10626
  %v10691 = vmax.f32 %v10563, %v10627
  %v10692 = vmax.f32 %v10564, %v10628
  %v10693 = vmax.f32 %v10565, %v10629
  %v10694 = vmax.f32 %v10566, %v10630
  %v10695 = vmax.f32 %v10567, %v10631
  %v10696 = vmax.f32 %v10568, %v10632
  %v10697 = vmax.f32 %v10569, %v10633
  %v10698 = vmax.f32 %v10570, %v10634
  %v10699 = vmax.f32 %v10571, %v10635
  %v10700 = vmax.f32 %v10572, %v10636
  %v10701 = vmax.f32 %v10573, %v10637
  %v10702 = vmax.f32 %v10574, %v10638
  %v10703 = vmax.f32 %v10575, %v10639
  %v10704 = vmax.f32 %v10576, %v10640
  %v10705 = vmax.f32 %v10577, %v10641
  %v10706 = vmax.f32 %v10578, %v10642
  %v10707 = vmax.f32 %v10579, %v10643
  %v10708 = vmax.f32 %v10580, %v10644
  %v10709 = vmax.f32 %v10581, %v10645
  %v10710 = vmax.f32 %v10582, %v10646
  %v10711 = vmax.f32 %v10583, %v10647
  %v10712 = vmax.f32 %v10584, %v10648
  %v10713 = vmax.f32 %v10585, %v10649
  %v10714 = vmax.f32 %v10586, %v10650
  %v10715 = vmax.f32 %v10587, %v10651
  %v10716 = vmax.f32 %v10588, %v10652
  %v10717 = vmax.f32 %v10589, %v10653
  %v10718 = vmax.f32 %v10590, %v10654
  %v10719 = vmax.f32 %v10591, %v10655
  %v10720 = vmax.f32 %v10592, %v10656
  %v10721 = vmax.f32 %v10593, %v10657
  %v10722 = vmax.f32 %v10594, %v10658
  %v10723 = vmax.f32 %v10595, %v10659
  %v10724 = vmax.f32 %v10596, %v10660
  %v10725 = vmax.f32 %v10597, %v10661
  %v10726 = vmax.f32 %v10598, %v10662
  %v10727 = vmax.f32 %v10599, %v10663
  %v10728 = vmax.f32 %v10600, %v10664
  %v10729 = vmax.f32 %v10601, %v10665
  %v10730 = vmax.f32 %v10602, %v10666
  %v10731 = vmax.f32 %v10603, %v10667
  %v10732 = vmax.f32 %v10604, %v10668
  %v10733 = vmax.f32 %v10605, %v10669
  %v10734 = vmax.f32 %v10606, %v10670
  %v10735 = vmax.f32 %v10607, %v10671
  %v10736 = vld [vmem:[%s4] sm:$0xff]
  %v10737 = vld [vmem:[%s4 + $0x8] sm:$0xff]
  %10739 = vset.pattern.permute.xlu0 0
  %10740 = vperm.xlu0 %10739, %v10736
  %v10741 = vpop.permute.xlu0 %10740
  %10744 = vset.pattern.permute.xlu0 0
  %10745 = vperm.xlu0 %10744, %v10737
  %v10746 = vpop.permute.xlu0 %10745
  %v10748 = vadd.f32 %v10672, %v10741
  %v10749 = vadd.f32 %v10673, %v10741
  %v10750 = vadd.f32 %v10674, %v10741
  %v10751 = vadd.f32 %v10675, %v10741
  %v10752 = vadd.f32 %v10676, %v10741
  %v10753 = vadd.f32 %v10677, %v10741
  %v10754 = vadd.f32 %v10678, %v10741
  %v10755 = vadd.f32 %v10679, %v10741
  %v10756 = vadd.f32 %v10680, %v10741
  %v10757 = vadd.f32 %v10681, %v10741
  %v10758 = vadd.f32 %v10682, %v10741
  %v10759 = vadd.f32 %v10683, %v10741
  %v10760 = vadd.f32 %v10684, %v10741
  %v10761 = vadd.f32 %v10685, %v10741
  %v10762 = vadd.f32 %v10686, %v10741
  %v10763 = vadd.f32 %v10687, %v10741
  %v10764 = vadd.f32 %v10688, %v10741
  %v10765 = vadd.f32 %v10689, %v10741
  %v10766 = vadd.f32 %v10690, %v10741
  %v10767 = vadd.f32 %v10691, %v10741
  %v10768 = vadd.f32 %v10692, %v10741
  %v10769 = vadd.f32 %v10693, %v10741
  %v10770 = vadd.f32 %v10694, %v10741
  %v10771 = vadd.f32 %v10695, %v10741
  %v10772 = vadd.f32 %v10696, %v10741
  %v10773 = vadd.f32 %v10697, %v10741
  %v10774 = vadd.f32 %v10698, %v10741
  %v10775 = vadd.f32 %v10699, %v10741
  %v10776 = vadd.f32 %v10700, %v10741
  %v10777 = vadd.f32 %v10701, %v10741
  %v10778 = vadd.f32 %v10702, %v10741
  %v10779 = vadd.f32 %v10703, %v10741
  %v10780 = vadd.f32 %v10704, %v10746
  %v10781 = vadd.f32 %v10705, %v10746
  %v10782 = vadd.f32 %v10706, %v10746
  %v10783 = vadd.f32 %v10707, %v10746
  %v10784 = vadd.f32 %v10708, %v10746
  %v10785 = vadd.f32 %v10709, %v10746
  %v10786 = vadd.f32 %v10710, %v10746
  %v10787 = vadd.f32 %v10711, %v10746
  %v10788 = vadd.f32 %v10712, %v10746
  %v10789 = vadd.f32 %v10713, %v10746
  %v10790 = vadd.f32 %v10714, %v10746
  %v10791 = vadd.f32 %v10715, %v10746
  %v10792 = vadd.f32 %v10716, %v10746
  %v10793 = vadd.f32 %v10717, %v10746
  %v10794 = vadd.f32 %v10718, %v10746
  %v10795 = vadd.f32 %v10719, %v10746
  %v10796 = vadd.f32 %v10720, %v10746
  %v10797 = vadd.f32 %v10721, %v10746
  %v10798 = vadd.f32 %v10722, %v10746
  %v10799 = vadd.f32 %v10723, %v10746
  %v10800 = vadd.f32 %v10724, %v10746
  %v10801 = vadd.f32 %v10725, %v10746
  %v10802 = vadd.f32 %v10726, %v10746
  %v10803 = vadd.f32 %v10727, %v10746
  %v10804 = vadd.f32 %v10728, %v10746
  %v10805 = vadd.f32 %v10729, %v10746
  %v10806 = vadd.f32 %v10730, %v10746
  %v10807 = vadd.f32 %v10731, %v10746
  %v10808 = vadd.f32 %v10732, %v10746
  %v10809 = vadd.f32 %v10733, %v10746
  %v10810 = vadd.f32 %v10734, %v10746
  %v10811 = vadd.f32 %v10735, %v10746
  %v10812 = vmax.f32 %v10748, 0.0
  %v10813 = vmax.f32 %v10749, 0.0
  %v10814 = vmax.f32 %v10750, 0.0
  %v10815 = vmax.f32 %v10751, 0.0
  %v10816 = vmax.f32 %v10752, 0.0
  %v10817 = vmax.f32 %v10753, 0.0
  %v10818 = vmax.f32 %v10754, 0.0
  %v10819 = vmax.f32 %v10755, 0.0
  %v10820 = vmax.f32 %v10756, 0.0
  %v10821 = vmax.f32 %v10757, 0.0
  %v10822 = vmax.f32 %v10758, 0.0
  %v10823 = vmax.f32 %v10759, 0.0
  %v10824 = vmax.f32 %v10760, 0.0
  %v10825 = vmax.f32 %v10761, 0.0
  %v10826 = vmax.f32 %v10762, 0.0
  %v10827 = vmax.f32 %v10763, 0.0
  %v10828 = vmax.f32 %v10764, 0.0
  %v10829 = vmax.f32 %v10765, 0.0
  %v10830 = vmax.f32 %v10766, 0.0
  %v10831 = vmax.f32 %v10767, 0.0
  %v10832 = vmax.f32 %v10768, 0.0
  %v10833 = vmax.f32 %v10769, 0.0
  %v10834 = vmax.f32 %v10770, 0.0
  %v10835 = vmax.f32 %v10771, 0.0
  %v10836 = vmax.f32 %v10772, 0.0
  %v10837 = vmax.f32 %v10773, 0.0
  %v10838 = vmax.f32 %v10774, 0.0
  %v10839 = vmax.f32 %v10775, 0.0
  %v10840 = vmax.f32 %v10776, 0.0
  %v10841 = vmax.f32 %v10777, 0.0
  %v10842 = vmax.f32 %v10778, 0.0
  %v10843 = vmax.f32 %v10779, 0.0
  %v10844 = vmax.f32 %v10780, 0.0
  %v10845 = vmax.f32 %v10781, 0.0
  %v10846 = vmax.f32 %v10782, 0.0
  %v10847 = vmax.f32 %v10783, 0.0
  %v10848 = vmax.f32 %v10784, 0.0
  %v10849 = vmax.f32 %v10785, 0.0
  %v10850 = vmax.f32 %v10786, 0.0
  %v10851 = vmax.f32 %v10787, 0.0
  %v10852 = vmax.f32 %v10788, 0.0
  %v10853 = vmax.f32 %v10789, 0.0
  %v10854 = vmax.f32 %v10790, 0.0
  %v10855 = vmax.f32 %v10791, 0.0
  %v10856 = vmax.f32 %v10792, 0.0
  %v10857 = vmax.f32 %v10793, 0.0
  %v10858 = vmax.f32 %v10794, 0.0
  %v10859 = vmax.f32 %v10795, 0.0
  %v10860 = vmax.f32 %v10796, 0.0
  %v10861 = vmax.f32 %v10797, 0.0
  %v10862 = vmax.f32 %v10798, 0.0
  %v10863 = vmax.f32 %v10799, 0.0
  %v10864 = vmax.f32 %v10800, 0.0
  %v10865 = vmax.f32 %v10801, 0.0
  %v10866 = vmax.f32 %v10802, 0.0
  %v10867 = vmax.f32 %v10803, 0.0
  %v10868 = vmax.f32 %v10804, 0.0
  %v10869 = vmax.f32 %v10805, 0.0
  %v10870 = vmax.f32 %v10806, 0.0
  %v10871 = vmax.f32 %v10807, 0.0
  %v10872 = vmax.f32 %v10808, 0.0
  %v10873 = vmax.f32 %v10809, 0.0
  %v10874 = vmax.f32 %v10810, 0.0
  %v10875 = vmax.f32 %v10811, 0.0
  %v10876 = vcombine.low %v10812, %v10814
  %v10877 = vcombine.high %v10812, %v10814
  %v10879 = vunpack.c.l.s4 1983009808
  %v10880 = vunpack.c.0.s8 %v10879
  %v10881 = vlaneseq
  %v10882 = vshrl.u32 %v10881, 7
  %v10883 = vsub.s32 %v10880, %v10882
  %v10884 = vrot.slane %v10876, %v10883
  %v10886 = vunpack.c.l.s4 1983009808
  %v10887 = vunpack.c.0.s8 %v10886
  %v10888 = vlaneseq
  %v10889 = vshrl.u32 %v10888, 7
  %v10890 = vsub.s32 %v10887, %v10889
  %v10891 = vrot.slane %v10877, %v10890
  %v10892 = vcombine.low %v10813, %v10815
  %v10893 = vcombine.high %v10813, %v10815
  %v10895 = vunpack.c.l.s4 1983009808
  %v10896 = vunpack.c.0.s8 %v10895
  %v10897 = vlaneseq
  %v10898 = vshrl.u32 %v10897, 7
  %v10899 = vsub.s32 %v10896, %v10898
  %v10900 = vrot.slane %v10892, %v10899
  %v10902 = vunpack.c.l.s4 1983009808
  %v10903 = vunpack.c.0.s8 %v10902
  %v10904 = vlaneseq
  %v10905 = vshrl.u32 %v10904, 7
  %v10906 = vsub.s32 %v10903, %v10905
  %v10907 = vrot.slane %v10893, %v10906
  %v10908 = vcombine.low %v10816, %v10818
  %v10909 = vcombine.high %v10816, %v10818
  %v10911 = vunpack.c.l.s4 1983009808
  %v10912 = vunpack.c.0.s8 %v10911
  %v10913 = vlaneseq
  %v10914 = vshrl.u32 %v10913, 7
  %v10915 = vsub.s32 %v10912, %v10914
  %v10916 = vrot.slane %v10908, %v10915
  %v10918 = vunpack.c.l.s4 1983009808
  %v10919 = vunpack.c.0.s8 %v10918
  %v10920 = vlaneseq
  %v10921 = vshrl.u32 %v10920, 7
  %v10922 = vsub.s32 %v10919, %v10921
  %v10923 = vrot.slane %v10909, %v10922
  %v10924 = vcombine.low %v10817, %v10819
  %v10925 = vcombine.high %v10817, %v10819
  %v10927 = vunpack.c.l.s4 1983009808
  %v10928 = vunpack.c.0.s8 %v10927
  %v10929 = vlaneseq
  %v10930 = vshrl.u32 %v10929, 7
  %v10931 = vsub.s32 %v10928, %v10930
  %v10932 = vrot.slane %v10924, %v10931
  %v10934 = vunpack.c.l.s4 1983009808
  %v10935 = vunpack.c.0.s8 %v10934
  %v10936 = vlaneseq
  %v10937 = vshrl.u32 %v10936, 7
  %v10938 = vsub.s32 %v10935, %v10937
  %v10939 = vrot.slane %v10925, %v10938
  %v10940 = vcombine.low %v10884, %v10900
  %v10941 = vcombine.high %v10884, %v10900
  %v10943 = vunpack.c.l.s4 1934713408
  %v10944 = vunpack.c.0.s8 %v10943
  %v10945 = vlaneseq
  %v10946 = vshrl.u32 %v10945, 7
  %v10947 = vsub.s32 %v10944, %v10946
  %v10948 = vrot.slane %v10940, %v10947
  %v10950 = vunpack.c.l.s4 1934713408
  %v10951 = vunpack.c.0.s8 %v10950
  %v10952 = vlaneseq
  %v10953 = vshrl.u32 %v10952, 7
  %v10954 = vsub.s32 %v10951, %v10953
  %v10955 = vrot.slane %v10941, %v10954
  %v10956 = vcombine.low %v10891, %v10907
  %v10957 = vcombine.high %v10891, %v10907
  %v10959 = vunpack.c.l.s4 1934713408
  %v10960 = vunpack.c.0.s8 %v10959
  %v10961 = vlaneseq
  %v10962 = vshrl.u32 %v10961, 7
  %v10963 = vsub.s32 %v10960, %v10962
  %v10964 = vrot.slane %v10956, %v10963
  %v10966 = vunpack.c.l.s4 1934713408
  %v10967 = vunpack.c.0.s8 %v10966
  %v10968 = vlaneseq
  %v10969 = vshrl.u32 %v10968, 7
  %v10970 = vsub.s32 %v10967, %v10969
  %v10971 = vrot.slane %v10957, %v10970
  %v10972 = vcombine.low %v10916, %v10932
  %v10973 = vcombine.high %v10916, %v10932
  %v10975 = vunpack.c.l.s4 1934713408
  %v10976 = vunpack.c.0.s8 %v10975
  %v10977 = vlaneseq
  %v10978 = vshrl.u32 %v10977, 7
  %v10979 = vsub.s32 %v10976, %v10978
  %v10980 = vrot.slane %v10972, %v10979
  %v10982 = vunpack.c.l.s4 1934713408
  %v10983 = vunpack.c.0.s8 %v10982
  %v10984 = vlaneseq
  %v10985 = vshrl.u32 %v10984, 7
  %v10986 = vsub.s32 %v10983, %v10985
  %v10987 = vrot.slane %v10973, %v10986
  %v10988 = vcombine.low %v10923, %v10939
  %v10989 = vcombine.high %v10923, %v10939
  %v10991 = vunpack.c.l.s4 1934713408
  %v10992 = vunpack.c.0.s8 %v10991
  %v10993 = vlaneseq
  %v10994 = vshrl.u32 %v10993, 7
  %v10995 = vsub.s32 %v10992, %v10994
  %v10996 = vrot.slane %v10988, %v10995
  %v10998 = vunpack.c.l.s4 1934713408
  %v10999 = vunpack.c.0.s8 %v10998
  %v11000 = vlaneseq
  %v11001 = vshrl.u32 %v11000, 7
  %v11002 = vsub.s32 %v10999, %v11001
  %v11003 = vrot.slane %v10989, %v11002
  %v11004 = vcombine.low %v10948, %v10980
  %v11005 = vcombine.high %v10948, %v10980
  %v11006 = vcombine.low %v10955, %v10987
  %v11007 = vcombine.high %v10955, %v10987
  %v11008 = vcombine.low %v10964, %v10996
  %v11009 = vcombine.high %v10964, %v10996
  %v11010 = vcombine.low %v10971, %v11003
  %v11011 = vcombine.high %v10971, %v11003
  %v11012 = vcombine.low %v10820, %v10822
  %v11013 = vcombine.high %v10820, %v10822
  %v11015 = vunpack.c.l.s4 1983009808
  %v11016 = vunpack.c.0.s8 %v11015
  %v11017 = vlaneseq
  %v11018 = vshrl.u32 %v11017, 7
  %v11019 = vsub.s32 %v11016, %v11018
  %v11020 = vrot.slane %v11012, %v11019
  %v11022 = vunpack.c.l.s4 1983009808
  %v11023 = vunpack.c.0.s8 %v11022
  %v11024 = vlaneseq
  %v11025 = vshrl.u32 %v11024, 7
  %v11026 = vsub.s32 %v11023, %v11025
  %v11027 = vrot.slane %v11013, %v11026
  %v11028 = vcombine.low %v10821, %v10823
  %v11029 = vcombine.high %v10821, %v10823
  %v11031 = vunpack.c.l.s4 1983009808
  %v11032 = vunpack.c.0.s8 %v11031
  %v11033 = vlaneseq
  %v11034 = vshrl.u32 %v11033, 7
  %v11035 = vsub.s32 %v11032, %v11034
  %v11036 = vrot.slane %v11028, %v11035
  %v11038 = vunpack.c.l.s4 1983009808
  %v11039 = vunpack.c.0.s8 %v11038
  %v11040 = vlaneseq
  %v11041 = vshrl.u32 %v11040, 7
  %v11042 = vsub.s32 %v11039, %v11041
  %v11043 = vrot.slane %v11029, %v11042
  %v11044 = vcombine.low %v10824, %v10826
  %v11045 = vcombine.high %v10824, %v10826
  %v11047 = vunpack.c.l.s4 1983009808
  %v11048 = vunpack.c.0.s8 %v11047
  %v11049 = vlaneseq
  %v11050 = vshrl.u32 %v11049, 7
  %v11051 = vsub.s32 %v11048, %v11050
  %v11052 = vrot.slane %v11044, %v11051
  %v11054 = vunpack.c.l.s4 1983009808
  %v11055 = vunpack.c.0.s8 %v11054
  %v11056 = vlaneseq
  %v11057 = vshrl.u32 %v11056, 7
  %v11058 = vsub.s32 %v11055, %v11057
  %v11059 = vrot.slane %v11045, %v11058
  %v11060 = vcombine.low %v10825, %v10827
  %v11061 = vcombine.high %v10825, %v10827
  %v11063 = vunpack.c.l.s4 1983009808
  %v11064 = vunpack.c.0.s8 %v11063
  %v11065 = vlaneseq
  %v11066 = vshrl.u32 %v11065, 7
  %v11067 = vsub.s32 %v11064, %v11066
  %v11068 = vrot.slane %v11060, %v11067
  %v11070 = vunpack.c.l.s4 1983009808
  %v11071 = vunpack.c.0.s8 %v11070
  %v11072 = vlaneseq
  %v11073 = vshrl.u32 %v11072, 7
  %v11074 = vsub.s32 %v11071, %v11073
  %v11075 = vrot.slane %v11061, %v11074
  %v11076 = vcombine.low %v11020, %v11036
  %v11077 = vcombine.high %v11020, %v11036
  %v11079 = vunpack.c.l.s4 1934713408
  %v11080 = vunpack.c.0.s8 %v11079
  %v11081 = vlaneseq
  %v11082 = vshrl.u32 %v11081, 7
  %v11083 = vsub.s32 %v11080, %v11082
  %v11084 = vrot.slane %v11076, %v11083
  %v11086 = vunpack.c.l.s4 1934713408
  %v11087 = vunpack.c.0.s8 %v11086
  %v11088 = vlaneseq
  %v11089 = vshrl.u32 %v11088, 7
  %v11090 = vsub.s32 %v11087, %v11089
  %v11091 = vrot.slane %v11077, %v11090
  %v11092 = vcombine.low %v11027, %v11043
  %v11093 = vcombine.high %v11027, %v11043
  %v11095 = vunpack.c.l.s4 1934713408
  %v11096 = vunpack.c.0.s8 %v11095
  %v11097 = vlaneseq
  %v11098 = vshrl.u32 %v11097, 7
  %v11099 = vsub.s32 %v11096, %v11098
  %v11100 = vrot.slane %v11092, %v11099
  %v11102 = vunpack.c.l.s4 1934713408
  %v11103 = vunpack.c.0.s8 %v11102
  %v11104 = vlaneseq
  %v11105 = vshrl.u32 %v11104, 7
  %v11106 = vsub.s32 %v11103, %v11105
  %v11107 = vrot.slane %v11093, %v11106
  %v11108 = vcombine.low %v11052, %v11068
  %v11109 = vcombine.high %v11052, %v11068
  %v11111 = vunpack.c.l.s4 1934713408
  %v11112 = vunpack.c.0.s8 %v11111
  %v11113 = vlaneseq
  %v11114 = vshrl.u32 %v11113, 7
  %v11115 = vsub.s32 %v11112, %v11114
  %v11116 = vrot.slane %v11108, %v11115
  %v11118 = vunpack.c.l.s4 1934713408
  %v11119 = vunpack.c.0.s8 %v11118
  %v11120 = vlaneseq
  %v11121 = vshrl.u32 %v11120, 7
  %v11122 = vsub.s32 %v11119, %v11121
  %v11123 = vrot.slane %v11109, %v11122
  %v11124 = vcombine.low %v11059, %v11075
  %v11125 = vcombine.high %v11059, %v11075
  %v11127 = vunpack.c.l.s4 1934713408
  %v11128 = vunpack.c.0.s8 %v11127
  %v11129 = vlaneseq
  %v11130 = vshrl.u32 %v11129, 7
  %v11131 = vsub.s32 %v11128, %v11130
  %v11132 = vrot.slane %v11124, %v11131
  %v11134 = vunpack.c.l.s4 1934713408
  %v11135 = vunpack.c.0.s8 %v11134
  %v11136 = vlaneseq
  %v11137 = vshrl.u32 %v11136, 7
  %v11138 = vsub.s32 %v11135, %v11137
  %v11139 = vrot.slane %v11125, %v11138
  %v11140 = vcombine.low %v11084, %v11116
  %v11141 = vcombine.high %v11084, %v11116
  %v11142 = vcombine.low %v11091, %v11123
  %v11143 = vcombine.high %v11091, %v11123
  %v11144 = vcombine.low %v11100, %v11132
  %v11145 = vcombine.high %v11100, %v11132
  %v11146 = vcombine.low %v11107, %v11139
  %v11147 = vcombine.high %v11107, %v11139
  %v11148 = vcombine.low %v10828, %v10830
  %v11149 = vcombine.high %v10828, %v10830
  %v11151 = vunpack.c.l.s4 1983009808
  %v11152 = vunpack.c.0.s8 %v11151
  %v11153 = vlaneseq
  %v11154 = vshrl.u32 %v11153, 7
  %v11155 = vsub.s32 %v11152, %v11154
  %v11156 = vrot.slane %v11148, %v11155
  %v11158 = vunpack.c.l.s4 1983009808
  %v11159 = vunpack.c.0.s8 %v11158
  %v11160 = vlaneseq
  %v11161 = vshrl.u32 %v11160, 7
  %v11162 = vsub.s32 %v11159, %v11161
  %v11163 = vrot.slane %v11149, %v11162
  %v11164 = vcombine.low %v10829, %v10831
  %v11165 = vcombine.high %v10829, %v10831
  %v11167 = vunpack.c.l.s4 1983009808
  %v11168 = vunpack.c.0.s8 %v11167
  %v11169 = vlaneseq
  %v11170 = vshrl.u32 %v11169, 7
  %v11171 = vsub.s32 %v11168, %v11170
  %v11172 = vrot.slane %v11164, %v11171
  %v11174 = vunpack.c.l.s4 1983009808
  %v11175 = vunpack.c.0.s8 %v11174
  %v11176 = vlaneseq
  %v11177 = vshrl.u32 %v11176, 7
  %v11178 = vsub.s32 %v11175, %v11177
  %v11179 = vrot.slane %v11165, %v11178
  %v11180 = vcombine.low %v10832, %v10834
  %v11181 = vcombine.high %v10832, %v10834
  %v11183 = vunpack.c.l.s4 1983009808
  %v11184 = vunpack.c.0.s8 %v11183
  %v11185 = vlaneseq
  %v11186 = vshrl.u32 %v11185, 7
  %v11187 = vsub.s32 %v11184, %v11186
  %v11188 = vrot.slane %v11180, %v11187
  %v11190 = vunpack.c.l.s4 1983009808
  %v11191 = vunpack.c.0.s8 %v11190
  %v11192 = vlaneseq
  %v11193 = vshrl.u32 %v11192, 7
  %v11194 = vsub.s32 %v11191, %v11193
  %v11195 = vrot.slane %v11181, %v11194
  %v11196 = vcombine.low %v10833, %v10835
  %v11197 = vcombine.high %v10833, %v10835
  %v11199 = vunpack.c.l.s4 1983009808
  %v11200 = vunpack.c.0.s8 %v11199
  %v11201 = vlaneseq
  %v11202 = vshrl.u32 %v11201, 7
  %v11203 = vsub.s32 %v11200, %v11202
  %v11204 = vrot.slane %v11196, %v11203
  %v11206 = vunpack.c.l.s4 1983009808
  %v11207 = vunpack.c.0.s8 %v11206
  %v11208 = vlaneseq
  %v11209 = vshrl.u32 %v11208, 7
  %v11210 = vsub.s32 %v11207, %v11209
  %v11211 = vrot.slane %v11197, %v11210
  %v11212 = vcombine.low %v11156, %v11172
  %v11213 = vcombine.high %v11156, %v11172
  %v11215 = vunpack.c.l.s4 1934713408
  %v11216 = vunpack.c.0.s8 %v11215
  %v11217 = vlaneseq
  %v11218 = vshrl.u32 %v11217, 7
  %v11219 = vsub.s32 %v11216, %v11218
  %v11220 = vrot.slane %v11212, %v11219
  %v11222 = vunpack.c.l.s4 1934713408
  %v11223 = vunpack.c.0.s8 %v11222
  %v11224 = vlaneseq
  %v11225 = vshrl.u32 %v11224, 7
  %v11226 = vsub.s32 %v11223, %v11225
  %v11227 = vrot.slane %v11213, %v11226
  %v11228 = vcombine.low %v11163, %v11179
  %v11229 = vcombine.high %v11163, %v11179
  %v11231 = vunpack.c.l.s4 1934713408
  %v11232 = vunpack.c.0.s8 %v11231
  %v11233 = vlaneseq
  %v11234 = vshrl.u32 %v11233, 7
  %v11235 = vsub.s32 %v11232, %v11234
  %v11236 = vrot.slane %v11228, %v11235
  %v11238 = vunpack.c.l.s4 1934713408
  %v11239 = vunpack.c.0.s8 %v11238
  %v11240 = vlaneseq
  %v11241 = vshrl.u32 %v11240, 7
  %v11242 = vsub.s32 %v11239, %v11241
  %v11243 = vrot.slane %v11229, %v11242
  %v11244 = vcombine.low %v11188, %v11204
  %v11245 = vcombine.high %v11188, %v11204
  %v11247 = vunpack.c.l.s4 1934713408
  %v11248 = vunpack.c.0.s8 %v11247
  %v11249 = vlaneseq
  %v11250 = vshrl.u32 %v11249, 7
  %v11251 = vsub.s32 %v11248, %v11250
  %v11252 = vrot.slane %v11244, %v11251
  %v11254 = vunpack.c.l.s4 1934713408
  %v11255 = vunpack.c.0.s8 %v11254
  %v11256 = vlaneseq
  %v11257 = vshrl.u32 %v11256, 7
  %v11258 = vsub.s32 %v11255, %v11257
  %v11259 = vrot.slane %v11245, %v11258
  %v11260 = vcombine.low %v11195, %v11211
  %v11261 = vcombine.high %v11195, %v11211
  %v11263 = vunpack.c.l.s4 1934713408
  %v11264 = vunpack.c.0.s8 %v11263
  %v11265 = vlaneseq
  %v11266 = vshrl.u32 %v11265, 7
  %v11267 = vsub.s32 %v11264, %v11266
  %v11268 = vrot.slane %v11260, %v11267
  %v11270 = vunpack.c.l.s4 1934713408
  %v11271 = vunpack.c.0.s8 %v11270
  %v11272 = vlaneseq
  %v11273 = vshrl.u32 %v11272, 7
  %v11274 = vsub.s32 %v11271, %v11273
  %v11275 = vrot.slane %v11261, %v11274
  %v11276 = vcombine.low %v11220, %v11252
  %v11277 = vcombine.high %v11220, %v11252
  %v11278 = vcombine.low %v11227, %v11259
  %v11279 = vcombine.high %v11227, %v11259
  %v11280 = vcombine.low %v11236, %v11268
  %v11281 = vcombine.high %v11236, %v11268
  %v11282 = vcombine.low %v11243, %v11275
  %v11283 = vcombine.high %v11243, %v11275
  %v11284 = vcombine.low %v10836, %v10838
  %v11285 = vcombine.high %v10836, %v10838
  %v11287 = vunpack.c.l.s4 1983009808
  %v11288 = vunpack.c.0.s8 %v11287
  %v11289 = vlaneseq
  %v11290 = vshrl.u32 %v11289, 7
  %v11291 = vsub.s32 %v11288, %v11290
  %v11292 = vrot.slane %v11284, %v11291
  %v11294 = vunpack.c.l.s4 1983009808
  %v11295 = vunpack.c.0.s8 %v11294
  %v11296 = vlaneseq
  %v11297 = vshrl.u32 %v11296, 7
  %v11298 = vsub.s32 %v11295, %v11297
  %v11299 = vrot.slane %v11285, %v11298
  %v11300 = vcombine.low %v10837, %v10839
  %v11301 = vcombine.high %v10837, %v10839
  %v11303 = vunpack.c.l.s4 1983009808
  %v11304 = vunpack.c.0.s8 %v11303
  %v11305 = vlaneseq
  %v11306 = vshrl.u32 %v11305, 7
  %v11307 = vsub.s32 %v11304, %v11306
  %v11308 = vrot.slane %v11300, %v11307
  %v11310 = vunpack.c.l.s4 1983009808
  %v11311 = vunpack.c.0.s8 %v11310
  %v11312 = vlaneseq
  %v11313 = vshrl.u32 %v11312, 7
  %v11314 = vsub.s32 %v11311, %v11313
  %v11315 = vrot.slane %v11301, %v11314
  %v11316 = vcombine.low %v10840, %v10842
  %v11317 = vcombine.high %v10840, %v10842
  %v11319 = vunpack.c.l.s4 1983009808
  %v11320 = vunpack.c.0.s8 %v11319
  %v11321 = vlaneseq
  %v11322 = vshrl.u32 %v11321, 7
  %v11323 = vsub.s32 %v11320, %v11322
  %v11324 = vrot.slane %v11316, %v11323
  %v11326 = vunpack.c.l.s4 1983009808
  %v11327 = vunpack.c.0.s8 %v11326
  %v11328 = vlaneseq
  %v11329 = vshrl.u32 %v11328, 7
  %v11330 = vsub.s32 %v11327, %v11329
  %v11331 = vrot.slane %v11317, %v11330
  %v11332 = vcombine.low %v10841, %v10843
  %v11333 = vcombine.high %v10841, %v10843
  %v11335 = vunpack.c.l.s4 1983009808
  %v11336 = vunpack.c.0.s8 %v11335
  %v11337 = vlaneseq
  %v11338 = vshrl.u32 %v11337, 7
  %v11339 = vsub.s32 %v11336, %v11338
  %v11340 = vrot.slane %v11332, %v11339
  %v11342 = vunpack.c.l.s4 1983009808
  %v11343 = vunpack.c.0.s8 %v11342
  %v11344 = vlaneseq
  %v11345 = vshrl.u32 %v11344, 7
  %v11346 = vsub.s32 %v11343, %v11345
  %v11347 = vrot.slane %v11333, %v11346
  %v11348 = vcombine.low %v11292, %v11308
  %v11349 = vcombine.high %v11292, %v11308
  %v11351 = vunpack.c.l.s4 1934713408
  %v11352 = vunpack.c.0.s8 %v11351
  %v11353 = vlaneseq
  %v11354 = vshrl.u32 %v11353, 7
  %v11355 = vsub.s32 %v11352, %v11354
  %v11356 = vrot.slane %v11348, %v11355
  %v11358 = vunpack.c.l.s4 1934713408
  %v11359 = vunpack.c.0.s8 %v11358
  %v11360 = vlaneseq
  %v11361 = vshrl.u32 %v11360, 7
  %v11362 = vsub.s32 %v11359, %v11361
  %v11363 = vrot.slane %v11349, %v11362
  %v11364 = vcombine.low %v11299, %v11315
  %v11365 = vcombine.high %v11299, %v11315
  %v11367 = vunpack.c.l.s4 1934713408
  %v11368 = vunpack.c.0.s8 %v11367
  %v11369 = vlaneseq
  %v11370 = vshrl.u32 %v11369, 7
  %v11371 = vsub.s32 %v11368, %v11370
  %v11372 = vrot.slane %v11364, %v11371
  %v11374 = vunpack.c.l.s4 1934713408
  %v11375 = vunpack.c.0.s8 %v11374
  %v11376 = vlaneseq
  %v11377 = vshrl.u32 %v11376, 7
  %v11378 = vsub.s32 %v11375, %v11377
  %v11379 = vrot.slane %v11365, %v11378
  %v11380 = vcombine.low %v11324, %v11340
  %v11381 = vcombine.high %v11324, %v11340
  %v11383 = vunpack.c.l.s4 1934713408
  %v11384 = vunpack.c.0.s8 %v11383
  %v11385 = vlaneseq
  %v11386 = vshrl.u32 %v11385, 7
  %v11387 = vsub.s32 %v11384, %v11386
  %v11388 = vrot.slane %v11380, %v11387
  %v11390 = vunpack.c.l.s4 1934713408
  %v11391 = vunpack.c.0.s8 %v11390
  %v11392 = vlaneseq
  %v11393 = vshrl.u32 %v11392, 7
  %v11394 = vsub.s32 %v11391, %v11393
  %v11395 = vrot.slane %v11381, %v11394
  %v11396 = vcombine.low %v11331, %v11347
  %v11397 = vcombine.high %v11331, %v11347
  %v11399 = vunpack.c.l.s4 1934713408
  %v11400 = vunpack.c.0.s8 %v11399
  %v11401 = vlaneseq
  %v11402 = vshrl.u32 %v11401, 7
  %v11403 = vsub.s32 %v11400, %v11402
  %v11404 = vrot.slane %v11396, %v11403
  %v11406 = vunpack.c.l.s4 1934713408
  %v11407 = vunpack.c.0.s8 %v11406
  %v11408 = vlaneseq
  %v11409 = vshrl.u32 %v11408, 7
  %v11410 = vsub.s32 %v11407, %v11409
  %v11411 = vrot.slane %v11397, %v11410
  %v11412 = vcombine.low %v11356, %v11388
  %v11413 = vcombine.high %v11356, %v11388
  %v11414 = vcombine.low %v11363, %v11395
  %v11415 = vcombine.high %v11363, %v11395
  %v11416 = vcombine.low %v11372, %v11404
  %v11417 = vcombine.high %v11372, %v11404
  %v11418 = vcombine.low %v11379, %v11411
  %v11419 = vcombine.high %v11379, %v11411
  %v11420 = vcombine.low %v10844, %v10846
  %v11421 = vcombine.high %v10844, %v10846
  %v11423 = vunpack.c.l.s4 1983009808
  %v11424 = vunpack.c.0.s8 %v11423
  %v11425 = vlaneseq
  %v11426 = vshrl.u32 %v11425, 7
  %v11427 = vsub.s32 %v11424, %v11426
  %v11428 = vrot.slane %v11420, %v11427
  %v11430 = vunpack.c.l.s4 1983009808
  %v11431 = vunpack.c.0.s8 %v11430
  %v11432 = vlaneseq
  %v11433 = vshrl.u32 %v11432, 7
  %v11434 = vsub.s32 %v11431, %v11433
  %v11435 = vrot.slane %v11421, %v11434
  %v11436 = vcombine.low %v10845, %v10847
  %v11437 = vcombine.high %v10845, %v10847
  %v11439 = vunpack.c.l.s4 1983009808
  %v11440 = vunpack.c.0.s8 %v11439
  %v11441 = vlaneseq
  %v11442 = vshrl.u32 %v11441, 7
  %v11443 = vsub.s32 %v11440, %v11442
  %v11444 = vrot.slane %v11436, %v11443
  %v11446 = vunpack.c.l.s4 1983009808
  %v11447 = vunpack.c.0.s8 %v11446
  %v11448 = vlaneseq
  %v11449 = vshrl.u32 %v11448, 7
  %v11450 = vsub.s32 %v11447, %v11449
  %v11451 = vrot.slane %v11437, %v11450
  %v11452 = vcombine.low %v10848, %v10850
  %v11453 = vcombine.high %v10848, %v10850
  %v11455 = vunpack.c.l.s4 1983009808
  %v11456 = vunpack.c.0.s8 %v11455
  %v11457 = vlaneseq
  %v11458 = vshrl.u32 %v11457, 7
  %v11459 = vsub.s32 %v11456, %v11458
  %v11460 = vrot.slane %v11452, %v11459
  %v11462 = vunpack.c.l.s4 1983009808
  %v11463 = vunpack.c.0.s8 %v11462
  %v11464 = vlaneseq
  %v11465 = vshrl.u32 %v11464, 7
  %v11466 = vsub.s32 %v11463, %v11465
  %v11467 = vrot.slane %v11453, %v11466
  %v11468 = vcombine.low %v10849, %v10851
  %v11469 = vcombine.high %v10849, %v10851
  %v11471 = vunpack.c.l.s4 1983009808
  %v11472 = vunpack.c.0.s8 %v11471
  %v11473 = vlaneseq
  %v11474 = vshrl.u32 %v11473, 7
  %v11475 = vsub.s32 %v11472, %v11474
  %v11476 = vrot.slane %v11468, %v11475
  %v11478 = vunpack.c.l.s4 1983009808
  %v11479 = vunpack.c.0.s8 %v11478
  %v11480 = vlaneseq
  %v11481 = vshrl.u32 %v11480, 7
  %v11482 = vsub.s32 %v11479, %v11481
  %v11483 = vrot.slane %v11469, %v11482
  %v11484 = vcombine.low %v11428, %v11444
  %v11485 = vcombine.high %v11428, %v11444
  %v11487 = vunpack.c.l.s4 1934713408
  %v11488 = vunpack.c.0.s8 %v11487
  %v11489 = vlaneseq
  %v11490 = vshrl.u32 %v11489, 7
  %v11491 = vsub.s32 %v11488, %v11490
  %v11492 = vrot.slane %v11484, %v11491
  %v11494 = vunpack.c.l.s4 1934713408
  %v11495 = vunpack.c.0.s8 %v11494
  %v11496 = vlaneseq
  %v11497 = vshrl.u32 %v11496, 7
  %v11498 = vsub.s32 %v11495, %v11497
  %v11499 = vrot.slane %v11485, %v11498
  %v11500 = vcombine.low %v11435, %v11451
  %v11501 = vcombine.high %v11435, %v11451
  %v11503 = vunpack.c.l.s4 1934713408
  %v11504 = vunpack.c.0.s8 %v11503
  %v11505 = vlaneseq
  %v11506 = vshrl.u32 %v11505, 7
  %v11507 = vsub.s32 %v11504, %v11506
  %v11508 = vrot.slane %v11500, %v11507
  %v11510 = vunpack.c.l.s4 1934713408
  %v11511 = vunpack.c.0.s8 %v11510
  %v11512 = vlaneseq
  %v11513 = vshrl.u32 %v11512, 7
  %v11514 = vsub.s32 %v11511, %v11513
  %v11515 = vrot.slane %v11501, %v11514
  %v11516 = vcombine.low %v11460, %v11476
  %v11517 = vcombine.high %v11460, %v11476
  %v11519 = vunpack.c.l.s4 1934713408
  %v11520 = vunpack.c.0.s8 %v11519
  %v11521 = vlaneseq
  %v11522 = vshrl.u32 %v11521, 7
  %v11523 = vsub.s32 %v11520, %v11522
  %v11524 = vrot.slane %v11516, %v11523
  %v11526 = vunpack.c.l.s4 1934713408
  %v11527 = vunpack.c.0.s8 %v11526
  %v11528 = vlaneseq
  %v11529 = vshrl.u32 %v11528, 7
  %v11530 = vsub.s32 %v11527, %v11529
  %v11531 = vrot.slane %v11517, %v11530
  %v11532 = vcombine.low %v11467, %v11483
  %v11533 = vcombine.high %v11467, %v11483
  %v11535 = vunpack.c.l.s4 1934713408
  %v11536 = vunpack.c.0.s8 %v11535
  %v11537 = vlaneseq
  %v11538 = vshrl.u32 %v11537, 7
  %v11539 = vsub.s32 %v11536, %v11538
  %v11540 = vrot.slane %v11532, %v11539
  %v11542 = vunpack.c.l.s4 1934713408
  %v11543 = vunpack.c.0.s8 %v11542
  %v11544 = vlaneseq
  %v11545 = vshrl.u32 %v11544, 7
  %v11546 = vsub.s32 %v11543, %v11545
  %v11547 = vrot.slane %v11533, %v11546
  %v11548 = vcombine.low %v11492, %v11524
  %v11549 = vcombine.high %v11492, %v11524
  %v11550 = vcombine.low %v11499, %v11531
  %v11551 = vcombine.high %v11499, %v11531
  %v11552 = vcombine.low %v11508, %v11540
  %v11553 = vcombine.high %v11508, %v11540
  %v11554 = vcombine.low %v11515, %v11547
  %v11555 = vcombine.high %v11515, %v11547
  %v11556 = vcombine.low %v10852, %v10854
  %v11557 = vcombine.high %v10852, %v10854
  %v11559 = vunpack.c.l.s4 1983009808
  %v11560 = vunpack.c.0.s8 %v11559
  %v11561 = vlaneseq
  %v11562 = vshrl.u32 %v11561, 7
  %v11563 = vsub.s32 %v11560, %v11562
  %v11564 = vrot.slane %v11556, %v11563
  %v11566 = vunpack.c.l.s4 1983009808
  %v11567 = vunpack.c.0.s8 %v11566
  %v11568 = vlaneseq
  %v11569 = vshrl.u32 %v11568, 7
  %v11570 = vsub.s32 %v11567, %v11569
  %v11571 = vrot.slane %v11557, %v11570
  %v11572 = vcombine.low %v10853, %v10855
  %v11573 = vcombine.high %v10853, %v10855
  %v11575 = vunpack.c.l.s4 1983009808
  %v11576 = vunpack.c.0.s8 %v11575
  %v11577 = vlaneseq
  %v11578 = vshrl.u32 %v11577, 7
  %v11579 = vsub.s32 %v11576, %v11578
  %v11580 = vrot.slane %v11572, %v11579
  %v11582 = vunpack.c.l.s4 1983009808
  %v11583 = vunpack.c.0.s8 %v11582
  %v11584 = vlaneseq
  %v11585 = vshrl.u32 %v11584, 7
  %v11586 = vsub.s32 %v11583, %v11585
  %v11587 = vrot.slane %v11573, %v11586
  %v11588 = vcombine.low %v10856, %v10858
  %v11589 = vcombine.high %v10856, %v10858
  %v11591 = vunpack.c.l.s4 1983009808
  %v11592 = vunpack.c.0.s8 %v11591
  %v11593 = vlaneseq
  %v11594 = vshrl.u32 %v11593, 7
  %v11595 = vsub.s32 %v11592, %v11594
  %v11596 = vrot.slane %v11588, %v11595
  %v11598 = vunpack.c.l.s4 1983009808
  %v11599 = vunpack.c.0.s8 %v11598
  %v11600 = vlaneseq
  %v11601 = vshrl.u32 %v11600, 7
  %v11602 = vsub.s32 %v11599, %v11601
  %v11603 = vrot.slane %v11589, %v11602
  %v11604 = vcombine.low %v10857, %v10859
  %v11605 = vcombine.high %v10857, %v10859
  %v11607 = vunpack.c.l.s4 1983009808
  %v11608 = vunpack.c.0.s8 %v11607
  %v11609 = vlaneseq
  %v11610 = vshrl.u32 %v11609, 7
  %v11611 = vsub.s32 %v11608, %v11610
  %v11612 = vrot.slane %v11604, %v11611
  %v11614 = vunpack.c.l.s4 1983009808
  %v11615 = vunpack.c.0.s8 %v11614
  %v11616 = vlaneseq
  %v11617 = vshrl.u32 %v11616, 7
  %v11618 = vsub.s32 %v11615, %v11617
  %v11619 = vrot.slane %v11605, %v11618
  %v11620 = vcombine.low %v11564, %v11580
  %v11621 = vcombine.high %v11564, %v11580
  %v11623 = vunpack.c.l.s4 1934713408
  %v11624 = vunpack.c.0.s8 %v11623
  %v11625 = vlaneseq
  %v11626 = vshrl.u32 %v11625, 7
  %v11627 = vsub.s32 %v11624, %v11626
  %v11628 = vrot.slane %v11620, %v11627
  %v11630 = vunpack.c.l.s4 1934713408
  %v11631 = vunpack.c.0.s8 %v11630
  %v11632 = vlaneseq
  %v11633 = vshrl.u32 %v11632, 7
  %v11634 = vsub.s32 %v11631, %v11633
  %v11635 = vrot.slane %v11621, %v11634
  %v11636 = vcombine.low %v11571, %v11587
  %v11637 = vcombine.high %v11571, %v11587
  %v11639 = vunpack.c.l.s4 1934713408
  %v11640 = vunpack.c.0.s8 %v11639
  %v11641 = vlaneseq
  %v11642 = vshrl.u32 %v11641, 7
  %v11643 = vsub.s32 %v11640, %v11642
  %v11644 = vrot.slane %v11636, %v11643
  %v11646 = vunpack.c.l.s4 1934713408
  %v11647 = vunpack.c.0.s8 %v11646
  %v11648 = vlaneseq
  %v11649 = vshrl.u32 %v11648, 7
  %v11650 = vsub.s32 %v11647, %v11649
  %v11651 = vrot.slane %v11637, %v11650
  %v11652 = vcombine.low %v11596, %v11612
  %v11653 = vcombine.high %v11596, %v11612
  %v11655 = vunpack.c.l.s4 1934713408
  %v11656 = vunpack.c.0.s8 %v11655
  %v11657 = vlaneseq
  %v11658 = vshrl.u32 %v11657, 7
  %v11659 = vsub.s32 %v11656, %v11658
  %v11660 = vrot.slane %v11652, %v11659
  %v11662 = vunpack.c.l.s4 1934713408
  %v11663 = vunpack.c.0.s8 %v11662
  %v11664 = vlaneseq
  %v11665 = vshrl.u32 %v11664, 7
  %v11666 = vsub.s32 %v11663, %v11665
  %v11667 = vrot.slane %v11653, %v11666
  %v11668 = vcombine.low %v11603, %v11619
  %v11669 = vcombine.high %v11603, %v11619
  %v11671 = vunpack.c.l.s4 1934713408
  %v11672 = vunpack.c.0.s8 %v11671
  %v11673 = vlaneseq
  %v11674 = vshrl.u32 %v11673, 7
  %v11675 = vsub.s32 %v11672, %v11674
  %v11676 = vrot.slane %v11668, %v11675
  %v11678 = vunpack.c.l.s4 1934713408
  %v11679 = vunpack.c.0.s8 %v11678
  %v11680 = vlaneseq
  %v11681 = vshrl.u32 %v11680, 7
  %v11682 = vsub.s32 %v11679, %v11681
  %v11683 = vrot.slane %v11669, %v11682
  %v11684 = vcombine.low %v11628, %v11660
  %v11685 = vcombine.high %v11628, %v11660
  %v11686 = vcombine.low %v11635, %v11667
  %v11687 = vcombine.high %v11635, %v11667
  %v11688 = vcombine.low %v11644, %v11676
  %v11689 = vcombine.high %v11644, %v11676
  %v11690 = vcombine.low %v11651, %v11683
  %v11691 = vcombine.high %v11651, %v11683
  %v11692 = vcombine.low %v10860, %v10862
  %v11693 = vcombine.high %v10860, %v10862
  %v11695 = vunpack.c.l.s4 1983009808
  %v11696 = vunpack.c.0.s8 %v11695
  %v11697 = vlaneseq
  %v11698 = vshrl.u32 %v11697, 7
  %v11699 = vsub.s32 %v11696, %v11698
  %v11700 = vrot.slane %v11692, %v11699
  %v11702 = vunpack.c.l.s4 1983009808
  %v11703 = vunpack.c.0.s8 %v11702
  %v11704 = vlaneseq
  %v11705 = vshrl.u32 %v11704, 7
  %v11706 = vsub.s32 %v11703, %v11705
  %v11707 = vrot.slane %v11693, %v11706
  %v11708 = vcombine.low %v10861, %v10863
  %v11709 = vcombine.high %v10861, %v10863
  %v11711 = vunpack.c.l.s4 1983009808
  %v11712 = vunpack.c.0.s8 %v11711
  %v11713 = vlaneseq
  %v11714 = vshrl.u32 %v11713, 7
  %v11715 = vsub.s32 %v11712, %v11714
  %v11716 = vrot.slane %v11708, %v11715
  %v11718 = vunpack.c.l.s4 1983009808
  %v11719 = vunpack.c.0.s8 %v11718
  %v11720 = vlaneseq
  %v11721 = vshrl.u32 %v11720, 7
  %v11722 = vsub.s32 %v11719, %v11721
  %v11723 = vrot.slane %v11709, %v11722
  %v11724 = vcombine.low %v10864, %v10866
  %v11725 = vcombine.high %v10864, %v10866
  %v11727 = vunpack.c.l.s4 1983009808
  %v11728 = vunpack.c.0.s8 %v11727
  %v11729 = vlaneseq
  %v11730 = vshrl.u32 %v11729, 7
  %v11731 = vsub.s32 %v11728, %v11730
  %v11732 = vrot.slane %v11724, %v11731
  %v11734 = vunpack.c.l.s4 1983009808
  %v11735 = vunpack.c.0.s8 %v11734
  %v11736 = vlaneseq
  %v11737 = vshrl.u32 %v11736, 7
  %v11738 = vsub.s32 %v11735, %v11737
  %v11739 = vrot.slane %v11725, %v11738
  %v11740 = vcombine.low %v10865, %v10867
  %v11741 = vcombine.high %v10865, %v10867
  %v11743 = vunpack.c.l.s4 1983009808
  %v11744 = vunpack.c.0.s8 %v11743
  %v11745 = vlaneseq
  %v11746 = vshrl.u32 %v11745, 7
  %v11747 = vsub.s32 %v11744, %v11746
  %v11748 = vrot.slane %v11740, %v11747
  %v11750 = vunpack.c.l.s4 1983009808
  %v11751 = vunpack.c.0.s8 %v11750
  %v11752 = vlaneseq
  %v11753 = vshrl.u32 %v11752, 7
  %v11754 = vsub.s32 %v11751, %v11753
  %v11755 = vrot.slane %v11741, %v11754
  %v11756 = vcombine.low %v11700, %v11716
  %v11757 = vcombine.high %v11700, %v11716
  %v11759 = vunpack.c.l.s4 1934713408
  %v11760 = vunpack.c.0.s8 %v11759
  %v11761 = vlaneseq
  %v11762 = vshrl.u32 %v11761, 7
  %v11763 = vsub.s32 %v11760, %v11762
  %v11764 = vrot.slane %v11756, %v11763
  %v11766 = vunpack.c.l.s4 1934713408
  %v11767 = vunpack.c.0.s8 %v11766
  %v11768 = vlaneseq
  %v11769 = vshrl.u32 %v11768, 7
  %v11770 = vsub.s32 %v11767, %v11769
  %v11771 = vrot.slane %v11757, %v11770
  %v11772 = vcombine.low %v11707, %v11723
  %v11773 = vcombine.high %v11707, %v11723
  %v11775 = vunpack.c.l.s4 1934713408
  %v11776 = vunpack.c.0.s8 %v11775
  %v11777 = vlaneseq
  %v11778 = vshrl.u32 %v11777, 7
  %v11779 = vsub.s32 %v11776, %v11778
  %v11780 = vrot.slane %v11772, %v11779
  %v11782 = vunpack.c.l.s4 1934713408
  %v11783 = vunpack.c.0.s8 %v11782
  %v11784 = vlaneseq
  %v11785 = vshrl.u32 %v11784, 7
  %v11786 = vsub.s32 %v11783, %v11785
  %v11787 = vrot.slane %v11773, %v11786
  %v11788 = vcombine.low %v11732, %v11748
  %v11789 = vcombine.high %v11732, %v11748
  %v11791 = vunpack.c.l.s4 1934713408
  %v11792 = vunpack.c.0.s8 %v11791
  %v11793 = vlaneseq
  %v11794 = vshrl.u32 %v11793, 7
  %v11795 = vsub.s32 %v11792, %v11794
  %v11796 = vrot.slane %v11788, %v11795
  %v11798 = vunpack.c.l.s4 1934713408
  %v11799 = vunpack.c.0.s8 %v11798
  %v11800 = vlaneseq
  %v11801 = vshrl.u32 %v11800, 7
  %v11802 = vsub.s32 %v11799, %v11801
  %v11803 = vrot.slane %v11789, %v11802
  %v11804 = vcombine.low %v11739, %v11755
  %v11805 = vcombine.high %v11739, %v11755
  %v11807 = vunpack.c.l.s4 1934713408
  %v11808 = vunpack.c.0.s8 %v11807
  %v11809 = vlaneseq
  %v11810 = vshrl.u32 %v11809, 7
  %v11811 = vsub.s32 %v11808, %v11810
  %v11812 = vrot.slane %v11804, %v11811
  %v11814 = vunpack.c.l.s4 1934713408
  %v11815 = vunpack.c.0.s8 %v11814
  %v11816 = vlaneseq
  %v11817 = vshrl.u32 %v11816, 7
  %v11818 = vsub.s32 %v11815, %v11817
  %v11819 = vrot.slane %v11805, %v11818
  %v11820 = vcombine.low %v11764, %v11796
  %v11821 = vcombine.high %v11764, %v11796
  %v11822 = vcombine.low %v11771, %v11803
  %v11823 = vcombine.high %v11771, %v11803
  %v11824 = vcombine.low %v11780, %v11812
  %v11825 = vcombine.high %v11780, %v11812
  %v11826 = vcombine.low %v11787, %v11819
  %v11827 = vcombine.high %v11787, %v11819
  %v11828 = vcombine.low %v10868, %v10870
  %v11829 = vcombine.high %v10868, %v10870
  %v11831 = vunpack.c.l.s4 1983009808
  %v11832 = vunpack.c.0.s8 %v11831
  %v11833 = vlaneseq
  %v11834 = vshrl.u32 %v11833, 7
  %v11835 = vsub.s32 %v11832, %v11834
  %v11836 = vrot.slane %v11828, %v11835
  %v11838 = vunpack.c.l.s4 1983009808
  %v11839 = vunpack.c.0.s8 %v11838
  %v11840 = vlaneseq
  %v11841 = vshrl.u32 %v11840, 7
  %v11842 = vsub.s32 %v11839, %v11841
  %v11843 = vrot.slane %v11829, %v11842
  %v11844 = vcombine.low %v10869, %v10871
  %v11845 = vcombine.high %v10869, %v10871
  %v11847 = vunpack.c.l.s4 1983009808
  %v11848 = vunpack.c.0.s8 %v11847
  %v11849 = vlaneseq
  %v11850 = vshrl.u32 %v11849, 7
  %v11851 = vsub.s32 %v11848, %v11850
  %v11852 = vrot.slane %v11844, %v11851
  %v11854 = vunpack.c.l.s4 1983009808
  %v11855 = vunpack.c.0.s8 %v11854
  %v11856 = vlaneseq
  %v11857 = vshrl.u32 %v11856, 7
  %v11858 = vsub.s32 %v11855, %v11857
  %v11859 = vrot.slane %v11845, %v11858
  %v11860 = vcombine.low %v10872, %v10874
  %v11861 = vcombine.high %v10872, %v10874
  %v11863 = vunpack.c.l.s4 1983009808
  %v11864 = vunpack.c.0.s8 %v11863
  %v11865 = vlaneseq
  %v11866 = vshrl.u32 %v11865, 7
  %v11867 = vsub.s32 %v11864, %v11866
  %v11868 = vrot.slane %v11860, %v11867
  %v11870 = vunpack.c.l.s4 1983009808
  %v11871 = vunpack.c.0.s8 %v11870
  %v11872 = vlaneseq
  %v11873 = vshrl.u32 %v11872, 7
  %v11874 = vsub.s32 %v11871, %v11873
  %v11875 = vrot.slane %v11861, %v11874
  %v11876 = vcombine.low %v10873, %v10875
  %v11877 = vcombine.high %v10873, %v10875
  %v11879 = vunpack.c.l.s4 1983009808
  %v11880 = vunpack.c.0.s8 %v11879
  %v11881 = vlaneseq
  %v11882 = vshrl.u32 %v11881, 7
  %v11883 = vsub.s32 %v11880, %v11882
  %v11884 = vrot.slane %v11876, %v11883
  %v11886 = vunpack.c.l.s4 1983009808
  %v11887 = vunpack.c.0.s8 %v11886
  %v11888 = vlaneseq
  %v11889 = vshrl.u32 %v11888, 7
  %v11890 = vsub.s32 %v11887, %v11889
  %v11891 = vrot.slane %v11877, %v11890
  %v11892 = vcombine.low %v11836, %v11852
  %v11893 = vcombine.high %v11836, %v11852
  %v11895 = vunpack.c.l.s4 1934713408
  %v11896 = vunpack.c.0.s8 %v11895
  %v11897 = vlaneseq
  %v11898 = vshrl.u32 %v11897, 7
  %v11899 = vsub.s32 %v11896, %v11898
  %v11900 = vrot.slane %v11892, %v11899
  %v11902 = vunpack.c.l.s4 1934713408
  %v11903 = vunpack.c.0.s8 %v11902
  %v11904 = vlaneseq
  %v11905 = vshrl.u32 %v11904, 7
  %v11906 = vsub.s32 %v11903, %v11905
  %v11907 = vrot.slane %v11893, %v11906
  %v11908 = vcombine.low %v11843, %v11859
  %v11909 = vcombine.high %v11843, %v11859
  %v11911 = vunpack.c.l.s4 1934713408
  %v11912 = vunpack.c.0.s8 %v11911
  %v11913 = vlaneseq
  %v11914 = vshrl.u32 %v11913, 7
  %v11915 = vsub.s32 %v11912, %v11914
  %v11916 = vrot.slane %v11908, %v11915
  %v11918 = vunpack.c.l.s4 1934713408
  %v11919 = vunpack.c.0.s8 %v11918
  %v11920 = vlaneseq
  %v11921 = vshrl.u32 %v11920, 7
  %v11922 = vsub.s32 %v11919, %v11921
  %v11923 = vrot.slane %v11909, %v11922
  %v11924 = vcombine.low %v11868, %v11884
  %v11925 = vcombine.high %v11868, %v11884
  %v11927 = vunpack.c.l.s4 1934713408
  %v11928 = vunpack.c.0.s8 %v11927
  %v11929 = vlaneseq
  %v11930 = vshrl.u32 %v11929, 7
  %v11931 = vsub.s32 %v11928, %v11930
  %v11932 = vrot.slane %v11924, %v11931
  %v11934 = vunpack.c.l.s4 1934713408
  %v11935 = vunpack.c.0.s8 %v11934
  %v11936 = vlaneseq
  %v11937 = vshrl.u32 %v11936, 7
  %v11938 = vsub.s32 %v11935, %v11937
  %v11939 = vrot.slane %v11925, %v11938
  %v11940 = vcombine.low %v11875, %v11891
  %v11941 = vcombine.high %v11875, %v11891
  %v11943 = vunpack.c.l.s4 1934713408
  %v11944 = vunpack.c.0.s8 %v11943
  %v11945 = vlaneseq
  %v11946 = vshrl.u32 %v11945, 7
  %v11947 = vsub.s32 %v11944, %v11946
  %v11948 = vrot.slane %v11940, %v11947
  %v11950 = vunpack.c.l.s4 1934713408
  %v11951 = vunpack.c.0.s8 %v11950
  %v11952 = vlaneseq
  %v11953 = vshrl.u32 %v11952, 7
  %v11954 = vsub.s32 %v11951, %v11953
  %v11955 = vrot.slane %v11941, %v11954
  %v11956 = vcombine.low %v11900, %v11932
  %v11957 = vcombine.high %v11900, %v11932
  %v11958 = vcombine.low %v11907, %v11939
  %v11959 = vcombine.high %v11907, %v11939
  %v11960 = vcombine.low %v11916, %v11948
  %v11961 = vcombine.high %v11916, %v11948
  %v11962 = vcombine.low %v11923, %v11955
  %v11963 = vcombine.high %v11923, %v11955
  %v11964 = vld [vmem:[%s5] sm:$0xff]
  %v11965 = vld [vmem:[%s5 + $0x8] sm:$0xff]
  %v11966 = vld [vmem:[%s5 + $0x10] sm:$0xff]
  %v11967 = vld [vmem:[%s5 + $0x18] sm:$0xff]
  %v11968 = vld [vmem:[%s5 + $0x20] sm:$0xff]
  %v11969 = vld [vmem:[%s5 + $0x28] sm:$0xff]
  %v11970 = vld [vmem:[%s5 + $0x30] sm:$0xff]
  %v11971 = vld [vmem:[%s5 + $0x38] sm:$0xff]
  %v11972 = vld [vmem:[%s5 + $0x40] sm:$0xff]
  %v11973 = vld [vmem:[%s5 + $0x48] sm:$0xff]
  %v11974 = vld [vmem:[%s5 + $0x50] sm:$0xff]
  %v11975 = vld [vmem:[%s5 + $0x58] sm:$0xff]
  %v11976 = vld [vmem:[%s5 + $0x60] sm:$0xff]
  %v11977 = vld [vmem:[%s5 + $0x68] sm:$0xff]
  %v11978 = vld [vmem:[%s5 + $0x70] sm:$0xff]
  %v11979 = vld [vmem:[%s5 + $0x78] sm:$0xff]
  %v11980 = vld [vmem:[%s5 + $0x80] sm:$0xff]
  %v11981 = vld [vmem:[%s5 + $0x88] sm:$0xff]
  %v11982 = vld [vmem:[%s5 + $0x90] sm:$0xff]
  %v11983 = vld [vmem:[%s5 + $0x98] sm:$0xff]
  %v11984 = vld [vmem:[%s5 + $0xa0] sm:$0xff]
  %v11985 = vld [vmem:[%s5 + $0xa8] sm:$0xff]
  %v11986 = vld [vmem:[%s5 + $0xb0] sm:$0xff]
  %v11987 = vld [vmem:[%s5 + $0xb8] sm:$0xff]
  %v11988 = vld [vmem:[%s5 + $0xc0] sm:$0xff]
  %v11989 = vld [vmem:[%s5 + $0xc8] sm:$0xff]
  %v11990 = vld [vmem:[%s5 + $0xd0] sm:$0xff]
  %v11991 = vld [vmem:[%s5 + $0xd8] sm:$0xff]
  %v11992 = vld [vmem:[%s5 + $0xe0] sm:$0xff]
  %v11993 = vld [vmem:[%s5 + $0xe8] sm:$0xff]
  %v11994 = vld [vmem:[%s5 + $0xf0] sm:$0xff]
  %v11995 = vld [vmem:[%s5 + $0xf8] sm:$0xff]
  %v11996 = vld [vmem:[%s5 + $0x100] sm:$0xff]
  %v11997 = vld [vmem:[%s5 + $0x108] sm:$0xff]
  %v11998 = vld [vmem:[%s5 + $0x110] sm:$0xff]
  %v11999 = vld [vmem:[%s5 + $0x118] sm:$0xff]
  %v12000 = vld [vmem:[%s5 + $0x120] sm:$0xff]
  %v12001 = vld [vmem:[%s5 + $0x128] sm:$0xff]
  %v12002 = vld [vmem:[%s5 + $0x130] sm:$0xff]
  %v12003 = vld [vmem:[%s5 + $0x138] sm:$0xff]
  %v12004 = vld [vmem:[%s5 + $0x140] sm:$0xff]
  %v12005 = vld [vmem:[%s5 + $0x148] sm:$0xff]
  %v12006 = vld [vmem:[%s5 + $0x150] sm:$0xff]
  %v12007 = vld [vmem:[%s5 + $0x158] sm:$0xff]
  %v12008 = vld [vmem:[%s5 + $0x160] sm:$0xff]
  %v12009 = vld [vmem:[%s5 + $0x168] sm:$0xff]
  %v12010 = vld [vmem:[%s5 + $0x170] sm:$0xff]
  %v12011 = vld [vmem:[%s5 + $0x178] sm:$0xff]
  %v12012 = vld [vmem:[%s5 + $0x180] sm:$0xff]
  %v12013 = vld [vmem:[%s5 + $0x188] sm:$0xff]
  %v12014 = vld [vmem:[%s5 + $0x190] sm:$0xff]
  %v12015 = vld [vmem:[%s5 + $0x198] sm:$0xff]
  %v12016 = vld [vmem:[%s5 + $0x1a0] sm:$0xff]
  %v12017 = vld [vmem:[%s5 + $0x1a8] sm:$0xff]
  %v12018 = vld [vmem:[%s5 + $0x1b0] sm:$0xff]
  %v12019 = vld [vmem:[%s5 + $0x1b8] sm:$0xff]
  %v12020 = vld [vmem:[%s5 + $0x1c0] sm:$0xff]
  %v12021 = vld [vmem:[%s5 + $0x1c8] sm:$0xff]
  %v12022 = vld [vmem:[%s5 + $0x1d0] sm:$0xff]
  %v12023 = vld [vmem:[%s5 + $0x1d8] sm:$0xff]
  %v12024 = vld [vmem:[%s5 + $0x1e0] sm:$0xff]
  %v12025 = vld [vmem:[%s5 + $0x1e8] sm:$0xff]
  %v12026 = vld [vmem:[%s5 + $0x1f0] sm:$0xff]
  %v12027 = vld [vmem:[%s5 + $0x1f8] sm:$0xff]
  %v12028 = vld [vmem:[%s5 + $0x200] sm:$0xff]
  %v12029 = vld [vmem:[%s5 + $0x208] sm:$0xff]
  %v12030 = vld [vmem:[%s5 + $0x210] sm:$0xff]
  %v12031 = vld [vmem:[%s5 + $0x218] sm:$0xff]
  %v12032 = vld [vmem:[%s5 + $0x220] sm:$0xff]
  %v12033 = vld [vmem:[%s5 + $0x228] sm:$0xff]
  %v12034 = vld [vmem:[%s5 + $0x230] sm:$0xff]
  %v12035 = vld [vmem:[%s5 + $0x238] sm:$0xff]
  %v12036 = vld [vmem:[%s5 + $0x240] sm:$0xff]
  %v12037 = vld [vmem:[%s5 + $0x248] sm:$0xff]
  %v12038 = vld [vmem:[%s5 + $0x250] sm:$0xff]
  %v12039 = vld [vmem:[%s5 + $0x258] sm:$0xff]
  %v12040 = vld [vmem:[%s5 + $0x260] sm:$0xff]
  %v12041 = vld [vmem:[%s5 + $0x268] sm:$0xff]
  %v12042 = vld [vmem:[%s5 + $0x270] sm:$0xff]
  %v12043 = vld [vmem:[%s5 + $0x278] sm:$0xff]
  %v12044 = vld [vmem:[%s5 + $0x280] sm:$0xff]
  %v12045 = vld [vmem:[%s5 + $0x288] sm:$0xff]
  %v12046 = vld [vmem:[%s5 + $0x290] sm:$0xff]
  %v12047 = vld [vmem:[%s5 + $0x298] sm:$0xff]
  %v12048 = vld [vmem:[%s5 + $0x2a0] sm:$0xff]
  %v12049 = vld [vmem:[%s5 + $0x2a8] sm:$0xff]
  %v12050 = vld [vmem:[%s5 + $0x2b0] sm:$0xff]
  %v12051 = vld [vmem:[%s5 + $0x2b8] sm:$0xff]
  %v12052 = vld [vmem:[%s5 + $0x2c0] sm:$0xff]
  %v12053 = vld [vmem:[%s5 + $0x2c8] sm:$0xff]
  %v12054 = vld [vmem:[%s5 + $0x2d0] sm:$0xff]
  %v12055 = vld [vmem:[%s5 + $0x2d8] sm:$0xff]
  %v12056 = vld [vmem:[%s5 + $0x2e0] sm:$0xff]
  %v12057 = vld [vmem:[%s5 + $0x2e8] sm:$0xff]
  %v12058 = vld [vmem:[%s5 + $0x2f0] sm:$0xff]
  %v12059 = vld [vmem:[%s5 + $0x2f8] sm:$0xff]
  %v12060 = vld [vmem:[%s5 + $0x300] sm:$0xff]
  %v12061 = vld [vmem:[%s5 + $0x308] sm:$0xff]
  %v12062 = vld [vmem:[%s5 + $0x310] sm:$0xff]
  %v12063 = vld [vmem:[%s5 + $0x318] sm:$0xff]
  %v12064 = vld [vmem:[%s5 + $0x320] sm:$0xff]
  %v12065 = vld [vmem:[%s5 + $0x328] sm:$0xff]
  %v12066 = vld [vmem:[%s5 + $0x330] sm:$0xff]
  %v12067 = vld [vmem:[%s5 + $0x338] sm:$0xff]
  %v12068 = vld [vmem:[%s5 + $0x340] sm:$0xff]
  %v12069 = vld [vmem:[%s5 + $0x348] sm:$0xff]
  %v12070 = vld [vmem:[%s5 + $0x350] sm:$0xff]
  %v12071 = vld [vmem:[%s5 + $0x358] sm:$0xff]
  %v12072 = vld [vmem:[%s5 + $0x360] sm:$0xff]
  %v12073 = vld [vmem:[%s5 + $0x368] sm:$0xff]
  %v12074 = vld [vmem:[%s5 + $0x370] sm:$0xff]
  %v12075 = vld [vmem:[%s5 + $0x378] sm:$0xff]
  %v12076 = vld [vmem:[%s5 + $0x380] sm:$0xff]
  %v12077 = vld [vmem:[%s5 + $0x388] sm:$0xff]
  %v12078 = vld [vmem:[%s5 + $0x390] sm:$0xff]
  %v12079 = vld [vmem:[%s5 + $0x398] sm:$0xff]
  %v12080 = vld [vmem:[%s5 + $0x3a0] sm:$0xff]
  %v12081 = vld [vmem:[%s5 + $0x3a8] sm:$0xff]
  %v12082 = vld [vmem:[%s5 + $0x3b0] sm:$0xff]
  %v12083 = vld [vmem:[%s5 + $0x3b8] sm:$0xff]
  %v12084 = vld [vmem:[%s5 + $0x3c0] sm:$0xff]
  %v12085 = vld [vmem:[%s5 + $0x3c8] sm:$0xff]
  %v12086 = vld [vmem:[%s5 + $0x3d0] sm:$0xff]
  %v12087 = vld [vmem:[%s5 + $0x3d8] sm:$0xff]
  %v12088 = vld [vmem:[%s5 + $0x3e0] sm:$0xff]
  %v12089 = vld [vmem:[%s5 + $0x3e8] sm:$0xff]
  %v12090 = vld [vmem:[%s5 + $0x3f0] sm:$0xff]
  %v12091 = vld [vmem:[%s5 + $0x3f8] sm:$0xff]
  %v12092 = vld [vmem:[%s5 + $0x400] sm:$0xff]
  %v12093 = vld [vmem:[%s5 + $0x408] sm:$0xff]
  %v12094 = vld [vmem:[%s5 + $0x410] sm:$0xff]
  %v12095 = vld [vmem:[%s5 + $0x418] sm:$0xff]
  %v12096 = vld [vmem:[%s5 + $0x420] sm:$0xff]
  %v12097 = vld [vmem:[%s5 + $0x428] sm:$0xff]
  %v12098 = vld [vmem:[%s5 + $0x430] sm:$0xff]
  %v12099 = vld [vmem:[%s5 + $0x438] sm:$0xff]
  %v12100 = vld [vmem:[%s5 + $0x440] sm:$0xff]
  %v12101 = vld [vmem:[%s5 + $0x448] sm:$0xff]
  %v12102 = vld [vmem:[%s5 + $0x450] sm:$0xff]
  %v12103 = vld [vmem:[%s5 + $0x458] sm:$0xff]
  %v12104 = vld [vmem:[%s5 + $0x460] sm:$0xff]
  %v12105 = vld [vmem:[%s5 + $0x468] sm:$0xff]
  %v12106 = vld [vmem:[%s5 + $0x470] sm:$0xff]
  %v12107 = vld [vmem:[%s5 + $0x478] sm:$0xff]
  %v12108 = vld [vmem:[%s5 + $0x480] sm:$0xff]
  %v12109 = vld [vmem:[%s5 + $0x488] sm:$0xff]
  %v12110 = vld [vmem:[%s5 + $0x490] sm:$0xff]
  %v12111 = vld [vmem:[%s5 + $0x498] sm:$0xff]
  %v12112 = vld [vmem:[%s5 + $0x4a0] sm:$0xff]
  %v12113 = vld [vmem:[%s5 + $0x4a8] sm:$0xff]
  %v12114 = vld [vmem:[%s5 + $0x4b0] sm:$0xff]
  %v12115 = vld [vmem:[%s5 + $0x4b8] sm:$0xff]
  %v12116 = vld [vmem:[%s5 + $0x4c0] sm:$0xff]
  %v12117 = vld [vmem:[%s5 + $0x4c8] sm:$0xff]
  %v12118 = vld [vmem:[%s5 + $0x4d0] sm:$0xff]
  %v12119 = vld [vmem:[%s5 + $0x4d8] sm:$0xff]
  %v12120 = vld [vmem:[%s5 + $0x4e0] sm:$0xff]
  %v12121 = vld [vmem:[%s5 + $0x4e8] sm:$0xff]
  %v12122 = vld [vmem:[%s5 + $0x4f0] sm:$0xff]
  %v12123 = vld [vmem:[%s5 + $0x4f8] sm:$0xff]
  %v12124 = vld [vmem:[%s5 + $0x500] sm:$0xff]
  %v12125 = vld [vmem:[%s5 + $0x508] sm:$0xff]
  %v12126 = vld [vmem:[%s5 + $0x510] sm:$0xff]
  %v12127 = vld [vmem:[%s5 + $0x518] sm:$0xff]
  %v12128 = vld [vmem:[%s5 + $0x520] sm:$0xff]
  %v12129 = vld [vmem:[%s5 + $0x528] sm:$0xff]
  %v12130 = vld [vmem:[%s5 + $0x530] sm:$0xff]
  %v12131 = vld [vmem:[%s5 + $0x538] sm:$0xff]
  %v12132 = vld [vmem:[%s5 + $0x540] sm:$0xff]
  %v12133 = vld [vmem:[%s5 + $0x548] sm:$0xff]
  %v12134 = vld [vmem:[%s5 + $0x550] sm:$0xff]
  %v12135 = vld [vmem:[%s5 + $0x558] sm:$0xff]
  %v12136 = vld [vmem:[%s5 + $0x560] sm:$0xff]
  %v12137 = vld [vmem:[%s5 + $0x568] sm:$0xff]
  %v12138 = vld [vmem:[%s5 + $0x570] sm:$0xff]
  %v12139 = vld [vmem:[%s5 + $0x578] sm:$0xff]
  %v12140 = vld [vmem:[%s5 + $0x580] sm:$0xff]
  %v12141 = vld [vmem:[%s5 + $0x588] sm:$0xff]
  %v12142 = vld [vmem:[%s5 + $0x590] sm:$0xff]
  %v12143 = vld [vmem:[%s5 + $0x598] sm:$0xff]
  %v12144 = vld [vmem:[%s5 + $0x5a0] sm:$0xff]
  %v12145 = vld [vmem:[%s5 + $0x5a8] sm:$0xff]
  %v12146 = vld [vmem:[%s5 + $0x5b0] sm:$0xff]
  %v12147 = vld [vmem:[%s5 + $0x5b8] sm:$0xff]
  %v12148 = vld [vmem:[%s5 + $0x5c0] sm:$0xff]
  %v12149 = vld [vmem:[%s5 + $0x5c8] sm:$0xff]
  %v12150 = vld [vmem:[%s5 + $0x5d0] sm:$0xff]
  %v12151 = vld [vmem:[%s5 + $0x5d8] sm:$0xff]
  %v12152 = vld [vmem:[%s5 + $0x5e0] sm:$0xff]
  %v12153 = vld [vmem:[%s5 + $0x5e8] sm:$0xff]
  %v12154 = vld [vmem:[%s5 + $0x5f0] sm:$0xff]
  %v12155 = vld [vmem:[%s5 + $0x5f8] sm:$0xff]
  %v12156 = vld [vmem:[%s5 + $0x600] sm:$0xff]
  %v12157 = vld [vmem:[%s5 + $0x608] sm:$0xff]
  %v12158 = vld [vmem:[%s5 + $0x610] sm:$0xff]
  %v12159 = vld [vmem:[%s5 + $0x618] sm:$0xff]
  %v12160 = vld [vmem:[%s5 + $0x620] sm:$0xff]
  %v12161 = vld [vmem:[%s5 + $0x628] sm:$0xff]
  %v12162 = vld [vmem:[%s5 + $0x630] sm:$0xff]
  %v12163 = vld [vmem:[%s5 + $0x638] sm:$0xff]
  %v12164 = vld [vmem:[%s5 + $0x640] sm:$0xff]
  %v12165 = vld [vmem:[%s5 + $0x648] sm:$0xff]
  %v12166 = vld [vmem:[%s5 + $0x650] sm:$0xff]
  %v12167 = vld [vmem:[%s5 + $0x658] sm:$0xff]
  %v12168 = vld [vmem:[%s5 + $0x660] sm:$0xff]
  %v12169 = vld [vmem:[%s5 + $0x668] sm:$0xff]
  %v12170 = vld [vmem:[%s5 + $0x670] sm:$0xff]
  %v12171 = vld [vmem:[%s5 + $0x678] sm:$0xff]
  %v12172 = vld [vmem:[%s5 + $0x680] sm:$0xff]
  %v12173 = vld [vmem:[%s5 + $0x688] sm:$0xff]
  %v12174 = vld [vmem:[%s5 + $0x690] sm:$0xff]
  %v12175 = vld [vmem:[%s5 + $0x698] sm:$0xff]
  %v12176 = vld [vmem:[%s5 + $0x6a0] sm:$0xff]
  %v12177 = vld [vmem:[%s5 + $0x6a8] sm:$0xff]
  %v12178 = vld [vmem:[%s5 + $0x6b0] sm:$0xff]
  %v12179 = vld [vmem:[%s5 + $0x6b8] sm:$0xff]
  %v12180 = vld [vmem:[%s5 + $0x6c0] sm:$0xff]
  %v12181 = vld [vmem:[%s5 + $0x6c8] sm:$0xff]
  %v12182 = vld [vmem:[%s5 + $0x6d0] sm:$0xff]
  %v12183 = vld [vmem:[%s5 + $0x6d8] sm:$0xff]
  %v12184 = vld [vmem:[%s5 + $0x6e0] sm:$0xff]
  %v12185 = vld [vmem:[%s5 + $0x6e8] sm:$0xff]
  %v12186 = vld [vmem:[%s5 + $0x6f0] sm:$0xff]
  %v12187 = vld [vmem:[%s5 + $0x6f8] sm:$0xff]
  %v12188 = vld [vmem:[%s5 + $0x700] sm:$0xff]
  %v12189 = vld [vmem:[%s5 + $0x708] sm:$0xff]
  %v12190 = vld [vmem:[%s5 + $0x710] sm:$0xff]
  %v12191 = vld [vmem:[%s5 + $0x718] sm:$0xff]
  %v12192 = vld [vmem:[%s5 + $0x720] sm:$0xff]
  %v12193 = vld [vmem:[%s5 + $0x728] sm:$0xff]
  %v12194 = vld [vmem:[%s5 + $0x730] sm:$0xff]
  %v12195 = vld [vmem:[%s5 + $0x738] sm:$0xff]
  %v12196 = vld [vmem:[%s5 + $0x740] sm:$0xff]
  %v12197 = vld [vmem:[%s5 + $0x748] sm:$0xff]
  %v12198 = vld [vmem:[%s5 + $0x750] sm:$0xff]
  %v12199 = vld [vmem:[%s5 + $0x758] sm:$0xff]
  %v12200 = vld [vmem:[%s5 + $0x760] sm:$0xff]
  %v12201 = vld [vmem:[%s5 + $0x768] sm:$0xff]
  %v12202 = vld [vmem:[%s5 + $0x770] sm:$0xff]
  %v12203 = vld [vmem:[%s5 + $0x778] sm:$0xff]
  %v12204 = vld [vmem:[%s5 + $0x780] sm:$0xff]
  %v12205 = vld [vmem:[%s5 + $0x788] sm:$0xff]
  %v12206 = vld [vmem:[%s5 + $0x790] sm:$0xff]
  %v12207 = vld [vmem:[%s5 + $0x798] sm:$0xff]
  %v12208 = vld [vmem:[%s5 + $0x7a0] sm:$0xff]
  %v12209 = vld [vmem:[%s5 + $0x7a8] sm:$0xff]
  %v12210 = vld [vmem:[%s5 + $0x7b0] sm:$0xff]
  %v12211 = vld [vmem:[%s5 + $0x7b8] sm:$0xff]
  %v12212 = vld [vmem:[%s5 + $0x7c0] sm:$0xff]
  %v12213 = vld [vmem:[%s5 + $0x7c8] sm:$0xff]
  %v12214 = vld [vmem:[%s5 + $0x7d0] sm:$0xff]
  %v12215 = vld [vmem:[%s5 + $0x7d8] sm:$0xff]
  %v12216 = vld [vmem:[%s5 + $0x7e0] sm:$0xff]
  %v12217 = vld [vmem:[%s5 + $0x7e8] sm:$0xff]
  %v12218 = vld [vmem:[%s5 + $0x7f0] sm:$0xff]
  %v12219 = vld [vmem:[%s5 + $0x7f8] sm:$0xff]
  %v12220 = vld [vmem:[%s6] sm:$0x1]
  %v12222 = vlaneseq
  %v12223 = vshrl.u32 %v12222, 7
  %v12224 = vsub.s32 0, %v12223
  %v12225 = vrot.slane %v12220, %v12224
  %12227 = vmatprep.subr.mxu0 0.0
  %12228 = vmatpush1.msra.mxu0 %v11979
  %12229 = vmatprep.subr.mxu0 0.0
  %12230 = vmatpush1.msra.mxu0 %v11978
  %12231 = vmatprep.subr.mxu0 0.0
  %12232 = vmatpush1.msra.mxu0 %v11977
  %12233 = vmatprep.subr.mxu0 0.0
  %12234 = vmatpush1.msra.mxu0 %v11976
  %12235 = vmatprep.subr.mxu0 0.0
  %12236 = vmatpush1.msra.mxu0 %v11975
  %12237 = vmatprep.subr.mxu0 0.0
  %12238 = vmatpush1.msra.mxu0 %v11974
  %12239 = vmatprep.subr.mxu0 0.0
  %12240 = vmatpush1.msra.mxu0 %v11973
  %12241 = vmatprep.subr.mxu0 0.0
  %12242 = vmatpush1.msra.mxu0 %v11972
  %12243 = vmatprep.subr.mxu0 0.0
  %12244 = vmatpush1.msra.mxu0 %v11971
  %12245 = vmatprep.subr.mxu0 0.0
  %12246 = vmatpush1.msra.mxu0 %v11970
  %12247 = vmatprep.subr.mxu0 0.0
  %12248 = vmatpush1.msra.mxu0 %v11969
  %12249 = vmatprep.subr.mxu0 0.0
  %12250 = vmatpush1.msra.mxu0 %v11968
  %12251 = vmatprep.subr.mxu0 0.0
  %12252 = vmatpush1.msra.mxu0 %v11967
  %12253 = vmatprep.subr.mxu0 0.0
  %12254 = vmatpush1.msra.mxu0 %v11966
  %12255 = vmatprep.subr.mxu0 0.0
  %12256 = vmatpush1.msra.mxu0 %v11965
  %12257 = vmatprep.subr.mxu0 0.0
  %12258 = vmatpush1.msra.mxu0 %v11964
  %12259 = vmatprep.subr.mxu0 0.0
  %12260 = vmatpush2.msra.mxu0 %v11995
  %12261 = vmatprep.subr.mxu0 0.0
  %12262 = vmatpush2.msra.mxu0 %v11994
  %12263 = vmatprep.subr.mxu0 0.0
  %12264 = vmatpush2.msra.mxu0 %v11993
  %12265 = vmatprep.subr.mxu0 0.0
  %12266 = vmatpush2.msra.mxu0 %v11992
  %12267 = vmatprep.subr.mxu0 0.0
  %12268 = vmatpush2.msra.mxu0 %v11991
  %12269 = vmatprep.subr.mxu0 0.0
  %12270 = vmatpush2.msra.mxu0 %v11990
  %12271 = vmatprep.subr.mxu0 0.0
  %12272 = vmatpush2.msra.mxu0 %v11989
  %12273 = vmatprep.subr.mxu0 0.0
  %12274 = vmatpush2.msra.mxu0 %v11988
  %12275 = vmatprep.subr.mxu0 0.0
  %12276 = vmatpush2.msra.mxu0 %v11987
  %12277 = vmatprep.subr.mxu0 0.0
  %12278 = vmatpush2.msra.mxu0 %v11986
  %12279 = vmatprep.subr.mxu0 0.0
  %12280 = vmatpush2.msra.mxu0 %v11985
  %12281 = vmatprep.subr.mxu0 0.0
  %12282 = vmatpush2.msra.mxu0 %v11984
  %12283 = vmatprep.subr.mxu0 0.0
  %12284 = vmatpush2.msra.mxu0 %v11983
  %12285 = vmatprep.subr.mxu0 0.0
  %12286 = vmatpush2.msra.mxu0 %v11982
  %12287 = vmatprep.subr.mxu0 0.0
  %12288 = vmatpush2.msra.mxu0 %v11981
  %12289 = vmatprep.subr.mxu0 0.0
  %12290 = vmatpush2.msra.mxu0 %v11980
  %12291 = vmatprep.mubr.f32.mxu0 %v11005
  %12292 = vmatmul.mubr.f32.gmra.mxu0 %v11004
  %v12293 = vpop.f32.mrf.mxu0
  %v12294 = vadd.f32 %v12225, %v12293
  %v12295 = vpop.f32.mrf.mxu0
  %12296 = vmatprep.mubr.f32.mxu0 %v11141
  %12297 = vmatmul.mubr.f32.gmra.mxu0 %v11140
  %v12298 = vpop.f32.mrf.mxu0
  %v12299 = vadd.f32 %v12225, %v12298
  %v12300 = vpop.f32.mrf.mxu0
  %12301 = vmatprep.mubr.f32.mxu0 %v11277
  %12302 = vmatmul.mubr.f32.gmra.mxu0 %v11276
  %v12303 = vpop.f32.mrf.mxu0
  %v12304 = vadd.f32 %v12225, %v12303
  %v12305 = vpop.f32.mrf.mxu0
  %12306 = vmatprep.mubr.f32.mxu0 %v11413
  %12307 = vmatmul.mubr.f32.gmra.mxu0 %v11412
  %v12308 = vpop.f32.mrf.mxu0
  %v12309 = vadd.f32 %v12225, %v12308
  %v12310 = vpop.f32.mrf.mxu0
  %12311 = vdwg.mxu0
  %12312 = vmatprep.subr.mxu0 0.0
  %12313 = vmatpush1.msra.mxu0 %v12011
  %12314 = vmatprep.subr.mxu0 0.0
  %12315 = vmatpush1.msra.mxu0 %v12010
  %12316 = vmatprep.subr.mxu0 0.0
  %12317 = vmatpush1.msra.mxu0 %v12009
  %12318 = vmatprep.subr.mxu0 0.0
  %12319 = vmatpush1.msra.mxu0 %v12008
  %12320 = vmatprep.subr.mxu0 0.0
  %12321 = vmatpush1.msra.mxu0 %v12007
  %12322 = vmatprep.subr.mxu0 0.0
  %12323 = vmatpush1.msra.mxu0 %v12006
  %12324 = vmatprep.subr.mxu0 0.0
  %12325 = vmatpush1.msra.mxu0 %v12005
  %12326 = vmatprep.subr.mxu0 0.0
  %12327 = vmatpush1.msra.mxu0 %v12004
  %12328 = vmatprep.subr.mxu0 0.0
  %12329 = vmatpush1.msra.mxu0 %v12003
  %12330 = vmatprep.subr.mxu0 0.0
  %12331 = vmatpush1.msra.mxu0 %v12002
  %12332 = vmatprep.subr.mxu0 0.0
  %12333 = vmatpush1.msra.mxu0 %v12001
  %12334 = vmatprep.subr.mxu0 0.0
  %12335 = vmatpush1.msra.mxu0 %v12000
  %12336 = vmatprep.subr.mxu0 0.0
  %12337 = vmatpush1.msra.mxu0 %v11999
  %12338 = vmatprep.subr.mxu0 0.0
  %12339 = vmatpush1.msra.mxu0 %v11998
  %12340 = vmatprep.subr.mxu0 0.0
  %12341 = vmatpush1.msra.mxu0 %v11997
  %12342 = vmatprep.subr.mxu0 0.0
  %12343 = vmatpush1.msra.mxu0 %v11996
  %12344 = vmatprep.subr.mxu0 0.0
  %12345 = vmatpush2.msra.mxu0 %v12027
  %12346 = vmatprep.subr.mxu0 0.0
  %12347 = vmatpush2.msra.mxu0 %v12026
  %12348 = vmatprep.subr.mxu0 0.0
  %12349 = vmatpush2.msra.mxu0 %v12025
  %12350 = vmatprep.subr.mxu0 0.0
  %12351 = vmatpush2.msra.mxu0 %v12024
  %12352 = vmatprep.subr.mxu0 0.0
  %12353 = vmatpush2.msra.mxu0 %v12023
  %12354 = vmatprep.subr.mxu0 0.0
  %12355 = vmatpush2.msra.mxu0 %v12022
  %12356 = vmatprep.subr.mxu0 0.0
  %12357 = vmatpush2.msra.mxu0 %v12021
  %12358 = vmatprep.subr.mxu0 0.0
  %12359 = vmatpush2.msra.mxu0 %v12020
  %12360 = vmatprep.subr.mxu0 0.0
  %12361 = vmatpush2.msra.mxu0 %v12019
  %12362 = vmatprep.subr.mxu0 0.0
  %12363 = vmatpush2.msra.mxu0 %v12018
  %12364 = vmatprep.subr.mxu0 0.0
  %12365 = vmatpush2.msra.mxu0 %v12017
  %12366 = vmatprep.subr.mxu0 0.0
  %12367 = vmatpush2.msra.mxu0 %v12016
  %12368 = vmatprep.subr.mxu0 0.0
  %12369 = vmatpush2.msra.mxu0 %v12015
  %12370 = vmatprep.subr.mxu0 0.0
  %12371 = vmatpush2.msra.mxu0 %v12014
  %12372 = vmatprep.subr.mxu0 0.0
  %12373 = vmatpush2.msra.mxu0 %v12013
  %12374 = vmatprep.subr.mxu0 0.0
  %12375 = vmatpush2.msra.mxu0 %v12012
  %12376 = vmatprep.mubr.f32.mxu0 %v11007
  %12377 = vmatmul.mubr.f32.gmra.mxu0 %v11006
  %v12378 = vpop.f32.mrf.mxu0
  %v12379 = vadd.f32 %v12294, %v12378
  %v12380 = vpop.f32.mrf.mxu0
  %12381 = vmatprep.mubr.f32.mxu0 %v11143
  %12382 = vmatmul.mubr.f32.gmra.mxu0 %v11142
  %v12383 = vpop.f32.mrf.mxu0
  %v12384 = vadd.f32 %v12299, %v12383
  %v12385 = vpop.f32.mrf.mxu0
  %12386 = vmatprep.mubr.f32.mxu0 %v11279
  %12387 = vmatmul.mubr.f32.gmra.mxu0 %v11278
  %v12388 = vpop.f32.mrf.mxu0
  %v12389 = vadd.f32 %v12304, %v12388
  %v12390 = vpop.f32.mrf.mxu0
  %12391 = vmatprep.mubr.f32.mxu0 %v11415
  %12392 = vmatmul.mubr.f32.gmra.mxu0 %v11414
  %v12393 = vpop.f32.mrf.mxu0
  %v12394 = vadd.f32 %v12309, %v12393
  %v12395 = vpop.f32.mrf.mxu0
  %12396 = vdwg.mxu0
  %12397 = vmatprep.subr.mxu0 0.0
  %12398 = vmatpush1.msra.mxu0 %v12043
  %12399 = vmatprep.subr.mxu0 0.0
  %12400 = vmatpush1.msra.mxu0 %v12042
  %12401 = vmatprep.subr.mxu0 0.0
  %12402 = vmatpush1.msra.mxu0 %v12041
  %12403 = vmatprep.subr.mxu0 0.0
  %12404 = vmatpush1.msra.mxu0 %v12040
  %12405 = vmatprep.subr.mxu0 0.0
  %12406 = vmatpush1.msra.mxu0 %v12039
  %12407 = vmatprep.subr.mxu0 0.0
  %12408 = vmatpush1.msra.mxu0 %v12038
  %12409 = vmatprep.subr.mxu0 0.0
  %12410 = vmatpush1.msra.mxu0 %v12037
  %12411 = vmatprep.subr.mxu0 0.0
  %12412 = vmatpush1.msra.mxu0 %v12036
  %12413 = vmatprep.subr.mxu0 0.0
  %12414 = vmatpush1.msra.mxu0 %v12035
  %12415 = vmatprep.subr.mxu0 0.0
  %12416 = vmatpush1.msra.mxu0 %v12034
  %12417 = vmatprep.subr.mxu0 0.0
  %12418 = vmatpush1.msra.mxu0 %v12033
  %12419 = vmatprep.subr.mxu0 0.0
  %12420 = vmatpush1.msra.mxu0 %v12032
  %12421 = vmatprep.subr.mxu0 0.0
  %12422 = vmatpush1.msra.mxu0 %v12031
  %12423 = vmatprep.subr.mxu0 0.0
  %12424 = vmatpush1.msra.mxu0 %v12030
  %12425 = vmatprep.subr.mxu0 0.0
  %12426 = vmatpush1.msra.mxu0 %v12029
  %12427 = vmatprep.subr.mxu0 0.0
  %12428 = vmatpush1.msra.mxu0 %v12028
  %12429 = vmatprep.subr.mxu0 0.0
  %12430 = vmatpush2.msra.mxu0 %v12059
  %12431 = vmatprep.subr.mxu0 0.0
  %12432 = vmatpush2.msra.mxu0 %v12058
  %12433 = vmatprep.subr.mxu0 0.0
  %12434 = vmatpush2.msra.mxu0 %v12057
  %12435 = vmatprep.subr.mxu0 0.0
  %12436 = vmatpush2.msra.mxu0 %v12056
  %12437 = vmatprep.subr.mxu0 0.0
  %12438 = vmatpush2.msra.mxu0 %v12055
  %12439 = vmatprep.subr.mxu0 0.0
  %12440 = vmatpush2.msra.mxu0 %v12054
  %12441 = vmatprep.subr.mxu0 0.0
  %12442 = vmatpush2.msra.mxu0 %v12053
  %12443 = vmatprep.subr.mxu0 0.0
  %12444 = vmatpush2.msra.mxu0 %v12052
  %12445 = vmatprep.subr.mxu0 0.0
  %12446 = vmatpush2.msra.mxu0 %v12051
  %12447 = vmatprep.subr.mxu0 0.0
  %12448 = vmatpush2.msra.mxu0 %v12050
  %12449 = vmatprep.subr.mxu0 0.0
  %12450 = vmatpush2.msra.mxu0 %v12049
  %12451 = vmatprep.subr.mxu0 0.0
  %12452 = vmatpush2.msra.mxu0 %v12048
  %12453 = vmatprep.subr.mxu0 0.0
  %12454 = vmatpush2.msra.mxu0 %v12047
  %12455 = vmatprep.subr.mxu0 0.0
  %12456 = vmatpush2.msra.mxu0 %v12046
  %12457 = vmatprep.subr.mxu0 0.0
  %12458 = vmatpush2.msra.mxu0 %v12045
  %12459 = vmatprep.subr.mxu0 0.0
  %12460 = vmatpush2.msra.mxu0 %v12044
  %12461 = vmatprep.mubr.f32.mxu0 %v11009
  %12462 = vmatmul.mubr.f32.gmra.mxu0 %v11008
  %v12463 = vpop.f32.mrf.mxu0
  %v12464 = vadd.f32 %v12379, %v12463
  %v12465 = vpop.f32.mrf.mxu0
  %12466 = vmatprep.mubr.f32.mxu0 %v11145
  %12467 = vmatmul.mubr.f32.gmra.mxu0 %v11144
  %v12468 = vpop.f32.mrf.mxu0
  %v12469 = vadd.f32 %v12384, %v12468
  %v12470 = vpop.f32.mrf.mxu0
  %12471 = vmatprep.mubr.f32.mxu0 %v11281
  %12472 = vmatmul.mubr.f32.gmra.mxu0 %v11280
  %v12473 = vpop.f32.mrf.mxu0
  %v12474 = vadd.f32 %v12389, %v12473
  %v12475 = vpop.f32.mrf.mxu0
  %12476 = vmatprep.mubr.f32.mxu0 %v11417
  %12477 = vmatmul.mubr.f32.gmra.mxu0 %v11416
  %v12478 = vpop.f32.mrf.mxu0
  %v12479 = vadd.f32 %v12394, %v12478
  %v12480 = vpop.f32.mrf.mxu0
  %12481 = vdwg.mxu0
  %12482 = vmatprep.subr.mxu0 0.0
  %12483 = vmatpush1.msra.mxu0 %v12075
  %12484 = vmatprep.subr.mxu0 0.0
  %12485 = vmatpush1.msra.mxu0 %v12074
  %12486 = vmatprep.subr.mxu0 0.0
  %12487 = vmatpush1.msra.mxu0 %v12073
  %12488 = vmatprep.subr.mxu0 0.0
  %12489 = vmatpush1.msra.mxu0 %v12072
  %12490 = vmatprep.subr.mxu0 0.0
  %12491 = vmatpush1.msra.mxu0 %v12071
  %12492 = vmatprep.subr.mxu0 0.0
  %12493 = vmatpush1.msra.mxu0 %v12070
  %12494 = vmatprep.subr.mxu0 0.0
  %12495 = vmatpush1.msra.mxu0 %v12069
  %12496 = vmatprep.subr.mxu0 0.0
  %12497 = vmatpush1.msra.mxu0 %v12068
  %12498 = vmatprep.subr.mxu0 0.0
  %12499 = vmatpush1.msra.mxu0 %v12067
  %12500 = vmatprep.subr.mxu0 0.0
  %12501 = vmatpush1.msra.mxu0 %v12066
  %12502 = vmatprep.subr.mxu0 0.0
  %12503 = vmatpush1.msra.mxu0 %v12065
  %12504 = vmatprep.subr.mxu0 0.0
  %12505 = vmatpush1.msra.mxu0 %v12064
  %12506 = vmatprep.subr.mxu0 0.0
  %12507 = vmatpush1.msra.mxu0 %v12063
  %12508 = vmatprep.subr.mxu0 0.0
  %12509 = vmatpush1.msra.mxu0 %v12062
  %12510 = vmatprep.subr.mxu0 0.0
  %12511 = vmatpush1.msra.mxu0 %v12061
  %12512 = vmatprep.subr.mxu0 0.0
  %12513 = vmatpush1.msra.mxu0 %v12060
  %12514 = vmatprep.subr.mxu0 0.0
  %12515 = vmatpush2.msra.mxu0 %v12091
  %12516 = vmatprep.subr.mxu0 0.0
  %12517 = vmatpush2.msra.mxu0 %v12090
  %12518 = vmatprep.subr.mxu0 0.0
  %12519 = vmatpush2.msra.mxu0 %v12089
  %12520 = vmatprep.subr.mxu0 0.0
  %12521 = vmatpush2.msra.mxu0 %v12088
  %12522 = vmatprep.subr.mxu0 0.0
  %12523 = vmatpush2.msra.mxu0 %v12087
  %12524 = vmatprep.subr.mxu0 0.0
  %12525 = vmatpush2.msra.mxu0 %v12086
  %12526 = vmatprep.subr.mxu0 0.0
  %12527 = vmatpush2.msra.mxu0 %v12085
  %12528 = vmatprep.subr.mxu0 0.0
  %12529 = vmatpush2.msra.mxu0 %v12084
  %12530 = vmatprep.subr.mxu0 0.0
  %12531 = vmatpush2.msra.mxu0 %v12083
  %12532 = vmatprep.subr.mxu0 0.0
  %12533 = vmatpush2.msra.mxu0 %v12082
  %12534 = vmatprep.subr.mxu0 0.0
  %12535 = vmatpush2.msra.mxu0 %v12081
  %12536 = vmatprep.subr.mxu0 0.0
  %12537 = vmatpush2.msra.mxu0 %v12080
  %12538 = vmatprep.subr.mxu0 0.0
  %12539 = vmatpush2.msra.mxu0 %v12079
  %12540 = vmatprep.subr.mxu0 0.0
  %12541 = vmatpush2.msra.mxu0 %v12078
  %12542 = vmatprep.subr.mxu0 0.0
  %12543 = vmatpush2.msra.mxu0 %v12077
  %12544 = vmatprep.subr.mxu0 0.0
  %12545 = vmatpush2.msra.mxu0 %v12076
  %12546 = vmatprep.mubr.f32.mxu0 %v11011
  %12547 = vmatmul.mubr.f32.gmra.mxu0 %v11010
  %v12548 = vpop.f32.mrf.mxu0
  %v12549 = vadd.f32 %v12464, %v12548
  %v12550 = vpop.f32.mrf.mxu0
  %12551 = vmatprep.mubr.f32.mxu0 %v11147
  %12552 = vmatmul.mubr.f32.gmra.mxu0 %v11146
  %v12553 = vpop.f32.mrf.mxu0
  %v12554 = vadd.f32 %v12469, %v12553
  %v12555 = vpop.f32.mrf.mxu0
  %12556 = vmatprep.mubr.f32.mxu0 %v11283
  %12557 = vmatmul.mubr.f32.gmra.mxu0 %v11282
  %v12558 = vpop.f32.mrf.mxu0
  %v12559 = vadd.f32 %v12474, %v12558
  %v12560 = vpop.f32.mrf.mxu0
  %12561 = vmatprep.mubr.f32.mxu0 %v11419
  %12562 = vmatmul.mubr.f32.gmra.mxu0 %v11418
  %v12563 = vpop.f32.mrf.mxu0
  %v12564 = vadd.f32 %v12479, %v12563
  %v12565 = vpop.f32.mrf.mxu0
  %12566 = vdwg.mxu0
  %12567 = vmatprep.subr.mxu0 0.0
  %12568 = vmatpush1.msra.mxu0 %v12107
  %12569 = vmatprep.subr.mxu0 0.0
  %12570 = vmatpush1.msra.mxu0 %v12106
  %12571 = vmatprep.subr.mxu0 0.0
  %12572 = vmatpush1.msra.mxu0 %v12105
  %12573 = vmatprep.subr.mxu0 0.0
  %12574 = vmatpush1.msra.mxu0 %v12104
  %12575 = vmatprep.subr.mxu0 0.0
  %12576 = vmatpush1.msra.mxu0 %v12103
  %12577 = vmatprep.subr.mxu0 0.0
  %12578 = vmatpush1.msra.mxu0 %v12102
  %12579 = vmatprep.subr.mxu0 0.0
  %12580 = vmatpush1.msra.mxu0 %v12101
  %12581 = vmatprep.subr.mxu0 0.0
  %12582 = vmatpush1.msra.mxu0 %v12100
  %12583 = vmatprep.subr.mxu0 0.0
  %12584 = vmatpush1.msra.mxu0 %v12099
  %12585 = vmatprep.subr.mxu0 0.0
  %12586 = vmatpush1.msra.mxu0 %v12098
  %12587 = vmatprep.subr.mxu0 0.0
  %12588 = vmatpush1.msra.mxu0 %v12097
  %12589 = vmatprep.subr.mxu0 0.0
  %12590 = vmatpush1.msra.mxu0 %v12096
  %12591 = vmatprep.subr.mxu0 0.0
  %12592 = vmatpush1.msra.mxu0 %v12095
  %12593 = vmatprep.subr.mxu0 0.0
  %12594 = vmatpush1.msra.mxu0 %v12094
  %12595 = vmatprep.subr.mxu0 0.0
  %12596 = vmatpush1.msra.mxu0 %v12093
  %12597 = vmatprep.subr.mxu0 0.0
  %12598 = vmatpush1.msra.mxu0 %v12092
  %12599 = vmatprep.subr.mxu0 0.0
  %12600 = vmatpush2.msra.mxu0 %v12123
  %12601 = vmatprep.subr.mxu0 0.0
  %12602 = vmatpush2.msra.mxu0 %v12122
  %12603 = vmatprep.subr.mxu0 0.0
  %12604 = vmatpush2.msra.mxu0 %v12121
  %12605 = vmatprep.subr.mxu0 0.0
  %12606 = vmatpush2.msra.mxu0 %v12120
  %12607 = vmatprep.subr.mxu0 0.0
  %12608 = vmatpush2.msra.mxu0 %v12119
  %12609 = vmatprep.subr.mxu0 0.0
  %12610 = vmatpush2.msra.mxu0 %v12118
  %12611 = vmatprep.subr.mxu0 0.0
  %12612 = vmatpush2.msra.mxu0 %v12117
  %12613 = vmatprep.subr.mxu0 0.0
  %12614 = vmatpush2.msra.mxu0 %v12116
  %12615 = vmatprep.subr.mxu0 0.0
  %12616 = vmatpush2.msra.mxu0 %v12115
  %12617 = vmatprep.subr.mxu0 0.0
  %12618 = vmatpush2.msra.mxu0 %v12114
  %12619 = vmatprep.subr.mxu0 0.0
  %12620 = vmatpush2.msra.mxu0 %v12113
  %12621 = vmatprep.subr.mxu0 0.0
  %12622 = vmatpush2.msra.mxu0 %v12112
  %12623 = vmatprep.subr.mxu0 0.0
  %12624 = vmatpush2.msra.mxu0 %v12111
  %12625 = vmatprep.subr.mxu0 0.0
  %12626 = vmatpush2.msra.mxu0 %v12110
  %12627 = vmatprep.subr.mxu0 0.0
  %12628 = vmatpush2.msra.mxu0 %v12109
  %12629 = vmatprep.subr.mxu0 0.0
  %12630 = vmatpush2.msra.mxu0 %v12108
  %12631 = vmatprep.mubr.f32.mxu0 %v11549
  %12632 = vmatmul.mubr.f32.gmra.mxu0 %v11548
  %v12633 = vpop.f32.mrf.mxu0
  %v12634 = vadd.f32 %v12549, %v12633
  %v12635 = vpop.f32.mrf.mxu0
  %12636 = vmatprep.mubr.f32.mxu0 %v11685
  %12637 = vmatmul.mubr.f32.gmra.mxu0 %v11684
  %v12638 = vpop.f32.mrf.mxu0
  %v12639 = vadd.f32 %v12554, %v12638
  %v12640 = vpop.f32.mrf.mxu0
  %12641 = vmatprep.mubr.f32.mxu0 %v11821
  %12642 = vmatmul.mubr.f32.gmra.mxu0 %v11820
  %v12643 = vpop.f32.mrf.mxu0
  %v12644 = vadd.f32 %v12559, %v12643
  %v12645 = vpop.f32.mrf.mxu0
  %12646 = vmatprep.mubr.f32.mxu0 %v11957
  %12647 = vmatmul.mubr.f32.gmra.mxu0 %v11956
  %v12648 = vpop.f32.mrf.mxu0
  %v12649 = vadd.f32 %v12564, %v12648
  %v12650 = vpop.f32.mrf.mxu0
  %12651 = vdwg.mxu0
  %12652 = vmatprep.subr.mxu0 0.0
  %12653 = vmatpush1.msra.mxu0 %v12139
  %12654 = vmatprep.subr.mxu0 0.0
  %12655 = vmatpush1.msra.mxu0 %v12138
  %12656 = vmatprep.subr.mxu0 0.0
  %12657 = vmatpush1.msra.mxu0 %v12137
  %12658 = vmatprep.subr.mxu0 0.0
  %12659 = vmatpush1.msra.mxu0 %v12136
  %12660 = vmatprep.subr.mxu0 0.0
  %12661 = vmatpush1.msra.mxu0 %v12135
  %12662 = vmatprep.subr.mxu0 0.0
  %12663 = vmatpush1.msra.mxu0 %v12134
  %12664 = vmatprep.subr.mxu0 0.0
  %12665 = vmatpush1.msra.mxu0 %v12133
  %12666 = vmatprep.subr.mxu0 0.0
  %12667 = vmatpush1.msra.mxu0 %v12132
  %12668 = vmatprep.subr.mxu0 0.0
  %12669 = vmatpush1.msra.mxu0 %v12131
  %12670 = vmatprep.subr.mxu0 0.0
  %12671 = vmatpush1.msra.mxu0 %v12130
  %12672 = vmatprep.subr.mxu0 0.0
  %12673 = vmatpush1.msra.mxu0 %v12129
  %12674 = vmatprep.subr.mxu0 0.0
  %12675 = vmatpush1.msra.mxu0 %v12128
  %12676 = vmatprep.subr.mxu0 0.0
  %12677 = vmatpush1.msra.mxu0 %v12127
  %12678 = vmatprep.subr.mxu0 0.0
  %12679 = vmatpush1.msra.mxu0 %v12126
  %12680 = vmatprep.subr.mxu0 0.0
  %12681 = vmatpush1.msra.mxu0 %v12125
  %12682 = vmatprep.subr.mxu0 0.0
  %12683 = vmatpush1.msra.mxu0 %v12124
  %12684 = vmatprep.subr.mxu0 0.0
  %12685 = vmatpush2.msra.mxu0 %v12155
  %12686 = vmatprep.subr.mxu0 0.0
  %12687 = vmatpush2.msra.mxu0 %v12154
  %12688 = vmatprep.subr.mxu0 0.0
  %12689 = vmatpush2.msra.mxu0 %v12153
  %12690 = vmatprep.subr.mxu0 0.0
  %12691 = vmatpush2.msra.mxu0 %v12152
  %12692 = vmatprep.subr.mxu0 0.0
  %12693 = vmatpush2.msra.mxu0 %v12151
  %12694 = vmatprep.subr.mxu0 0.0
  %12695 = vmatpush2.msra.mxu0 %v12150
  %12696 = vmatprep.subr.mxu0 0.0
  %12697 = vmatpush2.msra.mxu0 %v12149
  %12698 = vmatprep.subr.mxu0 0.0
  %12699 = vmatpush2.msra.mxu0 %v12148
  %12700 = vmatprep.subr.mxu0 0.0
  %12701 = vmatpush2.msra.mxu0 %v12147
  %12702 = vmatprep.subr.mxu0 0.0
  %12703 = vmatpush2.msra.mxu0 %v12146
  %12704 = vmatprep.subr.mxu0 0.0
  %12705 = vmatpush2.msra.mxu0 %v12145
  %12706 = vmatprep.subr.mxu0 0.0
  %12707 = vmatpush2.msra.mxu0 %v12144
  %12708 = vmatprep.subr.mxu0 0.0
  %12709 = vmatpush2.msra.mxu0 %v12143
  %12710 = vmatprep.subr.mxu0 0.0
  %12711 = vmatpush2.msra.mxu0 %v12142
  %12712 = vmatprep.subr.mxu0 0.0
  %12713 = vmatpush2.msra.mxu0 %v12141
  %12714 = vmatprep.subr.mxu0 0.0
  %12715 = vmatpush2.msra.mxu0 %v12140
  %12716 = vmatprep.mubr.f32.mxu0 %v11551
  %12717 = vmatmul.mubr.f32.gmra.mxu0 %v11550
  %v12718 = vpop.f32.mrf.mxu0
  %v12719 = vadd.f32 %v12634, %v12718
  %v12720 = vpop.f32.mrf.mxu0
  %12721 = vmatprep.mubr.f32.mxu0 %v11687
  %12722 = vmatmul.mubr.f32.gmra.mxu0 %v11686
  %v12723 = vpop.f32.mrf.mxu0
  %v12724 = vadd.f32 %v12639, %v12723
  %v12725 = vpop.f32.mrf.mxu0
  %12726 = vmatprep.mubr.f32.mxu0 %v11823
  %12727 = vmatmul.mubr.f32.gmra.mxu0 %v11822
  %v12728 = vpop.f32.mrf.mxu0
  %v12729 = vadd.f32 %v12644, %v12728
  %v12730 = vpop.f32.mrf.mxu0
  %12731 = vmatprep.mubr.f32.mxu0 %v11959
  %12732 = vmatmul.mubr.f32.gmra.mxu0 %v11958
  %v12733 = vpop.f32.mrf.mxu0
  %v12734 = vadd.f32 %v12649, %v12733
  %v12735 = vpop.f32.mrf.mxu0
  %12736 = vdwg.mxu0
  %12737 = vmatprep.subr.mxu0 0.0
  %12738 = vmatpush1.msra.mxu0 %v12171
  %12739 = vmatprep.subr.mxu0 0.0
  %12740 = vmatpush1.msra.mxu0 %v12170
  %12741 = vmatprep.subr.mxu0 0.0
  %12742 = vmatpush1.msra.mxu0 %v12169
  %12743 = vmatprep.subr.mxu0 0.0
  %12744 = vmatpush1.msra.mxu0 %v12168
  %12745 = vmatprep.subr.mxu0 0.0
  %12746 = vmatpush1.msra.mxu0 %v12167
  %12747 = vmatprep.subr.mxu0 0.0
  %12748 = vmatpush1.msra.mxu0 %v12166
  %12749 = vmatprep.subr.mxu0 0.0
  %12750 = vmatpush1.msra.mxu0 %v12165
  %12751 = vmatprep.subr.mxu0 0.0
  %12752 = vmatpush1.msra.mxu0 %v12164
  %12753 = vmatprep.subr.mxu0 0.0
  %12754 = vmatpush1.msra.mxu0 %v12163
  %12755 = vmatprep.subr.mxu0 0.0
  %12756 = vmatpush1.msra.mxu0 %v12162
  %12757 = vmatprep.subr.mxu0 0.0
  %12758 = vmatpush1.msra.mxu0 %v12161
  %12759 = vmatprep.subr.mxu0 0.0
  %12760 = vmatpush1.msra.mxu0 %v12160
  %12761 = vmatprep.subr.mxu0 0.0
  %12762 = vmatpush1.msra.mxu0 %v12159
  %12763 = vmatprep.subr.mxu0 0.0
  %12764 = vmatpush1.msra.mxu0 %v12158
  %12765 = vmatprep.subr.mxu0 0.0
  %12766 = vmatpush1.msra.mxu0 %v12157
  %12767 = vmatprep.subr.mxu0 0.0
  %12768 = vmatpush1.msra.mxu0 %v12156
  %12769 = vmatprep.subr.mxu0 0.0
  %12770 = vmatpush2.msra.mxu0 %v12187
  %12771 = vmatprep.subr.mxu0 0.0
  %12772 = vmatpush2.msra.mxu0 %v12186
  %12773 = vmatprep.subr.mxu0 0.0
  %12774 = vmatpush2.msra.mxu0 %v12185
  %12775 = vmatprep.subr.mxu0 0.0
  %12776 = vmatpush2.msra.mxu0 %v12184
  %12777 = vmatprep.subr.mxu0 0.0
  %12778 = vmatpush2.msra.mxu0 %v12183
  %12779 = vmatprep.subr.mxu0 0.0
  %12780 = vmatpush2.msra.mxu0 %v12182
  %12781 = vmatprep.subr.mxu0 0.0
  %12782 = vmatpush2.msra.mxu0 %v12181
  %12783 = vmatprep.subr.mxu0 0.0
  %12784 = vmatpush2.msra.mxu0 %v12180
  %12785 = vmatprep.subr.mxu0 0.0
  %12786 = vmatpush2.msra.mxu0 %v12179
  %12787 = vmatprep.subr.mxu0 0.0
  %12788 = vmatpush2.msra.mxu0 %v12178
  %12789 = vmatprep.subr.mxu0 0.0
  %12790 = vmatpush2.msra.mxu0 %v12177
  %12791 = vmatprep.subr.mxu0 0.0
  %12792 = vmatpush2.msra.mxu0 %v12176
  %12793 = vmatprep.subr.mxu0 0.0
  %12794 = vmatpush2.msra.mxu0 %v12175
  %12795 = vmatprep.subr.mxu0 0.0
  %12796 = vmatpush2.msra.mxu0 %v12174
  %12797 = vmatprep.subr.mxu0 0.0
  %12798 = vmatpush2.msra.mxu0 %v12173
  %12799 = vmatprep.subr.mxu0 0.0
  %12800 = vmatpush2.msra.mxu0 %v12172
  %12801 = vmatprep.mubr.f32.mxu0 %v11553
  %12802 = vmatmul.mubr.f32.gmra.mxu0 %v11552
  %v12803 = vpop.f32.mrf.mxu0
  %v12804 = vadd.f32 %v12719, %v12803
  %v12805 = vpop.f32.mrf.mxu0
  %12806 = vmatprep.mubr.f32.mxu0 %v11689
  %12807 = vmatmul.mubr.f32.gmra.mxu0 %v11688
  %v12808 = vpop.f32.mrf.mxu0
  %v12809 = vadd.f32 %v12724, %v12808
  %v12810 = vpop.f32.mrf.mxu0
  %12811 = vmatprep.mubr.f32.mxu0 %v11825
  %12812 = vmatmul.mubr.f32.gmra.mxu0 %v11824
  %v12813 = vpop.f32.mrf.mxu0
  %v12814 = vadd.f32 %v12729, %v12813
  %v12815 = vpop.f32.mrf.mxu0
  %12816 = vmatprep.mubr.f32.mxu0 %v11961
  %12817 = vmatmul.mubr.f32.gmra.mxu0 %v11960
  %v12818 = vpop.f32.mrf.mxu0
  %v12819 = vadd.f32 %v12734, %v12818
  %v12820 = vpop.f32.mrf.mxu0
  %12821 = vdwg.mxu0
  %12822 = vmatprep.subr.mxu0 0.0
  %12823 = vmatpush1.msra.mxu0 %v12203
  %12824 = vmatprep.subr.mxu0 0.0
  %12825 = vmatpush1.msra.mxu0 %v12202
  %12826 = vmatprep.subr.mxu0 0.0
  %12827 = vmatpush1.msra.mxu0 %v12201
  %12828 = vmatprep.subr.mxu0 0.0
  %12829 = vmatpush1.msra.mxu0 %v12200
  %12830 = vmatprep.subr.mxu0 0.0
  %12831 = vmatpush1.msra.mxu0 %v12199
  %12832 = vmatprep.subr.mxu0 0.0
  %12833 = vmatpush1.msra.mxu0 %v12198
  %12834 = vmatprep.subr.mxu0 0.0
  %12835 = vmatpush1.msra.mxu0 %v12197
  %12836 = vmatprep.subr.mxu0 0.0
  %12837 = vmatpush1.msra.mxu0 %v12196
  %12838 = vmatprep.subr.mxu0 0.0
  %12839 = vmatpush1.msra.mxu0 %v12195
  %12840 = vmatprep.subr.mxu0 0.0
  %12841 = vmatpush1.msra.mxu0 %v12194
  %12842 = vmatprep.subr.mxu0 0.0
  %12843 = vmatpush1.msra.mxu0 %v12193
  %12844 = vmatprep.subr.mxu0 0.0
  %12845 = vmatpush1.msra.mxu0 %v12192
  %12846 = vmatprep.subr.mxu0 0.0
  %12847 = vmatpush1.msra.mxu0 %v12191
  %12848 = vmatprep.subr.mxu0 0.0
  %12849 = vmatpush1.msra.mxu0 %v12190
  %12850 = vmatprep.subr.mxu0 0.0
  %12851 = vmatpush1.msra.mxu0 %v12189
  %12852 = vmatprep.subr.mxu0 0.0
  %12853 = vmatpush1.msra.mxu0 %v12188
  %12854 = vmatprep.subr.mxu0 0.0
  %12855 = vmatpush2.msra.mxu0 %v12219
  %12856 = vmatprep.subr.mxu0 0.0
  %12857 = vmatpush2.msra.mxu0 %v12218
  %12858 = vmatprep.subr.mxu0 0.0
  %12859 = vmatpush2.msra.mxu0 %v12217
  %12860 = vmatprep.subr.mxu0 0.0
  %12861 = vmatpush2.msra.mxu0 %v12216
  %12862 = vmatprep.subr.mxu0 0.0
  %12863 = vmatpush2.msra.mxu0 %v12215
  %12864 = vmatprep.subr.mxu0 0.0
  %12865 = vmatpush2.msra.mxu0 %v12214
  %12866 = vmatprep.subr.mxu0 0.0
  %12867 = vmatpush2.msra.mxu0 %v12213
  %12868 = vmatprep.subr.mxu0 0.0
  %12869 = vmatpush2.msra.mxu0 %v12212
  %12870 = vmatprep.subr.mxu0 0.0
  %12871 = vmatpush2.msra.mxu0 %v12211
  %12872 = vmatprep.subr.mxu0 0.0
  %12873 = vmatpush2.msra.mxu0 %v12210
  %12874 = vmatprep.subr.mxu0 0.0
  %12875 = vmatpush2.msra.mxu0 %v12209
  %12876 = vmatprep.subr.mxu0 0.0
  %12877 = vmatpush2.msra.mxu0 %v12208
  %12878 = vmatprep.subr.mxu0 0.0
  %12879 = vmatpush2.msra.mxu0 %v12207
  %12880 = vmatprep.subr.mxu0 0.0
  %12881 = vmatpush2.msra.mxu0 %v12206
  %12882 = vmatprep.subr.mxu0 0.0
  %12883 = vmatpush2.msra.mxu0 %v12205
  %12884 = vmatprep.subr.mxu0 0.0
  %12885 = vmatpush2.msra.mxu0 %v12204
  %12886 = vmatprep.mubr.f32.mxu0 %v11555
  %12887 = vmatmul.mubr.f32.gmra.mxu0 %v11554
  %v12888 = vpop.f32.mrf.mxu0
  %v12889 = vadd.f32 %v12804, %v12888
  %v12890 = vpop.f32.mrf.mxu0
  %12891 = vmatprep.mubr.f32.mxu0 %v11691
  %12892 = vmatmul.mubr.f32.gmra.mxu0 %v11690
  %v12893 = vpop.f32.mrf.mxu0
  %v12894 = vadd.f32 %v12809, %v12893
  %v12895 = vpop.f32.mrf.mxu0
  %12896 = vmatprep.mubr.f32.mxu0 %v11827
  %12897 = vmatmul.mubr.f32.gmra.mxu0 %v11826
  %v12898 = vpop.f32.mrf.mxu0
  %v12899 = vadd.f32 %v12814, %v12898
  %v12900 = vpop.f32.mrf.mxu0
  %12901 = vmatprep.mubr.f32.mxu0 %v11963
  %12902 = vmatmul.mubr.f32.gmra.mxu0 %v11962
  %v12903 = vpop.f32.mrf.mxu0
  %v12904 = vadd.f32 %v12819, %v12903
  %v12905 = vpop.f32.mrf.mxu0
  %12906 = vdwg.mxu0
  %v12907 = vmax.f32 %v12889, 0.0
  %v12908 = vmax.f32 %v12894, 0.0
  %v12909 = vmax.f32 %v12899, 0.0
  %v12910 = vmax.f32 %v12904, 0.0
  %v12911 = vld [vmem:[%s7] sm:$0xff]
  %v12912 = vld [vmem:[%s7 + $0x8] sm:$0xff]
  %v12913 = vld [vmem:[%s7 + $0x10] sm:$0xff]
  %v12914 = vld [vmem:[%s7 + $0x18] sm:$0xff]
  %v12915 = vld [vmem:[%s7 + $0x20] sm:$0xff]
  %v12916 = vld [vmem:[%s7 + $0x28] sm:$0xff]
  %v12917 = vld [vmem:[%s7 + $0x30] sm:$0xff]
  %v12918 = vld [vmem:[%s7 + $0x38] sm:$0xff]
  %v12919 = vld [vmem:[%s7 + $0x40] sm:$0xff]
  %v12920 = vld [vmem:[%s7 + $0x48] sm:$0xff]
  %v12921 = vld [vmem:[%s7 + $0x50] sm:$0xff]
  %v12922 = vld [vmem:[%s7 + $0x58] sm:$0xff]
  %v12923 = vld [vmem:[%s7 + $0x60] sm:$0xff]
  %v12924 = vld [vmem:[%s7 + $0x68] sm:$0xff]
  %v12925 = vld [vmem:[%s7 + $0x70] sm:$0xff]
  %v12926 = vld [vmem:[%s8] sm:$0x1]
  %v12928 = vlaneseq
  %v12929 = vshrl.u32 %v12928, 7
  %v12930 = vsub.s32 0, %v12929
  %v12931 = vrot.slane %v12926, %v12930
  %vm12933 = vcmask 982016
  %v12935 = vsel %vm12933, %v12907, 0
  %v12938 = vsel %vm12933, %v12908, 0
  %v12941 = vsel %vm12933, %v12909, 0
  %v12944 = vsel %vm12933, %v12910, 0
  %12946 = vmatprep.subr.mxu0 0.0
  %12947 = vmatpush1.msra.mxu0 0.0
  %12948 = vmatprep.subr.mxu0 0.0
  %12949 = vmatpush1.msra.mxu0 %v12925
  %12950 = vmatprep.subr.mxu0 0.0
  %12951 = vmatpush1.msra.mxu0 %v12924
  %12952 = vmatprep.subr.mxu0 0.0
  %12953 = vmatpush1.msra.mxu0 %v12923
  %12954 = vmatprep.subr.mxu0 0.0
  %12955 = vmatpush1.msra.mxu0 %v12922
  %12956 = vmatprep.subr.mxu0 0.0
  %12957 = vmatpush1.msra.mxu0 %v12921
  %12958 = vmatprep.subr.mxu0 0.0
  %12959 = vmatpush1.msra.mxu0 %v12920
  %12960 = vmatprep.subr.mxu0 0.0
  %12961 = vmatpush1.msra.mxu0 %v12919
  %12962 = vmatprep.subr.mxu0 0.0
  %12963 = vmatpush1.msra.mxu0 %v12918
  %12964 = vmatprep.subr.mxu0 0.0
  %12965 = vmatpush1.msra.mxu0 %v12917
  %12966 = vmatprep.subr.mxu0 0.0
  %12967 = vmatpush1.msra.mxu0 %v12916
  %12968 = vmatprep.subr.mxu0 0.0
  %12969 = vmatpush1.msra.mxu0 %v12915
  %12970 = vmatprep.subr.mxu0 0.0
  %12971 = vmatpush1.msra.mxu0 %v12914
  %12972 = vmatprep.subr.mxu0 0.0
  %12973 = vmatpush1.msra.mxu0 %v12913
  %12974 = vmatprep.subr.mxu0 0.0
  %12975 = vmatpush1.msra.mxu0 %v12912
  %12976 = vmatprep.subr.mxu0 0.0
  %12977 = vmatpush1.msra.mxu0 %v12911
  %12978 = vmatprep.subr.mxu0 0.0
  %12979 = vmatpush2.msra.mxu0 0.0
  %12980 = vmatprep.subr.mxu0 0.0
  %12981 = vmatpush2.msra.mxu0 0.0
  %12982 = vmatprep.subr.mxu0 0.0
  %12983 = vmatpush2.msra.mxu0 0.0
  %12984 = vmatprep.subr.mxu0 0.0
  %12985 = vmatpush2.msra.mxu0 0.0
  %12986 = vmatprep.subr.mxu0 0.0
  %12987 = vmatpush2.msra.mxu0 0.0
  %12988 = vmatprep.subr.mxu0 0.0
  %12989 = vmatpush2.msra.mxu0 0.0
  %12990 = vmatprep.subr.mxu0 0.0
  %12991 = vmatpush2.msra.mxu0 0.0
  %12992 = vmatprep.subr.mxu0 0.0
  %12993 = vmatpush2.msra.mxu0 0.0
  %12994 = vmatprep.subr.mxu0 0.0
  %12995 = vmatpush2.msra.mxu0 0.0
  %12996 = vmatprep.subr.mxu0 0.0
  %12997 = vmatpush2.msra.mxu0 0.0
  %12998 = vmatprep.subr.mxu0 0.0
  %12999 = vmatpush2.msra.mxu0 0.0
  %13000 = vmatprep.subr.mxu0 0.0
  %13001 = vmatpush2.msra.mxu0 0.0
  %13002 = vmatprep.subr.mxu0 0.0
  %13003 = vmatpush2.msra.mxu0 0.0
  %13004 = vmatprep.subr.mxu0 0.0
  %13005 = vmatpush2.msra.mxu0 0.0
  %13006 = vmatprep.subr.mxu0 0.0
  %13007 = vmatpush2.msra.mxu0 0.0
  %13008 = vmatprep.subr.mxu0 0.0
  %13009 = vmatpush2.msra.mxu0 0.0
  %13010 = vmatprep.mubr.f32.mxu0 0.0
  %13011 = vmatmul.mubr.f32.gmra.mxu0 %v12935
  %v13012 = vpop.f32.mrf.mxu0
  %v13013 = vadd.f32 %v12931, %v13012
  %v13014 = vpop.f32.mrf.mxu0
  %13015 = vmatprep.mubr.f32.mxu0 0.0
  %13016 = vmatmul.mubr.f32.gmra.mxu0 %v12938
  %v13017 = vpop.f32.mrf.mxu0
  %v13018 = vadd.f32 %v12931, %v13017
  %v13019 = vpop.f32.mrf.mxu0
  %13020 = vmatprep.mubr.f32.mxu0 0.0
  %13021 = vmatmul.mubr.f32.gmra.mxu0 %v12941
  %v13022 = vpop.f32.mrf.mxu0
  %v13023 = vadd.f32 %v12931, %v13022
  %v13024 = vpop.f32.mrf.mxu0
  %13025 = vmatprep.mubr.f32.mxu0 0.0
  %13026 = vmatmul.mubr.f32.gmra.mxu0 %v12944
  %v13027 = vpop.f32.mrf.mxu0
  %v13028 = vadd.f32 %v12931, %v13027
  %v13029 = vpop.f32.mrf.mxu0
  %13030 = vdwg.mxu0
  %v13031 = vmax.f32 %v13013, 0.0
  %v13032 = vmax.f32 %v13018, 0.0
  %v13033 = vmax.f32 %v13023, 0.0
  %v13034 = vmax.f32 %v13028, 0.0
  %v13035 = vld [vmem:[%s9] sm:$0xff]
  %v13036 = vld [vmem:[%s9 + $0x8] sm:$0xff]
  %v13037 = vld [vmem:[%s9 + $0x10] sm:$0xff]
  %v13038 = vld [vmem:[%s9 + $0x18] sm:$0xff]
  %v13039 = vld [vmem:[%s9 + $0x20] sm:$0xff]
  %v13040 = vld [vmem:[%s9 + $0x28] sm:$0xff]
  %v13041 = vld [vmem:[%s9 + $0x30] sm:$0xff]
  %v13042 = vld [vmem:[%s9 + $0x38] sm:$0xff]
  %v13043 = vld [vmem:[%s9 + $0x40] sm:$0xff]
  %v13044 = vld [vmem:[%s9 + $0x48] sm:$0xff]
  %v13045 = vld [vmem:[%s9 + $0x50] sm:$0xf]
  %v13046 = vld [vmem:[%s10] sm:$0x1]
  %v13048 = vlaneseq
  %v13049 = vshrl.u32 %v13048, 7
  %v13050 = vsub.s32 0, %v13049
  %v13051 = vrot.slane %v13046, %v13050
  %vm13053 = vcmask 687104
  %v13055 = vsel %vm13053, %v13031, 0
  %v13058 = vsel %vm13053, %v13032, 0
  %v13061 = vsel %vm13053, %v13033, 0
  %v13064 = vsel %vm13053, %v13034, 0
  %vm13066 = vcmask 1043456
  %v13068 = vsel %vm13066, %v13045, 0
  %13070 = vmatprep.subr.mxu0 0.0
  %13071 = vmatpush1.msra.mxu0 0.0
  %13072 = vmatprep.subr.mxu0 0.0
  %13073 = vmatpush1.msra.mxu0 0.0
  %13074 = vmatprep.subr.mxu0 0.0
  %13075 = vmatpush1.msra.mxu0 0.0
  %13076 = vmatprep.subr.mxu0 0.0
  %13077 = vmatpush1.msra.mxu0 0.0
  %13078 = vmatprep.subr.mxu0 0.0
  %13079 = vmatpush1.msra.mxu0 0.0
  %13080 = vmatprep.subr.mxu0 0.0
  %13081 = vmatpush1.msra.mxu0 %v13068
  %13082 = vmatprep.subr.mxu0 0.0
  %13083 = vmatpush1.msra.mxu0 %v13044
  %13084 = vmatprep.subr.mxu0 0.0
  %13085 = vmatpush1.msra.mxu0 %v13043
  %13086 = vmatprep.subr.mxu0 0.0
  %13087 = vmatpush1.msra.mxu0 %v13042
  %13088 = vmatprep.subr.mxu0 0.0
  %13089 = vmatpush1.msra.mxu0 %v13041
  %13090 = vmatprep.subr.mxu0 0.0
  %13091 = vmatpush1.msra.mxu0 %v13040
  %13092 = vmatprep.subr.mxu0 0.0
  %13093 = vmatpush1.msra.mxu0 %v13039
  %13094 = vmatprep.subr.mxu0 0.0
  %13095 = vmatpush1.msra.mxu0 %v13038
  %13096 = vmatprep.subr.mxu0 0.0
  %13097 = vmatpush1.msra.mxu0 %v13037
  %13098 = vmatprep.subr.mxu0 0.0
  %13099 = vmatpush1.msra.mxu0 %v13036
  %13100 = vmatprep.subr.mxu0 0.0
  %13101 = vmatpush1.msra.mxu0 %v13035
  %13102 = vmatprep.subr.mxu0 0.0
  %13103 = vmatpush2.msra.mxu0 0.0
  %13104 = vmatprep.subr.mxu0 0.0
  %13105 = vmatpush2.msra.mxu0 0.0
  %13106 = vmatprep.subr.mxu0 0.0
  %13107 = vmatpush2.msra.mxu0 0.0
  %13108 = vmatprep.subr.mxu0 0.0
  %13109 = vmatpush2.msra.mxu0 0.0
  %13110 = vmatprep.subr.mxu0 0.0
  %13111 = vmatpush2.msra.mxu0 0.0
  %13112 = vmatprep.subr.mxu0 0.0
  %13113 = vmatpush2.msra.mxu0 0.0
  %13114 = vmatprep.subr.mxu0 0.0
  %13115 = vmatpush2.msra.mxu0 0.0
  %13116 = vmatprep.subr.mxu0 0.0
  %13117 = vmatpush2.msra.mxu0 0.0
  %13118 = vmatprep.subr.mxu0 0.0
  %13119 = vmatpush2.msra.mxu0 0.0
  %13120 = vmatprep.subr.mxu0 0.0
  %13121 = vmatpush2.msra.mxu0 0.0
  %13122 = vmatprep.subr.mxu0 0.0
  %13123 = vmatpush2.msra.mxu0 0.0
  %13124 = vmatprep.subr.mxu0 0.0
  %13125 = vmatpush2.msra.mxu0 0.0
  %13126 = vmatprep.subr.mxu0 0.0
  %13127 = vmatpush2.msra.mxu0 0.0
  %13128 = vmatprep.subr.mxu0 0.0
  %13129 = vmatpush2.msra.mxu0 0.0
  %13130 = vmatprep.subr.mxu0 0.0
  %13131 = vmatpush2.msra.mxu0 0.0
  %13132 = vmatprep.subr.mxu0 0.0
  %13133 = vmatpush2.msra.mxu0 0.0
  %13134 = vmatprep.mubr.f32.mxu0 0.0
  %13135 = vmatmul.mubr.f32.gmra.mxu0 %v13055
  %v13136 = vpop.f32.mrf.mxu0
  %v13137 = vadd.f32 %v13051, %v13136
  %v13138 = vpop.f32.mrf.mxu0
  %13139 = vmatprep.mubr.f32.mxu0 0.0
  %13140 = vmatmul.mubr.f32.gmra.mxu0 %v13058
  %v13141 = vpop.f32.mrf.mxu0
  %v13142 = vadd.f32 %v13051, %v13141
  %v13143 = vpop.f32.mrf.mxu0
  %13144 = vmatprep.mubr.f32.mxu0 0.0
  %13145 = vmatmul.mubr.f32.gmra.mxu0 %v13061
  %v13146 = vpop.f32.mrf.mxu0
  %v13147 = vadd.f32 %v13051, %v13146
  %v13148 = vpop.f32.mrf.mxu0
  %13149 = vmatprep.mubr.f32.mxu0 0.0
  %13150 = vmatmul.mubr.f32.gmra.mxu0 %v13064
  %v13151 = vpop.f32.mrf.mxu0
  %v13152 = vadd.f32 %v13051, %v13151
  %v13153 = vpop.f32.mrf.mxu0
  %13154 = vdwg.mxu0
  %13155 = vst [vmem:[%s11] sm:$0xff] %v13137
  %13156 = vst [vmem:[%s11 + $0x8] sm:$0xff] %v13142
  %13157 = vst [vmem:[%s11 + $0x10] sm:$0xff] %v13147
  %13158 = vst [vmem:[%s11 + $0x18] sm:$0xff] %v13152
  // Predicated region
  $region46: #{net_forward.1} parent=0 // pred_check
    _
  $region47: #{net_forward.1} parent=0 // pred_check_branch
    %13160 = sbr.rel (0) target = $region49
  $region48: #{net_forward.1} parent=0 // pred_region
    _
  $region49: #{net_forward.1} parent=0 // pred_fallthru
    _
  // Predicated region
  $region50: #{net_forward.1} parent=0 // pred_check
    _
  $region51: #{net_forward.1} parent=0 // pred_check_branch
    %13162 = sbr.rel (0) target = $region53
  $region52: #{net_forward.1} parent=0 // pred_region
    _
  $region53: #{net_forward.1} parent=0 // pred_fallthru
    _

</llo_original>
